<compile_context>
chip_gen: v7x
topology: tpu7x:2x2x1
jax: 0.10.0
libtpu: 0.0.40
codegen_flags: <defaults>
</compile_context>

<pallas_src>
import jax
import jax.numpy as jnp
from jax import lax
from jax.experimental import pallas as pl
from jax.experimental.pallas import tpu as pltpu


# ----------------------------- model config ---------------------------------
EMBED = 13            # attention embed_dim (nn.MultiheadAttention(13, 1))
CIN1, COUT1 = 4, 8    # cnn1 conv channels; e1 embed = 13 - 8 = 5
CIN2, COUT2 = 4, 6    # cnn2 conv channels; e2 embed = 13 - 6 = 7
H1, W1 = 8, 8         # cnn1 spatial -> seq1 = 64
H2, W2 = 4, 8         # cnn2 spatial -> seq2 = 32
SEQ1, SEQ2 = H1 * W1, H2 * W2
SEQ = SEQ1 + SEQ2     # combined sequence length (96)
REG_HIDDEN = 64       # regressor hidden width
PATCH1 = 9 * CIN1     # 36 im2col taps for cnn1
PATCH2 = 9 * CIN2     # 36 im2col taps for cnn2
PCOLS = PATCH1 + PATCH2 + 2   # block-diagonal patches + two bias-indicator cols


# ------------------------------ kernel helpers -------------------------------
def _layernorm(x, gamma, beta, eps=1e-5):
    mu = jnp.mean(x, axis=-1, keepdims=True)
    xc = x - mu
    var = jnp.mean(xc * xc, axis=-1, keepdims=True)
    return xc * lax.rsqrt(var + eps) * gamma + beta


def _attention(x, wqkv_ref, bqkv_ref, wo, bo, dim):
    """Single-head self-attention for ONE batch element.  x: (S, dim)."""
    scale = 1.0 / (float(dim) ** 0.5)
    # Three lane-aligned projections (no lane slicing of a packed result).
    q = jnp.dot(x, wqkv_ref[0], preferred_element_type=jnp.float32) + bqkv_ref[0]
    k = jnp.dot(x, wqkv_ref[1], preferred_element_type=jnp.float32) + bqkv_ref[1]
    v = jnp.dot(x, wqkv_ref[2], preferred_element_type=jnp.float32) + bqkv_ref[2]
    s = lax.dot_general(q, k, (((1,), (1,)), ((), ())),
                        preferred_element_type=jnp.float32) * scale     # (S, S)
    m = jnp.max(s, axis=-1, keepdims=True)
    p = jnp.exp(s - m)
    attn = p / jnp.sum(p, axis=-1, keepdims=True)        # exact divide (parity)
    ctx = jnp.dot(attn, v, preferred_element_type=jnp.float32)          # (S, D)
    return jnp.dot(ctx, wo, preferred_element_type=jnp.float32) + bo


# ------------------------------ fused kernel ---------------------------------
def fused_forward_kernel(
        pcombo_ref, ecomb_ref, wcombo_ref, eye_ref,
        wqkv1_ref, bqkv1_ref, wo1_ref, bo1_ref, g1_ref, be1_ref,
        wqkv2_ref, bqkv2_ref, wo2_ref, bo2_ref, g2_ref, be2_ref,
        w3_hbm_ref, rb1_ref, rw2_ref, rb2_ref,
        out_ref,
        w3_vmem, w3_sem):
    B = out_ref.shape[0]
    D = ecomb_ref.shape[1]
    S = ecomb_ref.shape[0] // B

    # Kick off the big regressor-weight DMA first; it overlaps conv+attention
    # and is only waited on right before its first use.
    w3_copy = pltpu.make_async_copy(w3_hbm_ref, w3_vmem, w3_sem)
    w3_copy.start()

    # Region feature extractors (conv1 & conv2) as ONE block-diagonal im2col
    # matmul (bias folded in via indicator columns).  e1/e2 were pre-placed in
    # `ecomb`, so `combined` is just relu(conv) + ecomb -- no lane-offset
    # stores, no assembly scratch.
    z = jnp.dot(pcombo_ref[...], wcombo_ref[...],
                preferred_element_type=jnp.float32)                     # (B*S, D)
    combined = jnp.maximum(z, 0.0) + ecomb_ref[...]

    eye = eye_ref[...]                                                  # (D, D)

    for b in range(B):            # B == 2: fully unrolled; batch-independent
        xb = combined[b * S:(b + 1) * S, :]                             # (S, D)

        # --- attention block 1: residual + LayerNorm -------------------------
        a1 = _attention(xb, wqkv1_ref, bqkv1_ref, wo1_ref[...], bo1_ref[...], D)
        y1 = _layernorm(a1 + xb, g1_ref[...], be1_ref[...])
        # --- attention block 2: LayerNorm only (matches reference forward) ---
        a2 = _attention(y1, wqkv2_ref, bqkv2_ref, wo2_ref[...], bo2_ref[...], D)
        y2 = _layernorm(a2, g2_ref[...], be2_ref[...])                  # (S, D)

        if b == 0:
            w3_copy.wait()        # regressor weight is in VMEM from here on

        # --- regressor: h = flatten(y2) @ W1 + b1, WITHOUT materializing the
        # flatten.  y2^T via one MXU matmul with the identity, then D small
        # (1,S)@(S,H) matmuls against per-feature weight slabs
        # (reg_w1 re-laid-out host-side to (D, S, H)).
        y2t = lax.dot_general(eye, y2, (((1,), (1,)), ((), ())),
                              preferred_element_type=jnp.float32)       # (D, S)
        h = rb1_ref[...]                                                # (1, H)
        for d in range(D):
            h = h + jnp.dot(y2t[d:d + 1, :], w3_vmem[d],
                            preferred_element_type=jnp.float32)
        h = jnp.maximum(h, 0.0)
        yb = (jnp.dot(h, rw2_ref[...], preferred_element_type=jnp.float32)
              + rb2_ref[...])                                           # (1, 1)
        out_ref[b:b + 1, :] = yb.astype(out_ref.dtype)


# ------------------------------ host-side glue -------------------------------
def _im2col_3x3_same(x_nchw):
    """NCHW -> (B, H*W, 9*C) patch matrix for a 3x3 stride-1 'same' conv."""
    B, C, H, W = x_nchw.shape
    x = jnp.transpose(x_nchw, (0, 2, 3, 1)).astype(jnp.float32)         # NHWC
    xp = jnp.pad(x, ((0, 0), (1, 1), (1, 1), (0, 0)))
    taps = [xp[:, ky:ky + H, kx:kx + W, :] for ky in range(3) for kx in range(3)]
    patches = jnp.concatenate(taps, axis=-1)                            # (B,H,W,9C)
    return patches.reshape(B, H * W, 9 * C)


def _prepare_inputs(params, x1, x2, e1, e2):
    B = x1.shape[0]
    f32 = jnp.float32
    p1 = _im2col_3x3_same(x1)                                           # (B,S1,36)
    p2 = _im2col_3x3_same(x2)                                           # (B,S2,36)

    # Block-diagonal patch matrix: region-1 rows carry conv1 patches + a 1 in
    # the cnn1-bias column; region-2 rows carry conv2 patches + cnn2-bias 1.
    rows1 = jnp.concatenate(
        [p1, jnp.zeros((B, SEQ1, PATCH2), f32),
         jnp.ones((B, SEQ1, 1), f32), jnp.zeros((B, SEQ1, 1), f32)], axis=-1)
    rows2 = jnp.concatenate(
        [jnp.zeros((B, SEQ2, PATCH1), f32), p2,
         jnp.zeros((B, SEQ2, 1), f32), jnp.ones((B, SEQ2, 1), f32)], axis=-1)
    pcombo = jnp.concatenate([rows1, rows2], axis=1).reshape(B * SEQ, PCOLS)

    # e1 / e2 pre-placed at lanes COUT1:13 / COUT2:13 of the combined layout.
    e1p = jnp.pad(e1.astype(f32), ((0, 0), (0, 0), (COUT1, 0)))
    e2p = jnp.pad(e2.astype(f32), ((0, 0), (0, 0), (COUT2, 0)))
    ecomb = jnp.concatenate([e1p, e2p], axis=1).reshape(B * SEQ, EMBED)

    # Matching block-diagonal conv weight (+ two bias rows), mapping into
    # lanes 0:COUT1 (region 1) / 0:COUT2 (region 2) of the 13-wide feature.
    w1c = params["cnn1_w"].reshape(PATCH1, COUT1)
    w2c = params["cnn2_w"].reshape(PATCH2, COUT2)
    wcombo = jnp.concatenate([
        jnp.pad(w1c, ((0, 0), (0, EMBED - COUT1))),
        jnp.pad(w2c, ((0, 0), (0, EMBED - COUT2))),
        jnp.pad(params["cnn1_b"], ((0, 0), (0, EMBED - COUT1))),
        jnp.pad(params["cnn2_b"], ((0, 0), (0, EMBED - COUT2))),
    ], axis=0)                                                           # (74, 13)

    # Regressor first-layer weight re-laid-out so the kernel never flattens:
    # (SEQ*EMBED, H) -> (EMBED, SEQ, H);  h[k] = sum_{d,s} y2[s,d] * w3[d,s,k].
    w3 = params["reg_w1"].reshape(SEQ, EMBED, REG_HIDDEN).transpose(1, 0, 2)
    eye = jnp.eye(EMBED, dtype=f32)
    return pcombo, ecomb, wcombo, eye, w3


def dual_cnn_regressor_forward(params, x1, x2, e1, e2):
    B = x1.shape[0]
    pcombo, ecomb, wcombo, eye, w3 = _prepare_inputs(params, x1, x2, e1, e2)

    vmem = pltpu.MemorySpace.VMEM
    in_specs = ([pl.BlockSpec(memory_space=vmem)] * 16
                + [pl.BlockSpec(memory_space=pl.ANY)]     # w3 stays in HBM
                + [pl.BlockSpec(memory_space=vmem)] * 3)

    return pl.pallas_call(
        fused_forward_kernel,
        out_shape=jax.ShapeDtypeStruct((B, 1), jnp.float32),
        in_specs=in_specs,
        out_specs=pl.BlockSpec(memory_space=vmem),
        scratch_shapes=[
            pltpu.VMEM((EMBED, SEQ, REG_HIDDEN), jnp.float32),   # regressor W1
            pltpu.SemaphoreType.DMA(()),                         # its DMA sem
        ],
    )(pcombo, ecomb, wcombo, eye,
      params["wqkv1"], params["bqkv1"], params["wo1"], params["bo1"],
      params["ln1_g"], params["ln1_b"],
      params["wqkv2"], params["bqkv2"], params["wo2"], params["bo2"],
      params["ln2_g"], params["ln2_b"],
      w3, params["reg_b1"], params["reg_w2"], params["reg_b2"])


# ------------------------- plain-JAX reference path --------------------------
def reference_forward(params, x1, x2, e1, e2):
    hp = jax.lax.Precision.HIGHEST
    B = x1.shape[0]

    def conv_relu(x, w, bias, cout):
        p = _im2col_3x3_same(x)
        wf = w.reshape(-1, cout)
        return jax.nn.relu(jnp.einsum('bnc,ck->bnk', p, wf, precision=hp)
                           + bias.reshape(1, 1, cout))

    out1 = conv_relu(x1, params["cnn1_w"], params["cnn1_b"], COUT1)
    out2 = conv_relu(x2, params["cnn2_w"], params["cnn2_b"], COUT2)
    c1 = jnp.concatenate([out1, e1.astype(jnp.float32)], axis=2)
    c2 = jnp.concatenate([out2, e2.astype(jnp.float32)], axis=2)
    combined = jnp.concatenate([c1, c2], axis=1)                        # (B,S,13)

    def mha(x, wqkv, bqkv, wo, bo):
        q = jnp.einsum('bnd,de->bne', x, wqkv[0], precision=hp) + bqkv[0]
        k = jnp.einsum('bnd,de->bne', x, wqkv[1], precision=hp) + bqkv[1]
        v = jnp.einsum('bnd,de->bne', x, wqkv[2], precision=hp) + bqkv[2]
        s = jnp.einsum('bqd,bkd->bqk', q, k, precision=hp) / (float(EMBED) ** 0.5)
        a = jax.nn.softmax(s, axis=-1)
        ctx = jnp.einsum('bqk,bkd->bqd', a, v, precision=hp)
        return jnp.einsum('bnd,de->bne', ctx, wo, precision=hp) + bo

    def ln(x, g, b_):
        mu = jnp.mean(x, axis=-1, keepdims=True)
        var = jnp.mean((x - mu) ** 2, axis=-1, keepdims=True)
        return (x - mu) * jax.lax.rsqrt(var + 1e-5) * g + b_

    a1 = mha(combined, params["wqkv1"], params["bqkv1"], params["wo1"], params["bo1"])
    y1 = ln(a1 + combined, params["ln1_g"], params["ln1_b"])
    a2 = mha(y1, params["wqkv2"], params["bqkv2"], params["wo2"], params["bo2"])
    y2 = ln(a2, params["ln2_g"], params["ln2_b"])
    flat = y2.reshape(B, -1)
    h = jax.nn.relu(jnp.dot(flat, params["reg_w1"], precision=hp) + params["reg_b1"])
    return jnp.dot(h, params["reg_w2"], precision=hp) + params["reg_b2"]


# ---------------------------- parameter creation ----------------------------
def init_params(key):
    D = EMBED
    ks = jax.random.split(key, 14)

    def norm(k, shape, scale=0.1):
        return jax.random.normal(k, shape, jnp.float32) * scale

    return {
        # CNN feature extractors (HWIO conv weights, bias (1, Cout)).
        "cnn1_w": norm(ks[0], (3, 3, CIN1, COUT1)),
        "cnn1_b": norm(ks[1], (1, COUT1)),
        "cnn2_w": norm(ks[2], (3, 3, CIN2, COUT2)),
        "cnn2_b": norm(ks[3], (1, COUT2)),
        # MultiheadAttention(13, 1): wqkv[i] == in_proj_weight q/k/v block
        # transposed, wo == out_proj.weight.T.  Fresh random init.
        "wqkv1": norm(ks[4], (3, D, D)),
        "bqkv1": norm(ks[5], (3, 1, D)),
        "wo1":   norm(ks[6], (D, D)),
        "bo1":   norm(ks[7], (1, D)),
        "ln1_g": jnp.ones((1, D), jnp.float32),
        "ln1_b": jnp.zeros((1, D), jnp.float32),
        "wqkv2": norm(ks[8], (3, D, D)),
        "bqkv2": norm(ks[9], (3, 1, D)),
        "wo2":   norm(ks[10], (D, D)),
        "bo2":   norm(ks[11], (1, D)),
        "ln2_g": jnp.ones((1, D), jnp.float32),
        "ln2_b": jnp.zeros((1, D), jnp.float32),
        # Regressor stand-in: Linear(SEQ*13, 64) -> ReLU -> Linear(64, 1).
        "reg_w1": norm(ks[12], (SEQ * D, REG_HIDDEN)),
        "reg_b1": jnp.zeros((1, REG_HIDDEN), jnp.float32),
        "reg_w2": norm(ks[13], (REG_HIDDEN, 1)),
        "reg_b2": jnp.zeros((1, 1), jnp.float32),
    }


# ----------------------------------- main ------------------------------------
if __name__ == "__main__":
    B = 2
    key = jax.random.PRNGKey(0)
    kp, k1, k2, k3, k4 = jax.random.split(key, 5)

    params = init_params(kp)
    x1 = jax.random.normal(k1, (B, CIN1, H1, W1), jnp.float32)          # NCHW
    x2 = jax.random.normal(k2, (B, CIN2, H2, W2), jnp.float32)          # NCHW
    e1 = jax.random.normal(k3, (B, SEQ1, EMBED - COUT1), jnp.float32)   # (B, 64, 5)
    e2 = jax.random.normal(k4, (B, SEQ2, EMBED - COUT2), jnp.float32)   # (B, 32, 7)

    out = jax.jit(dual_cnn_regressor_forward)(params, x1, x2, e1, e2)
    out = jax.block_until_ready(out)

    ref = reference_forward(params, x1, x2, e1, e2)
    assert out.shape == (B, 1)
    assert bool(jnp.all(jnp.isfinite(out)))
    # Loose tolerance: catches layout/semantics bugs while allowing for
    # MXU-vs-XLA matmul precision differences.
    assert bool(jnp.allclose(out, ref, rtol=5e-2, atol=5e-2))
    print("KERNEL_OK")
</pallas_src>

<mosaic_0001>
module attributes {stable_mosaic.version = 11 : i64} {
  func.func @fused_forward_kernel(%arg0: memref<192x74xf32, #tpu.memory_space<vmem>>, %arg1: memref<192x13xf32, #tpu.memory_space<vmem>>, %arg2: memref<74x13xf32, #tpu.memory_space<vmem>>, %arg3: memref<13x13xf32, #tpu.memory_space<vmem>>, %arg4: memref<3x13x13xf32, #tpu.memory_space<vmem>>, %arg5: memref<3x1x13xf32, #tpu.memory_space<vmem>>, %arg6: memref<13x13xf32, #tpu.memory_space<vmem>>, %arg7: memref<1x13xf32, #tpu.memory_space<vmem>>, %arg8: memref<1x13xf32, #tpu.memory_space<vmem>>, %arg9: memref<1x13xf32, #tpu.memory_space<vmem>>, %arg10: memref<3x13x13xf32, #tpu.memory_space<vmem>>, %arg11: memref<3x1x13xf32, #tpu.memory_space<vmem>>, %arg12: memref<13x13xf32, #tpu.memory_space<vmem>>, %arg13: memref<1x13xf32, #tpu.memory_space<vmem>>, %arg14: memref<1x13xf32, #tpu.memory_space<vmem>>, %arg15: memref<1x13xf32, #tpu.memory_space<vmem>>, %arg16: memref<13x96x64xf32, #tpu.memory_space<any>>, %arg17: memref<1x64xf32, #tpu.memory_space<vmem>>, %arg18: memref<64x1xf32, #tpu.memory_space<vmem>>, %arg19: memref<1x1xf32, #tpu.memory_space<vmem>>, %arg20: memref<2x1xf32, #tpu.memory_space<vmem>>, %arg21: memref<13x96x64xf32, #tpu.memory_space<vmem>>, %arg22: memref<!tpu.dma_semaphore, #tpu.memory_space<semaphore_mem>>) attributes {dimension_semantics = [], scalar_prefetch = 0 : i64, scratch_operands = 2 : i64, tpu.core_type = #tpu.core_type<tc>} {
    tpu.enqueue_dma source(%arg16 : memref<13x96x64xf32, #tpu.memory_space<any>>) target(%arg21 : memref<13x96x64xf32, #tpu.memory_space<vmem>>) target_semaphore(%arg22 : memref<!tpu.dma_semaphore, #tpu.memory_space<semaphore_mem>>)
    %c0 = arith.constant 0 : index
    %c0_0 = arith.constant 0 : index
    %0 = vector.load %arg0[%c0, %c0_0] : memref<192x74xf32, #tpu.memory_space<vmem>>, vector<192x74xf32>
    %c0_1 = arith.constant 0 : index
    %c0_2 = arith.constant 0 : index
    %1 = vector.load %arg2[%c0_1, %c0_2] : memref<74x13xf32, #tpu.memory_space<vmem>>, vector<74x13xf32>
    %cst = arith.constant dense<0.000000e+00> : vector<192x13xf32>
    %2 = tpu.matmul %0, %1, %cst {dimension_numbers = #tpu.dot_dimension_numbers<[1], [0], [0], [1], [0, 0, 1, 1], [], []>} : vector<192x74xf32>, vector<74x13xf32>, vector<192x13xf32> -> vector<192x13xf32>
    %cst_3 = arith.constant 0.000000e+00 : f32
    %3 = vector.broadcast %cst_3 : f32 to vector<192x13xf32>
    %4 = arith.maximumf %2, %3 : vector<192x13xf32>
    %c0_4 = arith.constant 0 : index
    %c0_5 = arith.constant 0 : index
    %5 = vector.load %arg1[%c0_4, %c0_5] : memref<192x13xf32, #tpu.memory_space<vmem>>, vector<192x13xf32>
    %6 = arith.addf %4, %5 : vector<192x13xf32>
    %c0_6 = arith.constant 0 : index
    %c0_7 = arith.constant 0 : index
    %7 = vector.load %arg3[%c0_6, %c0_7] : memref<13x13xf32, #tpu.memory_space<vmem>>, vector<13x13xf32>
    %8 = vector.extract_strided_slice %6 {offsets = [0, 0], sizes = [96, 13], strides = [1, 1]} : vector<192x13xf32> to vector<96x13xf32>
    %c0_8 = arith.constant 0 : index
    %c0_9 = arith.constant 0 : index
    %9 = vector.load %arg6[%c0_8, %c0_9] : memref<13x13xf32, #tpu.memory_space<vmem>>, vector<13x13xf32>
    %c0_10 = arith.constant 0 : index
    %c0_11 = arith.constant 0 : index
    %10 = vector.load %arg7[%c0_10, %c0_11] : memref<1x13xf32, #tpu.memory_space<vmem>>, vector<1x13xf32>
    %c0_12 = arith.constant 0 : index
    %c0_13 = arith.constant 0 : index
    %c0_14 = arith.constant 0 : index
    %11 = vector.load %arg4[%c0_12, %c0_13, %c0_14] : memref<3x13x13xf32, #tpu.memory_space<vmem>>, vector<1x13x13xf32>
    %12 = vector.shape_cast %11 : vector<1x13x13xf32> to vector<13x13xf32>
    %cst_15 = arith.constant dense<0.000000e+00> : vector<96x13xf32>
    %13 = tpu.matmul %8, %12, %cst_15 {dimension_numbers = #tpu.dot_dimension_numbers<[1], [0], [0], [1], [0, 0, 1, 1], [], []>} : vector<96x13xf32>, vector<13x13xf32>, vector<96x13xf32> -> vector<96x13xf32>
    %c0_16 = arith.constant 0 : index
    %c0_17 = arith.constant 0 : index
    %c0_18 = arith.constant 0 : index
    %14 = vector.load %arg5[%c0_16, %c0_17, %c0_18] : memref<3x1x13xf32, #tpu.memory_space<vmem>>, vector<1x1x13xf32>
    %15 = vector.shape_cast %14 : vector<1x1x13xf32> to vector<1x13xf32>
    %16 = vector.broadcast %15 : vector<1x13xf32> to vector<96x13xf32>
    %17 = arith.addf %13, %16 : vector<96x13xf32>
    %c1 = arith.constant 1 : index
    %c0_19 = arith.constant 0 : index
    %c0_20 = arith.constant 0 : index
    %18 = vector.load %arg4[%c1, %c0_19, %c0_20] : memref<3x13x13xf32, #tpu.memory_space<vmem>>, vector<1x13x13xf32>
    %19 = vector.shape_cast %18 : vector<1x13x13xf32> to vector<13x13xf32>
    %cst_21 = arith.constant dense<0.000000e+00> : vector<96x13xf32>
    %20 = tpu.matmul %8, %19, %cst_21 {dimension_numbers = #tpu.dot_dimension_numbers<[1], [0], [0], [1], [0, 0, 1, 1], [], []>} : vector<96x13xf32>, vector<13x13xf32>, vector<96x13xf32> -> vector<96x13xf32>
    %c1_22 = arith.constant 1 : index
    %c0_23 = arith.constant 0 : index
    %c0_24 = arith.constant 0 : index
    %21 = vector.load %arg5[%c1_22, %c0_23, %c0_24] : memref<3x1x13xf32, #tpu.memory_space<vmem>>, vector<1x1x13xf32>
    %22 = vector.shape_cast %21 : vector<1x1x13xf32> to vector<1x13xf32>
    %23 = vector.broadcast %22 : vector<1x13xf32> to vector<96x13xf32>
    %24 = arith.addf %20, %23 : vector<96x13xf32>
    %c2 = arith.constant 2 : index
    %c0_25 = arith.constant 0 : index
    %c0_26 = arith.constant 0 : index
    %25 = vector.load %arg4[%c2, %c0_25, %c0_26] : memref<3x13x13xf32, #tpu.memory_space<vmem>>, vector<1x13x13xf32>
    %26 = vector.shape_cast %25 : vector<1x13x13xf32> to vector<13x13xf32>
    %cst_27 = arith.constant dense<0.000000e+00> : vector<96x13xf32>
    %27 = tpu.matmul %8, %26, %cst_27 {dimension_numbers = #tpu.dot_dimension_numbers<[1], [0], [0], [1], [0, 0, 1, 1], [], []>} : vector<96x13xf32>, vector<13x13xf32>, vector<96x13xf32> -> vector<96x13xf32>
    %c2_28 = arith.constant 2 : index
    %c0_29 = arith.constant 0 : index
    %c0_30 = arith.constant 0 : index
    %28 = vector.load %arg5[%c2_28, %c0_29, %c0_30] : memref<3x1x13xf32, #tpu.memory_space<vmem>>, vector<1x1x13xf32>
    %29 = vector.shape_cast %28 : vector<1x1x13xf32> to vector<1x13xf32>
    %30 = vector.broadcast %29 : vector<1x13xf32> to vector<96x13xf32>
    %31 = arith.addf %27, %30 : vector<96x13xf32>
    %cst_31 = arith.constant dense<0.000000e+00> : vector<96x96xf32>
    %32 = tpu.matmul %17, %24, %cst_31 {dimension_numbers = #tpu.dot_dimension_numbers<[1], [1], [0], [0], [0, 0, 1, 0], [], []>} : vector<96x13xf32>, vector<96x13xf32>, vector<96x96xf32> -> vector<96x96xf32>
    %cst_32 = arith.constant 0.277350098 : f32
    %33 = vector.broadcast %cst_32 : f32 to vector<96x96xf32>
    %34 = arith.mulf %32, %33 : vector<96x96xf32>
    %cst_33 = arith.constant dense<0xFF800000> : vector<96xf32>
    %35 = vector.multi_reduction <maximumf>, %34, %cst_33 [1] : vector<96x96xf32> to vector<96xf32>
    %36 = vector.shape_cast %35 : vector<96xf32> to vector<96x1xf32>
    %37 = vector.broadcast %36 : vector<96x1xf32> to vector<96x96xf32>
    %38 = arith.subf %34, %37 : vector<96x96xf32>
    %39 = math.exp %38 : vector<96x96xf32>
    %cst_34 = arith.constant dense<0.000000e+00> : vector<96xf32>
    %40 = vector.multi_reduction <add>, %39, %cst_34 [1] : vector<96x96xf32> to vector<96xf32>
    %41 = vector.shape_cast %40 : vector<96xf32> to vector<96x1xf32>
    %42 = vector.broadcast %41 : vector<96x1xf32> to vector<96x96xf32>
    %43 = arith.divf %39, %42 : vector<96x96xf32>
    %cst_35 = arith.constant dense<0.000000e+00> : vector<96x13xf32>
    %44 = tpu.matmul %43, %31, %cst_35 {dimension_numbers = #tpu.dot_dimension_numbers<[1], [0], [0], [1], [0, 0, 1, 1], [], []>} : vector<96x96xf32>, vector<96x13xf32>, vector<96x13xf32> -> vector<96x13xf32>
    %cst_36 = arith.constant dense<0.000000e+00> : vector<96x13xf32>
    %45 = tpu.matmul %44, %9, %cst_36 {dimension_numbers = #tpu.dot_dimension_numbers<[1], [0], [0], [1], [0, 0, 1, 1], [], []>} : vector<96x13xf32>, vector<13x13xf32>, vector<96x13xf32> -> vector<96x13xf32>
    %46 = vector.broadcast %10 : vector<1x13xf32> to vector<96x13xf32>
    %47 = arith.addf %45, %46 : vector<96x13xf32>
    %48 = arith.addf %47, %8 : vector<96x13xf32>
    %c0_37 = arith.constant 0 : index
    %c0_38 = arith.constant 0 : index
    %49 = vector.load %arg8[%c0_37, %c0_38] : memref<1x13xf32, #tpu.memory_space<vmem>>, vector<1x13xf32>
    %c0_39 = arith.constant 0 : index
    %c0_40 = arith.constant 0 : index
    %50 = vector.load %arg9[%c0_39, %c0_40] : memref<1x13xf32, #tpu.memory_space<vmem>>, vector<1x13xf32>
    %cst_41 = arith.constant dense<0.000000e+00> : vector<96xf32>
    %51 = vector.multi_reduction <add>, %48, %cst_41 [1] : vector<96x13xf32> to vector<96xf32>
    %52 = vector.shape_cast %51 : vector<96xf32> to vector<96x1xf32>
    %cst_42 = arith.constant 1.300000e+01 : f32
    %53 = vector.broadcast %cst_42 : f32 to vector<96x1xf32>
    %54 = arith.divf %52, %53 : vector<96x1xf32>
    %55 = vector.broadcast %54 : vector<96x1xf32> to vector<96x13xf32>
    %56 = arith.subf %48, %55 : vector<96x13xf32>
    %57 = arith.mulf %56, %56 : vector<96x13xf32>
    %cst_43 = arith.constant dense<0.000000e+00> : vector<96xf32>
    %58 = vector.multi_reduction <add>, %57, %cst_43 [1] : vector<96x13xf32> to vector<96xf32>
    %59 = vector.shape_cast %58 : vector<96xf32> to vector<96x1xf32>
    %cst_44 = arith.constant 1.300000e+01 : f32
    %60 = vector.broadcast %cst_44 : f32 to vector<96x1xf32>
    %61 = arith.divf %59, %60 : vector<96x1xf32>
    %cst_45 = arith.constant 9.99999974E-6 : f32
    %62 = vector.broadcast %cst_45 : f32 to vector<96x1xf32>
    %63 = arith.addf %61, %62 : vector<96x1xf32>
    %64 = math.rsqrt %63 : vector<96x1xf32>
    %65 = vector.broadcast %64 : vector<96x1xf32> to vector<96x13xf32>
    %66 = arith.mulf %56, %65 : vector<96x13xf32>
    %67 = vector.broadcast %49 : vector<1x13xf32> to vector<96x13xf32>
    %68 = arith.mulf %66, %67 : vector<96x13xf32>
    %69 = vector.broadcast %50 : vector<1x13xf32> to vector<96x13xf32>
    %70 = arith.addf %68, %69 : vector<96x13xf32>
    %c0_46 = arith.constant 0 : index
    %c0_47 = arith.constant 0 : index
    %71 = vector.load %arg12[%c0_46, %c0_47] : memref<13x13xf32, #tpu.memory_space<vmem>>, vector<13x13xf32>
    %c0_48 = arith.constant 0 : index
    %c0_49 = arith.constant 0 : index
    %72 = vector.load %arg13[%c0_48, %c0_49] : memref<1x13xf32, #tpu.memory_space<vmem>>, vector<1x13xf32>
    %c0_50 = arith.constant 0 : index
    %c0_51 = arith.constant 0 : index
    %c0_52 = arith.constant 0 : index
    %73 = vector.load %arg10[%c0_50, %c0_51, %c0_52] : memref<3x13x13xf32, #tpu.memory_space<vmem>>, vector<1x13x13xf32>
    %74 = vector.shape_cast %73 : vector<1x13x13xf32> to vector<13x13xf32>
    %cst_53 = arith.constant dense<0.000000e+00> : vector<96x13xf32>
    %75 = tpu.matmul %70, %74, %cst_53 {dimension_numbers = #tpu.dot_dimension_numbers<[1], [0], [0], [1], [0, 0, 1, 1], [], []>} : vector<96x13xf32>, vector<13x13xf32>, vector<96x13xf32> -> vector<96x13xf32>
    %c0_54 = arith.constant 0 : index
    %c0_55 = arith.constant 0 : index
    %c0_56 = arith.constant 0 : index
    %76 = vector.load %arg11[%c0_54, %c0_55, %c0_56] : memref<3x1x13xf32, #tpu.memory_space<vmem>>, vector<1x1x13xf32>
    %77 = vector.shape_cast %76 : vector<1x1x13xf32> to vector<1x13xf32>
    %78 = vector.broadcast %77 : vector<1x13xf32> to vector<96x13xf32>
    %79 = arith.addf %75, %78 : vector<96x13xf32>
    %c1_57 = arith.constant 1 : index
    %c0_58 = arith.constant 0 : index
    %c0_59 = arith.constant 0 : index
    %80 = vector.load %arg10[%c1_57, %c0_58, %c0_59] : memref<3x13x13xf32, #tpu.memory_space<vmem>>, vector<1x13x13xf32>
    %81 = vector.shape_cast %80 : vector<1x13x13xf32> to vector<13x13xf32>
    %cst_60 = arith.constant dense<0.000000e+00> : vector<96x13xf32>
    %82 = tpu.matmul %70, %81, %cst_60 {dimension_numbers = #tpu.dot_dimension_numbers<[1], [0], [0], [1], [0, 0, 1, 1], [], []>} : vector<96x13xf32>, vector<13x13xf32>, vector<96x13xf32> -> vector<96x13xf32>
    %c1_61 = arith.constant 1 : index
    %c0_62 = arith.constant 0 : index
    %c0_63 = arith.constant 0 : index
    %83 = vector.load %arg11[%c1_61, %c0_62, %c0_63] : memref<3x1x13xf32, #tpu.memory_space<vmem>>, vector<1x1x13xf32>
    %84 = vector.shape_cast %83 : vector<1x1x13xf32> to vector<1x13xf32>
    %85 = vector.broadcast %84 : vector<1x13xf32> to vector<96x13xf32>
    %86 = arith.addf %82, %85 : vector<96x13xf32>
    %c2_64 = arith.constant 2 : index
    %c0_65 = arith.constant 0 : index
    %c0_66 = arith.constant 0 : index
    %87 = vector.load %arg10[%c2_64, %c0_65, %c0_66] : memref<3x13x13xf32, #tpu.memory_space<vmem>>, vector<1x13x13xf32>
    %88 = vector.shape_cast %87 : vector<1x13x13xf32> to vector<13x13xf32>
    %cst_67 = arith.constant dense<0.000000e+00> : vector<96x13xf32>
    %89 = tpu.matmul %70, %88, %cst_67 {dimension_numbers = #tpu.dot_dimension_numbers<[1], [0], [0], [1], [0, 0, 1, 1], [], []>} : vector<96x13xf32>, vector<13x13xf32>, vector<96x13xf32> -> vector<96x13xf32>
    %c2_68 = arith.constant 2 : index
    %c0_69 = arith.constant 0 : index
    %c0_70 = arith.constant 0 : index
    %90 = vector.load %arg11[%c2_68, %c0_69, %c0_70] : memref<3x1x13xf32, #tpu.memory_space<vmem>>, vector<1x1x13xf32>
    %91 = vector.shape_cast %90 : vector<1x1x13xf32> to vector<1x13xf32>
    %92 = vector.broadcast %91 : vector<1x13xf32> to vector<96x13xf32>
    %93 = arith.addf %89, %92 : vector<96x13xf32>
    %cst_71 = arith.constant dense<0.000000e+00> : vector<96x96xf32>
    %94 = tpu.matmul %79, %86, %cst_71 {dimension_numbers = #tpu.dot_dimension_numbers<[1], [1], [0], [0], [0, 0, 1, 0], [], []>} : vector<96x13xf32>, vector<96x13xf32>, vector<96x96xf32> -> vector<96x96xf32>
    %cst_72 = arith.constant 0.277350098 : f32
    %95 = vector.broadcast %cst_72 : f32 to vector<96x96xf32>
    %96 = arith.mulf %94, %95 : vector<96x96xf32>
    %cst_73 = arith.constant dense<0xFF800000> : vector<96xf32>
    %97 = vector.multi_reduction <maximumf>, %96, %cst_73 [1] : vector<96x96xf32> to vector<96xf32>
    %98 = vector.shape_cast %97 : vector<96xf32> to vector<96x1xf32>
    %99 = vector.broadcast %98 : vector<96x1xf32> to vector<96x96xf32>
    %100 = arith.subf %96, %99 : vector<96x96xf32>
    %101 = math.exp %100 : vector<96x96xf32>
    %cst_74 = arith.constant dense<0.000000e+00> : vector<96xf32>
    %102 = vector.multi_reduction <add>, %101, %cst_74 [1] : vector<96x96xf32> to vector<96xf32>
    %103 = vector.shape_cast %102 : vector<96xf32> to vector<96x1xf32>
    %104 = vector.broadcast %103 : vector<96x1xf32> to vector<96x96xf32>
    %105 = arith.divf %101, %104 : vector<96x96xf32>
    %cst_75 = arith.constant dense<0.000000e+00> : vector<96x13xf32>
    %106 = tpu.matmul %105, %93, %cst_75 {dimension_numbers = #tpu.dot_dimension_numbers<[1], [0], [0], [1], [0, 0, 1, 1], [], []>} : vector<96x96xf32>, vector<96x13xf32>, vector<96x13xf32> -> vector<96x13xf32>
    %cst_76 = arith.constant dense<0.000000e+00> : vector<96x13xf32>
    %107 = tpu.matmul %106, %71, %cst_76 {dimension_numbers = #tpu.dot_dimension_numbers<[1], [0], [0], [1], [0, 0, 1, 1], [], []>} : vector<96x13xf32>, vector<13x13xf32>, vector<96x13xf32> -> vector<96x13xf32>
    %108 = vector.broadcast %72 : vector<1x13xf32> to vector<96x13xf32>
    %109 = arith.addf %107, %108 : vector<96x13xf32>
    %c0_77 = arith.constant 0 : index
    %c0_78 = arith.constant 0 : index
    %110 = vector.load %arg14[%c0_77, %c0_78] : memref<1x13xf32, #tpu.memory_space<vmem>>, vector<1x13xf32>
    %c0_79 = arith.constant 0 : index
    %c0_80 = arith.constant 0 : index
    %111 = vector.load %arg15[%c0_79, %c0_80] : memref<1x13xf32, #tpu.memory_space<vmem>>, vector<1x13xf32>
    %cst_81 = arith.constant dense<0.000000e+00> : vector<96xf32>
    %112 = vector.multi_reduction <add>, %109, %cst_81 [1] : vector<96x13xf32> to vector<96xf32>
    %113 = vector.shape_cast %112 : vector<96xf32> to vector<96x1xf32>
    %cst_82 = arith.constant 1.300000e+01 : f32
    %114 = vector.broadcast %cst_82 : f32 to vector<96x1xf32>
    %115 = arith.divf %113, %114 : vector<96x1xf32>
    %116 = vector.broadcast %115 : vector<96x1xf32> to vector<96x13xf32>
    %117 = arith.subf %109, %116 : vector<96x13xf32>
    %118 = arith.mulf %117, %117 : vector<96x13xf32>
    %cst_83 = arith.constant dense<0.000000e+00> : vector<96xf32>
    %119 = vector.multi_reduction <add>, %118, %cst_83 [1] : vector<96x13xf32> to vector<96xf32>
    %120 = vector.shape_cast %119 : vector<96xf32> to vector<96x1xf32>
    %cst_84 = arith.constant 1.300000e+01 : f32
    %121 = vector.broadcast %cst_84 : f32 to vector<96x1xf32>
    %122 = arith.divf %120, %121 : vector<96x1xf32>
    %cst_85 = arith.constant 9.99999974E-6 : f32
    %123 = vector.broadcast %cst_85 : f32 to vector<96x1xf32>
    %124 = arith.addf %122, %123 : vector<96x1xf32>
    %125 = math.rsqrt %124 : vector<96x1xf32>
    %126 = vector.broadcast %125 : vector<96x1xf32> to vector<96x13xf32>
    %127 = arith.mulf %117, %126 : vector<96x13xf32>
    %128 = vector.broadcast %110 : vector<1x13xf32> to vector<96x13xf32>
    %129 = arith.mulf %127, %128 : vector<96x13xf32>
    %130 = vector.broadcast %111 : vector<1x13xf32> to vector<96x13xf32>
    %131 = arith.addf %129, %130 : vector<96x13xf32>
    tpu.wait_dma2 semaphore(%arg22 : memref<!tpu.dma_semaphore, #tpu.memory_space<semaphore_mem>>) src(%arg16 : memref<13x96x64xf32, #tpu.memory_space<any>>) dst(%arg21 : memref<13x96x64xf32, #tpu.memory_space<vmem>>)
    %cst_86 = arith.constant dense<0.000000e+00> : vector<13x96xf32>
    %132 = tpu.matmul %7, %131, %cst_86 {dimension_numbers = #tpu.dot_dimension_numbers<[1], [1], [0], [0], [0, 0, 1, 0], [], []>} : vector<13x13xf32>, vector<96x13xf32>, vector<13x96xf32> -> vector<13x96xf32>
    %c0_87 = arith.constant 0 : index
    %c0_88 = arith.constant 0 : index
    %133 = vector.load %arg17[%c0_87, %c0_88] : memref<1x64xf32, #tpu.memory_space<vmem>>, vector<1x64xf32>
    %134 = vector.extract_strided_slice %132 {offsets = [0, 0], sizes = [1, 96], strides = [1, 1]} : vector<13x96xf32> to vector<1x96xf32>
    %c0_89 = arith.constant 0 : index
    %c0_90 = arith.constant 0 : index
    %c0_91 = arith.constant 0 : index
    %135 = vector.load %arg21[%c0_89, %c0_90, %c0_91] : memref<13x96x64xf32, #tpu.memory_space<vmem>>, vector<1x96x64xf32>
    %136 = vector.shape_cast %135 : vector<1x96x64xf32> to vector<96x64xf32>
    %cst_92 = arith.constant dense<0.000000e+00> : vector<1x64xf32>
    %137 = tpu.matmul %134, %136, %cst_92 {dimension_numbers = #tpu.dot_dimension_numbers<[1], [0], [0], [1], [0, 0, 1, 1], [], []>} : vector<1x96xf32>, vector<96x64xf32>, vector<1x64xf32> -> vector<1x64xf32>
    %138 = arith.addf %133, %137 : vector<1x64xf32>
    %139 = vector.extract_strided_slice %132 {offsets = [1, 0], sizes = [1, 96], strides = [1, 1]} : vector<13x96xf32> to vector<1x96xf32>
    %c1_93 = arith.constant 1 : index
    %c0_94 = arith.constant 0 : index
    %c0_95 = arith.constant 0 : index
    %140 = vector.load %arg21[%c1_93, %c0_94, %c0_95] : memref<13x96x64xf32, #tpu.memory_space<vmem>>, vector<1x96x64xf32>
    %141 = vector.shape_cast %140 : vector<1x96x64xf32> to vector<96x64xf32>
    %cst_96 = arith.constant dense<0.000000e+00> : vector<1x64xf32>
    %142 = tpu.matmul %139, %141, %cst_96 {dimension_numbers = #tpu.dot_dimension_numbers<[1], [0], [0], [1], [0, 0, 1, 1], [], []>} : vector<1x96xf32>, vector<96x64xf32>, vector<1x64xf32> -> vector<1x64xf32>
    %143 = arith.addf %138, %142 : vector<1x64xf32>
    %144 = vector.extract_strided_slice %132 {offsets = [2, 0], sizes = [1, 96], strides = [1, 1]} : vector<13x96xf32> to vector<1x96xf32>
    %c2_97 = arith.constant 2 : index
    %c0_98 = arith.constant 0 : index
    %c0_99 = arith.constant 0 : index
    %145 = vector.load %arg21[%c2_97, %c0_98, %c0_99] : memref<13x96x64xf32, #tpu.memory_space<vmem>>, vector<1x96x64xf32>
    %146 = vector.shape_cast %145 : vector<1x96x64xf32> to vector<96x64xf32>
    %cst_100 = arith.constant dense<0.000000e+00> : vector<1x64xf32>
    %147 = tpu.matmul %144, %146, %cst_100 {dimension_numbers = #tpu.dot_dimension_numbers<[1], [0], [0], [1], [0, 0, 1, 1], [], []>} : vector<1x96xf32>, vector<96x64xf32>, vector<1x64xf32> -> vector<1x64xf32>
    %148 = arith.addf %143, %147 : vector<1x64xf32>
    %149 = vector.extract_strided_slice %132 {offsets = [3, 0], sizes = [1, 96], strides = [1, 1]} : vector<13x96xf32> to vector<1x96xf32>
    %c3 = arith.constant 3 : index
    %c0_101 = arith.constant 0 : index
    %c0_102 = arith.constant 0 : index
    %150 = vector.load %arg21[%c3, %c0_101, %c0_102] : memref<13x96x64xf32, #tpu.memory_space<vmem>>, vector<1x96x64xf32>
    %151 = vector.shape_cast %150 : vector<1x96x64xf32> to vector<96x64xf32>
    %cst_103 = arith.constant dense<0.000000e+00> : vector<1x64xf32>
    %152 = tpu.matmul %149, %151, %cst_103 {dimension_numbers = #tpu.dot_dimension_numbers<[1], [0], [0], [1], [0, 0, 1, 1], [], []>} : vector<1x96xf32>, vector<96x64xf32>, vector<1x64xf32> -> vector<1x64xf32>
    %153 = arith.addf %148, %152 : vector<1x64xf32>
    %154 = vector.extract_strided_slice %132 {offsets = [4, 0], sizes = [1, 96], strides = [1, 1]} : vector<13x96xf32> to vector<1x96xf32>
    %c4 = arith.constant 4 : index
    %c0_104 = arith.constant 0 : index
    %c0_105 = arith.constant 0 : index
    %155 = vector.load %arg21[%c4, %c0_104, %c0_105] : memref<13x96x64xf32, #tpu.memory_space<vmem>>, vector<1x96x64xf32>
    %156 = vector.shape_cast %155 : vector<1x96x64xf32> to vector<96x64xf32>
    %cst_106 = arith.constant dense<0.000000e+00> : vector<1x64xf32>
    %157 = tpu.matmul %154, %156, %cst_106 {dimension_numbers = #tpu.dot_dimension_numbers<[1], [0], [0], [1], [0, 0, 1, 1], [], []>} : vector<1x96xf32>, vector<96x64xf32>, vector<1x64xf32> -> vector<1x64xf32>
    %158 = arith.addf %153, %157 : vector<1x64xf32>
    %159 = vector.extract_strided_slice %132 {offsets = [5, 0], sizes = [1, 96], strides = [1, 1]} : vector<13x96xf32> to vector<1x96xf32>
    %c5 = arith.constant 5 : index
    %c0_107 = arith.constant 0 : index
    %c0_108 = arith.constant 0 : index
    %160 = vector.load %arg21[%c5, %c0_107, %c0_108] : memref<13x96x64xf32, #tpu.memory_space<vmem>>, vector<1x96x64xf32>
    %161 = vector.shape_cast %160 : vector<1x96x64xf32> to vector<96x64xf32>
    %cst_109 = arith.constant dense<0.000000e+00> : vector<1x64xf32>
    %162 = tpu.matmul %159, %161, %cst_109 {dimension_numbers = #tpu.dot_dimension_numbers<[1], [0], [0], [1], [0, 0, 1, 1], [], []>} : vector<1x96xf32>, vector<96x64xf32>, vector<1x64xf32> -> vector<1x64xf32>
    %163 = arith.addf %158, %162 : vector<1x64xf32>
    %164 = vector.extract_strided_slice %132 {offsets = [6, 0], sizes = [1, 96], strides = [1, 1]} : vector<13x96xf32> to vector<1x96xf32>
    %c6 = arith.constant 6 : index
    %c0_110 = arith.constant 0 : index
    %c0_111 = arith.constant 0 : index
    %165 = vector.load %arg21[%c6, %c0_110, %c0_111] : memref<13x96x64xf32, #tpu.memory_space<vmem>>, vector<1x96x64xf32>
    %166 = vector.shape_cast %165 : vector<1x96x64xf32> to vector<96x64xf32>
    %cst_112 = arith.constant dense<0.000000e+00> : vector<1x64xf32>
    %167 = tpu.matmul %164, %166, %cst_112 {dimension_numbers = #tpu.dot_dimension_numbers<[1], [0], [0], [1], [0, 0, 1, 1], [], []>} : vector<1x96xf32>, vector<96x64xf32>, vector<1x64xf32> -> vector<1x64xf32>
    %168 = arith.addf %163, %167 : vector<1x64xf32>
    %169 = vector.extract_strided_slice %132 {offsets = [7, 0], sizes = [1, 96], strides = [1, 1]} : vector<13x96xf32> to vector<1x96xf32>
    %c7 = arith.constant 7 : index
    %c0_113 = arith.constant 0 : index
    %c0_114 = arith.constant 0 : index
    %170 = vector.load %arg21[%c7, %c0_113, %c0_114] : memref<13x96x64xf32, #tpu.memory_space<vmem>>, vector<1x96x64xf32>
    %171 = vector.shape_cast %170 : vector<1x96x64xf32> to vector<96x64xf32>
    %cst_115 = arith.constant dense<0.000000e+00> : vector<1x64xf32>
    %172 = tpu.matmul %169, %171, %cst_115 {dimension_numbers = #tpu.dot_dimension_numbers<[1], [0], [0], [1], [0, 0, 1, 1], [], []>} : vector<1x96xf32>, vector<96x64xf32>, vector<1x64xf32> -> vector<1x64xf32>
    %173 = arith.addf %168, %172 : vector<1x64xf32>
    %174 = vector.extract_strided_slice %132 {offsets = [8, 0], sizes = [1, 96], strides = [1, 1]} : vector<13x96xf32> to vector<1x96xf32>
    %c8 = arith.constant 8 : index
    %c0_116 = arith.constant 0 : index
    %c0_117 = arith.constant 0 : index
    %175 = vector.load %arg21[%c8, %c0_116, %c0_117] : memref<13x96x64xf32, #tpu.memory_space<vmem>>, vector<1x96x64xf32>
    %176 = vector.shape_cast %175 : vector<1x96x64xf32> to vector<96x64xf32>
    %cst_118 = arith.constant dense<0.000000e+00> : vector<1x64xf32>
    %177 = tpu.matmul %174, %176, %cst_118 {dimension_numbers = #tpu.dot_dimension_numbers<[1], [0], [0], [1], [0, 0, 1, 1], [], []>} : vector<1x96xf32>, vector<96x64xf32>, vector<1x64xf32> -> vector<1x64xf32>
    %178 = arith.addf %173, %177 : vector<1x64xf32>
    %179 = vector.extract_strided_slice %132 {offsets = [9, 0], sizes = [1, 96], strides = [1, 1]} : vector<13x96xf32> to vector<1x96xf32>
    %c9 = arith.constant 9 : index
    %c0_119 = arith.constant 0 : index
    %c0_120 = arith.constant 0 : index
    %180 = vector.load %arg21[%c9, %c0_119, %c0_120] : memref<13x96x64xf32, #tpu.memory_space<vmem>>, vector<1x96x64xf32>
    %181 = vector.shape_cast %180 : vector<1x96x64xf32> to vector<96x64xf32>
    %cst_121 = arith.constant dense<0.000000e+00> : vector<1x64xf32>
    %182 = tpu.matmul %179, %181, %cst_121 {dimension_numbers = #tpu.dot_dimension_numbers<[1], [0], [0], [1], [0, 0, 1, 1], [], []>} : vector<1x96xf32>, vector<96x64xf32>, vector<1x64xf32> -> vector<1x64xf32>
    %183 = arith.addf %178, %182 : vector<1x64xf32>
    %184 = vector.extract_strided_slice %132 {offsets = [10, 0], sizes = [1, 96], strides = [1, 1]} : vector<13x96xf32> to vector<1x96xf32>
    %c10 = arith.constant 10 : index
    %c0_122 = arith.constant 0 : index
    %c0_123 = arith.constant 0 : index
    %185 = vector.load %arg21[%c10, %c0_122, %c0_123] : memref<13x96x64xf32, #tpu.memory_space<vmem>>, vector<1x96x64xf32>
    %186 = vector.shape_cast %185 : vector<1x96x64xf32> to vector<96x64xf32>
    %cst_124 = arith.constant dense<0.000000e+00> : vector<1x64xf32>
    %187 = tpu.matmul %184, %186, %cst_124 {dimension_numbers = #tpu.dot_dimension_numbers<[1], [0], [0], [1], [0, 0, 1, 1], [], []>} : vector<1x96xf32>, vector<96x64xf32>, vector<1x64xf32> -> vector<1x64xf32>
    %188 = arith.addf %183, %187 : vector<1x64xf32>
    %189 = vector.extract_strided_slice %132 {offsets = [11, 0], sizes = [1, 96], strides = [1, 1]} : vector<13x96xf32> to vector<1x96xf32>
    %c11 = arith.constant 11 : index
    %c0_125 = arith.constant 0 : index
    %c0_126 = arith.constant 0 : index
    %190 = vector.load %arg21[%c11, %c0_125, %c0_126] : memref<13x96x64xf32, #tpu.memory_space<vmem>>, vector<1x96x64xf32>
    %191 = vector.shape_cast %190 : vector<1x96x64xf32> to vector<96x64xf32>
    %cst_127 = arith.constant dense<0.000000e+00> : vector<1x64xf32>
    %192 = tpu.matmul %189, %191, %cst_127 {dimension_numbers = #tpu.dot_dimension_numbers<[1], [0], [0], [1], [0, 0, 1, 1], [], []>} : vector<1x96xf32>, vector<96x64xf32>, vector<1x64xf32> -> vector<1x64xf32>
    %193 = arith.addf %188, %192 : vector<1x64xf32>
    %194 = vector.extract_strided_slice %132 {offsets = [12, 0], sizes = [1, 96], strides = [1, 1]} : vector<13x96xf32> to vector<1x96xf32>
    %c12 = arith.constant 12 : index
    %c0_128 = arith.constant 0 : index
    %c0_129 = arith.constant 0 : index
    %195 = vector.load %arg21[%c12, %c0_128, %c0_129] : memref<13x96x64xf32, #tpu.memory_space<vmem>>, vector<1x96x64xf32>
    %196 = vector.shape_cast %195 : vector<1x96x64xf32> to vector<96x64xf32>
    %cst_130 = arith.constant dense<0.000000e+00> : vector<1x64xf32>
    %197 = tpu.matmul %194, %196, %cst_130 {dimension_numbers = #tpu.dot_dimension_numbers<[1], [0], [0], [1], [0, 0, 1, 1], [], []>} : vector<1x96xf32>, vector<96x64xf32>, vector<1x64xf32> -> vector<1x64xf32>
    %198 = arith.addf %193, %197 : vector<1x64xf32>
    %cst_131 = arith.constant 0.000000e+00 : f32
    %199 = vector.broadcast %cst_131 : f32 to vector<1x64xf32>
    %200 = arith.maximumf %198, %199 : vector<1x64xf32>
    %c0_132 = arith.constant 0 : index
    %c0_133 = arith.constant 0 : index
    %201 = vector.load %arg18[%c0_132, %c0_133] : memref<64x1xf32, #tpu.memory_space<vmem>>, vector<64x1xf32>
    %cst_134 = arith.constant dense<0.000000e+00> : vector<1x1xf32>
    %202 = tpu.matmul %200, %201, %cst_134 {dimension_numbers = #tpu.dot_dimension_numbers<[1], [0], [0], [1], [0, 0, 1, 1], [], []>} : vector<1x64xf32>, vector<64x1xf32>, vector<1x1xf32> -> vector<1x1xf32>
    %c0_135 = arith.constant 0 : index
    %c0_136 = arith.constant 0 : index
    %203 = vector.load %arg19[%c0_135, %c0_136] : memref<1x1xf32, #tpu.memory_space<vmem>>, vector<1x1xf32>
    %204 = arith.addf %202, %203 : vector<1x1xf32>
    %c0_137 = arith.constant 0 : index
    %c0_138 = arith.constant 0 : index
    %205 = vector.load %arg20[%c0_137, %c0_138] : memref<2x1xf32, #tpu.memory_space<vmem>>, vector<1x1xf32>
    tpu.vector_store %arg20[%c0_137, %c0_138], %204 {strides = array<i32>} : memref<2x1xf32, #tpu.memory_space<vmem>>, vector<1x1xf32>,
    %206 = vector.extract_strided_slice %6 {offsets = [96, 0], sizes = [96, 13], strides = [1, 1]} : vector<192x13xf32> to vector<96x13xf32>
    %c0_139 = arith.constant 0 : index
    %c0_140 = arith.constant 0 : index
    %207 = vector.load %arg6[%c0_139, %c0_140] : memref<13x13xf32, #tpu.memory_space<vmem>>, vector<13x13xf32>
    %c0_141 = arith.constant 0 : index
    %c0_142 = arith.constant 0 : index
    %208 = vector.load %arg7[%c0_141, %c0_142] : memref<1x13xf32, #tpu.memory_space<vmem>>, vector<1x13xf32>
    %c0_143 = arith.constant 0 : index
    %c0_144 = arith.constant 0 : index
    %c0_145 = arith.constant 0 : index
    %209 = vector.load %arg4[%c0_143, %c0_144, %c0_145] : memref<3x13x13xf32, #tpu.memory_space<vmem>>, vector<1x13x13xf32>
    %210 = vector.shape_cast %209 : vector<1x13x13xf32> to vector<13x13xf32>
    %cst_146 = arith.constant dense<0.000000e+00> : vector<96x13xf32>
    %211 = tpu.matmul %206, %210, %cst_146 {dimension_numbers = #tpu.dot_dimension_numbers<[1], [0], [0], [1], [0, 0, 1, 1], [], []>} : vector<96x13xf32>, vector<13x13xf32>, vector<96x13xf32> -> vector<96x13xf32>
    %c0_147 = arith.constant 0 : index
    %c0_148 = arith.constant 0 : index
    %c0_149 = arith.constant 0 : index
    %212 = vector.load %arg5[%c0_147, %c0_148, %c0_149] : memref<3x1x13xf32, #tpu.memory_space<vmem>>, vector<1x1x13xf32>
    %213 = vector.shape_cast %212 : vector<1x1x13xf32> to vector<1x13xf32>
    %214 = vector.broadcast %213 : vector<1x13xf32> to vector<96x13xf32>
    %215 = arith.addf %211, %214 : vector<96x13xf32>
    %c1_150 = arith.constant 1 : index
    %c0_151 = arith.constant 0 : index
    %c0_152 = arith.constant 0 : index
    %216 = vector.load %arg4[%c1_150, %c0_151, %c0_152] : memref<3x13x13xf32, #tpu.memory_space<vmem>>, vector<1x13x13xf32>
    %217 = vector.shape_cast %216 : vector<1x13x13xf32> to vector<13x13xf32>
    %cst_153 = arith.constant dense<0.000000e+00> : vector<96x13xf32>
    %218 = tpu.matmul %206, %217, %cst_153 {dimension_numbers = #tpu.dot_dimension_numbers<[1], [0], [0], [1], [0, 0, 1, 1], [], []>} : vector<96x13xf32>, vector<13x13xf32>, vector<96x13xf32> -> vector<96x13xf32>
    %c1_154 = arith.constant 1 : index
    %c0_155 = arith.constant 0 : index
    %c0_156 = arith.constant 0 : index
    %219 = vector.load %arg5[%c1_154, %c0_155, %c0_156] : memref<3x1x13xf32, #tpu.memory_space<vmem>>, vector<1x1x13xf32>
    %220 = vector.shape_cast %219 : vector<1x1x13xf32> to vector<1x13xf32>
    %221 = vector.broadcast %220 : vector<1x13xf32> to vector<96x13xf32>
    %222 = arith.addf %218, %221 : vector<96x13xf32>
    %c2_157 = arith.constant 2 : index
    %c0_158 = arith.constant 0 : index
    %c0_159 = arith.constant 0 : index
    %223 = vector.load %arg4[%c2_157, %c0_158, %c0_159] : memref<3x13x13xf32, #tpu.memory_space<vmem>>, vector<1x13x13xf32>
    %224 = vector.shape_cast %223 : vector<1x13x13xf32> to vector<13x13xf32>
    %cst_160 = arith.constant dense<0.000000e+00> : vector<96x13xf32>
    %225 = tpu.matmul %206, %224, %cst_160 {dimension_numbers = #tpu.dot_dimension_numbers<[1], [0], [0], [1], [0, 0, 1, 1], [], []>} : vector<96x13xf32>, vector<13x13xf32>, vector<96x13xf32> -> vector<96x13xf32>
    %c2_161 = arith.constant 2 : index
    %c0_162 = arith.constant 0 : index
    %c0_163 = arith.constant 0 : index
    %226 = vector.load %arg5[%c2_161, %c0_162, %c0_163] : memref<3x1x13xf32, #tpu.memory_space<vmem>>, vector<1x1x13xf32>
    %227 = vector.shape_cast %226 : vector<1x1x13xf32> to vector<1x13xf32>
    %228 = vector.broadcast %227 : vector<1x13xf32> to vector<96x13xf32>
    %229 = arith.addf %225, %228 : vector<96x13xf32>
    %cst_164 = arith.constant dense<0.000000e+00> : vector<96x96xf32>
    %230 = tpu.matmul %215, %222, %cst_164 {dimension_numbers = #tpu.dot_dimension_numbers<[1], [1], [0], [0], [0, 0, 1, 0], [], []>} : vector<96x13xf32>, vector<96x13xf32>, vector<96x96xf32> -> vector<96x96xf32>
    %cst_165 = arith.constant 0.277350098 : f32
    %231 = vector.broadcast %cst_165 : f32 to vector<96x96xf32>
    %232 = arith.mulf %230, %231 : vector<96x96xf32>
    %cst_166 = arith.constant dense<0xFF800000> : vector<96xf32>
    %233 = vector.multi_reduction <maximumf>, %232, %cst_166 [1] : vector<96x96xf32> to vector<96xf32>
    %234 = vector.shape_cast %233 : vector<96xf32> to vector<96x1xf32>
    %235 = vector.broadcast %234 : vector<96x1xf32> to vector<96x96xf32>
    %236 = arith.subf %232, %235 : vector<96x96xf32>
    %237 = math.exp %236 : vector<96x96xf32>
    %cst_167 = arith.constant dense<0.000000e+00> : vector<96xf32>
    %238 = vector.multi_reduction <add>, %237, %cst_167 [1] : vector<96x96xf32> to vector<96xf32>
    %239 = vector.shape_cast %238 : vector<96xf32> to vector<96x1xf32>
    %240 = vector.broadcast %239 : vector<96x1xf32> to vector<96x96xf32>
    %241 = arith.divf %237, %240 : vector<96x96xf32>
    %cst_168 = arith.constant dense<0.000000e+00> : vector<96x13xf32>
    %242 = tpu.matmul %241, %229, %cst_168 {dimension_numbers = #tpu.dot_dimension_numbers<[1], [0], [0], [1], [0, 0, 1, 1], [], []>} : vector<96x96xf32>, vector<96x13xf32>, vector<96x13xf32> -> vector<96x13xf32>
    %cst_169 = arith.constant dense<0.000000e+00> : vector<96x13xf32>
    %243 = tpu.matmul %242, %207, %cst_169 {dimension_numbers = #tpu.dot_dimension_numbers<[1], [0], [0], [1], [0, 0, 1, 1], [], []>} : vector<96x13xf32>, vector<13x13xf32>, vector<96x13xf32> -> vector<96x13xf32>
    %244 = vector.broadcast %208 : vector<1x13xf32> to vector<96x13xf32>
    %245 = arith.addf %243, %244 : vector<96x13xf32>
    %246 = arith.addf %245, %206 : vector<96x13xf32>
    %c0_170 = arith.constant 0 : index
    %c0_171 = arith.constant 0 : index
    %247 = vector.load %arg8[%c0_170, %c0_171] : memref<1x13xf32, #tpu.memory_space<vmem>>, vector<1x13xf32>
    %c0_172 = arith.constant 0 : index
    %c0_173 = arith.constant 0 : index
    %248 = vector.load %arg9[%c0_172, %c0_173] : memref<1x13xf32, #tpu.memory_space<vmem>>, vector<1x13xf32>
    %cst_174 = arith.constant dense<0.000000e+00> : vector<96xf32>
    %249 = vector.multi_reduction <add>, %246, %cst_174 [1] : vector<96x13xf32> to vector<96xf32>
    %250 = vector.shape_cast %249 : vector<96xf32> to vector<96x1xf32>
    %cst_175 = arith.constant 1.300000e+01 : f32
    %251 = vector.broadcast %cst_175 : f32 to vector<96x1xf32>
    %252 = arith.divf %250, %251 : vector<96x1xf32>
    %253 = vector.broadcast %252 : vector<96x1xf32> to vector<96x13xf32>
    %254 = arith.subf %246, %253 : vector<96x13xf32>
    %255 = arith.mulf %254, %254 : vector<96x13xf32>
    %cst_176 = arith.constant dense<0.000000e+00> : vector<96xf32>
    %256 = vector.multi_reduction <add>, %255, %cst_176 [1] : vector<96x13xf32> to vector<96xf32>
    %257 = vector.shape_cast %256 : vector<96xf32> to vector<96x1xf32>
    %cst_177 = arith.constant 1.300000e+01 : f32
    %258 = vector.broadcast %cst_177 : f32 to vector<96x1xf32>
    %259 = arith.divf %257, %258 : vector<96x1xf32>
    %cst_178 = arith.constant 9.99999974E-6 : f32
    %260 = vector.broadcast %cst_178 : f32 to vector<96x1xf32>
    %261 = arith.addf %259, %260 : vector<96x1xf32>
    %262 = math.rsqrt %261 : vector<96x1xf32>
    %263 = vector.broadcast %262 : vector<96x1xf32> to vector<96x13xf32>
    %264 = arith.mulf %254, %263 : vector<96x13xf32>
    %265 = vector.broadcast %247 : vector<1x13xf32> to vector<96x13xf32>
    %266 = arith.mulf %264, %265 : vector<96x13xf32>
    %267 = vector.broadcast %248 : vector<1x13xf32> to vector<96x13xf32>
    %268 = arith.addf %266, %267 : vector<96x13xf32>
    %c0_179 = arith.constant 0 : index
    %c0_180 = arith.constant 0 : index
    %269 = vector.load %arg12[%c0_179, %c0_180] : memref<13x13xf32, #tpu.memory_space<vmem>>, vector<13x13xf32>
    %c0_181 = arith.constant 0 : index
    %c0_182 = arith.constant 0 : index
    %270 = vector.load %arg13[%c0_181, %c0_182] : memref<1x13xf32, #tpu.memory_space<vmem>>, vector<1x13xf32>
    %c0_183 = arith.constant 0 : index
    %c0_184 = arith.constant 0 : index
    %c0_185 = arith.constant 0 : index
    %271 = vector.load %arg10[%c0_183, %c0_184, %c0_185] : memref<3x13x13xf32, #tpu.memory_space<vmem>>, vector<1x13x13xf32>
    %272 = vector.shape_cast %271 : vector<1x13x13xf32> to vector<13x13xf32>
    %cst_186 = arith.constant dense<0.000000e+00> : vector<96x13xf32>
    %273 = tpu.matmul %268, %272, %cst_186 {dimension_numbers = #tpu.dot_dimension_numbers<[1], [0], [0], [1], [0, 0, 1, 1], [], []>} : vector<96x13xf32>, vector<13x13xf32>, vector<96x13xf32> -> vector<96x13xf32>
    %c0_187 = arith.constant 0 : index
    %c0_188 = arith.constant 0 : index
    %c0_189 = arith.constant 0 : index
    %274 = vector.load %arg11[%c0_187, %c0_188, %c0_189] : memref<3x1x13xf32, #tpu.memory_space<vmem>>, vector<1x1x13xf32>
    %275 = vector.shape_cast %274 : vector<1x1x13xf32> to vector<1x13xf32>
    %276 = vector.broadcast %275 : vector<1x13xf32> to vector<96x13xf32>
    %277 = arith.addf %273, %276 : vector<96x13xf32>
    %c1_190 = arith.constant 1 : index
    %c0_191 = arith.constant 0 : index
    %c0_192 = arith.constant 0 : index
    %278 = vector.load %arg10[%c1_190, %c0_191, %c0_192] : memref<3x13x13xf32, #tpu.memory_space<vmem>>, vector<1x13x13xf32>
    %279 = vector.shape_cast %278 : vector<1x13x13xf32> to vector<13x13xf32>
    %cst_193 = arith.constant dense<0.000000e+00> : vector<96x13xf32>
    %280 = tpu.matmul %268, %279, %cst_193 {dimension_numbers = #tpu.dot_dimension_numbers<[1], [0], [0], [1], [0, 0, 1, 1], [], []>} : vector<96x13xf32>, vector<13x13xf32>, vector<96x13xf32> -> vector<96x13xf32>
    %c1_194 = arith.constant 1 : index
    %c0_195 = arith.constant 0 : index
    %c0_196 = arith.constant 0 : index
    %281 = vector.load %arg11[%c1_194, %c0_195, %c0_196] : memref<3x1x13xf32, #tpu.memory_space<vmem>>, vector<1x1x13xf32>
    %282 = vector.shape_cast %281 : vector<1x1x13xf32> to vector<1x13xf32>
    %283 = vector.broadcast %282 : vector<1x13xf32> to vector<96x13xf32>
    %284 = arith.addf %280, %283 : vector<96x13xf32>
    %c2_197 = arith.constant 2 : index
    %c0_198 = arith.constant 0 : index
    %c0_199 = arith.constant 0 : index
    %285 = vector.load %arg10[%c2_197, %c0_198, %c0_199] : memref<3x13x13xf32, #tpu.memory_space<vmem>>, vector<1x13x13xf32>
    %286 = vector.shape_cast %285 : vector<1x13x13xf32> to vector<13x13xf32>
    %cst_200 = arith.constant dense<0.000000e+00> : vector<96x13xf32>
    %287 = tpu.matmul %268, %286, %cst_200 {dimension_numbers = #tpu.dot_dimension_numbers<[1], [0], [0], [1], [0, 0, 1, 1], [], []>} : vector<96x13xf32>, vector<13x13xf32>, vector<96x13xf32> -> vector<96x13xf32>
    %c2_201 = arith.constant 2 : index
    %c0_202 = arith.constant 0 : index
    %c0_203 = arith.constant 0 : index
    %288 = vector.load %arg11[%c2_201, %c0_202, %c0_203] : memref<3x1x13xf32, #tpu.memory_space<vmem>>, vector<1x1x13xf32>
    %289 = vector.shape_cast %288 : vector<1x1x13xf32> to vector<1x13xf32>
    %290 = vector.broadcast %289 : vector<1x13xf32> to vector<96x13xf32>
    %291 = arith.addf %287, %290 : vector<96x13xf32>
    %cst_204 = arith.constant dense<0.000000e+00> : vector<96x96xf32>
    %292 = tpu.matmul %277, %284, %cst_204 {dimension_numbers = #tpu.dot_dimension_numbers<[1], [1], [0], [0], [0, 0, 1, 0], [], []>} : vector<96x13xf32>, vector<96x13xf32>, vector<96x96xf32> -> vector<96x96xf32>
    %cst_205 = arith.constant 0.277350098 : f32
    %293 = vector.broadcast %cst_205 : f32 to vector<96x96xf32>
    %294 = arith.mulf %292, %293 : vector<96x96xf32>
    %cst_206 = arith.constant dense<0xFF800000> : vector<96xf32>
    %295 = vector.multi_reduction <maximumf>, %294, %cst_206 [1] : vector<96x96xf32> to vector<96xf32>
    %296 = vector.shape_cast %295 : vector<96xf32> to vector<96x1xf32>
    %297 = vector.broadcast %296 : vector<96x1xf32> to vector<96x96xf32>
    %298 = arith.subf %294, %297 : vector<96x96xf32>
    %299 = math.exp %298 : vector<96x96xf32>
    %cst_207 = arith.constant dense<0.000000e+00> : vector<96xf32>
    %300 = vector.multi_reduction <add>, %299, %cst_207 [1] : vector<96x96xf32> to vector<96xf32>
    %301 = vector.shape_cast %300 : vector<96xf32> to vector<96x1xf32>
    %302 = vector.broadcast %301 : vector<96x1xf32> to vector<96x96xf32>
    %303 = arith.divf %299, %302 : vector<96x96xf32>
    %cst_208 = arith.constant dense<0.000000e+00> : vector<96x13xf32>
    %304 = tpu.matmul %303, %291, %cst_208 {dimension_numbers = #tpu.dot_dimension_numbers<[1], [0], [0], [1], [0, 0, 1, 1], [], []>} : vector<96x96xf32>, vector<96x13xf32>, vector<96x13xf32> -> vector<96x13xf32>
    %cst_209 = arith.constant dense<0.000000e+00> : vector<96x13xf32>
    %305 = tpu.matmul %304, %269, %cst_209 {dimension_numbers = #tpu.dot_dimension_numbers<[1], [0], [0], [1], [0, 0, 1, 1], [], []>} : vector<96x13xf32>, vector<13x13xf32>, vector<96x13xf32> -> vector<96x13xf32>
    %306 = vector.broadcast %270 : vector<1x13xf32> to vector<96x13xf32>
    %307 = arith.addf %305, %306 : vector<96x13xf32>
    %c0_210 = arith.constant 0 : index
    %c0_211 = arith.constant 0 : index
    %308 = vector.load %arg14[%c0_210, %c0_211] : memref<1x13xf32, #tpu.memory_space<vmem>>, vector<1x13xf32>
    %c0_212 = arith.constant 0 : index
    %c0_213 = arith.constant 0 : index
    %309 = vector.load %arg15[%c0_212, %c0_213] : memref<1x13xf32, #tpu.memory_space<vmem>>, vector<1x13xf32>
    %cst_214 = arith.constant dense<0.000000e+00> : vector<96xf32>
    %310 = vector.multi_reduction <add>, %307, %cst_214 [1] : vector<96x13xf32> to vector<96xf32>
    %311 = vector.shape_cast %310 : vector<96xf32> to vector<96x1xf32>
    %cst_215 = arith.constant 1.300000e+01 : f32
    %312 = vector.broadcast %cst_215 : f32 to vector<96x1xf32>
    %313 = arith.divf %311, %312 : vector<96x1xf32>
    %314 = vector.broadcast %313 : vector<96x1xf32> to vector<96x13xf32>
    %315 = arith.subf %307, %314 : vector<96x13xf32>
    %316 = arith.mulf %315, %315 : vector<96x13xf32>
    %cst_216 = arith.constant dense<0.000000e+00> : vector<96xf32>
    %317 = vector.multi_reduction <add>, %316, %cst_216 [1] : vector<96x13xf32> to vector<96xf32>
    %318 = vector.shape_cast %317 : vector<96xf32> to vector<96x1xf32>
    %cst_217 = arith.constant 1.300000e+01 : f32
    %319 = vector.broadcast %cst_217 : f32 to vector<96x1xf32>
    %320 = arith.divf %318, %319 : vector<96x1xf32>
    %cst_218 = arith.constant 9.99999974E-6 : f32
    %321 = vector.broadcast %cst_218 : f32 to vector<96x1xf32>
    %322 = arith.addf %320, %321 : vector<96x1xf32>
    %323 = math.rsqrt %322 : vector<96x1xf32>
    %324 = vector.broadcast %323 : vector<96x1xf32> to vector<96x13xf32>
    %325 = arith.mulf %315, %324 : vector<96x13xf32>
    %326 = vector.broadcast %308 : vector<1x13xf32> to vector<96x13xf32>
    %327 = arith.mulf %325, %326 : vector<96x13xf32>
    %328 = vector.broadcast %309 : vector<1x13xf32> to vector<96x13xf32>
    %329 = arith.addf %327, %328 : vector<96x13xf32>
    %cst_219 = arith.constant dense<0.000000e+00> : vector<13x96xf32>
    %330 = tpu.matmul %7, %329, %cst_219 {dimension_numbers = #tpu.dot_dimension_numbers<[1], [1], [0], [0], [0, 0, 1, 0], [], []>} : vector<13x13xf32>, vector<96x13xf32>, vector<13x96xf32> -> vector<13x96xf32>
    %c0_220 = arith.constant 0 : index
    %c0_221 = arith.constant 0 : index
    %331 = vector.load %arg17[%c0_220, %c0_221] : memref<1x64xf32, #tpu.memory_space<vmem>>, vector<1x64xf32>
    %332 = vector.extract_strided_slice %330 {offsets = [0, 0], sizes = [1, 96], strides = [1, 1]} : vector<13x96xf32> to vector<1x96xf32>
    %c0_222 = arith.constant 0 : index
    %c0_223 = arith.constant 0 : index
    %c0_224 = arith.constant 0 : index
    %333 = vector.load %arg21[%c0_222, %c0_223, %c0_224] : memref<13x96x64xf32, #tpu.memory_space<vmem>>, vector<1x96x64xf32>
    %334 = vector.shape_cast %333 : vector<1x96x64xf32> to vector<96x64xf32>
    %cst_225 = arith.constant dense<0.000000e+00> : vector<1x64xf32>
    %335 = tpu.matmul %332, %334, %cst_225 {dimension_numbers = #tpu.dot_dimension_numbers<[1], [0], [0], [1], [0, 0, 1, 1], [], []>} : vector<1x96xf32>, vector<96x64xf32>, vector<1x64xf32> -> vector<1x64xf32>
    %336 = arith.addf %331, %335 : vector<1x64xf32>
    %337 = vector.extract_strided_slice %330 {offsets = [1, 0], sizes = [1, 96], strides = [1, 1]} : vector<13x96xf32> to vector<1x96xf32>
    %c1_226 = arith.constant 1 : index
    %c0_227 = arith.constant 0 : index
    %c0_228 = arith.constant 0 : index
    %338 = vector.load %arg21[%c1_226, %c0_227, %c0_228] : memref<13x96x64xf32, #tpu.memory_space<vmem>>, vector<1x96x64xf32>
    %339 = vector.shape_cast %338 : vector<1x96x64xf32> to vector<96x64xf32>
    %cst_229 = arith.constant dense<0.000000e+00> : vector<1x64xf32>
    %340 = tpu.matmul %337, %339, %cst_229 {dimension_numbers = #tpu.dot_dimension_numbers<[1], [0], [0], [1], [0, 0, 1, 1], [], []>} : vector<1x96xf32>, vector<96x64xf32>, vector<1x64xf32> -> vector<1x64xf32>
    %341 = arith.addf %336, %340 : vector<1x64xf32>
    %342 = vector.extract_strided_slice %330 {offsets = [2, 0], sizes = [1, 96], strides = [1, 1]} : vector<13x96xf32> to vector<1x96xf32>
    %c2_230 = arith.constant 2 : index
    %c0_231 = arith.constant 0 : index
    %c0_232 = arith.constant 0 : index
    %343 = vector.load %arg21[%c2_230, %c0_231, %c0_232] : memref<13x96x64xf32, #tpu.memory_space<vmem>>, vector<1x96x64xf32>
    %344 = vector.shape_cast %343 : vector<1x96x64xf32> to vector<96x64xf32>
    %cst_233 = arith.constant dense<0.000000e+00> : vector<1x64xf32>
    %345 = tpu.matmul %342, %344, %cst_233 {dimension_numbers = #tpu.dot_dimension_numbers<[1], [0], [0], [1], [0, 0, 1, 1], [], []>} : vector<1x96xf32>, vector<96x64xf32>, vector<1x64xf32> -> vector<1x64xf32>
    %346 = arith.addf %341, %345 : vector<1x64xf32>
    %347 = vector.extract_strided_slice %330 {offsets = [3, 0], sizes = [1, 96], strides = [1, 1]} : vector<13x96xf32> to vector<1x96xf32>
    %c3_234 = arith.constant 3 : index
    %c0_235 = arith.constant 0 : index
    %c0_236 = arith.constant 0 : index
    %348 = vector.load %arg21[%c3_234, %c0_235, %c0_236] : memref<13x96x64xf32, #tpu.memory_space<vmem>>, vector<1x96x64xf32>
    %349 = vector.shape_cast %348 : vector<1x96x64xf32> to vector<96x64xf32>
    %cst_237 = arith.constant dense<0.000000e+00> : vector<1x64xf32>
    %350 = tpu.matmul %347, %349, %cst_237 {dimension_numbers = #tpu.dot_dimension_numbers<[1], [0], [0], [1], [0, 0, 1, 1], [], []>} : vector<1x96xf32>, vector<96x64xf32>, vector<1x64xf32> -> vector<1x64xf32>
    %351 = arith.addf %346, %350 : vector<1x64xf32>
    %352 = vector.extract_strided_slice %330 {offsets = [4, 0], sizes = [1, 96], strides = [1, 1]} : vector<13x96xf32> to vector<1x96xf32>
    %c4_238 = arith.constant 4 : index
    %c0_239 = arith.constant 0 : index
    %c0_240 = arith.constant 0 : index
    %353 = vector.load %arg21[%c4_238, %c0_239, %c0_240] : memref<13x96x64xf32, #tpu.memory_space<vmem>>, vector<1x96x64xf32>
    %354 = vector.shape_cast %353 : vector<1x96x64xf32> to vector<96x64xf32>
    %cst_241 = arith.constant dense<0.000000e+00> : vector<1x64xf32>
    %355 = tpu.matmul %352, %354, %cst_241 {dimension_numbers = #tpu.dot_dimension_numbers<[1], [0], [0], [1], [0, 0, 1, 1], [], []>} : vector<1x96xf32>, vector<96x64xf32>, vector<1x64xf32> -> vector<1x64xf32>
    %356 = arith.addf %351, %355 : vector<1x64xf32>
    %357 = vector.extract_strided_slice %330 {offsets = [5, 0], sizes = [1, 96], strides = [1, 1]} : vector<13x96xf32> to vector<1x96xf32>
    %c5_242 = arith.constant 5 : index
    %c0_243 = arith.constant 0 : index
    %c0_244 = arith.constant 0 : index
    %358 = vector.load %arg21[%c5_242, %c0_243, %c0_244] : memref<13x96x64xf32, #tpu.memory_space<vmem>>, vector<1x96x64xf32>
    %359 = vector.shape_cast %358 : vector<1x96x64xf32> to vector<96x64xf32>
    %cst_245 = arith.constant dense<0.000000e+00> : vector<1x64xf32>
    %360 = tpu.matmul %357, %359, %cst_245 {dimension_numbers = #tpu.dot_dimension_numbers<[1], [0], [0], [1], [0, 0, 1, 1], [], []>} : vector<1x96xf32>, vector<96x64xf32>, vector<1x64xf32> -> vector<1x64xf32>
    %361 = arith.addf %356, %360 : vector<1x64xf32>
    %362 = vector.extract_strided_slice %330 {offsets = [6, 0], sizes = [1, 96], strides = [1, 1]} : vector<13x96xf32> to vector<1x96xf32>
    %c6_246 = arith.constant 6 : index
    %c0_247 = arith.constant 0 : index
    %c0_248 = arith.constant 0 : index
    %363 = vector.load %arg21[%c6_246, %c0_247, %c0_248] : memref<13x96x64xf32, #tpu.memory_space<vmem>>, vector<1x96x64xf32>
    %364 = vector.shape_cast %363 : vector<1x96x64xf32> to vector<96x64xf32>
    %cst_249 = arith.constant dense<0.000000e+00> : vector<1x64xf32>
    %365 = tpu.matmul %362, %364, %cst_249 {dimension_numbers = #tpu.dot_dimension_numbers<[1], [0], [0], [1], [0, 0, 1, 1], [], []>} : vector<1x96xf32>, vector<96x64xf32>, vector<1x64xf32> -> vector<1x64xf32>
    %366 = arith.addf %361, %365 : vector<1x64xf32>
    %367 = vector.extract_strided_slice %330 {offsets = [7, 0], sizes = [1, 96], strides = [1, 1]} : vector<13x96xf32> to vector<1x96xf32>
    %c7_250 = arith.constant 7 : index
    %c0_251 = arith.constant 0 : index
    %c0_252 = arith.constant 0 : index
    %368 = vector.load %arg21[%c7_250, %c0_251, %c0_252] : memref<13x96x64xf32, #tpu.memory_space<vmem>>, vector<1x96x64xf32>
    %369 = vector.shape_cast %368 : vector<1x96x64xf32> to vector<96x64xf32>
    %cst_253 = arith.constant dense<0.000000e+00> : vector<1x64xf32>
    %370 = tpu.matmul %367, %369, %cst_253 {dimension_numbers = #tpu.dot_dimension_numbers<[1], [0], [0], [1], [0, 0, 1, 1], [], []>} : vector<1x96xf32>, vector<96x64xf32>, vector<1x64xf32> -> vector<1x64xf32>
    %371 = arith.addf %366, %370 : vector<1x64xf32>
    %372 = vector.extract_strided_slice %330 {offsets = [8, 0], sizes = [1, 96], strides = [1, 1]} : vector<13x96xf32> to vector<1x96xf32>
    %c8_254 = arith.constant 8 : index
    %c0_255 = arith.constant 0 : index
    %c0_256 = arith.constant 0 : index
    %373 = vector.load %arg21[%c8_254, %c0_255, %c0_256] : memref<13x96x64xf32, #tpu.memory_space<vmem>>, vector<1x96x64xf32>
    %374 = vector.shape_cast %373 : vector<1x96x64xf32> to vector<96x64xf32>
    %cst_257 = arith.constant dense<0.000000e+00> : vector<1x64xf32>
    %375 = tpu.matmul %372, %374, %cst_257 {dimension_numbers = #tpu.dot_dimension_numbers<[1], [0], [0], [1], [0, 0, 1, 1], [], []>} : vector<1x96xf32>, vector<96x64xf32>, vector<1x64xf32> -> vector<1x64xf32>
    %376 = arith.addf %371, %375 : vector<1x64xf32>
    %377 = vector.extract_strided_slice %330 {offsets = [9, 0], sizes = [1, 96], strides = [1, 1]} : vector<13x96xf32> to vector<1x96xf32>
    %c9_258 = arith.constant 9 : index
    %c0_259 = arith.constant 0 : index
    %c0_260 = arith.constant 0 : index
    %378 = vector.load %arg21[%c9_258, %c0_259, %c0_260] : memref<13x96x64xf32, #tpu.memory_space<vmem>>, vector<1x96x64xf32>
    %379 = vector.shape_cast %378 : vector<1x96x64xf32> to vector<96x64xf32>
    %cst_261 = arith.constant dense<0.000000e+00> : vector<1x64xf32>
    %380 = tpu.matmul %377, %379, %cst_261 {dimension_numbers = #tpu.dot_dimension_numbers<[1], [0], [0], [1], [0, 0, 1, 1], [], []>} : vector<1x96xf32>, vector<96x64xf32>, vector<1x64xf32> -> vector<1x64xf32>
    %381 = arith.addf %376, %380 : vector<1x64xf32>
    %382 = vector.extract_strided_slice %330 {offsets = [10, 0], sizes = [1, 96], strides = [1, 1]} : vector<13x96xf32> to vector<1x96xf32>
    %c10_262 = arith.constant 10 : index
    %c0_263 = arith.constant 0 : index
    %c0_264 = arith.constant 0 : index
    %383 = vector.load %arg21[%c10_262, %c0_263, %c0_264] : memref<13x96x64xf32, #tpu.memory_space<vmem>>, vector<1x96x64xf32>
    %384 = vector.shape_cast %383 : vector<1x96x64xf32> to vector<96x64xf32>
    %cst_265 = arith.constant dense<0.000000e+00> : vector<1x64xf32>
    %385 = tpu.matmul %382, %384, %cst_265 {dimension_numbers = #tpu.dot_dimension_numbers<[1], [0], [0], [1], [0, 0, 1, 1], [], []>} : vector<1x96xf32>, vector<96x64xf32>, vector<1x64xf32> -> vector<1x64xf32>
    %386 = arith.addf %381, %385 : vector<1x64xf32>
    %387 = vector.extract_strided_slice %330 {offsets = [11, 0], sizes = [1, 96], strides = [1, 1]} : vector<13x96xf32> to vector<1x96xf32>
    %c11_266 = arith.constant 11 : index
    %c0_267 = arith.constant 0 : index
    %c0_268 = arith.constant 0 : index
    %388 = vector.load %arg21[%c11_266, %c0_267, %c0_268] : memref<13x96x64xf32, #tpu.memory_space<vmem>>, vector<1x96x64xf32>
    %389 = vector.shape_cast %388 : vector<1x96x64xf32> to vector<96x64xf32>
    %cst_269 = arith.constant dense<0.000000e+00> : vector<1x64xf32>
    %390 = tpu.matmul %387, %389, %cst_269 {dimension_numbers = #tpu.dot_dimension_numbers<[1], [0], [0], [1], [0, 0, 1, 1], [], []>} : vector<1x96xf32>, vector<96x64xf32>, vector<1x64xf32> -> vector<1x64xf32>
    %391 = arith.addf %386, %390 : vector<1x64xf32>
    %392 = vector.extract_strided_slice %330 {offsets = [12, 0], sizes = [1, 96], strides = [1, 1]} : vector<13x96xf32> to vector<1x96xf32>
    %c12_270 = arith.constant 12 : index
    %c0_271 = arith.constant 0 : index
    %c0_272 = arith.constant 0 : index
    %393 = vector.load %arg21[%c12_270, %c0_271, %c0_272] : memref<13x96x64xf32, #tpu.memory_space<vmem>>, vector<1x96x64xf32>
    %394 = vector.shape_cast %393 : vector<1x96x64xf32> to vector<96x64xf32>
    %cst_273 = arith.constant dense<0.000000e+00> : vector<1x64xf32>
    %395 = tpu.matmul %392, %394, %cst_273 {dimension_numbers = #tpu.dot_dimension_numbers<[1], [0], [0], [1], [0, 0, 1, 1], [], []>} : vector<1x96xf32>, vector<96x64xf32>, vector<1x64xf32> -> vector<1x64xf32>
    %396 = arith.addf %391, %395 : vector<1x64xf32>
    %cst_274 = arith.constant 0.000000e+00 : f32
    %397 = vector.broadcast %cst_274 : f32 to vector<1x64xf32>
    %398 = arith.maximumf %396, %397 : vector<1x64xf32>
    %c0_275 = arith.constant 0 : index
    %c0_276 = arith.constant 0 : index
    %399 = vector.load %arg18[%c0_275, %c0_276] : memref<64x1xf32, #tpu.memory_space<vmem>>, vector<64x1xf32>
    %cst_277 = arith.constant dense<0.000000e+00> : vector<1x1xf32>
    %400 = tpu.matmul %398, %399, %cst_277 {dimension_numbers = #tpu.dot_dimension_numbers<[1], [0], [0], [1], [0, 0, 1, 1], [], []>} : vector<1x64xf32>, vector<64x1xf32>, vector<1x1xf32> -> vector<1x1xf32>
    %c0_278 = arith.constant 0 : index
    %c0_279 = arith.constant 0 : index
    %401 = vector.load %arg19[%c0_278, %c0_279] : memref<1x1xf32, #tpu.memory_space<vmem>>, vector<1x1xf32>
    %402 = arith.addf %400, %401 : vector<1x1xf32>
    %c1_280 = arith.constant 1 : index
    %c0_281 = arith.constant 0 : index
    %403 = vector.load %arg20[%c1_280, %c0_281] : memref<2x1xf32, #tpu.memory_space<vmem>>, vector<1x1xf32>
    tpu.vector_store %arg20[%c1_280, %c0_281], %402 {strides = array<i32>} : memref<2x1xf32, #tpu.memory_space<vmem>>, vector<1x1xf32>,
    return
  }
}

</mosaic_0001>

<llo_original>
// kernel: dual_cnn_regressor_forward.1
$region0: #{dual_cnn_regressor_forward.1}
  #allocation0 [shape = 'u32[]', space=smem, size = 0x4, offset = 0x4, fixed_abs, tag = 'smem constant byte address 0x4 - core index']
  #allocation1 [shape = 'u32[144,128]{1,0:T(1,128)}', space=vmem, size = 0x12000, scoped, tag = 'internal scratch']
  #allocation2 [shape = 'f32[13,96,64]{2,1,0:T(8,128)}', space=vmem, size = 0x9c000, scoped, tag = 'scratch operand']
  #allocation3 [shape = 's32[1]{0}', space=sflag, size = 0x4, scoped, tag = 'scratch operand']
  #allocation4 [shape = 'f32[1,1]{1,0:T(1,128)S(1)}', space=vmem, size = 0x200, scoped, tag = 'scoped memory for dual_cnn_regressor_forward.1']
  #allocation5 [shape = 's32[]', space=sflag, size = 0x4, offset = 0, fixed_abs, tag = 'sflag constant byte address 0x0 - dummy sync flag']
  %s0 = inlined_call_operand.vmem [shape: f32[192,74], index: 0, kind: input, shape index: {}]
  %s1 = inlined_call_operand.vmem [shape: f32[192,13], index: 1, kind: input, shape index: {}]
  %s2 = inlined_call_operand.vmem [shape: f32[74,13], index: 2, kind: input, shape index: {}]
  %s3 = inlined_call_operand.vmem [shape: f32[13,13], index: 3, kind: input, shape index: {}]
  %s4 = inlined_call_operand.vmem [shape: f32[3,13,13], index: 4, kind: input, shape index: {}]
  %s5 = inlined_call_operand.vmem [shape: f32[3,1,13], index: 5, kind: input, shape index: {}]
  %s6 = inlined_call_operand.vmem [shape: f32[13,13], index: 6, kind: input, shape index: {}]
  %s7 = inlined_call_operand.vmem [shape: f32[1,13], index: 7, kind: input, shape index: {}]
  %s8 = inlined_call_operand.vmem [shape: f32[1,13], index: 8, kind: input, shape index: {}]
  %s9 = inlined_call_operand.vmem [shape: f32[1,13], index: 9, kind: input, shape index: {}]
  %s10 = inlined_call_operand.vmem [shape: f32[3,13,13], index: 10, kind: input, shape index: {}]
  %s11 = inlined_call_operand.vmem [shape: f32[3,1,13], index: 11, kind: input, shape index: {}]
  %s12 = inlined_call_operand.vmem [shape: f32[13,13], index: 12, kind: input, shape index: {}]
  %s13 = inlined_call_operand.vmem [shape: f32[1,13], index: 13, kind: input, shape index: {}]
  %s14 = inlined_call_operand.vmem [shape: f32[1,13], index: 14, kind: input, shape index: {}]
  %s15 = inlined_call_operand.vmem [shape: f32[1,13], index: 15, kind: input, shape index: {}]
  %s16 = inlined_call_operand.vmem [shape: f32[13,96,64], index: 16, kind: input, shape index: {}]
  %s17 = inlined_call_operand.vmem [shape: f32[1,64], index: 17, kind: input, shape index: {}]
  %s18 = inlined_call_operand.vmem [shape: f32[64,1], index: 18, kind: input, shape index: {}]
  %s19 = inlined_call_operand.<no memory space> [shape: f32[1,1], index: 19, kind: input, shape index: {}]
  %s20 = inlined_call_operand.vmem [shape: f32[2,1], index: 20, kind: output, shape index: {}]
  %s21 = sld [smem:[#allocation0]]
  $region120: #{dual_cnn_regressor_forward.1} parent=0
    _
  %s23 = ssub.s32 1, %s21
  %s24 = scalar_select 0, %s23, %s21
  %v25 = vstv %s19
  %26 = vst [vmem:[#allocation4] sm:$0x1] %v25
  // Predicated region
  $region2: #{dual_cnn_regressor_forward.1} parent=0 // pred_check
    _
  $region3: #{dual_cnn_regressor_forward.1} parent=0 // pred_check_branch
    %28 = sbr.rel (0) target = $region5
  $region4: #{dual_cnn_regressor_forward.1} parent=0 // pred_region
    _
  $region5: #{dual_cnn_regressor_forward.1} parent=0 // pred_fallthru
    _
  // Predicated region
  $region6: #{dual_cnn_regressor_forward.1} parent=0 // pred_check
    _
  $region7: #{dual_cnn_regressor_forward.1} parent=0 // pred_check_branch
    %30 = sbr.rel (0) target = $region9
  $region8: #{dual_cnn_regressor_forward.1} parent=0 // pred_region
    _
  $region9: #{dual_cnn_regressor_forward.1} parent=0 // pred_fallthru
    _
  // Predicated region
  $region10: #{dual_cnn_regressor_forward.1} parent=0 // pred_check
    _
  $region11: #{dual_cnn_regressor_forward.1} parent=0 // pred_check_branch
    %32 = sbr.rel (0) target = $region13
  $region12: #{dual_cnn_regressor_forward.1} parent=0 // pred_region
    _
  $region13: #{dual_cnn_regressor_forward.1} parent=0 // pred_fallthru
    _
  // Predicated region
  $region14: #{dual_cnn_regressor_forward.1} parent=0 // pred_check
    _
  $region15: #{dual_cnn_regressor_forward.1} parent=0 // pred_check_branch
    %34 = sbr.rel (0) target = $region17
  $region16: #{dual_cnn_regressor_forward.1} parent=0 // pred_region
    _
  $region17: #{dual_cnn_regressor_forward.1} parent=0 // pred_fallthru
    _
  // Predicated region
  $region18: #{dual_cnn_regressor_forward.1} parent=0 // pred_check
    _
  $region19: #{dual_cnn_regressor_forward.1} parent=0 // pred_check_branch
    %36 = sbr.rel (0) target = $region21
  $region20: #{dual_cnn_regressor_forward.1} parent=0 // pred_region
    _
  $region21: #{dual_cnn_regressor_forward.1} parent=0 // pred_fallthru
    _
  // Predicated region
  $region22: #{dual_cnn_regressor_forward.1} parent=0 // pred_check
    _
  $region23: #{dual_cnn_regressor_forward.1} parent=0 // pred_check_branch
    %38 = sbr.rel (0) target = $region25
  $region24: #{dual_cnn_regressor_forward.1} parent=0 // pred_region
    _
  $region25: #{dual_cnn_regressor_forward.1} parent=0 // pred_fallthru
    _
  // Predicated region
  $region26: #{dual_cnn_regressor_forward.1} parent=0 // pred_check
    _
  $region27: #{dual_cnn_regressor_forward.1} parent=0 // pred_check_branch
    %40 = sbr.rel (0) target = $region29
  $region28: #{dual_cnn_regressor_forward.1} parent=0 // pred_region
    _
  $region29: #{dual_cnn_regressor_forward.1} parent=0 // pred_fallthru
    _
  // Predicated region
  $region30: #{dual_cnn_regressor_forward.1} parent=0 // pred_check
    _
  $region31: #{dual_cnn_regressor_forward.1} parent=0 // pred_check_branch
    %42 = sbr.rel (0) target = $region33
  $region32: #{dual_cnn_regressor_forward.1} parent=0 // pred_region
    _
  $region33: #{dual_cnn_regressor_forward.1} parent=0 // pred_fallthru
    _
  // Predicated region
  $region34: #{dual_cnn_regressor_forward.1} parent=0 // pred_check
    _
  $region35: #{dual_cnn_regressor_forward.1} parent=0 // pred_check_branch
    %44 = sbr.rel (0) target = $region37
  $region36: #{dual_cnn_regressor_forward.1} parent=0 // pred_region
    _
  $region37: #{dual_cnn_regressor_forward.1} parent=0 // pred_fallthru
    _
  // Predicated region
  $region38: #{dual_cnn_regressor_forward.1} parent=0 // pred_check
    _
  $region39: #{dual_cnn_regressor_forward.1} parent=0 // pred_check_branch
    %46 = sbr.rel (0) target = $region41
  $region40: #{dual_cnn_regressor_forward.1} parent=0 // pred_region
    _
  $region41: #{dual_cnn_regressor_forward.1} parent=0 // pred_fallthru
    _
  // Predicated region
  $region42: #{dual_cnn_regressor_forward.1} parent=0 // pred_check
    _
  $region43: #{dual_cnn_regressor_forward.1} parent=0 // pred_check_branch
    %48 = sbr.rel (0) target = $region45
  $region44: #{dual_cnn_regressor_forward.1} parent=0 // pred_region
    _
  $region45: #{dual_cnn_regressor_forward.1} parent=0 // pred_fallthru
    _
  // Predicated region
  $region46: #{dual_cnn_regressor_forward.1} parent=0 // pred_check
    _
  $region47: #{dual_cnn_regressor_forward.1} parent=0 // pred_check_branch
    %50 = sbr.rel (0) target = $region49
  $region48: #{dual_cnn_regressor_forward.1} parent=0 // pred_region
    _
  $region49: #{dual_cnn_regressor_forward.1} parent=0 // pred_fallthru
    _
  // Predicated region
  $region50: #{dual_cnn_regressor_forward.1} parent=0 // pred_check
    _
  $region51: #{dual_cnn_regressor_forward.1} parent=0 // pred_check_branch
    %52 = sbr.rel (0) target = $region53
  $region52: #{dual_cnn_regressor_forward.1} parent=0 // pred_region
    _
  $region53: #{dual_cnn_regressor_forward.1} parent=0 // pred_fallthru
    _
  // Predicated region
  $region54: #{dual_cnn_regressor_forward.1} parent=0 // pred_check
    _
  $region55: #{dual_cnn_regressor_forward.1} parent=0 // pred_check_branch
    %54 = sbr.rel (0) target = $region57
  $region56: #{dual_cnn_regressor_forward.1} parent=0 // pred_region
    _
  $region57: #{dual_cnn_regressor_forward.1} parent=0 // pred_fallthru
    _
  // Predicated region
  $region58: #{dual_cnn_regressor_forward.1} parent=0 // pred_check
    _
  $region59: #{dual_cnn_regressor_forward.1} parent=0 // pred_check_branch
    %56 = sbr.rel (0) target = $region61
  $region60: #{dual_cnn_regressor_forward.1} parent=0 // pred_region
    _
  $region61: #{dual_cnn_regressor_forward.1} parent=0 // pred_fallthru
    _
  // Predicated region
  $region62: #{dual_cnn_regressor_forward.1} parent=0 // pred_check
    _
  $region63: #{dual_cnn_regressor_forward.1} parent=0 // pred_check_branch
    %58 = sbr.rel (0) target = $region65
  $region64: #{dual_cnn_regressor_forward.1} parent=0 // pred_region
    _
  $region65: #{dual_cnn_regressor_forward.1} parent=0 // pred_fallthru
    _
  // Predicated region
  $region66: #{dual_cnn_regressor_forward.1} parent=0 // pred_check
    _
  $region67: #{dual_cnn_regressor_forward.1} parent=0 // pred_check_branch
    %60 = sbr.rel (0) target = $region69
  $region68: #{dual_cnn_regressor_forward.1} parent=0 // pred_region
    _
  $region69: #{dual_cnn_regressor_forward.1} parent=0 // pred_fallthru
    _
  // Predicated region
  $region70: #{dual_cnn_regressor_forward.1} parent=0 // pred_check
    _
  $region71: #{dual_cnn_regressor_forward.1} parent=0 // pred_check_branch
    %62 = sbr.rel (0) target = $region73
  $region72: #{dual_cnn_regressor_forward.1} parent=0 // pred_region
    _
  $region73: #{dual_cnn_regressor_forward.1} parent=0 // pred_fallthru
    _
  // Predicated region
  $region74: #{dual_cnn_regressor_forward.1} parent=0 // pred_check
    _
  $region75: #{dual_cnn_regressor_forward.1} parent=0 // pred_check_branch
    %64 = sbr.rel (0) target = $region77
  $region76: #{dual_cnn_regressor_forward.1} parent=0 // pred_region
    _
  $region77: #{dual_cnn_regressor_forward.1} parent=0 // pred_fallthru
    _
  %p66 = scmp.lt.u32.totalorder 1248, 8
  %p67 = pneg %p66
  // Predicated region
  $region78: #{dual_cnn_regressor_forward.1} parent=0 // pred_check
    _
  $region79: #{dual_cnn_regressor_forward.1} parent=0 // pred_check_branch
    %69 = sbr.rel (%p66) target = $region81
  $region80: #{dual_cnn_regressor_forward.1} parent=0 // pred_region
    %s84 = sand.u32 1248, 7
    %p85 = scmp.eq.s32.totalorder %s84, 0
    // Predicated region
    $region93: #{dual_cnn_regressor_forward.1} parent=80 // pred_check
      %p86 = pneg %p85
    $region94: #{dual_cnn_regressor_forward.1} parent=80 // pred_check_branch
      %88 = sbr.rel (%p86) target = $region96
    $region95: #{dual_cnn_regressor_forward.1} parent=80 // pred_region
      loop: start=0, step=1, limit=1
      $region97: #{dual_cnn_regressor_forward.1} parent=95 // loop_pre_header
        _
      $region98: #{dual_cnn_regressor_forward.1} parent=95 // loop_header
        %s90 = sphi 0, %s94
        %p91 = scmp.ge.s32.totalorder %s90, 1
        %s95 = sphi %s16, %s16
        %s96 = sphi [#allocation2], [#allocation2]
      $region99: #{dual_cnn_regressor_forward.1} parent=95 // loop_header_branch
        %93 = sbr.rel (%p91) target = $region103
      $region100: #{dual_cnn_regressor_forward.1} parent=95 // loop_body
        %v97 = vld [vmem:[%s95] sm:$0xff]
        %98 = vst [vmem:[%s96] sm:$0xff] %v97
        %v99 = vld [vmem:[%s95 + $0x8] sm:$0xff]
        %100 = vst [vmem:[%s96 + $0x8] sm:$0xff] %v99
        %v101 = vld [vmem:[%s95 + $0x10] sm:$0xff]
        %102 = vst [vmem:[%s96 + $0x10] sm:$0xff] %v101
        %v103 = vld [vmem:[%s95 + $0x18] sm:$0xff]
        %104 = vst [vmem:[%s96 + $0x18] sm:$0xff] %v103
        %v105 = vld [vmem:[%s95 + $0x20] sm:$0xff]
        %106 = vst [vmem:[%s96 + $0x20] sm:$0xff] %v105
        %v107 = vld [vmem:[%s95 + $0x28] sm:$0xff]
        %108 = vst [vmem:[%s96 + $0x28] sm:$0xff] %v107
        %v109 = vld [vmem:[%s95 + $0x30] sm:$0xff]
        %110 = vst [vmem:[%s96 + $0x30] sm:$0xff] %v109
        %v111 = vld [vmem:[%s95 + $0x38] sm:$0xff]
        %112 = vst [vmem:[%s96 + $0x38] sm:$0xff] %v111
        %v113 = vld [vmem:[%s95 + $0x40] sm:$0xff]
        %114 = vst [vmem:[%s96 + $0x40] sm:$0xff] %v113
        %v115 = vld [vmem:[%s95 + $0x48] sm:$0xff]
        %116 = vst [vmem:[%s96 + $0x48] sm:$0xff] %v115
        %v117 = vld [vmem:[%s95 + $0x50] sm:$0xff]
        %118 = vst [vmem:[%s96 + $0x50] sm:$0xff] %v117
        %v119 = vld [vmem:[%s95 + $0x58] sm:$0xff]
        %120 = vst [vmem:[%s96 + $0x58] sm:$0xff] %v119
        %v121 = vld [vmem:[%s95 + $0x60] sm:$0xff]
        %122 = vst [vmem:[%s96 + $0x60] sm:$0xff] %v121
        %v123 = vld [vmem:[%s95 + $0x68] sm:$0xff]
        %124 = vst [vmem:[%s96 + $0x68] sm:$0xff] %v123
        %v125 = vld [vmem:[%s95 + $0x70] sm:$0xff]
        %126 = vst [vmem:[%s96 + $0x70] sm:$0xff] %v125
        %v127 = vld [vmem:[%s95 + $0x78] sm:$0xff]
        %128 = vst [vmem:[%s96 + $0x78] sm:$0xff] %v127
        %v129 = vld [vmem:[%s95 + $0x80] sm:$0xff]
        %130 = vst [vmem:[%s96 + $0x80] sm:$0xff] %v129
        %v131 = vld [vmem:[%s95 + $0x88] sm:$0xff]
        %132 = vst [vmem:[%s96 + $0x88] sm:$0xff] %v131
        %v133 = vld [vmem:[%s95 + $0x90] sm:$0xff]
        %134 = vst [vmem:[%s96 + $0x90] sm:$0xff] %v133
        %v135 = vld [vmem:[%s95 + $0x98] sm:$0xff]
        %136 = vst [vmem:[%s96 + $0x98] sm:$0xff] %v135
        %v137 = vld [vmem:[%s95 + $0xa0] sm:$0xff]
        %138 = vst [vmem:[%s96 + $0xa0] sm:$0xff] %v137
        %v139 = vld [vmem:[%s95 + $0xa8] sm:$0xff]
        %140 = vst [vmem:[%s96 + $0xa8] sm:$0xff] %v139
        %v141 = vld [vmem:[%s95 + $0xb0] sm:$0xff]
        %142 = vst [vmem:[%s96 + $0xb0] sm:$0xff] %v141
        %v143 = vld [vmem:[%s95 + $0xb8] sm:$0xff]
        %144 = vst [vmem:[%s96 + $0xb8] sm:$0xff] %v143
        %v145 = vld [vmem:[%s95 + $0xc0] sm:$0xff]
        %146 = vst [vmem:[%s96 + $0xc0] sm:$0xff] %v145
        %v147 = vld [vmem:[%s95 + $0xc8] sm:$0xff]
        %148 = vst [vmem:[%s96 + $0xc8] sm:$0xff] %v147
        %v149 = vld [vmem:[%s95 + $0xd0] sm:$0xff]
        %150 = vst [vmem:[%s96 + $0xd0] sm:$0xff] %v149
        %v151 = vld [vmem:[%s95 + $0xd8] sm:$0xff]
        %152 = vst [vmem:[%s96 + $0xd8] sm:$0xff] %v151
        %v153 = vld [vmem:[%s95 + $0xe0] sm:$0xff]
        %154 = vst [vmem:[%s96 + $0xe0] sm:$0xff] %v153
        %v155 = vld [vmem:[%s95 + $0xe8] sm:$0xff]
        %156 = vst [vmem:[%s96 + $0xe8] sm:$0xff] %v155
        %v157 = vld [vmem:[%s95 + $0xf0] sm:$0xff]
        %158 = vst [vmem:[%s96 + $0xf0] sm:$0xff] %v157
        %v159 = vld [vmem:[%s95 + $0xf8] sm:$0xff]
        %160 = vst [vmem:[%s96 + $0xf8] sm:$0xff] %v159
        %v161 = vld [vmem:[%s95 + $0x100] sm:$0xff]
        %162 = vst [vmem:[%s96 + $0x100] sm:$0xff] %v161
        %v163 = vld [vmem:[%s95 + $0x108] sm:$0xff]
        %164 = vst [vmem:[%s96 + $0x108] sm:$0xff] %v163
        %v165 = vld [vmem:[%s95 + $0x110] sm:$0xff]
        %166 = vst [vmem:[%s96 + $0x110] sm:$0xff] %v165
        %v167 = vld [vmem:[%s95 + $0x118] sm:$0xff]
        %168 = vst [vmem:[%s96 + $0x118] sm:$0xff] %v167
        %v169 = vld [vmem:[%s95 + $0x120] sm:$0xff]
        %170 = vst [vmem:[%s96 + $0x120] sm:$0xff] %v169
        %v171 = vld [vmem:[%s95 + $0x128] sm:$0xff]
        %172 = vst [vmem:[%s96 + $0x128] sm:$0xff] %v171
        %v173 = vld [vmem:[%s95 + $0x130] sm:$0xff]
        %174 = vst [vmem:[%s96 + $0x130] sm:$0xff] %v173
        %v175 = vld [vmem:[%s95 + $0x138] sm:$0xff]
        %176 = vst [vmem:[%s96 + $0x138] sm:$0xff] %v175
        %v177 = vld [vmem:[%s95 + $0x140] sm:$0xff]
        %178 = vst [vmem:[%s96 + $0x140] sm:$0xff] %v177
        %v179 = vld [vmem:[%s95 + $0x148] sm:$0xff]
        %180 = vst [vmem:[%s96 + $0x148] sm:$0xff] %v179
        %v181 = vld [vmem:[%s95 + $0x150] sm:$0xff]
        %182 = vst [vmem:[%s96 + $0x150] sm:$0xff] %v181
        %v183 = vld [vmem:[%s95 + $0x158] sm:$0xff]
        %184 = vst [vmem:[%s96 + $0x158] sm:$0xff] %v183
        %v185 = vld [vmem:[%s95 + $0x160] sm:$0xff]
        %186 = vst [vmem:[%s96 + $0x160] sm:$0xff] %v185
        %v187 = vld [vmem:[%s95 + $0x168] sm:$0xff]
        %188 = vst [vmem:[%s96 + $0x168] sm:$0xff] %v187
        %v189 = vld [vmem:[%s95 + $0x170] sm:$0xff]
        %190 = vst [vmem:[%s96 + $0x170] sm:$0xff] %v189
        %v191 = vld [vmem:[%s95 + $0x178] sm:$0xff]
        %192 = vst [vmem:[%s96 + $0x178] sm:$0xff] %v191
        %v193 = vld [vmem:[%s95 + $0x180] sm:$0xff]
        %194 = vst [vmem:[%s96 + $0x180] sm:$0xff] %v193
        %v195 = vld [vmem:[%s95 + $0x188] sm:$0xff]
        %196 = vst [vmem:[%s96 + $0x188] sm:$0xff] %v195
        %v197 = vld [vmem:[%s95 + $0x190] sm:$0xff]
        %198 = vst [vmem:[%s96 + $0x190] sm:$0xff] %v197
        %v199 = vld [vmem:[%s95 + $0x198] sm:$0xff]
        %200 = vst [vmem:[%s96 + $0x198] sm:$0xff] %v199
        %v201 = vld [vmem:[%s95 + $0x1a0] sm:$0xff]
        %202 = vst [vmem:[%s96 + $0x1a0] sm:$0xff] %v201
        %v203 = vld [vmem:[%s95 + $0x1a8] sm:$0xff]
        %204 = vst [vmem:[%s96 + $0x1a8] sm:$0xff] %v203
        %v205 = vld [vmem:[%s95 + $0x1b0] sm:$0xff]
        %206 = vst [vmem:[%s96 + $0x1b0] sm:$0xff] %v205
        %v207 = vld [vmem:[%s95 + $0x1b8] sm:$0xff]
        %208 = vst [vmem:[%s96 + $0x1b8] sm:$0xff] %v207
        %v209 = vld [vmem:[%s95 + $0x1c0] sm:$0xff]
        %210 = vst [vmem:[%s96 + $0x1c0] sm:$0xff] %v209
        %v211 = vld [vmem:[%s95 + $0x1c8] sm:$0xff]
        %212 = vst [vmem:[%s96 + $0x1c8] sm:$0xff] %v211
        %v213 = vld [vmem:[%s95 + $0x1d0] sm:$0xff]
        %214 = vst [vmem:[%s96 + $0x1d0] sm:$0xff] %v213
        %v215 = vld [vmem:[%s95 + $0x1d8] sm:$0xff]
        %216 = vst [vmem:[%s96 + $0x1d8] sm:$0xff] %v215
        %v217 = vld [vmem:[%s95 + $0x1e0] sm:$0xff]
        %218 = vst [vmem:[%s96 + $0x1e0] sm:$0xff] %v217
        %v219 = vld [vmem:[%s95 + $0x1e8] sm:$0xff]
        %220 = vst [vmem:[%s96 + $0x1e8] sm:$0xff] %v219
        %v221 = vld [vmem:[%s95 + $0x1f0] sm:$0xff]
        %222 = vst [vmem:[%s96 + $0x1f0] sm:$0xff] %v221
        %v223 = vld [vmem:[%s95 + $0x1f8] sm:$0xff]
        %224 = vst [vmem:[%s96 + $0x1f8] sm:$0xff] %v223
        %v225 = vld [vmem:[%s95 + $0x200] sm:$0xff]
        %226 = vst [vmem:[%s96 + $0x200] sm:$0xff] %v225
        %v227 = vld [vmem:[%s95 + $0x208] sm:$0xff]
        %228 = vst [vmem:[%s96 + $0x208] sm:$0xff] %v227
        %v229 = vld [vmem:[%s95 + $0x210] sm:$0xff]
        %230 = vst [vmem:[%s96 + $0x210] sm:$0xff] %v229
        %v231 = vld [vmem:[%s95 + $0x218] sm:$0xff]
        %232 = vst [vmem:[%s96 + $0x218] sm:$0xff] %v231
        %v233 = vld [vmem:[%s95 + $0x220] sm:$0xff]
        %234 = vst [vmem:[%s96 + $0x220] sm:$0xff] %v233
        %v235 = vld [vmem:[%s95 + $0x228] sm:$0xff]
        %236 = vst [vmem:[%s96 + $0x228] sm:$0xff] %v235
        %v237 = vld [vmem:[%s95 + $0x230] sm:$0xff]
        %238 = vst [vmem:[%s96 + $0x230] sm:$0xff] %v237
        %v239 = vld [vmem:[%s95 + $0x238] sm:$0xff]
        %240 = vst [vmem:[%s96 + $0x238] sm:$0xff] %v239
        %v241 = vld [vmem:[%s95 + $0x240] sm:$0xff]
        %242 = vst [vmem:[%s96 + $0x240] sm:$0xff] %v241
        %v243 = vld [vmem:[%s95 + $0x248] sm:$0xff]
        %244 = vst [vmem:[%s96 + $0x248] sm:$0xff] %v243
        %v245 = vld [vmem:[%s95 + $0x250] sm:$0xff]
        %246 = vst [vmem:[%s96 + $0x250] sm:$0xff] %v245
        %v247 = vld [vmem:[%s95 + $0x258] sm:$0xff]
        %248 = vst [vmem:[%s96 + $0x258] sm:$0xff] %v247
        %v249 = vld [vmem:[%s95 + $0x260] sm:$0xff]
        %250 = vst [vmem:[%s96 + $0x260] sm:$0xff] %v249
        %v251 = vld [vmem:[%s95 + $0x268] sm:$0xff]
        %252 = vst [vmem:[%s96 + $0x268] sm:$0xff] %v251
        %v253 = vld [vmem:[%s95 + $0x270] sm:$0xff]
        %254 = vst [vmem:[%s96 + $0x270] sm:$0xff] %v253
        %v255 = vld [vmem:[%s95 + $0x278] sm:$0xff]
        %256 = vst [vmem:[%s96 + $0x278] sm:$0xff] %v255
        %v257 = vld [vmem:[%s95 + $0x280] sm:$0xff]
        %258 = vst [vmem:[%s96 + $0x280] sm:$0xff] %v257
        %v259 = vld [vmem:[%s95 + $0x288] sm:$0xff]
        %260 = vst [vmem:[%s96 + $0x288] sm:$0xff] %v259
        %v261 = vld [vmem:[%s95 + $0x290] sm:$0xff]
        %262 = vst [vmem:[%s96 + $0x290] sm:$0xff] %v261
        %v263 = vld [vmem:[%s95 + $0x298] sm:$0xff]
        %264 = vst [vmem:[%s96 + $0x298] sm:$0xff] %v263
        %v265 = vld [vmem:[%s95 + $0x2a0] sm:$0xff]
        %266 = vst [vmem:[%s96 + $0x2a0] sm:$0xff] %v265
        %v267 = vld [vmem:[%s95 + $0x2a8] sm:$0xff]
        %268 = vst [vmem:[%s96 + $0x2a8] sm:$0xff] %v267
        %v269 = vld [vmem:[%s95 + $0x2b0] sm:$0xff]
        %270 = vst [vmem:[%s96 + $0x2b0] sm:$0xff] %v269
        %v271 = vld [vmem:[%s95 + $0x2b8] sm:$0xff]
        %272 = vst [vmem:[%s96 + $0x2b8] sm:$0xff] %v271
        %v273 = vld [vmem:[%s95 + $0x2c0] sm:$0xff]
        %274 = vst [vmem:[%s96 + $0x2c0] sm:$0xff] %v273
        %v275 = vld [vmem:[%s95 + $0x2c8] sm:$0xff]
        %276 = vst [vmem:[%s96 + $0x2c8] sm:$0xff] %v275
        %v277 = vld [vmem:[%s95 + $0x2d0] sm:$0xff]
        %278 = vst [vmem:[%s96 + $0x2d0] sm:$0xff] %v277
        %v279 = vld [vmem:[%s95 + $0x2d8] sm:$0xff]
        %280 = vst [vmem:[%s96 + $0x2d8] sm:$0xff] %v279
        %v281 = vld [vmem:[%s95 + $0x2e0] sm:$0xff]
        %282 = vst [vmem:[%s96 + $0x2e0] sm:$0xff] %v281
        %v283 = vld [vmem:[%s95 + $0x2e8] sm:$0xff]
        %284 = vst [vmem:[%s96 + $0x2e8] sm:$0xff] %v283
        %v285 = vld [vmem:[%s95 + $0x2f0] sm:$0xff]
        %286 = vst [vmem:[%s96 + $0x2f0] sm:$0xff] %v285
        %v287 = vld [vmem:[%s95 + $0x2f8] sm:$0xff]
        %288 = vst [vmem:[%s96 + $0x2f8] sm:$0xff] %v287
        %v289 = vld [vmem:[%s95 + $0x300] sm:$0xff]
        %290 = vst [vmem:[%s96 + $0x300] sm:$0xff] %v289
        %v291 = vld [vmem:[%s95 + $0x308] sm:$0xff]
        %292 = vst [vmem:[%s96 + $0x308] sm:$0xff] %v291
        %v293 = vld [vmem:[%s95 + $0x310] sm:$0xff]
        %294 = vst [vmem:[%s96 + $0x310] sm:$0xff] %v293
        %v295 = vld [vmem:[%s95 + $0x318] sm:$0xff]
        %296 = vst [vmem:[%s96 + $0x318] sm:$0xff] %v295
        %v297 = vld [vmem:[%s95 + $0x320] sm:$0xff]
        %298 = vst [vmem:[%s96 + $0x320] sm:$0xff] %v297
        %v299 = vld [vmem:[%s95 + $0x328] sm:$0xff]
        %300 = vst [vmem:[%s96 + $0x328] sm:$0xff] %v299
        %v301 = vld [vmem:[%s95 + $0x330] sm:$0xff]
        %302 = vst [vmem:[%s96 + $0x330] sm:$0xff] %v301
        %v303 = vld [vmem:[%s95 + $0x338] sm:$0xff]
        %304 = vst [vmem:[%s96 + $0x338] sm:$0xff] %v303
        %v305 = vld [vmem:[%s95 + $0x340] sm:$0xff]
        %306 = vst [vmem:[%s96 + $0x340] sm:$0xff] %v305
        %v307 = vld [vmem:[%s95 + $0x348] sm:$0xff]
        %308 = vst [vmem:[%s96 + $0x348] sm:$0xff] %v307
        %v309 = vld [vmem:[%s95 + $0x350] sm:$0xff]
        %310 = vst [vmem:[%s96 + $0x350] sm:$0xff] %v309
        %v311 = vld [vmem:[%s95 + $0x358] sm:$0xff]
        %312 = vst [vmem:[%s96 + $0x358] sm:$0xff] %v311
        %v313 = vld [vmem:[%s95 + $0x360] sm:$0xff]
        %314 = vst [vmem:[%s96 + $0x360] sm:$0xff] %v313
        %v315 = vld [vmem:[%s95 + $0x368] sm:$0xff]
        %316 = vst [vmem:[%s96 + $0x368] sm:$0xff] %v315
        %v317 = vld [vmem:[%s95 + $0x370] sm:$0xff]
        %318 = vst [vmem:[%s96 + $0x370] sm:$0xff] %v317
        %v319 = vld [vmem:[%s95 + $0x378] sm:$0xff]
        %320 = vst [vmem:[%s96 + $0x378] sm:$0xff] %v319
        %v321 = vld [vmem:[%s95 + $0x380] sm:$0xff]
        %322 = vst [vmem:[%s96 + $0x380] sm:$0xff] %v321
        %v323 = vld [vmem:[%s95 + $0x388] sm:$0xff]
        %324 = vst [vmem:[%s96 + $0x388] sm:$0xff] %v323
        %v325 = vld [vmem:[%s95 + $0x390] sm:$0xff]
        %326 = vst [vmem:[%s96 + $0x390] sm:$0xff] %v325
        %v327 = vld [vmem:[%s95 + $0x398] sm:$0xff]
        %328 = vst [vmem:[%s96 + $0x398] sm:$0xff] %v327
        %v329 = vld [vmem:[%s95 + $0x3a0] sm:$0xff]
        %330 = vst [vmem:[%s96 + $0x3a0] sm:$0xff] %v329
        %v331 = vld [vmem:[%s95 + $0x3a8] sm:$0xff]
        %332 = vst [vmem:[%s96 + $0x3a8] sm:$0xff] %v331
        %v333 = vld [vmem:[%s95 + $0x3b0] sm:$0xff]
        %334 = vst [vmem:[%s96 + $0x3b0] sm:$0xff] %v333
        %v335 = vld [vmem:[%s95 + $0x3b8] sm:$0xff]
        %336 = vst [vmem:[%s96 + $0x3b8] sm:$0xff] %v335
        %v337 = vld [vmem:[%s95 + $0x3c0] sm:$0xff]
        %338 = vst [vmem:[%s96 + $0x3c0] sm:$0xff] %v337
        %v339 = vld [vmem:[%s95 + $0x3c8] sm:$0xff]
        %340 = vst [vmem:[%s96 + $0x3c8] sm:$0xff] %v339
        %v341 = vld [vmem:[%s95 + $0x3d0] sm:$0xff]
        %342 = vst [vmem:[%s96 + $0x3d0] sm:$0xff] %v341
        %v343 = vld [vmem:[%s95 + $0x3d8] sm:$0xff]
        %344 = vst [vmem:[%s96 + $0x3d8] sm:$0xff] %v343
        %v345 = vld [vmem:[%s95 + $0x3e0] sm:$0xff]
        %346 = vst [vmem:[%s96 + $0x3e0] sm:$0xff] %v345
        %v347 = vld [vmem:[%s95 + $0x3e8] sm:$0xff]
        %348 = vst [vmem:[%s96 + $0x3e8] sm:$0xff] %v347
        %v349 = vld [vmem:[%s95 + $0x3f0] sm:$0xff]
        %350 = vst [vmem:[%s96 + $0x3f0] sm:$0xff] %v349
        %v351 = vld [vmem:[%s95 + $0x3f8] sm:$0xff]
        %352 = vst [vmem:[%s96 + $0x3f8] sm:$0xff] %v351
        %v353 = vld [vmem:[%s95 + $0x400] sm:$0xff]
        %354 = vst [vmem:[%s96 + $0x400] sm:$0xff] %v353
        %v355 = vld [vmem:[%s95 + $0x408] sm:$0xff]
        %356 = vst [vmem:[%s96 + $0x408] sm:$0xff] %v355
        %v357 = vld [vmem:[%s95 + $0x410] sm:$0xff]
        %358 = vst [vmem:[%s96 + $0x410] sm:$0xff] %v357
        %v359 = vld [vmem:[%s95 + $0x418] sm:$0xff]
        %360 = vst [vmem:[%s96 + $0x418] sm:$0xff] %v359
        %v361 = vld [vmem:[%s95 + $0x420] sm:$0xff]
        %362 = vst [vmem:[%s96 + $0x420] sm:$0xff] %v361
        %v363 = vld [vmem:[%s95 + $0x428] sm:$0xff]
        %364 = vst [vmem:[%s96 + $0x428] sm:$0xff] %v363
        %v365 = vld [vmem:[%s95 + $0x430] sm:$0xff]
        %366 = vst [vmem:[%s96 + $0x430] sm:$0xff] %v365
        %v367 = vld [vmem:[%s95 + $0x438] sm:$0xff]
        %368 = vst [vmem:[%s96 + $0x438] sm:$0xff] %v367
        %v369 = vld [vmem:[%s95 + $0x440] sm:$0xff]
        %370 = vst [vmem:[%s96 + $0x440] sm:$0xff] %v369
        %v371 = vld [vmem:[%s95 + $0x448] sm:$0xff]
        %372 = vst [vmem:[%s96 + $0x448] sm:$0xff] %v371
        %v373 = vld [vmem:[%s95 + $0x450] sm:$0xff]
        %374 = vst [vmem:[%s96 + $0x450] sm:$0xff] %v373
        %v375 = vld [vmem:[%s95 + $0x458] sm:$0xff]
        %376 = vst [vmem:[%s96 + $0x458] sm:$0xff] %v375
        %v377 = vld [vmem:[%s95 + $0x460] sm:$0xff]
        %378 = vst [vmem:[%s96 + $0x460] sm:$0xff] %v377
        %v379 = vld [vmem:[%s95 + $0x468] sm:$0xff]
        %380 = vst [vmem:[%s96 + $0x468] sm:$0xff] %v379
        %v381 = vld [vmem:[%s95 + $0x470] sm:$0xff]
        %382 = vst [vmem:[%s96 + $0x470] sm:$0xff] %v381
        %v383 = vld [vmem:[%s95 + $0x478] sm:$0xff]
        %384 = vst [vmem:[%s96 + $0x478] sm:$0xff] %v383
        %v385 = vld [vmem:[%s95 + $0x480] sm:$0xff]
        %386 = vst [vmem:[%s96 + $0x480] sm:$0xff] %v385
        %v387 = vld [vmem:[%s95 + $0x488] sm:$0xff]
        %388 = vst [vmem:[%s96 + $0x488] sm:$0xff] %v387
        %v389 = vld [vmem:[%s95 + $0x490] sm:$0xff]
        %390 = vst [vmem:[%s96 + $0x490] sm:$0xff] %v389
        %v391 = vld [vmem:[%s95 + $0x498] sm:$0xff]
        %392 = vst [vmem:[%s96 + $0x498] sm:$0xff] %v391
        %v393 = vld [vmem:[%s95 + $0x4a0] sm:$0xff]
        %394 = vst [vmem:[%s96 + $0x4a0] sm:$0xff] %v393
        %v395 = vld [vmem:[%s95 + $0x4a8] sm:$0xff]
        %396 = vst [vmem:[%s96 + $0x4a8] sm:$0xff] %v395
        %v397 = vld [vmem:[%s95 + $0x4b0] sm:$0xff]
        %398 = vst [vmem:[%s96 + $0x4b0] sm:$0xff] %v397
        %v399 = vld [vmem:[%s95 + $0x4b8] sm:$0xff]
        %400 = vst [vmem:[%s96 + $0x4b8] sm:$0xff] %v399
        %v401 = vld [vmem:[%s95 + $0x4c0] sm:$0xff]
        %402 = vst [vmem:[%s96 + $0x4c0] sm:$0xff] %v401
        %v403 = vld [vmem:[%s95 + $0x4c8] sm:$0xff]
        %404 = vst [vmem:[%s96 + $0x4c8] sm:$0xff] %v403
        %v405 = vld [vmem:[%s95 + $0x4d0] sm:$0xff]
        %406 = vst [vmem:[%s96 + $0x4d0] sm:$0xff] %v405
        %v407 = vld [vmem:[%s95 + $0x4d8] sm:$0xff]
        %408 = vst [vmem:[%s96 + $0x4d8] sm:$0xff] %v407
      $region101: #{dual_cnn_regressor_forward.1} parent=95 // loop_footer
        %s94 = sadd.s32 1, %s90
      $region102: #{dual_cnn_regressor_forward.1} parent=95 // loop_footer_branch
        %89 = sbr.rel target = $region98
      $region103: #{dual_cnn_regressor_forward.1} parent=95 // loop_exit
        _
    $region96: #{dual_cnn_regressor_forward.1} parent=80 // pred_fallthru
      _
    %p409 = pneg %p85
    // Predicated region
    $region104: #{dual_cnn_regressor_forward.1} parent=80 // pred_check
      _
    $region105: #{dual_cnn_regressor_forward.1} parent=80 // pred_check_branch
      %411 = sbr.rel (%p85) target = $region107
    $region106: #{dual_cnn_regressor_forward.1} parent=80 // pred_region
      %s412 = sand.u32 1248, 7
    $region107: #{dual_cnn_regressor_forward.1} parent=80 // pred_fallthru
      _
  $region81: #{dual_cnn_regressor_forward.1} parent=0 // pred_fallthru
    _
  // Predicated region
  $region82: #{dual_cnn_regressor_forward.1} parent=0 // pred_check
    %p70 = pneg %p66
  $region83: #{dual_cnn_regressor_forward.1} parent=0 // pred_check_branch
    %72 = sbr.rel (%p70) target = $region85
  $region84: #{dual_cnn_regressor_forward.1} parent=0 // pred_region
    %s73 = sshllo.u32 0, 1248
    loop: start=0, step=1, limit=1
    $region86: #{dual_cnn_regressor_forward.1} parent=84 // loop_pre_header
      _
    $region87: #{dual_cnn_regressor_forward.1} parent=84 // loop_header
      %s75 = sphi 0, %s79
      %p76 = scmp.ge.s32.totalorder %s75, 1
      %s80 = sphi %s16, %s16
      %s81 = sphi [#allocation2], [#allocation2]
    $region88: #{dual_cnn_regressor_forward.1} parent=84 // loop_header_branch
      %78 = sbr.rel (%p76) target = $region92
    $region89: #{dual_cnn_regressor_forward.1} parent=84 // loop_body
      %v82 = vld [vmem:[%s80] sm:%s73]
      %83 = vst [vmem:[%s81] sm:%s73] %v82
    $region90: #{dual_cnn_regressor_forward.1} parent=84 // loop_footer
      %s79 = sadd.s32 1, %s75
    $region91: #{dual_cnn_regressor_forward.1} parent=84 // loop_footer_branch
      %74 = sbr.rel target = $region87
    $region92: #{dual_cnn_regressor_forward.1} parent=84 // loop_exit
      _
  $region85: #{dual_cnn_regressor_forward.1} parent=0 // pred_fallthru
    _
  // Predicated region
  $region108: #{dual_cnn_regressor_forward.1} parent=0 // pred_check
    _
  $region109: #{dual_cnn_regressor_forward.1} parent=0 // pred_check_branch
    %415 = sbr.rel (0) target = $region111
  $region110: #{dual_cnn_regressor_forward.1} parent=0 // pred_region
    %416 = vsyncadd [#allocation3], 19968
  $region111: #{dual_cnn_regressor_forward.1} parent=0 // pred_fallthru
    _
  %v417 = vld [vmem:[%s0] sm:$0xff]
  %v418 = vld [vmem:[%s0 + $0x8] sm:$0xff]
  %v419 = vld [vmem:[%s0 + $0x10] sm:$0xff]
  %v420 = vld [vmem:[%s0 + $0x18] sm:$0xff]
  %v421 = vld [vmem:[%s0 + $0x20] sm:$0xff]
  %v422 = vld [vmem:[%s0 + $0x28] sm:$0xff]
  %v423 = vld [vmem:[%s0 + $0x30] sm:$0xff]
  %v424 = vld [vmem:[%s0 + $0x38] sm:$0xff]
  %v425 = vld [vmem:[%s0 + $0x40] sm:$0xff]
  %v426 = vld [vmem:[%s0 + $0x48] sm:$0xff]
  %v427 = vld [vmem:[%s0 + $0x50] sm:$0xff]
  %v428 = vld [vmem:[%s0 + $0x58] sm:$0xff]
  %v429 = vld [vmem:[%s0 + $0x60] sm:$0xff]
  %v430 = vld [vmem:[%s0 + $0x68] sm:$0xff]
  %v431 = vld [vmem:[%s0 + $0x70] sm:$0xff]
  %v432 = vld [vmem:[%s0 + $0x78] sm:$0xff]
  %v433 = vld [vmem:[%s0 + $0x80] sm:$0xff]
  %v434 = vld [vmem:[%s0 + $0x88] sm:$0xff]
  %v435 = vld [vmem:[%s0 + $0x90] sm:$0xff]
  %v436 = vld [vmem:[%s0 + $0x98] sm:$0xff]
  %v437 = vld [vmem:[%s0 + $0xa0] sm:$0xff]
  %v438 = vld [vmem:[%s0 + $0xa8] sm:$0xff]
  %v439 = vld [vmem:[%s0 + $0xb0] sm:$0xff]
  %v440 = vld [vmem:[%s0 + $0xb8] sm:$0xff]
  %v441 = vld [vmem:[%s2] sm:$0xff]
  %v442 = vld [vmem:[%s2 + $0x8] sm:$0xff]
  %v443 = vld [vmem:[%s2 + $0x10] sm:$0xff]
  %v444 = vld [vmem:[%s2 + $0x18] sm:$0xff]
  %v445 = vld [vmem:[%s2 + $0x20] sm:$0xff]
  %v446 = vld [vmem:[%s2 + $0x28] sm:$0xff]
  %v447 = vld [vmem:[%s2 + $0x30] sm:$0xff]
  %v448 = vld [vmem:[%s2 + $0x38] sm:$0xff]
  %v449 = vld [vmem:[%s2 + $0x40] sm:$0xff]
  %v450 = vld [vmem:[%s2 + $0x48] sm:$0x3]
  %vm451 = vcmask 605184
  %v453 = vsel %vm451, %v417, 0
  %v456 = vsel %vm451, %v418, 0
  %v459 = vsel %vm451, %v419, 0
  %v462 = vsel %vm451, %v420, 0
  %v465 = vsel %vm451, %v421, 0
  %v468 = vsel %vm451, %v422, 0
  %v471 = vsel %vm451, %v423, 0
  %v474 = vsel %vm451, %v424, 0
  %v477 = vsel %vm451, %v425, 0
  %v480 = vsel %vm451, %v426, 0
  %v483 = vsel %vm451, %v427, 0
  %v486 = vsel %vm451, %v428, 0
  %v489 = vsel %vm451, %v429, 0
  %v492 = vsel %vm451, %v430, 0
  %v495 = vsel %vm451, %v431, 0
  %v498 = vsel %vm451, %v432, 0
  %v501 = vsel %vm451, %v433, 0
  %v504 = vsel %vm451, %v434, 0
  %v507 = vsel %vm451, %v435, 0
  %v510 = vsel %vm451, %v436, 0
  %v513 = vsel %vm451, %v437, 0
  %v516 = vsel %vm451, %v438, 0
  %v519 = vsel %vm451, %v439, 0
  %v522 = vsel %vm451, %v440, 0
  %vm524 = vcmask 1041408
  %v526 = vsel %vm524, %v450, 0
  %528 = vmatprep.subr.mxu0 0.0
  %529 = vmatpush1.msra.mxu0 %v441
  %530 = vmatprep.subr.mxu0 0.0
  %531 = vmatpush1.msra.mxu0 %v442
  %532 = vmatprep.subr.mxu0 0.0
  %533 = vmatpush1.msra.mxu0 %v443
  %534 = vmatprep.subr.mxu0 0.0
  %535 = vmatpush1.msra.mxu0 %v444
  %536 = vmatprep.subr.mxu0 0.0
  %537 = vmatpush1.msra.mxu0 %v445
  %538 = vmatprep.subr.mxu0 0.0
  %539 = vmatpush1.msra.mxu0 %v446
  %540 = vmatprep.subr.mxu0 0.0
  %541 = vmatpush1.msra.mxu0 %v447
  %542 = vmatprep.subr.mxu0 0.0
  %543 = vmatpush1.msra.mxu0 %v448
  %544 = vmatprep.subr.mxu0 0.0
  %545 = vmatpush1.msra.mxu0 %v449
  %546 = vmatprep.subr.mxu0 0.0
  %547 = vmatpush1.msra.mxu0 %v526
  %548 = vmatprep.subr.mxu0 0.0
  %549 = vmatpush1.msra.mxu0 0.0
  %550 = vmatprep.subr.mxu0 0.0
  %551 = vmatpush1.msra.mxu0 0.0
  %552 = vmatprep.subr.mxu0 0.0
  %553 = vmatpush1.msra.mxu0 0.0
  %554 = vmatprep.subr.mxu0 0.0
  %555 = vmatpush1.msra.mxu0 0.0
  %556 = vmatprep.subr.mxu0 0.0
  %557 = vmatpush1.msra.mxu0 0.0
  %558 = vmatprep.subr.mxu0 0.0
  %559 = vmatpush1.msra.mxu0 0.0
  %560 = vmatprep.subr.mxu0 0.0
  %561 = vmatpush1.msra.mxu0 0.0
  %562 = vmatprep.subr.mxu0 0.0
  %563 = vmatpush1.msra.mxu0 0.0
  %564 = vmatprep.subr.mxu0 0.0
  %565 = vmatpush1.msra.mxu0 0.0
  %566 = vmatprep.subr.mxu0 0.0
  %567 = vmatpush1.msra.mxu0 0.0
  %568 = vmatprep.subr.mxu0 0.0
  %569 = vmatpush1.msra.mxu0 0.0
  %570 = vmatprep.subr.mxu0 0.0
  %571 = vmatpush1.msra.mxu0 0.0
  %572 = vmatprep.subr.mxu0 0.0
  %573 = vmatpush1.msra.mxu0 0.0
  %574 = vmatprep.subr.mxu0 0.0
  %575 = vmatpush1.msra.mxu0 0.0
  %576 = vmatprep.subr.mxu0 0.0
  %577 = vmatpush1.msra.mxu0 0.0
  %578 = vmatprep.subr.mxu0 0.0
  %579 = vmatpush1.msra.mxu0 0.0
  %580 = vmatprep.subr.mxu0 0.0
  %581 = vmatpush1.msra.mxu0 0.0
  %582 = vmatprep.subr.mxu0 0.0
  %583 = vmatpush1.msra.mxu0 0.0
  %584 = vmatprep.subr.mxu0 0.0
  %585 = vmatpush1.msra.mxu0 0.0
  %586 = vmatprep.subr.mxu0 0.0
  %587 = vmatpush1.msra.mxu0 0.0
  %588 = vmatprep.subr.mxu0 0.0
  %589 = vmatpush1.msra.mxu0 0.0
  %590 = vmatprep.subr.mxu0 0.0
  %591 = vmatpush1.msra.mxu0 0.0
  %592 = vmatprep.mubr.f32.mxu0 0.0
  %593 = vmatmul.mubr.f32.gmra.mrb[0].mxu0 %v453
  %v594 = vpop.f32.mrb[0].mxu0
  %v595 = vadd.f32 0.0, %v594
  %v596 = vpop.f32.mrb[0].mxu0
  %597 = vmatprep.mubr.f32.mxu0 0.0
  %598 = vmatmul.mubr.f32.gmra.mrb[0].mxu0 %v456
  %v599 = vpop.f32.mrb[0].mxu0
  %v600 = vadd.f32 0.0, %v599
  %v601 = vpop.f32.mrb[0].mxu0
  %602 = vmatprep.mubr.f32.mxu0 0.0
  %603 = vmatmul.mubr.f32.gmra.mrb[0].mxu0 %v459
  %v604 = vpop.f32.mrb[0].mxu0
  %v605 = vadd.f32 0.0, %v604
  %v606 = vpop.f32.mrb[0].mxu0
  %607 = vmatprep.mubr.f32.mxu0 0.0
  %608 = vmatmul.mubr.f32.gmra.mrb[0].mxu0 %v462
  %v609 = vpop.f32.mrb[0].mxu0
  %v610 = vadd.f32 0.0, %v609
  %v611 = vpop.f32.mrb[0].mxu0
  %612 = vmatprep.mubr.f32.mxu0 0.0
  %613 = vmatmul.mubr.f32.gmra.mrb[0].mxu0 %v465
  %v614 = vpop.f32.mrb[0].mxu0
  %v615 = vadd.f32 0.0, %v614
  %v616 = vpop.f32.mrb[0].mxu0
  %617 = vmatprep.mubr.f32.mxu0 0.0
  %618 = vmatmul.mubr.f32.gmra.mrb[0].mxu0 %v468
  %v619 = vpop.f32.mrb[0].mxu0
  %v620 = vadd.f32 0.0, %v619
  %v621 = vpop.f32.mrb[0].mxu0
  %622 = vmatprep.mubr.f32.mxu0 0.0
  %623 = vmatmul.mubr.f32.gmra.mrb[0].mxu0 %v471
  %v624 = vpop.f32.mrb[0].mxu0
  %v625 = vadd.f32 0.0, %v624
  %v626 = vpop.f32.mrb[0].mxu0
  %627 = vmatprep.mubr.f32.mxu0 0.0
  %628 = vmatmul.mubr.f32.gmra.mrb[0].mxu0 %v474
  %v629 = vpop.f32.mrb[0].mxu0
  %v630 = vadd.f32 0.0, %v629
  %v631 = vpop.f32.mrb[0].mxu0
  %632 = vmatprep.mubr.f32.mxu0 0.0
  %633 = vmatmul.mubr.f32.gmra.mrb[0].mxu0 %v477
  %v634 = vpop.f32.mrb[0].mxu0
  %v635 = vadd.f32 0.0, %v634
  %v636 = vpop.f32.mrb[0].mxu0
  %637 = vmatprep.mubr.f32.mxu0 0.0
  %638 = vmatmul.mubr.f32.gmra.mrb[0].mxu0 %v480
  %v639 = vpop.f32.mrb[0].mxu0
  %v640 = vadd.f32 0.0, %v639
  %v641 = vpop.f32.mrb[0].mxu0
  %642 = vmatprep.mubr.f32.mxu0 0.0
  %643 = vmatmul.mubr.f32.gmra.mrb[0].mxu0 %v483
  %v644 = vpop.f32.mrb[0].mxu0
  %v645 = vadd.f32 0.0, %v644
  %v646 = vpop.f32.mrb[0].mxu0
  %647 = vmatprep.mubr.f32.mxu0 0.0
  %648 = vmatmul.mubr.f32.gmra.mrb[0].mxu0 %v486
  %v649 = vpop.f32.mrb[0].mxu0
  %v650 = vadd.f32 0.0, %v649
  %v651 = vpop.f32.mrb[0].mxu0
  %652 = vmatprep.mubr.f32.mxu0 0.0
  %653 = vmatmul.mubr.f32.gmra.mrb[0].mxu0 %v489
  %v654 = vpop.f32.mrb[0].mxu0
  %v655 = vadd.f32 0.0, %v654
  %v656 = vpop.f32.mrb[0].mxu0
  %657 = vmatprep.mubr.f32.mxu0 0.0
  %658 = vmatmul.mubr.f32.gmra.mrb[0].mxu0 %v492
  %v659 = vpop.f32.mrb[0].mxu0
  %v660 = vadd.f32 0.0, %v659
  %v661 = vpop.f32.mrb[0].mxu0
  %662 = vmatprep.mubr.f32.mxu0 0.0
  %663 = vmatmul.mubr.f32.gmra.mrb[0].mxu0 %v495
  %v664 = vpop.f32.mrb[0].mxu0
  %v665 = vadd.f32 0.0, %v664
  %v666 = vpop.f32.mrb[0].mxu0
  %667 = vmatprep.mubr.f32.mxu0 0.0
  %668 = vmatmul.mubr.f32.gmra.mrb[0].mxu0 %v498
  %v669 = vpop.f32.mrb[0].mxu0
  %v670 = vadd.f32 0.0, %v669
  %v671 = vpop.f32.mrb[0].mxu0
  %672 = vmatprep.mubr.f32.mxu0 0.0
  %673 = vmatmul.mubr.f32.gmra.mrb[0].mxu0 %v501
  %v674 = vpop.f32.mrb[0].mxu0
  %v675 = vadd.f32 0.0, %v674
  %v676 = vpop.f32.mrb[0].mxu0
  %677 = vmatprep.mubr.f32.mxu0 0.0
  %678 = vmatmul.mubr.f32.gmra.mrb[0].mxu0 %v504
  %v679 = vpop.f32.mrb[0].mxu0
  %v680 = vadd.f32 0.0, %v679
  %v681 = vpop.f32.mrb[0].mxu0
  %682 = vmatprep.mubr.f32.mxu0 0.0
  %683 = vmatmul.mubr.f32.gmra.mrb[0].mxu0 %v507
  %v684 = vpop.f32.mrb[0].mxu0
  %v685 = vadd.f32 0.0, %v684
  %v686 = vpop.f32.mrb[0].mxu0
  %687 = vmatprep.mubr.f32.mxu0 0.0
  %688 = vmatmul.mubr.f32.gmra.mrb[0].mxu0 %v510
  %v689 = vpop.f32.mrb[0].mxu0
  %v690 = vadd.f32 0.0, %v689
  %v691 = vpop.f32.mrb[0].mxu0
  %692 = vmatprep.mubr.f32.mxu0 0.0
  %693 = vmatmul.mubr.f32.gmra.mrb[0].mxu0 %v513
  %v694 = vpop.f32.mrb[0].mxu0
  %v695 = vadd.f32 0.0, %v694
  %v696 = vpop.f32.mrb[0].mxu0
  %697 = vmatprep.mubr.f32.mxu0 0.0
  %698 = vmatmul.mubr.f32.gmra.mrb[0].mxu0 %v516
  %v699 = vpop.f32.mrb[0].mxu0
  %v700 = vadd.f32 0.0, %v699
  %v701 = vpop.f32.mrb[0].mxu0
  %702 = vmatprep.mubr.f32.mxu0 0.0
  %703 = vmatmul.mubr.f32.gmra.mrb[0].mxu0 %v519
  %v704 = vpop.f32.mrb[0].mxu0
  %v705 = vadd.f32 0.0, %v704
  %v706 = vpop.f32.mrb[0].mxu0
  %707 = vmatprep.mubr.f32.mxu0 0.0
  %708 = vmatmul.mubr.f32.gmra.mrb[0].mxu0 %v522
  %v709 = vpop.f32.mrb[0].mxu0
  %v710 = vadd.f32 0.0, %v709
  %v711 = vpop.f32.mrb[0].mxu0
  %712 = vdwg.mxu0
  %v713 = vmax.f32 %v595, 0.0
  %v714 = vmax.f32 %v600, 0.0
  %v715 = vmax.f32 %v605, 0.0
  %v716 = vmax.f32 %v610, 0.0
  %v717 = vmax.f32 %v615, 0.0
  %v718 = vmax.f32 %v620, 0.0
  %v719 = vmax.f32 %v625, 0.0
  %v720 = vmax.f32 %v630, 0.0
  %v721 = vmax.f32 %v635, 0.0
  %v722 = vmax.f32 %v640, 0.0
  %v723 = vmax.f32 %v645, 0.0
  %v724 = vmax.f32 %v650, 0.0
  %v725 = vmax.f32 %v655, 0.0
  %v726 = vmax.f32 %v660, 0.0
  %v727 = vmax.f32 %v665, 0.0
  %v728 = vmax.f32 %v670, 0.0
  %v729 = vmax.f32 %v675, 0.0
  %v730 = vmax.f32 %v680, 0.0
  %v731 = vmax.f32 %v685, 0.0
  %v732 = vmax.f32 %v690, 0.0
  %v733 = vmax.f32 %v695, 0.0
  %v734 = vmax.f32 %v700, 0.0
  %v735 = vmax.f32 %v705, 0.0
  %v736 = vmax.f32 %v710, 0.0
  %v737 = vld [vmem:[%s1] sm:$0xff]
  %v738 = vld [vmem:[%s1 + $0x8] sm:$0xff]
  %v739 = vld [vmem:[%s1 + $0x10] sm:$0xff]
  %v740 = vld [vmem:[%s1 + $0x18] sm:$0xff]
  %v741 = vld [vmem:[%s1 + $0x20] sm:$0xff]
  %v742 = vld [vmem:[%s1 + $0x28] sm:$0xff]
  %v743 = vld [vmem:[%s1 + $0x30] sm:$0xff]
  %v744 = vld [vmem:[%s1 + $0x38] sm:$0xff]
  %v745 = vld [vmem:[%s1 + $0x40] sm:$0xff]
  %v746 = vld [vmem:[%s1 + $0x48] sm:$0xff]
  %v747 = vld [vmem:[%s1 + $0x50] sm:$0xff]
  %v748 = vld [vmem:[%s1 + $0x58] sm:$0xff]
  %v749 = vld [vmem:[%s1 + $0x60] sm:$0xff]
  %v750 = vld [vmem:[%s1 + $0x68] sm:$0xff]
  %v751 = vld [vmem:[%s1 + $0x70] sm:$0xff]
  %v752 = vld [vmem:[%s1 + $0x78] sm:$0xff]
  %v753 = vld [vmem:[%s1 + $0x80] sm:$0xff]
  %v754 = vld [vmem:[%s1 + $0x88] sm:$0xff]
  %v755 = vld [vmem:[%s1 + $0x90] sm:$0xff]
  %v756 = vld [vmem:[%s1 + $0x98] sm:$0xff]
  %v757 = vld [vmem:[%s1 + $0xa0] sm:$0xff]
  %v758 = vld [vmem:[%s1 + $0xa8] sm:$0xff]
  %v759 = vld [vmem:[%s1 + $0xb0] sm:$0xff]
  %v760 = vld [vmem:[%s1 + $0xb8] sm:$0xff]
  %v761 = vadd.f32 %v713, %v737
  %v762 = vadd.f32 %v714, %v738
  %v763 = vadd.f32 %v715, %v739
  %v764 = vadd.f32 %v716, %v740
  %v765 = vadd.f32 %v717, %v741
  %v766 = vadd.f32 %v718, %v742
  %v767 = vadd.f32 %v719, %v743
  %v768 = vadd.f32 %v720, %v744
  %v769 = vadd.f32 %v721, %v745
  %v770 = vadd.f32 %v722, %v746
  %v771 = vadd.f32 %v723, %v747
  %v772 = vadd.f32 %v724, %v748
  %v773 = vadd.f32 %v725, %v749
  %v774 = vadd.f32 %v726, %v750
  %v775 = vadd.f32 %v727, %v751
  %v776 = vadd.f32 %v728, %v752
  %v777 = vadd.f32 %v729, %v753
  %v778 = vadd.f32 %v730, %v754
  %v779 = vadd.f32 %v731, %v755
  %v780 = vadd.f32 %v732, %v756
  %v781 = vadd.f32 %v733, %v757
  %v782 = vadd.f32 %v734, %v758
  %v783 = vadd.f32 %v735, %v759
  %v784 = vadd.f32 %v736, %v760
  %v785 = vld [vmem:[%s3] sm:$0xff]
  %v786 = vld [vmem:[%s3 + $0x8] sm:$0x1f]
  %v787 = vld [vmem:[%s6] sm:$0xff]
  %v788 = vld [vmem:[%s6 + $0x8] sm:$0x1f]
  %v789 = vld [vmem:[%s7] sm:$0x1]
  %v790 = vld [vmem:[%s4] sm:$0xff]
  %v791 = vld [vmem:[%s4 + $0x8] sm:$0x1f]
  %v792 = vld [vmem:[%s5] sm:$0x1]
  %v794 = vlaneseq
  %v795 = vshrl.u32 %v794, 7
  %v796 = vsub.s32 0, %v795
  %v797 = vrot.slane %v792, %v796
  %vm799 = vcmask 105472
  %v801 = vsel %vm799, %v761, 0
  %v804 = vsel %vm799, %v762, 0
  %v807 = vsel %vm799, %v763, 0
  %v810 = vsel %vm799, %v764, 0
  %v813 = vsel %vm799, %v765, 0
  %v816 = vsel %vm799, %v766, 0
  %v819 = vsel %vm799, %v767, 0
  %v822 = vsel %vm799, %v768, 0
  %v825 = vsel %vm799, %v769, 0
  %v828 = vsel %vm799, %v770, 0
  %v831 = vsel %vm799, %v771, 0
  %v834 = vsel %vm799, %v772, 0
  %vm836 = vcmask 1044480
  %v838 = vsel %vm836, %v791, 0
  %840 = vmatprep.subr.mxu0 0.0
  %841 = vmatpush1.msra.mxu0 %v790
  %842 = vmatprep.subr.mxu0 0.0
  %843 = vmatpush1.msra.mxu0 %v838
  %844 = vmatprep.subr.mxu0 0.0
  %845 = vmatpush1.msra.mxu0 0.0
  %846 = vmatprep.subr.mxu0 0.0
  %847 = vmatpush1.msra.mxu0 0.0
  %848 = vmatprep.subr.mxu0 0.0
  %849 = vmatpush1.msra.mxu0 0.0
  %850 = vmatprep.subr.mxu0 0.0
  %851 = vmatpush1.msra.mxu0 0.0
  %852 = vmatprep.subr.mxu0 0.0
  %853 = vmatpush1.msra.mxu0 0.0
  %854 = vmatprep.subr.mxu0 0.0
  %855 = vmatpush1.msra.mxu0 0.0
  %856 = vmatprep.subr.mxu0 0.0
  %857 = vmatpush1.msra.mxu0 0.0
  %858 = vmatprep.subr.mxu0 0.0
  %859 = vmatpush1.msra.mxu0 0.0
  %860 = vmatprep.subr.mxu0 0.0
  %861 = vmatpush1.msra.mxu0 0.0
  %862 = vmatprep.subr.mxu0 0.0
  %863 = vmatpush1.msra.mxu0 0.0
  %864 = vmatprep.subr.mxu0 0.0
  %865 = vmatpush1.msra.mxu0 0.0
  %866 = vmatprep.subr.mxu0 0.0
  %867 = vmatpush1.msra.mxu0 0.0
  %868 = vmatprep.subr.mxu0 0.0
  %869 = vmatpush1.msra.mxu0 0.0
  %870 = vmatprep.subr.mxu0 0.0
  %871 = vmatpush1.msra.mxu0 0.0
  %872 = vmatprep.subr.mxu0 0.0
  %873 = vmatpush1.msra.mxu0 0.0
  %874 = vmatprep.subr.mxu0 0.0
  %875 = vmatpush1.msra.mxu0 0.0
  %876 = vmatprep.subr.mxu0 0.0
  %877 = vmatpush1.msra.mxu0 0.0
  %878 = vmatprep.subr.mxu0 0.0
  %879 = vmatpush1.msra.mxu0 0.0
  %880 = vmatprep.subr.mxu0 0.0
  %881 = vmatpush1.msra.mxu0 0.0
  %882 = vmatprep.subr.mxu0 0.0
  %883 = vmatpush1.msra.mxu0 0.0
  %884 = vmatprep.subr.mxu0 0.0
  %885 = vmatpush1.msra.mxu0 0.0
  %886 = vmatprep.subr.mxu0 0.0
  %887 = vmatpush1.msra.mxu0 0.0
  %888 = vmatprep.subr.mxu0 0.0
  %889 = vmatpush1.msra.mxu0 0.0
  %890 = vmatprep.subr.mxu0 0.0
  %891 = vmatpush1.msra.mxu0 0.0
  %892 = vmatprep.subr.mxu0 0.0
  %893 = vmatpush1.msra.mxu0 0.0
  %894 = vmatprep.subr.mxu0 0.0
  %895 = vmatpush1.msra.mxu0 0.0
  %896 = vmatprep.subr.mxu0 0.0
  %897 = vmatpush1.msra.mxu0 0.0
  %898 = vmatprep.subr.mxu0 0.0
  %899 = vmatpush1.msra.mxu0 0.0
  %900 = vmatprep.subr.mxu0 0.0
  %901 = vmatpush1.msra.mxu0 0.0
  %902 = vmatprep.subr.mxu0 0.0
  %903 = vmatpush1.msra.mxu0 0.0
  %904 = vmatprep.mubr.f32.mxu0 0.0
  %905 = vmatmul.mubr.f32.gmra.mrb[0].mxu0 %v801
  %v906 = vpop.f32.mrb[0].mxu0
  %v907 = vadd.f32 %v797, %v906
  %v908 = vpop.f32.mrb[0].mxu0
  %909 = vmatprep.mubr.f32.mxu0 0.0
  %910 = vmatmul.mubr.f32.gmra.mrb[0].mxu0 %v804
  %v911 = vpop.f32.mrb[0].mxu0
  %v912 = vadd.f32 %v797, %v911
  %v913 = vpop.f32.mrb[0].mxu0
  %914 = vmatprep.mubr.f32.mxu0 0.0
  %915 = vmatmul.mubr.f32.gmra.mrb[0].mxu0 %v807
  %v916 = vpop.f32.mrb[0].mxu0
  %v917 = vadd.f32 %v797, %v916
  %v918 = vpop.f32.mrb[0].mxu0
  %919 = vmatprep.mubr.f32.mxu0 0.0
  %920 = vmatmul.mubr.f32.gmra.mrb[0].mxu0 %v810
  %v921 = vpop.f32.mrb[0].mxu0
  %v922 = vadd.f32 %v797, %v921
  %v923 = vpop.f32.mrb[0].mxu0
  %924 = vmatprep.mubr.f32.mxu0 0.0
  %925 = vmatmul.mubr.f32.gmra.mrb[0].mxu0 %v813
  %v926 = vpop.f32.mrb[0].mxu0
  %v927 = vadd.f32 %v797, %v926
  %v928 = vpop.f32.mrb[0].mxu0
  %929 = vmatprep.mubr.f32.mxu0 0.0
  %930 = vmatmul.mubr.f32.gmra.mrb[0].mxu0 %v816
  %v931 = vpop.f32.mrb[0].mxu0
  %v932 = vadd.f32 %v797, %v931
  %v933 = vpop.f32.mrb[0].mxu0
  %934 = vmatprep.mubr.f32.mxu0 0.0
  %935 = vmatmul.mubr.f32.gmra.mrb[0].mxu0 %v819
  %v936 = vpop.f32.mrb[0].mxu0
  %v937 = vadd.f32 %v797, %v936
  %v938 = vpop.f32.mrb[0].mxu0
  %939 = vmatprep.mubr.f32.mxu0 0.0
  %940 = vmatmul.mubr.f32.gmra.mrb[0].mxu0 %v822
  %v941 = vpop.f32.mrb[0].mxu0
  %v942 = vadd.f32 %v797, %v941
  %v943 = vpop.f32.mrb[0].mxu0
  %944 = vmatprep.mubr.f32.mxu0 0.0
  %945 = vmatmul.mubr.f32.gmra.mrb[0].mxu0 %v825
  %v946 = vpop.f32.mrb[0].mxu0
  %v947 = vadd.f32 %v797, %v946
  %v948 = vpop.f32.mrb[0].mxu0
  %949 = vmatprep.mubr.f32.mxu0 0.0
  %950 = vmatmul.mubr.f32.gmra.mrb[0].mxu0 %v828
  %v951 = vpop.f32.mrb[0].mxu0
  %v952 = vadd.f32 %v797, %v951
  %v953 = vpop.f32.mrb[0].mxu0
  %954 = vmatprep.mubr.f32.mxu0 0.0
  %955 = vmatmul.mubr.f32.gmra.mrb[0].mxu0 %v831
  %v956 = vpop.f32.mrb[0].mxu0
  %v957 = vadd.f32 %v797, %v956
  %v958 = vpop.f32.mrb[0].mxu0
  %959 = vmatprep.mubr.f32.mxu0 0.0
  %960 = vmatmul.mubr.f32.gmra.mrb[0].mxu0 %v834
  %v961 = vpop.f32.mrb[0].mxu0
  %v962 = vadd.f32 %v797, %v961
  %v963 = vpop.f32.mrb[0].mxu0
  %964 = vdwg.mxu0
  %s965 = scalar_lea.vmem %s4, 16
  %v966 = vld [vmem:[%s965] sm:$0xff]
  %v967 = vld [vmem:[%s965 + $0x8] sm:$0x1f]
  %s968 = scalar_lea.vmem %s5, 1
  %v969 = vld [vmem:[%s968] sm:$0x1]
  %v971 = vlaneseq
  %v972 = vshrl.u32 %v971, 7
  %v973 = vsub.s32 0, %v972
  %v974 = vrot.slane %v969, %v973
  %v977 = vsel %vm836, %v967, 0
  %979 = vmatprep.subr.mxu0 0.0
  %980 = vmatpush1.msra.mxu0 %v966
  %981 = vmatprep.subr.mxu0 0.0
  %982 = vmatpush1.msra.mxu0 %v977
  %983 = vmatprep.subr.mxu0 0.0
  %984 = vmatpush1.msra.mxu0 0.0
  %985 = vmatprep.subr.mxu0 0.0
  %986 = vmatpush1.msra.mxu0 0.0
  %987 = vmatprep.subr.mxu0 0.0
  %988 = vmatpush1.msra.mxu0 0.0
  %989 = vmatprep.subr.mxu0 0.0
  %990 = vmatpush1.msra.mxu0 0.0
  %991 = vmatprep.subr.mxu0 0.0
  %992 = vmatpush1.msra.mxu0 0.0
  %993 = vmatprep.subr.mxu0 0.0
  %994 = vmatpush1.msra.mxu0 0.0
  %995 = vmatprep.subr.mxu0 0.0
  %996 = vmatpush1.msra.mxu0 0.0
  %997 = vmatprep.subr.mxu0 0.0
  %998 = vmatpush1.msra.mxu0 0.0
  %999 = vmatprep.subr.mxu0 0.0
  %1000 = vmatpush1.msra.mxu0 0.0
  %1001 = vmatprep.subr.mxu0 0.0
  %1002 = vmatpush1.msra.mxu0 0.0
  %1003 = vmatprep.subr.mxu0 0.0
  %1004 = vmatpush1.msra.mxu0 0.0
  %1005 = vmatprep.subr.mxu0 0.0
  %1006 = vmatpush1.msra.mxu0 0.0
  %1007 = vmatprep.subr.mxu0 0.0
  %1008 = vmatpush1.msra.mxu0 0.0
  %1009 = vmatprep.subr.mxu0 0.0
  %1010 = vmatpush1.msra.mxu0 0.0
  %1011 = vmatprep.subr.mxu0 0.0
  %1012 = vmatpush1.msra.mxu0 0.0
  %1013 = vmatprep.subr.mxu0 0.0
  %1014 = vmatpush1.msra.mxu0 0.0
  %1015 = vmatprep.subr.mxu0 0.0
  %1016 = vmatpush1.msra.mxu0 0.0
  %1017 = vmatprep.subr.mxu0 0.0
  %1018 = vmatpush1.msra.mxu0 0.0
  %1019 = vmatprep.subr.mxu0 0.0
  %1020 = vmatpush1.msra.mxu0 0.0
  %1021 = vmatprep.subr.mxu0 0.0
  %1022 = vmatpush1.msra.mxu0 0.0
  %1023 = vmatprep.subr.mxu0 0.0
  %1024 = vmatpush1.msra.mxu0 0.0
  %1025 = vmatprep.subr.mxu0 0.0
  %1026 = vmatpush1.msra.mxu0 0.0
  %1027 = vmatprep.subr.mxu0 0.0
  %1028 = vmatpush1.msra.mxu0 0.0
  %1029 = vmatprep.subr.mxu0 0.0
  %1030 = vmatpush1.msra.mxu0 0.0
  %1031 = vmatprep.subr.mxu0 0.0
  %1032 = vmatpush1.msra.mxu0 0.0
  %1033 = vmatprep.subr.mxu0 0.0
  %1034 = vmatpush1.msra.mxu0 0.0
  %1035 = vmatprep.subr.mxu0 0.0
  %1036 = vmatpush1.msra.mxu0 0.0
  %1037 = vmatprep.subr.mxu0 0.0
  %1038 = vmatpush1.msra.mxu0 0.0
  %1039 = vmatprep.subr.mxu0 0.0
  %1040 = vmatpush1.msra.mxu0 0.0
  %1041 = vmatprep.subr.mxu0 0.0
  %1042 = vmatpush1.msra.mxu0 0.0
  %1043 = vmatprep.mubr.f32.mxu0 0.0
  %1044 = vmatmul.mubr.f32.gmra.mrb[0].mxu0 %v801
  %v1045 = vpop.f32.mrb[0].mxu0
  %v1046 = vadd.f32 %v974, %v1045
  %v1047 = vpop.f32.mrb[0].mxu0
  %1048 = vmatprep.mubr.f32.mxu0 0.0
  %1049 = vmatmul.mubr.f32.gmra.mrb[0].mxu0 %v804
  %v1050 = vpop.f32.mrb[0].mxu0
  %v1051 = vadd.f32 %v974, %v1050
  %v1052 = vpop.f32.mrb[0].mxu0
  %1053 = vmatprep.mubr.f32.mxu0 0.0
  %1054 = vmatmul.mubr.f32.gmra.mrb[0].mxu0 %v807
  %v1055 = vpop.f32.mrb[0].mxu0
  %v1056 = vadd.f32 %v974, %v1055
  %v1057 = vpop.f32.mrb[0].mxu0
  %1058 = vmatprep.mubr.f32.mxu0 0.0
  %1059 = vmatmul.mubr.f32.gmra.mrb[0].mxu0 %v810
  %v1060 = vpop.f32.mrb[0].mxu0
  %v1061 = vadd.f32 %v974, %v1060
  %v1062 = vpop.f32.mrb[0].mxu0
  %1063 = vmatprep.mubr.f32.mxu0 0.0
  %1064 = vmatmul.mubr.f32.gmra.mrb[0].mxu0 %v813
  %v1065 = vpop.f32.mrb[0].mxu0
  %v1066 = vadd.f32 %v974, %v1065
  %v1067 = vpop.f32.mrb[0].mxu0
  %1068 = vmatprep.mubr.f32.mxu0 0.0
  %1069 = vmatmul.mubr.f32.gmra.mrb[0].mxu0 %v816
  %v1070 = vpop.f32.mrb[0].mxu0
  %v1071 = vadd.f32 %v974, %v1070
  %v1072 = vpop.f32.mrb[0].mxu0
  %1073 = vmatprep.mubr.f32.mxu0 0.0
  %1074 = vmatmul.mubr.f32.gmra.mrb[0].mxu0 %v819
  %v1075 = vpop.f32.mrb[0].mxu0
  %v1076 = vadd.f32 %v974, %v1075
  %v1077 = vpop.f32.mrb[0].mxu0
  %1078 = vmatprep.mubr.f32.mxu0 0.0
  %1079 = vmatmul.mubr.f32.gmra.mrb[0].mxu0 %v822
  %v1080 = vpop.f32.mrb[0].mxu0
  %v1081 = vadd.f32 %v974, %v1080
  %v1082 = vpop.f32.mrb[0].mxu0
  %1083 = vmatprep.mubr.f32.mxu0 0.0
  %1084 = vmatmul.mubr.f32.gmra.mrb[0].mxu0 %v825
  %v1085 = vpop.f32.mrb[0].mxu0
  %v1086 = vadd.f32 %v974, %v1085
  %v1087 = vpop.f32.mrb[0].mxu0
  %1088 = vmatprep.mubr.f32.mxu0 0.0
  %1089 = vmatmul.mubr.f32.gmra.mrb[0].mxu0 %v828
  %v1090 = vpop.f32.mrb[0].mxu0
  %v1091 = vadd.f32 %v974, %v1090
  %v1092 = vpop.f32.mrb[0].mxu0
  %1093 = vmatprep.mubr.f32.mxu0 0.0
  %1094 = vmatmul.mubr.f32.gmra.mrb[0].mxu0 %v831
  %v1095 = vpop.f32.mrb[0].mxu0
  %v1096 = vadd.f32 %v974, %v1095
  %v1097 = vpop.f32.mrb[0].mxu0
  %1098 = vmatprep.mubr.f32.mxu0 0.0
  %1099 = vmatmul.mubr.f32.gmra.mrb[0].mxu0 %v834
  %v1100 = vpop.f32.mrb[0].mxu0
  %v1101 = vadd.f32 %v974, %v1100
  %v1102 = vpop.f32.mrb[0].mxu0
  %1103 = vdwg.mxu0
  %s1104 = scalar_lea.vmem %s4, 32
  %v1105 = vld [vmem:[%s1104] sm:$0xff]
  %v1106 = vld [vmem:[%s1104 + $0x8] sm:$0x1f]
  %s1107 = scalar_lea.vmem %s5, 2
  %v1108 = vld [vmem:[%s1107] sm:$0x1]
  %v1110 = vlaneseq
  %v1111 = vshrl.u32 %v1110, 7
  %v1112 = vsub.s32 0, %v1111
  %v1113 = vrot.slane %v1108, %v1112
  %v1116 = vsel %vm836, %v1106, 0
  %1118 = vmatprep.subr.mxu0 0.0
  %1119 = vmatpush1.msra.mxu0 %v1105
  %1120 = vmatprep.subr.mxu0 0.0
  %1121 = vmatpush1.msra.mxu0 %v1116
  %1122 = vmatprep.subr.mxu0 0.0
  %1123 = vmatpush1.msra.mxu0 0.0
  %1124 = vmatprep.subr.mxu0 0.0
  %1125 = vmatpush1.msra.mxu0 0.0
  %1126 = vmatprep.subr.mxu0 0.0
  %1127 = vmatpush1.msra.mxu0 0.0
  %1128 = vmatprep.subr.mxu0 0.0
  %1129 = vmatpush1.msra.mxu0 0.0
  %1130 = vmatprep.subr.mxu0 0.0
  %1131 = vmatpush1.msra.mxu0 0.0
  %1132 = vmatprep.subr.mxu0 0.0
  %1133 = vmatpush1.msra.mxu0 0.0
  %1134 = vmatprep.subr.mxu0 0.0
  %1135 = vmatpush1.msra.mxu0 0.0
  %1136 = vmatprep.subr.mxu0 0.0
  %1137 = vmatpush1.msra.mxu0 0.0
  %1138 = vmatprep.subr.mxu0 0.0
  %1139 = vmatpush1.msra.mxu0 0.0
  %1140 = vmatprep.subr.mxu0 0.0
  %1141 = vmatpush1.msra.mxu0 0.0
  %1142 = vmatprep.subr.mxu0 0.0
  %1143 = vmatpush1.msra.mxu0 0.0
  %1144 = vmatprep.subr.mxu0 0.0
  %1145 = vmatpush1.msra.mxu0 0.0
  %1146 = vmatprep.subr.mxu0 0.0
  %1147 = vmatpush1.msra.mxu0 0.0
  %1148 = vmatprep.subr.mxu0 0.0
  %1149 = vmatpush1.msra.mxu0 0.0
  %1150 = vmatprep.subr.mxu0 0.0
  %1151 = vmatpush1.msra.mxu0 0.0
  %1152 = vmatprep.subr.mxu0 0.0
  %1153 = vmatpush1.msra.mxu0 0.0
  %1154 = vmatprep.subr.mxu0 0.0
  %1155 = vmatpush1.msra.mxu0 0.0
  %1156 = vmatprep.subr.mxu0 0.0
  %1157 = vmatpush1.msra.mxu0 0.0
  %1158 = vmatprep.subr.mxu0 0.0
  %1159 = vmatpush1.msra.mxu0 0.0
  %1160 = vmatprep.subr.mxu0 0.0
  %1161 = vmatpush1.msra.mxu0 0.0
  %1162 = vmatprep.subr.mxu0 0.0
  %1163 = vmatpush1.msra.mxu0 0.0
  %1164 = vmatprep.subr.mxu0 0.0
  %1165 = vmatpush1.msra.mxu0 0.0
  %1166 = vmatprep.subr.mxu0 0.0
  %1167 = vmatpush1.msra.mxu0 0.0
  %1168 = vmatprep.subr.mxu0 0.0
  %1169 = vmatpush1.msra.mxu0 0.0
  %1170 = vmatprep.subr.mxu0 0.0
  %1171 = vmatpush1.msra.mxu0 0.0
  %1172 = vmatprep.subr.mxu0 0.0
  %1173 = vmatpush1.msra.mxu0 0.0
  %1174 = vmatprep.subr.mxu0 0.0
  %1175 = vmatpush1.msra.mxu0 0.0
  %1176 = vmatprep.subr.mxu0 0.0
  %1177 = vmatpush1.msra.mxu0 0.0
  %1178 = vmatprep.subr.mxu0 0.0
  %1179 = vmatpush1.msra.mxu0 0.0
  %1180 = vmatprep.subr.mxu0 0.0
  %1181 = vmatpush1.msra.mxu0 0.0
  %1182 = vmatprep.mubr.f32.mxu0 0.0
  %1183 = vmatmul.mubr.f32.gmra.mrb[0].mxu0 %v801
  %v1184 = vpop.f32.mrb[0].mxu0
  %v1185 = vadd.f32 %v1113, %v1184
  %v1186 = vpop.f32.mrb[0].mxu0
  %1187 = vmatprep.mubr.f32.mxu0 0.0
  %1188 = vmatmul.mubr.f32.gmra.mrb[0].mxu0 %v804
  %v1189 = vpop.f32.mrb[0].mxu0
  %v1190 = vadd.f32 %v1113, %v1189
  %v1191 = vpop.f32.mrb[0].mxu0
  %1192 = vmatprep.mubr.f32.mxu0 0.0
  %1193 = vmatmul.mubr.f32.gmra.mrb[0].mxu0 %v807
  %v1194 = vpop.f32.mrb[0].mxu0
  %v1195 = vadd.f32 %v1113, %v1194
  %v1196 = vpop.f32.mrb[0].mxu0
  %1197 = vmatprep.mubr.f32.mxu0 0.0
  %1198 = vmatmul.mubr.f32.gmra.mrb[0].mxu0 %v810
  %v1199 = vpop.f32.mrb[0].mxu0
  %v1200 = vadd.f32 %v1113, %v1199
  %v1201 = vpop.f32.mrb[0].mxu0
  %1202 = vmatprep.mubr.f32.mxu0 0.0
  %1203 = vmatmul.mubr.f32.gmra.mrb[0].mxu0 %v813
  %v1204 = vpop.f32.mrb[0].mxu0
  %v1205 = vadd.f32 %v1113, %v1204
  %v1206 = vpop.f32.mrb[0].mxu0
  %1207 = vmatprep.mubr.f32.mxu0 0.0
  %1208 = vmatmul.mubr.f32.gmra.mrb[0].mxu0 %v816
  %v1209 = vpop.f32.mrb[0].mxu0
  %v1210 = vadd.f32 %v1113, %v1209
  %v1211 = vpop.f32.mrb[0].mxu0
  %1212 = vmatprep.mubr.f32.mxu0 0.0
  %1213 = vmatmul.mubr.f32.gmra.mrb[0].mxu0 %v819
  %v1214 = vpop.f32.mrb[0].mxu0
  %v1215 = vadd.f32 %v1113, %v1214
  %v1216 = vpop.f32.mrb[0].mxu0
  %1217 = vmatprep.mubr.f32.mxu0 0.0
  %1218 = vmatmul.mubr.f32.gmra.mrb[0].mxu0 %v822
  %v1219 = vpop.f32.mrb[0].mxu0
  %v1220 = vadd.f32 %v1113, %v1219
  %v1221 = vpop.f32.mrb[0].mxu0
  %1222 = vmatprep.mubr.f32.mxu0 0.0
  %1223 = vmatmul.mubr.f32.gmra.mrb[0].mxu0 %v825
  %v1224 = vpop.f32.mrb[0].mxu0
  %v1225 = vadd.f32 %v1113, %v1224
  %v1226 = vpop.f32.mrb[0].mxu0
  %1227 = vmatprep.mubr.f32.mxu0 0.0
  %1228 = vmatmul.mubr.f32.gmra.mrb[0].mxu0 %v828
  %v1229 = vpop.f32.mrb[0].mxu0
  %v1230 = vadd.f32 %v1113, %v1229
  %v1231 = vpop.f32.mrb[0].mxu0
  %1232 = vmatprep.mubr.f32.mxu0 0.0
  %1233 = vmatmul.mubr.f32.gmra.mrb[0].mxu0 %v831
  %v1234 = vpop.f32.mrb[0].mxu0
  %v1235 = vadd.f32 %v1113, %v1234
  %v1236 = vpop.f32.mrb[0].mxu0
  %1237 = vmatprep.mubr.f32.mxu0 0.0
  %1238 = vmatmul.mubr.f32.gmra.mrb[0].mxu0 %v834
  %v1239 = vpop.f32.mrb[0].mxu0
  %v1240 = vadd.f32 %v1113, %v1239
  %v1241 = vpop.f32.mrb[0].mxu0
  %1242 = vdwg.mxu0
  %v1244 = vsel %vm799, %v907, 0
  %v1247 = vsel %vm799, %v912, 0
  %v1250 = vsel %vm799, %v917, 0
  %v1253 = vsel %vm799, %v922, 0
  %v1256 = vsel %vm799, %v927, 0
  %v1259 = vsel %vm799, %v932, 0
  %v1262 = vsel %vm799, %v937, 0
  %v1265 = vsel %vm799, %v942, 0
  %v1268 = vsel %vm799, %v947, 0
  %v1271 = vsel %vm799, %v952, 0
  %v1274 = vsel %vm799, %v957, 0
  %v1277 = vsel %vm799, %v962, 0
  %v1280 = vsel %vm799, %v1046, 0
  %v1283 = vsel %vm799, %v1051, 0
  %v1286 = vsel %vm799, %v1056, 0
  %v1289 = vsel %vm799, %v1061, 0
  %v1292 = vsel %vm799, %v1066, 0
  %v1295 = vsel %vm799, %v1071, 0
  %v1298 = vsel %vm799, %v1076, 0
  %v1301 = vsel %vm799, %v1081, 0
  %v1304 = vsel %vm799, %v1086, 0
  %v1307 = vsel %vm799, %v1091, 0
  %v1310 = vsel %vm799, %v1096, 0
  %v1313 = vsel %vm799, %v1101, 0
  %1315 = vmatprep.subr.mxu0 0.0
  %1316 = vmatpush1.xpose.msra.mxu0 %v1280
  %1317 = vmatprep.subr.mxu0 0.0
  %1318 = vmatpush1.xpose.msra.mxu0 %v1283
  %1319 = vmatprep.subr.mxu0 0.0
  %1320 = vmatpush1.xpose.msra.mxu0 %v1286
  %1321 = vmatprep.subr.mxu0 0.0
  %1322 = vmatpush1.xpose.msra.mxu0 %v1289
  %1323 = vmatprep.subr.mxu0 0.0
  %1324 = vmatpush1.xpose.msra.mxu0 %v1292
  %1325 = vmatprep.subr.mxu0 0.0
  %1326 = vmatpush1.xpose.msra.mxu0 %v1295
  %1327 = vmatprep.subr.mxu0 0.0
  %1328 = vmatpush1.xpose.msra.mxu0 %v1298
  %1329 = vmatprep.subr.mxu0 0.0
  %1330 = vmatpush1.xpose.msra.mxu0 %v1301
  %1331 = vmatprep.subr.mxu0 0.0
  %1332 = vmatpush1.xpose.msra.mxu0 %v1304
  %1333 = vmatprep.subr.mxu0 0.0
  %1334 = vmatpush1.xpose.msra.mxu0 %v1307
  %1335 = vmatprep.subr.mxu0 0.0
  %1336 = vmatpush1.xpose.msra.mxu0 %v1310
  %1337 = vmatprep.subr.mxu0 0.0
  %1338 = vmatpush1.xpose.msra.mxu0 %v1313
  %1339 = vmatprep.subr.mxu0 0.0
  %1340 = vmatpush1.xpose.msra.mxu0 0.0
  %1341 = vmatprep.subr.mxu0 0.0
  %1342 = vmatpush1.xpose.msra.mxu0 0.0
  %1343 = vmatprep.subr.mxu0 0.0
  %1344 = vmatpush1.xpose.msra.mxu0 0.0
  %1345 = vmatprep.subr.mxu0 0.0
  %1346 = vmatpush1.xpose.msra.mxu0 0.0
  %1347 = vmatprep.subr.mxu0 0.0
  %1348 = vmatpush1.xpose.msra.mxu0 0.0
  %1349 = vmatprep.subr.mxu0 0.0
  %1350 = vmatpush1.xpose.msra.mxu0 0.0
  %1351 = vmatprep.subr.mxu0 0.0
  %1352 = vmatpush1.xpose.msra.mxu0 0.0
  %1353 = vmatprep.subr.mxu0 0.0
  %1354 = vmatpush1.xpose.msra.mxu0 0.0
  %1355 = vmatprep.subr.mxu0 0.0
  %1356 = vmatpush1.xpose.msra.mxu0 0.0
  %1357 = vmatprep.subr.mxu0 0.0
  %1358 = vmatpush1.xpose.msra.mxu0 0.0
  %1359 = vmatprep.subr.mxu0 0.0
  %1360 = vmatpush1.xpose.msra.mxu0 0.0
  %1361 = vmatprep.subr.mxu0 0.0
  %1362 = vmatpush1.xpose.msra.mxu0 0.0
  %1363 = vmatprep.subr.mxu0 0.0
  %1364 = vmatpush1.xpose.msra.mxu0 0.0
  %1365 = vmatprep.subr.mxu0 0.0
  %1366 = vmatpush1.xpose.msra.mxu0 0.0
  %1367 = vmatprep.subr.mxu0 0.0
  %1368 = vmatpush1.xpose.msra.mxu0 0.0
  %1369 = vmatprep.subr.mxu0 0.0
  %1370 = vmatpush1.xpose.msra.mxu0 0.0
  %1371 = vmatprep.subr.mxu0 0.0
  %1372 = vmatpush1.xpose.msra.mxu0 0.0
  %1373 = vmatprep.subr.mxu0 0.0
  %1374 = vmatpush1.xpose.msra.mxu0 0.0
  %1375 = vmatprep.subr.mxu0 0.0
  %1376 = vmatpush1.xpose.msra.mxu0 0.0
  %1377 = vmatprep.subr.mxu0 0.0
  %1378 = vmatpush1.xpose.msra.mxu0 0.0
  %1379 = vmatprep.mubr.f32.mxu0 0.0
  %1380 = vmatmul.mubr.f32.gmra.mrb[0].mxu0 %v1244
  %v1381 = vpop.f32.mrb[0].mxu0
  %v1382 = vadd.f32 0.0, %v1381
  %v1383 = vpop.f32.mrb[0].mxu0
  %1384 = vmatprep.mubr.f32.mxu0 0.0
  %1385 = vmatmul.mubr.f32.gmra.mrb[0].mxu0 %v1247
  %v1386 = vpop.f32.mrb[0].mxu0
  %v1387 = vadd.f32 0.0, %v1386
  %v1388 = vpop.f32.mrb[0].mxu0
  %1389 = vmatprep.mubr.f32.mxu0 0.0
  %1390 = vmatmul.mubr.f32.gmra.mrb[0].mxu0 %v1250
  %v1391 = vpop.f32.mrb[0].mxu0
  %v1392 = vadd.f32 0.0, %v1391
  %v1393 = vpop.f32.mrb[0].mxu0
  %1394 = vmatprep.mubr.f32.mxu0 0.0
  %1395 = vmatmul.mubr.f32.gmra.mrb[0].mxu0 %v1253
  %v1396 = vpop.f32.mrb[0].mxu0
  %v1397 = vadd.f32 0.0, %v1396
  %v1398 = vpop.f32.mrb[0].mxu0
  %1399 = vmatprep.mubr.f32.mxu0 0.0
  %1400 = vmatmul.mubr.f32.gmra.mrb[0].mxu0 %v1256
  %v1401 = vpop.f32.mrb[0].mxu0
  %v1402 = vadd.f32 0.0, %v1401
  %v1403 = vpop.f32.mrb[0].mxu0
  %1404 = vmatprep.mubr.f32.mxu0 0.0
  %1405 = vmatmul.mubr.f32.gmra.mrb[0].mxu0 %v1259
  %v1406 = vpop.f32.mrb[0].mxu0
  %v1407 = vadd.f32 0.0, %v1406
  %v1408 = vpop.f32.mrb[0].mxu0
  %1409 = vmatprep.mubr.f32.mxu0 0.0
  %1410 = vmatmul.mubr.f32.gmra.mrb[0].mxu0 %v1262
  %v1411 = vpop.f32.mrb[0].mxu0
  %v1412 = vadd.f32 0.0, %v1411
  %v1413 = vpop.f32.mrb[0].mxu0
  %1414 = vmatprep.mubr.f32.mxu0 0.0
  %1415 = vmatmul.mubr.f32.gmra.mrb[0].mxu0 %v1265
  %v1416 = vpop.f32.mrb[0].mxu0
  %v1417 = vadd.f32 0.0, %v1416
  %v1418 = vpop.f32.mrb[0].mxu0
  %1419 = vmatprep.mubr.f32.mxu0 0.0
  %1420 = vmatmul.mubr.f32.gmra.mrb[0].mxu0 %v1268
  %v1421 = vpop.f32.mrb[0].mxu0
  %v1422 = vadd.f32 0.0, %v1421
  %v1423 = vpop.f32.mrb[0].mxu0
  %1424 = vmatprep.mubr.f32.mxu0 0.0
  %1425 = vmatmul.mubr.f32.gmra.mrb[0].mxu0 %v1271
  %v1426 = vpop.f32.mrb[0].mxu0
  %v1427 = vadd.f32 0.0, %v1426
  %v1428 = vpop.f32.mrb[0].mxu0
  %1429 = vmatprep.mubr.f32.mxu0 0.0
  %1430 = vmatmul.mubr.f32.gmra.mrb[0].mxu0 %v1274
  %v1431 = vpop.f32.mrb[0].mxu0
  %v1432 = vadd.f32 0.0, %v1431
  %v1433 = vpop.f32.mrb[0].mxu0
  %1434 = vmatprep.mubr.f32.mxu0 0.0
  %1435 = vmatmul.mubr.f32.gmra.mrb[0].mxu0 %v1277
  %v1436 = vpop.f32.mrb[0].mxu0
  %v1437 = vadd.f32 0.0, %v1436
  %v1438 = vpop.f32.mrb[0].mxu0
  %1439 = vdwg.mxu0
  %v1440 = vmul.f32 %v1382, 0.2773501
  %v1441 = vmul.f32 %v1387, 0.2773501
  %v1442 = vmul.f32 %v1392, 0.2773501
  %v1443 = vmul.f32 %v1397, 0.2773501
  %v1444 = vmul.f32 %v1402, 0.2773501
  %v1445 = vmul.f32 %v1407, 0.2773501
  %v1446 = vmul.f32 %v1412, 0.2773501
  %v1447 = vmul.f32 %v1417, 0.2773501
  %v1448 = vmul.f32 %v1422, 0.2773501
  %v1449 = vmul.f32 %v1427, 0.2773501
  %v1450 = vmul.f32 %v1432, 0.2773501
  %v1451 = vmul.f32 %v1437, 0.2773501
  %vm1452 = vcmask 785408
  %v1453 = vsel %vm1452, %v1440, -inf
  %1454 = vmax.xlane.f32.xlu0 %v1453
  %v1455 = vpop.xlane.xlu0 %1454
  %v1456 = vsel %vm1452, %v1441, -inf
  %1457 = vmax.xlane.f32.xlu0 %v1456
  %v1458 = vpop.xlane.xlu0 %1457
  %v1459 = vsel %vm1452, %v1442, -inf
  %1460 = vmax.xlane.f32.xlu0 %v1459
  %v1461 = vpop.xlane.xlu0 %1460
  %v1462 = vsel %vm1452, %v1443, -inf
  %1463 = vmax.xlane.f32.xlu0 %v1462
  %v1464 = vpop.xlane.xlu0 %1463
  %v1465 = vsel %vm1452, %v1444, -inf
  %1466 = vmax.xlane.f32.xlu0 %v1465
  %v1467 = vpop.xlane.xlu0 %1466
  %v1468 = vsel %vm1452, %v1445, -inf
  %1469 = vmax.xlane.f32.xlu0 %v1468
  %v1470 = vpop.xlane.xlu0 %1469
  %v1471 = vsel %vm1452, %v1446, -inf
  %1472 = vmax.xlane.f32.xlu0 %v1471
  %v1473 = vpop.xlane.xlu0 %1472
  %v1474 = vsel %vm1452, %v1447, -inf
  %1475 = vmax.xlane.f32.xlu0 %v1474
  %v1476 = vpop.xlane.xlu0 %1475
  %v1477 = vsel %vm1452, %v1448, -inf
  %1478 = vmax.xlane.f32.xlu0 %v1477
  %v1479 = vpop.xlane.xlu0 %1478
  %v1480 = vsel %vm1452, %v1449, -inf
  %1481 = vmax.xlane.f32.xlu0 %v1480
  %v1482 = vpop.xlane.xlu0 %1481
  %v1483 = vsel %vm1452, %v1450, -inf
  %1484 = vmax.xlane.f32.xlu0 %v1483
  %v1485 = vpop.xlane.xlu0 %1484
  %v1486 = vsel %vm1452, %v1451, -inf
  %1487 = vmax.xlane.f32.xlu0 %v1486
  %v1488 = vpop.xlane.xlu0 %1487
  %v1489 = vsub.f32 %v1440, %v1455
  %v1490 = vsub.f32 %v1441, %v1458
  %v1491 = vsub.f32 %v1442, %v1461
  %v1492 = vsub.f32 %v1443, %v1464
  %v1493 = vsub.f32 %v1444, %v1467
  %v1494 = vsub.f32 %v1445, %v1470
  %v1495 = vsub.f32 %v1446, %v1473
  %v1496 = vsub.f32 %v1447, %v1476
  %v1497 = vsub.f32 %v1448, %v1479
  %v1498 = vsub.f32 %v1449, %v1482
  %v1499 = vsub.f32 %v1450, %v1485
  %v1500 = vsub.f32 %v1451, %v1488
  %v1501 = vmul.f32 %v1489, 1.442695
  %v1502 = vpow.pop %v1501
  %v1503 = vmul.f32 %v1490, 1.442695
  %v1504 = vpow.pop %v1503
  %v1505 = vmul.f32 %v1491, 1.442695
  %v1506 = vpow.pop %v1505
  %v1507 = vmul.f32 %v1492, 1.442695
  %v1508 = vpow.pop %v1507
  %v1509 = vmul.f32 %v1493, 1.442695
  %v1510 = vpow.pop %v1509
  %v1511 = vmul.f32 %v1494, 1.442695
  %v1512 = vpow.pop %v1511
  %v1513 = vmul.f32 %v1495, 1.442695
  %v1514 = vpow.pop %v1513
  %v1515 = vmul.f32 %v1496, 1.442695
  %v1516 = vpow.pop %v1515
  %v1517 = vmul.f32 %v1497, 1.442695
  %v1518 = vpow.pop %v1517
  %v1519 = vmul.f32 %v1498, 1.442695
  %v1520 = vpow.pop %v1519
  %v1521 = vmul.f32 %v1499, 1.442695
  %v1522 = vpow.pop %v1521
  %v1523 = vmul.f32 %v1500, 1.442695
  %v1524 = vpow.pop %v1523
  %v1525 = vsel %vm1452, %v1502, 0.0
  %1526 = vadd.xlane.f32.xlu0 %v1525
  %v1527 = vpop.xlane.xlu0 %1526
  %v1528 = vsel %vm1452, %v1504, 0.0
  %1529 = vadd.xlane.f32.xlu0 %v1528
  %v1530 = vpop.xlane.xlu0 %1529
  %v1531 = vsel %vm1452, %v1506, 0.0
  %1532 = vadd.xlane.f32.xlu0 %v1531
  %v1533 = vpop.xlane.xlu0 %1532
  %v1534 = vsel %vm1452, %v1508, 0.0
  %1535 = vadd.xlane.f32.xlu0 %v1534
  %v1536 = vpop.xlane.xlu0 %1535
  %v1537 = vsel %vm1452, %v1510, 0.0
  %1538 = vadd.xlane.f32.xlu0 %v1537
  %v1539 = vpop.xlane.xlu0 %1538
  %v1540 = vsel %vm1452, %v1512, 0.0
  %1541 = vadd.xlane.f32.xlu0 %v1540
  %v1542 = vpop.xlane.xlu0 %1541
  %v1543 = vsel %vm1452, %v1514, 0.0
  %1544 = vadd.xlane.f32.xlu0 %v1543
  %v1545 = vpop.xlane.xlu0 %1544
  %v1546 = vsel %vm1452, %v1516, 0.0
  %1547 = vadd.xlane.f32.xlu0 %v1546
  %v1548 = vpop.xlane.xlu0 %1547
  %v1549 = vsel %vm1452, %v1518, 0.0
  %1550 = vadd.xlane.f32.xlu0 %v1549
  %v1551 = vpop.xlane.xlu0 %1550
  %v1552 = vsel %vm1452, %v1520, 0.0
  %1553 = vadd.xlane.f32.xlu0 %v1552
  %v1554 = vpop.xlane.xlu0 %1553
  %v1555 = vsel %vm1452, %v1522, 0.0
  %1556 = vadd.xlane.f32.xlu0 %v1555
  %v1557 = vpop.xlane.xlu0 %1556
  %v1558 = vsel %vm1452, %v1524, 0.0
  %1559 = vadd.xlane.f32.xlu0 %v1558
  %v1560 = vpop.xlane.xlu0 %1559
  %v1561 = vrcp.pop %v1527
  %v1562 = vmul.f32 %v1502, %v1561
  %v1563 = vrcp.pop %v1530
  %v1564 = vmul.f32 %v1504, %v1563
  %v1565 = vrcp.pop %v1533
  %v1566 = vmul.f32 %v1506, %v1565
  %v1567 = vrcp.pop %v1536
  %v1568 = vmul.f32 %v1508, %v1567
  %v1569 = vrcp.pop %v1539
  %v1570 = vmul.f32 %v1510, %v1569
  %v1571 = vrcp.pop %v1542
  %v1572 = vmul.f32 %v1512, %v1571
  %v1573 = vrcp.pop %v1545
  %v1574 = vmul.f32 %v1514, %v1573
  %v1575 = vrcp.pop %v1548
  %v1576 = vmul.f32 %v1516, %v1575
  %v1577 = vrcp.pop %v1551
  %v1578 = vmul.f32 %v1518, %v1577
  %v1579 = vrcp.pop %v1554
  %v1580 = vmul.f32 %v1520, %v1579
  %v1581 = vrcp.pop %v1557
  %v1582 = vmul.f32 %v1522, %v1581
  %v1583 = vrcp.pop %v1560
  %v1584 = vmul.f32 %v1524, %v1583
  %v1586 = vsel %vm1452, %v1562, 0
  %v1589 = vsel %vm1452, %v1564, 0
  %v1592 = vsel %vm1452, %v1566, 0
  %v1595 = vsel %vm1452, %v1568, 0
  %v1598 = vsel %vm1452, %v1570, 0
  %v1601 = vsel %vm1452, %v1572, 0
  %v1604 = vsel %vm1452, %v1574, 0
  %v1607 = vsel %vm1452, %v1576, 0
  %v1610 = vsel %vm1452, %v1578, 0
  %v1613 = vsel %vm1452, %v1580, 0
  %v1616 = vsel %vm1452, %v1582, 0
  %v1619 = vsel %vm1452, %v1584, 0
  %1621 = vmatprep.subr.mxu0 0.0
  %1622 = vmatpush1.msra.mxu0 %v1185
  %1623 = vmatprep.subr.mxu0 0.0
  %1624 = vmatpush1.msra.mxu0 %v1190
  %1625 = vmatprep.subr.mxu0 0.0
  %1626 = vmatpush1.msra.mxu0 %v1195
  %1627 = vmatprep.subr.mxu0 0.0
  %1628 = vmatpush1.msra.mxu0 %v1200
  %1629 = vmatprep.subr.mxu0 0.0
  %1630 = vmatpush1.msra.mxu0 %v1205
  %1631 = vmatprep.subr.mxu0 0.0
  %1632 = vmatpush1.msra.mxu0 %v1210
  %1633 = vmatprep.subr.mxu0 0.0
  %1634 = vmatpush1.msra.mxu0 %v1215
  %1635 = vmatprep.subr.mxu0 0.0
  %1636 = vmatpush1.msra.mxu0 %v1220
  %1637 = vmatprep.subr.mxu0 0.0
  %1638 = vmatpush1.msra.mxu0 %v1225
  %1639 = vmatprep.subr.mxu0 0.0
  %1640 = vmatpush1.msra.mxu0 %v1230
  %1641 = vmatprep.subr.mxu0 0.0
  %1642 = vmatpush1.msra.mxu0 %v1235
  %1643 = vmatprep.subr.mxu0 0.0
  %1644 = vmatpush1.msra.mxu0 %v1240
  %1645 = vmatprep.subr.mxu0 0.0
  %1646 = vmatpush1.msra.mxu0 0.0
  %1647 = vmatprep.subr.mxu0 0.0
  %1648 = vmatpush1.msra.mxu0 0.0
  %1649 = vmatprep.subr.mxu0 0.0
  %1650 = vmatpush1.msra.mxu0 0.0
  %1651 = vmatprep.subr.mxu0 0.0
  %1652 = vmatpush1.msra.mxu0 0.0
  %1653 = vmatprep.subr.mxu0 0.0
  %1654 = vmatpush1.msra.mxu0 0.0
  %1655 = vmatprep.subr.mxu0 0.0
  %1656 = vmatpush1.msra.mxu0 0.0
  %1657 = vmatprep.subr.mxu0 0.0
  %1658 = vmatpush1.msra.mxu0 0.0
  %1659 = vmatprep.subr.mxu0 0.0
  %1660 = vmatpush1.msra.mxu0 0.0
  %1661 = vmatprep.subr.mxu0 0.0
  %1662 = vmatpush1.msra.mxu0 0.0
  %1663 = vmatprep.subr.mxu0 0.0
  %1664 = vmatpush1.msra.mxu0 0.0
  %1665 = vmatprep.subr.mxu0 0.0
  %1666 = vmatpush1.msra.mxu0 0.0
  %1667 = vmatprep.subr.mxu0 0.0
  %1668 = vmatpush1.msra.mxu0 0.0
  %1669 = vmatprep.subr.mxu0 0.0
  %1670 = vmatpush1.msra.mxu0 0.0
  %1671 = vmatprep.subr.mxu0 0.0
  %1672 = vmatpush1.msra.mxu0 0.0
  %1673 = vmatprep.subr.mxu0 0.0
  %1674 = vmatpush1.msra.mxu0 0.0
  %1675 = vmatprep.subr.mxu0 0.0
  %1676 = vmatpush1.msra.mxu0 0.0
  %1677 = vmatprep.subr.mxu0 0.0
  %1678 = vmatpush1.msra.mxu0 0.0
  %1679 = vmatprep.subr.mxu0 0.0
  %1680 = vmatpush1.msra.mxu0 0.0
  %1681 = vmatprep.subr.mxu0 0.0
  %1682 = vmatpush1.msra.mxu0 0.0
  %1683 = vmatprep.subr.mxu0 0.0
  %1684 = vmatpush1.msra.mxu0 0.0
  %1685 = vmatprep.mubr.f32.mxu0 0.0
  %1686 = vmatmul.mubr.f32.gmra.mrb[0].mxu0 %v1586
  %v1687 = vpop.f32.mrb[0].mxu0
  %v1688 = vadd.f32 0.0, %v1687
  %v1689 = vpop.f32.mrb[0].mxu0
  %1690 = vmatprep.mubr.f32.mxu0 0.0
  %1691 = vmatmul.mubr.f32.gmra.mrb[0].mxu0 %v1589
  %v1692 = vpop.f32.mrb[0].mxu0
  %v1693 = vadd.f32 0.0, %v1692
  %v1694 = vpop.f32.mrb[0].mxu0
  %1695 = vmatprep.mubr.f32.mxu0 0.0
  %1696 = vmatmul.mubr.f32.gmra.mrb[0].mxu0 %v1592
  %v1697 = vpop.f32.mrb[0].mxu0
  %v1698 = vadd.f32 0.0, %v1697
  %v1699 = vpop.f32.mrb[0].mxu0
  %1700 = vmatprep.mubr.f32.mxu0 0.0
  %1701 = vmatmul.mubr.f32.gmra.mrb[0].mxu0 %v1595
  %v1702 = vpop.f32.mrb[0].mxu0
  %v1703 = vadd.f32 0.0, %v1702
  %v1704 = vpop.f32.mrb[0].mxu0
  %1705 = vmatprep.mubr.f32.mxu0 0.0
  %1706 = vmatmul.mubr.f32.gmra.mrb[0].mxu0 %v1598
  %v1707 = vpop.f32.mrb[0].mxu0
  %v1708 = vadd.f32 0.0, %v1707
  %v1709 = vpop.f32.mrb[0].mxu0
  %1710 = vmatprep.mubr.f32.mxu0 0.0
  %1711 = vmatmul.mubr.f32.gmra.mrb[0].mxu0 %v1601
  %v1712 = vpop.f32.mrb[0].mxu0
  %v1713 = vadd.f32 0.0, %v1712
  %v1714 = vpop.f32.mrb[0].mxu0
  %1715 = vmatprep.mubr.f32.mxu0 0.0
  %1716 = vmatmul.mubr.f32.gmra.mrb[0].mxu0 %v1604
  %v1717 = vpop.f32.mrb[0].mxu0
  %v1718 = vadd.f32 0.0, %v1717
  %v1719 = vpop.f32.mrb[0].mxu0
  %1720 = vmatprep.mubr.f32.mxu0 0.0
  %1721 = vmatmul.mubr.f32.gmra.mrb[0].mxu0 %v1607
  %v1722 = vpop.f32.mrb[0].mxu0
  %v1723 = vadd.f32 0.0, %v1722
  %v1724 = vpop.f32.mrb[0].mxu0
  %1725 = vmatprep.mubr.f32.mxu0 0.0
  %1726 = vmatmul.mubr.f32.gmra.mrb[0].mxu0 %v1610
  %v1727 = vpop.f32.mrb[0].mxu0
  %v1728 = vadd.f32 0.0, %v1727
  %v1729 = vpop.f32.mrb[0].mxu0
  %1730 = vmatprep.mubr.f32.mxu0 0.0
  %1731 = vmatmul.mubr.f32.gmra.mrb[0].mxu0 %v1613
  %v1732 = vpop.f32.mrb[0].mxu0
  %v1733 = vadd.f32 0.0, %v1732
  %v1734 = vpop.f32.mrb[0].mxu0
  %1735 = vmatprep.mubr.f32.mxu0 0.0
  %1736 = vmatmul.mubr.f32.gmra.mrb[0].mxu0 %v1616
  %v1737 = vpop.f32.mrb[0].mxu0
  %v1738 = vadd.f32 0.0, %v1737
  %v1739 = vpop.f32.mrb[0].mxu0
  %1740 = vmatprep.mubr.f32.mxu0 0.0
  %1741 = vmatmul.mubr.f32.gmra.mrb[0].mxu0 %v1619
  %v1742 = vpop.f32.mrb[0].mxu0
  %v1743 = vadd.f32 0.0, %v1742
  %v1744 = vpop.f32.mrb[0].mxu0
  %1745 = vdwg.mxu0
  %v1747 = vlaneseq
  %v1748 = vshrl.u32 %v1747, 7
  %v1749 = vsub.s32 0, %v1748
  %v1750 = vrot.slane %v789, %v1749
  %v1753 = vsel %vm799, %v1688, 0
  %v1756 = vsel %vm799, %v1693, 0
  %v1759 = vsel %vm799, %v1698, 0
  %v1762 = vsel %vm799, %v1703, 0
  %v1765 = vsel %vm799, %v1708, 0
  %v1768 = vsel %vm799, %v1713, 0
  %v1771 = vsel %vm799, %v1718, 0
  %v1774 = vsel %vm799, %v1723, 0
  %v1777 = vsel %vm799, %v1728, 0
  %v1780 = vsel %vm799, %v1733, 0
  %v1783 = vsel %vm799, %v1738, 0
  %v1786 = vsel %vm799, %v1743, 0
  %v1789 = vsel %vm836, %v788, 0
  %1791 = vmatprep.subr.mxu0 0.0
  %1792 = vmatpush1.msra.mxu0 %v787
  %1793 = vmatprep.subr.mxu0 0.0
  %1794 = vmatpush1.msra.mxu0 %v1789
  %1795 = vmatprep.subr.mxu0 0.0
  %1796 = vmatpush1.msra.mxu0 0.0
  %1797 = vmatprep.subr.mxu0 0.0
  %1798 = vmatpush1.msra.mxu0 0.0
  %1799 = vmatprep.subr.mxu0 0.0
  %1800 = vmatpush1.msra.mxu0 0.0
  %1801 = vmatprep.subr.mxu0 0.0
  %1802 = vmatpush1.msra.mxu0 0.0
  %1803 = vmatprep.subr.mxu0 0.0
  %1804 = vmatpush1.msra.mxu0 0.0
  %1805 = vmatprep.subr.mxu0 0.0
  %1806 = vmatpush1.msra.mxu0 0.0
  %1807 = vmatprep.subr.mxu0 0.0
  %1808 = vmatpush1.msra.mxu0 0.0
  %1809 = vmatprep.subr.mxu0 0.0
  %1810 = vmatpush1.msra.mxu0 0.0
  %1811 = vmatprep.subr.mxu0 0.0
  %1812 = vmatpush1.msra.mxu0 0.0
  %1813 = vmatprep.subr.mxu0 0.0
  %1814 = vmatpush1.msra.mxu0 0.0
  %1815 = vmatprep.subr.mxu0 0.0
  %1816 = vmatpush1.msra.mxu0 0.0
  %1817 = vmatprep.subr.mxu0 0.0
  %1818 = vmatpush1.msra.mxu0 0.0
  %1819 = vmatprep.subr.mxu0 0.0
  %1820 = vmatpush1.msra.mxu0 0.0
  %1821 = vmatprep.subr.mxu0 0.0
  %1822 = vmatpush1.msra.mxu0 0.0
  %1823 = vmatprep.subr.mxu0 0.0
  %1824 = vmatpush1.msra.mxu0 0.0
  %1825 = vmatprep.subr.mxu0 0.0
  %1826 = vmatpush1.msra.mxu0 0.0
  %1827 = vmatprep.subr.mxu0 0.0
  %1828 = vmatpush1.msra.mxu0 0.0
  %1829 = vmatprep.subr.mxu0 0.0
  %1830 = vmatpush1.msra.mxu0 0.0
  %1831 = vmatprep.subr.mxu0 0.0
  %1832 = vmatpush1.msra.mxu0 0.0
  %1833 = vmatprep.subr.mxu0 0.0
  %1834 = vmatpush1.msra.mxu0 0.0
  %1835 = vmatprep.subr.mxu0 0.0
  %1836 = vmatpush1.msra.mxu0 0.0
  %1837 = vmatprep.subr.mxu0 0.0
  %1838 = vmatpush1.msra.mxu0 0.0
  %1839 = vmatprep.subr.mxu0 0.0
  %1840 = vmatpush1.msra.mxu0 0.0
  %1841 = vmatprep.subr.mxu0 0.0
  %1842 = vmatpush1.msra.mxu0 0.0
  %1843 = vmatprep.subr.mxu0 0.0
  %1844 = vmatpush1.msra.mxu0 0.0
  %1845 = vmatprep.subr.mxu0 0.0
  %1846 = vmatpush1.msra.mxu0 0.0
  %1847 = vmatprep.subr.mxu0 0.0
  %1848 = vmatpush1.msra.mxu0 0.0
  %1849 = vmatprep.subr.mxu0 0.0
  %1850 = vmatpush1.msra.mxu0 0.0
  %1851 = vmatprep.subr.mxu0 0.0
  %1852 = vmatpush1.msra.mxu0 0.0
  %1853 = vmatprep.subr.mxu0 0.0
  %1854 = vmatpush1.msra.mxu0 0.0
  %1855 = vmatprep.mubr.f32.mxu0 0.0
  %1856 = vmatmul.mubr.f32.gmra.mrb[0].mxu0 %v1753
  %v1857 = vpop.f32.mrb[0].mxu0
  %v1858 = vadd.f32 %v1750, %v1857
  %v1859 = vpop.f32.mrb[0].mxu0
  %1860 = vmatprep.mubr.f32.mxu0 0.0
  %1861 = vmatmul.mubr.f32.gmra.mrb[0].mxu0 %v1756
  %v1862 = vpop.f32.mrb[0].mxu0
  %v1863 = vadd.f32 %v1750, %v1862
  %v1864 = vpop.f32.mrb[0].mxu0
  %1865 = vmatprep.mubr.f32.mxu0 0.0
  %1866 = vmatmul.mubr.f32.gmra.mrb[0].mxu0 %v1759
  %v1867 = vpop.f32.mrb[0].mxu0
  %v1868 = vadd.f32 %v1750, %v1867
  %v1869 = vpop.f32.mrb[0].mxu0
  %1870 = vmatprep.mubr.f32.mxu0 0.0
  %1871 = vmatmul.mubr.f32.gmra.mrb[0].mxu0 %v1762
  %v1872 = vpop.f32.mrb[0].mxu0
  %v1873 = vadd.f32 %v1750, %v1872
  %v1874 = vpop.f32.mrb[0].mxu0
  %1875 = vmatprep.mubr.f32.mxu0 0.0
  %1876 = vmatmul.mubr.f32.gmra.mrb[0].mxu0 %v1765
  %v1877 = vpop.f32.mrb[0].mxu0
  %v1878 = vadd.f32 %v1750, %v1877
  %v1879 = vpop.f32.mrb[0].mxu0
  %1880 = vmatprep.mubr.f32.mxu0 0.0
  %1881 = vmatmul.mubr.f32.gmra.mrb[0].mxu0 %v1768
  %v1882 = vpop.f32.mrb[0].mxu0
  %v1883 = vadd.f32 %v1750, %v1882
  %v1884 = vpop.f32.mrb[0].mxu0
  %1885 = vmatprep.mubr.f32.mxu0 0.0
  %1886 = vmatmul.mubr.f32.gmra.mrb[0].mxu0 %v1771
  %v1887 = vpop.f32.mrb[0].mxu0
  %v1888 = vadd.f32 %v1750, %v1887
  %v1889 = vpop.f32.mrb[0].mxu0
  %1890 = vmatprep.mubr.f32.mxu0 0.0
  %1891 = vmatmul.mubr.f32.gmra.mrb[0].mxu0 %v1774
  %v1892 = vpop.f32.mrb[0].mxu0
  %v1893 = vadd.f32 %v1750, %v1892
  %v1894 = vpop.f32.mrb[0].mxu0
  %1895 = vmatprep.mubr.f32.mxu0 0.0
  %1896 = vmatmul.mubr.f32.gmra.mrb[0].mxu0 %v1777
  %v1897 = vpop.f32.mrb[0].mxu0
  %v1898 = vadd.f32 %v1750, %v1897
  %v1899 = vpop.f32.mrb[0].mxu0
  %1900 = vmatprep.mubr.f32.mxu0 0.0
  %1901 = vmatmul.mubr.f32.gmra.mrb[0].mxu0 %v1780
  %v1902 = vpop.f32.mrb[0].mxu0
  %v1903 = vadd.f32 %v1750, %v1902
  %v1904 = vpop.f32.mrb[0].mxu0
  %1905 = vmatprep.mubr.f32.mxu0 0.0
  %1906 = vmatmul.mubr.f32.gmra.mrb[0].mxu0 %v1783
  %v1907 = vpop.f32.mrb[0].mxu0
  %v1908 = vadd.f32 %v1750, %v1907
  %v1909 = vpop.f32.mrb[0].mxu0
  %1910 = vmatprep.mubr.f32.mxu0 0.0
  %1911 = vmatmul.mubr.f32.gmra.mrb[0].mxu0 %v1786
  %v1912 = vpop.f32.mrb[0].mxu0
  %v1913 = vadd.f32 %v1750, %v1912
  %v1914 = vpop.f32.mrb[0].mxu0
  %1915 = vdwg.mxu0
  %v1916 = vadd.f32 %v1858, %v761
  %v1917 = vadd.f32 %v1863, %v762
  %v1918 = vadd.f32 %v1868, %v763
  %v1919 = vadd.f32 %v1873, %v764
  %v1920 = vadd.f32 %v1878, %v765
  %v1921 = vadd.f32 %v1883, %v766
  %v1922 = vadd.f32 %v1888, %v767
  %v1923 = vadd.f32 %v1893, %v768
  %v1924 = vadd.f32 %v1898, %v769
  %v1925 = vadd.f32 %v1903, %v770
  %v1926 = vadd.f32 %v1908, %v771
  %v1927 = vadd.f32 %v1913, %v772
  %v1928 = vld [vmem:[%s8] sm:$0x1]
  %v1929 = vld [vmem:[%s9] sm:$0x1]
  %v1930 = vsel %vm799, %v1916, 0.0
  %1931 = vadd.xlane.f32.xlu0 %v1930
  %v1932 = vpop.xlane.xlu0 %1931
  %v1933 = vsel %vm799, %v1917, 0.0
  %1934 = vadd.xlane.f32.xlu0 %v1933
  %v1935 = vpop.xlane.xlu0 %1934
  %v1936 = vsel %vm799, %v1918, 0.0
  %1937 = vadd.xlane.f32.xlu0 %v1936
  %v1938 = vpop.xlane.xlu0 %1937
  %v1939 = vsel %vm799, %v1919, 0.0
  %1940 = vadd.xlane.f32.xlu0 %v1939
  %v1941 = vpop.xlane.xlu0 %1940
  %v1942 = vsel %vm799, %v1920, 0.0
  %1943 = vadd.xlane.f32.xlu0 %v1942
  %v1944 = vpop.xlane.xlu0 %1943
  %v1945 = vsel %vm799, %v1921, 0.0
  %1946 = vadd.xlane.f32.xlu0 %v1945
  %v1947 = vpop.xlane.xlu0 %1946
  %v1948 = vsel %vm799, %v1922, 0.0
  %1949 = vadd.xlane.f32.xlu0 %v1948
  %v1950 = vpop.xlane.xlu0 %1949
  %v1951 = vsel %vm799, %v1923, 0.0
  %1952 = vadd.xlane.f32.xlu0 %v1951
  %v1953 = vpop.xlane.xlu0 %1952
  %v1954 = vsel %vm799, %v1924, 0.0
  %1955 = vadd.xlane.f32.xlu0 %v1954
  %v1956 = vpop.xlane.xlu0 %1955
  %v1957 = vsel %vm799, %v1925, 0.0
  %1958 = vadd.xlane.f32.xlu0 %v1957
  %v1959 = vpop.xlane.xlu0 %1958
  %v1960 = vsel %vm799, %v1926, 0.0
  %1961 = vadd.xlane.f32.xlu0 %v1960
  %v1962 = vpop.xlane.xlu0 %1961
  %v1963 = vsel %vm799, %v1927, 0.0
  %1964 = vadd.xlane.f32.xlu0 %v1963
  %v1965 = vpop.xlane.xlu0 %1964
  %v1966 = vrcp.pop 13.0
  %v1967 = vmul.f32 %v1932, %v1966
  %v1968 = vmul.f32 %v1935, %v1966
  %v1969 = vmul.f32 %v1938, %v1966
  %v1970 = vmul.f32 %v1941, %v1966
  %v1971 = vmul.f32 %v1944, %v1966
  %v1972 = vmul.f32 %v1947, %v1966
  %v1973 = vmul.f32 %v1950, %v1966
  %v1974 = vmul.f32 %v1953, %v1966
  %v1975 = vmul.f32 %v1956, %v1966
  %v1976 = vmul.f32 %v1959, %v1966
  %v1977 = vmul.f32 %v1962, %v1966
  %v1978 = vmul.f32 %v1965, %v1966
  %v1979 = vsub.f32 %v1916, %v1967
  %v1980 = vsub.f32 %v1917, %v1968
  %v1981 = vsub.f32 %v1918, %v1969
  %v1982 = vsub.f32 %v1919, %v1970
  %v1983 = vsub.f32 %v1920, %v1971
  %v1984 = vsub.f32 %v1921, %v1972
  %v1985 = vsub.f32 %v1922, %v1973
  %v1986 = vsub.f32 %v1923, %v1974
  %v1987 = vsub.f32 %v1924, %v1975
  %v1988 = vsub.f32 %v1925, %v1976
  %v1989 = vsub.f32 %v1926, %v1977
  %v1990 = vsub.f32 %v1927, %v1978
  %v1991 = vmul.f32 %v1979, %v1979
  %v1992 = vmul.f32 %v1980, %v1980
  %v1993 = vmul.f32 %v1981, %v1981
  %v1994 = vmul.f32 %v1982, %v1982
  %v1995 = vmul.f32 %v1983, %v1983
  %v1996 = vmul.f32 %v1984, %v1984
  %v1997 = vmul.f32 %v1985, %v1985
  %v1998 = vmul.f32 %v1986, %v1986
  %v1999 = vmul.f32 %v1987, %v1987
  %v2000 = vmul.f32 %v1988, %v1988
  %v2001 = vmul.f32 %v1989, %v1989
  %v2002 = vmul.f32 %v1990, %v1990
  %v2003 = vsel %vm799, %v1991, 0.0
  %2004 = vadd.xlane.f32.xlu0 %v2003
  %v2005 = vpop.xlane.xlu0 %2004
  %v2006 = vsel %vm799, %v1992, 0.0
  %2007 = vadd.xlane.f32.xlu0 %v2006
  %v2008 = vpop.xlane.xlu0 %2007
  %v2009 = vsel %vm799, %v1993, 0.0
  %2010 = vadd.xlane.f32.xlu0 %v2009
  %v2011 = vpop.xlane.xlu0 %2010
  %v2012 = vsel %vm799, %v1994, 0.0
  %2013 = vadd.xlane.f32.xlu0 %v2012
  %v2014 = vpop.xlane.xlu0 %2013
  %v2015 = vsel %vm799, %v1995, 0.0
  %2016 = vadd.xlane.f32.xlu0 %v2015
  %v2017 = vpop.xlane.xlu0 %2016
  %v2018 = vsel %vm799, %v1996, 0.0
  %2019 = vadd.xlane.f32.xlu0 %v2018
  %v2020 = vpop.xlane.xlu0 %2019
  %v2021 = vsel %vm799, %v1997, 0.0
  %2022 = vadd.xlane.f32.xlu0 %v2021
  %v2023 = vpop.xlane.xlu0 %2022
  %v2024 = vsel %vm799, %v1998, 0.0
  %2025 = vadd.xlane.f32.xlu0 %v2024
  %v2026 = vpop.xlane.xlu0 %2025
  %v2027 = vsel %vm799, %v1999, 0.0
  %2028 = vadd.xlane.f32.xlu0 %v2027
  %v2029 = vpop.xlane.xlu0 %2028
  %v2030 = vsel %vm799, %v2000, 0.0
  %2031 = vadd.xlane.f32.xlu0 %v2030
  %v2032 = vpop.xlane.xlu0 %2031
  %v2033 = vsel %vm799, %v2001, 0.0
  %2034 = vadd.xlane.f32.xlu0 %v2033
  %v2035 = vpop.xlane.xlu0 %2034
  %v2036 = vsel %vm799, %v2002, 0.0
  %2037 = vadd.xlane.f32.xlu0 %v2036
  %v2038 = vpop.xlane.xlu0 %2037
  %v2039 = vmul.f32 %v2005, %v1966
  %v2040 = vmul.f32 %v2008, %v1966
  %v2041 = vmul.f32 %v2011, %v1966
  %v2042 = vmul.f32 %v2014, %v1966
  %v2043 = vmul.f32 %v2017, %v1966
  %v2044 = vmul.f32 %v2020, %v1966
  %v2045 = vmul.f32 %v2023, %v1966
  %v2046 = vmul.f32 %v2026, %v1966
  %v2047 = vmul.f32 %v2029, %v1966
  %v2048 = vmul.f32 %v2032, %v1966
  %v2049 = vmul.f32 %v2035, %v1966
  %v2050 = vmul.f32 %v2038, %v1966
  %v2051 = vadd.f32 %v2039, 1e-05
  %v2052 = vadd.f32 %v2040, 1e-05
  %v2053 = vadd.f32 %v2041, 1e-05
  %v2054 = vadd.f32 %v2042, 1e-05
  %v2055 = vadd.f32 %v2043, 1e-05
  %v2056 = vadd.f32 %v2044, 1e-05
  %v2057 = vadd.f32 %v2045, 1e-05
  %v2058 = vadd.f32 %v2046, 1e-05
  %v2059 = vadd.f32 %v2047, 1e-05
  %v2060 = vadd.f32 %v2048, 1e-05
  %v2061 = vadd.f32 %v2049, 1e-05
  %v2062 = vadd.f32 %v2050, 1e-05
  %v2063 = vrsqrt.pop %v2051
  %v2064 = vrsqrt.pop %v2052
  %v2065 = vrsqrt.pop %v2053
  %v2066 = vrsqrt.pop %v2054
  %v2067 = vrsqrt.pop %v2055
  %v2068 = vrsqrt.pop %v2056
  %v2069 = vrsqrt.pop %v2057
  %v2070 = vrsqrt.pop %v2058
  %v2071 = vrsqrt.pop %v2059
  %v2072 = vrsqrt.pop %v2060
  %v2073 = vrsqrt.pop %v2061
  %v2074 = vrsqrt.pop %v2062
  %v2075 = vmul.f32 %v1979, %v2063
  %v2076 = vmul.f32 %v1980, %v2064
  %v2077 = vmul.f32 %v1981, %v2065
  %v2078 = vmul.f32 %v1982, %v2066
  %v2079 = vmul.f32 %v1983, %v2067
  %v2080 = vmul.f32 %v1984, %v2068
  %v2081 = vmul.f32 %v1985, %v2069
  %v2082 = vmul.f32 %v1986, %v2070
  %v2083 = vmul.f32 %v1987, %v2071
  %v2084 = vmul.f32 %v1988, %v2072
  %v2085 = vmul.f32 %v1989, %v2073
  %v2086 = vmul.f32 %v1990, %v2074
  %v2088 = vlaneseq
  %v2089 = vshrl.u32 %v2088, 7
  %v2090 = vsub.s32 0, %v2089
  %v2091 = vrot.slane %v1928, %v2090
  %v2093 = vmul.f32 %v2075, %v2091
  %v2094 = vmul.f32 %v2076, %v2091
  %v2095 = vmul.f32 %v2077, %v2091
  %v2096 = vmul.f32 %v2078, %v2091
  %v2097 = vmul.f32 %v2079, %v2091
  %v2098 = vmul.f32 %v2080, %v2091
  %v2099 = vmul.f32 %v2081, %v2091
  %v2100 = vmul.f32 %v2082, %v2091
  %v2101 = vmul.f32 %v2083, %v2091
  %v2102 = vmul.f32 %v2084, %v2091
  %v2103 = vmul.f32 %v2085, %v2091
  %v2104 = vmul.f32 %v2086, %v2091
  %v2106 = vlaneseq
  %v2107 = vshrl.u32 %v2106, 7
  %v2108 = vsub.s32 0, %v2107
  %v2109 = vrot.slane %v1929, %v2108
  %v2111 = vadd.f32 %v2093, %v2109
  %v2112 = vadd.f32 %v2094, %v2109
  %v2113 = vadd.f32 %v2095, %v2109
  %v2114 = vadd.f32 %v2096, %v2109
  %v2115 = vadd.f32 %v2097, %v2109
  %v2116 = vadd.f32 %v2098, %v2109
  %v2117 = vadd.f32 %v2099, %v2109
  %v2118 = vadd.f32 %v2100, %v2109
  %v2119 = vadd.f32 %v2101, %v2109
  %v2120 = vadd.f32 %v2102, %v2109
  %v2121 = vadd.f32 %v2103, %v2109
  %v2122 = vadd.f32 %v2104, %v2109
  %v2123 = vld [vmem:[%s12] sm:$0xff]
  %v2124 = vld [vmem:[%s12 + $0x8] sm:$0x1f]
  %v2125 = vld [vmem:[%s13] sm:$0x1]
  %v2126 = vld [vmem:[%s10] sm:$0xff]
  %v2127 = vld [vmem:[%s10 + $0x8] sm:$0x1f]
  %v2128 = vld [vmem:[%s11] sm:$0x1]
  %v2130 = vlaneseq
  %v2131 = vshrl.u32 %v2130, 7
  %v2132 = vsub.s32 0, %v2131
  %v2133 = vrot.slane %v2128, %v2132
  %v2136 = vsel %vm799, %v2111, 0
  %v2139 = vsel %vm799, %v2112, 0
  %v2142 = vsel %vm799, %v2113, 0
  %v2145 = vsel %vm799, %v2114, 0
  %v2148 = vsel %vm799, %v2115, 0
  %v2151 = vsel %vm799, %v2116, 0
  %v2154 = vsel %vm799, %v2117, 0
  %v2157 = vsel %vm799, %v2118, 0
  %v2160 = vsel %vm799, %v2119, 0
  %v2163 = vsel %vm799, %v2120, 0
  %v2166 = vsel %vm799, %v2121, 0
  %v2169 = vsel %vm799, %v2122, 0
  %v2172 = vsel %vm836, %v2127, 0
  %2174 = vmatprep.subr.mxu0 0.0
  %2175 = vmatpush1.msra.mxu0 %v2126
  %2176 = vmatprep.subr.mxu0 0.0
  %2177 = vmatpush1.msra.mxu0 %v2172
  %2178 = vmatprep.subr.mxu0 0.0
  %2179 = vmatpush1.msra.mxu0 0.0
  %2180 = vmatprep.subr.mxu0 0.0
  %2181 = vmatpush1.msra.mxu0 0.0
  %2182 = vmatprep.subr.mxu0 0.0
  %2183 = vmatpush1.msra.mxu0 0.0
  %2184 = vmatprep.subr.mxu0 0.0
  %2185 = vmatpush1.msra.mxu0 0.0
  %2186 = vmatprep.subr.mxu0 0.0
  %2187 = vmatpush1.msra.mxu0 0.0
  %2188 = vmatprep.subr.mxu0 0.0
  %2189 = vmatpush1.msra.mxu0 0.0
  %2190 = vmatprep.subr.mxu0 0.0
  %2191 = vmatpush1.msra.mxu0 0.0
  %2192 = vmatprep.subr.mxu0 0.0
  %2193 = vmatpush1.msra.mxu0 0.0
  %2194 = vmatprep.subr.mxu0 0.0
  %2195 = vmatpush1.msra.mxu0 0.0
  %2196 = vmatprep.subr.mxu0 0.0
  %2197 = vmatpush1.msra.mxu0 0.0
  %2198 = vmatprep.subr.mxu0 0.0
  %2199 = vmatpush1.msra.mxu0 0.0
  %2200 = vmatprep.subr.mxu0 0.0
  %2201 = vmatpush1.msra.mxu0 0.0
  %2202 = vmatprep.subr.mxu0 0.0
  %2203 = vmatpush1.msra.mxu0 0.0
  %2204 = vmatprep.subr.mxu0 0.0
  %2205 = vmatpush1.msra.mxu0 0.0
  %2206 = vmatprep.subr.mxu0 0.0
  %2207 = vmatpush1.msra.mxu0 0.0
  %2208 = vmatprep.subr.mxu0 0.0
  %2209 = vmatpush1.msra.mxu0 0.0
  %2210 = vmatprep.subr.mxu0 0.0
  %2211 = vmatpush1.msra.mxu0 0.0
  %2212 = vmatprep.subr.mxu0 0.0
  %2213 = vmatpush1.msra.mxu0 0.0
  %2214 = vmatprep.subr.mxu0 0.0
  %2215 = vmatpush1.msra.mxu0 0.0
  %2216 = vmatprep.subr.mxu0 0.0
  %2217 = vmatpush1.msra.mxu0 0.0
  %2218 = vmatprep.subr.mxu0 0.0
  %2219 = vmatpush1.msra.mxu0 0.0
  %2220 = vmatprep.subr.mxu0 0.0
  %2221 = vmatpush1.msra.mxu0 0.0
  %2222 = vmatprep.subr.mxu0 0.0
  %2223 = vmatpush1.msra.mxu0 0.0
  %2224 = vmatprep.subr.mxu0 0.0
  %2225 = vmatpush1.msra.mxu0 0.0
  %2226 = vmatprep.subr.mxu0 0.0
  %2227 = vmatpush1.msra.mxu0 0.0
  %2228 = vmatprep.subr.mxu0 0.0
  %2229 = vmatpush1.msra.mxu0 0.0
  %2230 = vmatprep.subr.mxu0 0.0
  %2231 = vmatpush1.msra.mxu0 0.0
  %2232 = vmatprep.subr.mxu0 0.0
  %2233 = vmatpush1.msra.mxu0 0.0
  %2234 = vmatprep.subr.mxu0 0.0
  %2235 = vmatpush1.msra.mxu0 0.0
  %2236 = vmatprep.subr.mxu0 0.0
  %2237 = vmatpush1.msra.mxu0 0.0
  %2238 = vmatprep.mubr.f32.mxu0 0.0
  %2239 = vmatmul.mubr.f32.gmra.mrb[0].mxu0 %v2136
  %v2240 = vpop.f32.mrb[0].mxu0
  %v2241 = vadd.f32 %v2133, %v2240
  %v2242 = vpop.f32.mrb[0].mxu0
  %2243 = vmatprep.mubr.f32.mxu0 0.0
  %2244 = vmatmul.mubr.f32.gmra.mrb[0].mxu0 %v2139
  %v2245 = vpop.f32.mrb[0].mxu0
  %v2246 = vadd.f32 %v2133, %v2245
  %v2247 = vpop.f32.mrb[0].mxu0
  %2248 = vmatprep.mubr.f32.mxu0 0.0
  %2249 = vmatmul.mubr.f32.gmra.mrb[0].mxu0 %v2142
  %v2250 = vpop.f32.mrb[0].mxu0
  %v2251 = vadd.f32 %v2133, %v2250
  %v2252 = vpop.f32.mrb[0].mxu0
  %2253 = vmatprep.mubr.f32.mxu0 0.0
  %2254 = vmatmul.mubr.f32.gmra.mrb[0].mxu0 %v2145
  %v2255 = vpop.f32.mrb[0].mxu0
  %v2256 = vadd.f32 %v2133, %v2255
  %v2257 = vpop.f32.mrb[0].mxu0
  %2258 = vmatprep.mubr.f32.mxu0 0.0
  %2259 = vmatmul.mubr.f32.gmra.mrb[0].mxu0 %v2148
  %v2260 = vpop.f32.mrb[0].mxu0
  %v2261 = vadd.f32 %v2133, %v2260
  %v2262 = vpop.f32.mrb[0].mxu0
  %2263 = vmatprep.mubr.f32.mxu0 0.0
  %2264 = vmatmul.mubr.f32.gmra.mrb[0].mxu0 %v2151
  %v2265 = vpop.f32.mrb[0].mxu0
  %v2266 = vadd.f32 %v2133, %v2265
  %v2267 = vpop.f32.mrb[0].mxu0
  %2268 = vmatprep.mubr.f32.mxu0 0.0
  %2269 = vmatmul.mubr.f32.gmra.mrb[0].mxu0 %v2154
  %v2270 = vpop.f32.mrb[0].mxu0
  %v2271 = vadd.f32 %v2133, %v2270
  %v2272 = vpop.f32.mrb[0].mxu0
  %2273 = vmatprep.mubr.f32.mxu0 0.0
  %2274 = vmatmul.mubr.f32.gmra.mrb[0].mxu0 %v2157
  %v2275 = vpop.f32.mrb[0].mxu0
  %v2276 = vadd.f32 %v2133, %v2275
  %v2277 = vpop.f32.mrb[0].mxu0
  %2278 = vmatprep.mubr.f32.mxu0 0.0
  %2279 = vmatmul.mubr.f32.gmra.mrb[0].mxu0 %v2160
  %v2280 = vpop.f32.mrb[0].mxu0
  %v2281 = vadd.f32 %v2133, %v2280
  %v2282 = vpop.f32.mrb[0].mxu0
  %2283 = vmatprep.mubr.f32.mxu0 0.0
  %2284 = vmatmul.mubr.f32.gmra.mrb[0].mxu0 %v2163
  %v2285 = vpop.f32.mrb[0].mxu0
  %v2286 = vadd.f32 %v2133, %v2285
  %v2287 = vpop.f32.mrb[0].mxu0
  %2288 = vmatprep.mubr.f32.mxu0 0.0
  %2289 = vmatmul.mubr.f32.gmra.mrb[0].mxu0 %v2166
  %v2290 = vpop.f32.mrb[0].mxu0
  %v2291 = vadd.f32 %v2133, %v2290
  %v2292 = vpop.f32.mrb[0].mxu0
  %2293 = vmatprep.mubr.f32.mxu0 0.0
  %2294 = vmatmul.mubr.f32.gmra.mrb[0].mxu0 %v2169
  %v2295 = vpop.f32.mrb[0].mxu0
  %v2296 = vadd.f32 %v2133, %v2295
  %v2297 = vpop.f32.mrb[0].mxu0
  %2298 = vdwg.mxu0
  %s2299 = scalar_lea.vmem %s10, 16
  %v2300 = vld [vmem:[%s2299] sm:$0xff]
  %v2301 = vld [vmem:[%s2299 + $0x8] sm:$0x1f]
  %s2302 = scalar_lea.vmem %s11, 1
  %v2303 = vld [vmem:[%s2302] sm:$0x1]
  %v2305 = vlaneseq
  %v2306 = vshrl.u32 %v2305, 7
  %v2307 = vsub.s32 0, %v2306
  %v2308 = vrot.slane %v2303, %v2307
  %v2311 = vsel %vm836, %v2301, 0
  %2313 = vmatprep.subr.mxu0 0.0
  %2314 = vmatpush1.msra.mxu0 %v2300
  %2315 = vmatprep.subr.mxu0 0.0
  %2316 = vmatpush1.msra.mxu0 %v2311
  %2317 = vmatprep.subr.mxu0 0.0
  %2318 = vmatpush1.msra.mxu0 0.0
  %2319 = vmatprep.subr.mxu0 0.0
  %2320 = vmatpush1.msra.mxu0 0.0
  %2321 = vmatprep.subr.mxu0 0.0
  %2322 = vmatpush1.msra.mxu0 0.0
  %2323 = vmatprep.subr.mxu0 0.0
  %2324 = vmatpush1.msra.mxu0 0.0
  %2325 = vmatprep.subr.mxu0 0.0
  %2326 = vmatpush1.msra.mxu0 0.0
  %2327 = vmatprep.subr.mxu0 0.0
  %2328 = vmatpush1.msra.mxu0 0.0
  %2329 = vmatprep.subr.mxu0 0.0
  %2330 = vmatpush1.msra.mxu0 0.0
  %2331 = vmatprep.subr.mxu0 0.0
  %2332 = vmatpush1.msra.mxu0 0.0
  %2333 = vmatprep.subr.mxu0 0.0
  %2334 = vmatpush1.msra.mxu0 0.0
  %2335 = vmatprep.subr.mxu0 0.0
  %2336 = vmatpush1.msra.mxu0 0.0
  %2337 = vmatprep.subr.mxu0 0.0
  %2338 = vmatpush1.msra.mxu0 0.0
  %2339 = vmatprep.subr.mxu0 0.0
  %2340 = vmatpush1.msra.mxu0 0.0
  %2341 = vmatprep.subr.mxu0 0.0
  %2342 = vmatpush1.msra.mxu0 0.0
  %2343 = vmatprep.subr.mxu0 0.0
  %2344 = vmatpush1.msra.mxu0 0.0
  %2345 = vmatprep.subr.mxu0 0.0
  %2346 = vmatpush1.msra.mxu0 0.0
  %2347 = vmatprep.subr.mxu0 0.0
  %2348 = vmatpush1.msra.mxu0 0.0
  %2349 = vmatprep.subr.mxu0 0.0
  %2350 = vmatpush1.msra.mxu0 0.0
  %2351 = vmatprep.subr.mxu0 0.0
  %2352 = vmatpush1.msra.mxu0 0.0
  %2353 = vmatprep.subr.mxu0 0.0
  %2354 = vmatpush1.msra.mxu0 0.0
  %2355 = vmatprep.subr.mxu0 0.0
  %2356 = vmatpush1.msra.mxu0 0.0
  %2357 = vmatprep.subr.mxu0 0.0
  %2358 = vmatpush1.msra.mxu0 0.0
  %2359 = vmatprep.subr.mxu0 0.0
  %2360 = vmatpush1.msra.mxu0 0.0
  %2361 = vmatprep.subr.mxu0 0.0
  %2362 = vmatpush1.msra.mxu0 0.0
  %2363 = vmatprep.subr.mxu0 0.0
  %2364 = vmatpush1.msra.mxu0 0.0
  %2365 = vmatprep.subr.mxu0 0.0
  %2366 = vmatpush1.msra.mxu0 0.0
  %2367 = vmatprep.subr.mxu0 0.0
  %2368 = vmatpush1.msra.mxu0 0.0
  %2369 = vmatprep.subr.mxu0 0.0
  %2370 = vmatpush1.msra.mxu0 0.0
  %2371 = vmatprep.subr.mxu0 0.0
  %2372 = vmatpush1.msra.mxu0 0.0
  %2373 = vmatprep.subr.mxu0 0.0
  %2374 = vmatpush1.msra.mxu0 0.0
  %2375 = vmatprep.subr.mxu0 0.0
  %2376 = vmatpush1.msra.mxu0 0.0
  %2377 = vmatprep.mubr.f32.mxu0 0.0
  %2378 = vmatmul.mubr.f32.gmra.mrb[0].mxu0 %v2136
  %v2379 = vpop.f32.mrb[0].mxu0
  %v2380 = vadd.f32 %v2308, %v2379
  %v2381 = vpop.f32.mrb[0].mxu0
  %2382 = vmatprep.mubr.f32.mxu0 0.0
  %2383 = vmatmul.mubr.f32.gmra.mrb[0].mxu0 %v2139
  %v2384 = vpop.f32.mrb[0].mxu0
  %v2385 = vadd.f32 %v2308, %v2384
  %v2386 = vpop.f32.mrb[0].mxu0
  %2387 = vmatprep.mubr.f32.mxu0 0.0
  %2388 = vmatmul.mubr.f32.gmra.mrb[0].mxu0 %v2142
  %v2389 = vpop.f32.mrb[0].mxu0
  %v2390 = vadd.f32 %v2308, %v2389
  %v2391 = vpop.f32.mrb[0].mxu0
  %2392 = vmatprep.mubr.f32.mxu0 0.0
  %2393 = vmatmul.mubr.f32.gmra.mrb[0].mxu0 %v2145
  %v2394 = vpop.f32.mrb[0].mxu0
  %v2395 = vadd.f32 %v2308, %v2394
  %v2396 = vpop.f32.mrb[0].mxu0
  %2397 = vmatprep.mubr.f32.mxu0 0.0
  %2398 = vmatmul.mubr.f32.gmra.mrb[0].mxu0 %v2148
  %v2399 = vpop.f32.mrb[0].mxu0
  %v2400 = vadd.f32 %v2308, %v2399
  %v2401 = vpop.f32.mrb[0].mxu0
  %2402 = vmatprep.mubr.f32.mxu0 0.0
  %2403 = vmatmul.mubr.f32.gmra.mrb[0].mxu0 %v2151
  %v2404 = vpop.f32.mrb[0].mxu0
  %v2405 = vadd.f32 %v2308, %v2404
  %v2406 = vpop.f32.mrb[0].mxu0
  %2407 = vmatprep.mubr.f32.mxu0 0.0
  %2408 = vmatmul.mubr.f32.gmra.mrb[0].mxu0 %v2154
  %v2409 = vpop.f32.mrb[0].mxu0
  %v2410 = vadd.f32 %v2308, %v2409
  %v2411 = vpop.f32.mrb[0].mxu0
  %2412 = vmatprep.mubr.f32.mxu0 0.0
  %2413 = vmatmul.mubr.f32.gmra.mrb[0].mxu0 %v2157
  %v2414 = vpop.f32.mrb[0].mxu0
  %v2415 = vadd.f32 %v2308, %v2414
  %v2416 = vpop.f32.mrb[0].mxu0
  %2417 = vmatprep.mubr.f32.mxu0 0.0
  %2418 = vmatmul.mubr.f32.gmra.mrb[0].mxu0 %v2160
  %v2419 = vpop.f32.mrb[0].mxu0
  %v2420 = vadd.f32 %v2308, %v2419
  %v2421 = vpop.f32.mrb[0].mxu0
  %2422 = vmatprep.mubr.f32.mxu0 0.0
  %2423 = vmatmul.mubr.f32.gmra.mrb[0].mxu0 %v2163
  %v2424 = vpop.f32.mrb[0].mxu0
  %v2425 = vadd.f32 %v2308, %v2424
  %v2426 = vpop.f32.mrb[0].mxu0
  %2427 = vmatprep.mubr.f32.mxu0 0.0
  %2428 = vmatmul.mubr.f32.gmra.mrb[0].mxu0 %v2166
  %v2429 = vpop.f32.mrb[0].mxu0
  %v2430 = vadd.f32 %v2308, %v2429
  %v2431 = vpop.f32.mrb[0].mxu0
  %2432 = vmatprep.mubr.f32.mxu0 0.0
  %2433 = vmatmul.mubr.f32.gmra.mrb[0].mxu0 %v2169
  %v2434 = vpop.f32.mrb[0].mxu0
  %v2435 = vadd.f32 %v2308, %v2434
  %v2436 = vpop.f32.mrb[0].mxu0
  %2437 = vdwg.mxu0
  %s2438 = scalar_lea.vmem %s10, 32
  %v2439 = vld [vmem:[%s2438] sm:$0xff]
  %v2440 = vld [vmem:[%s2438 + $0x8] sm:$0x1f]
  %s2441 = scalar_lea.vmem %s11, 2
  %v2442 = vld [vmem:[%s2441] sm:$0x1]
  %v2444 = vlaneseq
  %v2445 = vshrl.u32 %v2444, 7
  %v2446 = vsub.s32 0, %v2445
  %v2447 = vrot.slane %v2442, %v2446
  %v2450 = vsel %vm836, %v2440, 0
  %2452 = vmatprep.subr.mxu0 0.0
  %2453 = vmatpush1.msra.mxu0 %v2439
  %2454 = vmatprep.subr.mxu0 0.0
  %2455 = vmatpush1.msra.mxu0 %v2450
  %2456 = vmatprep.subr.mxu0 0.0
  %2457 = vmatpush1.msra.mxu0 0.0
  %2458 = vmatprep.subr.mxu0 0.0
  %2459 = vmatpush1.msra.mxu0 0.0
  %2460 = vmatprep.subr.mxu0 0.0
  %2461 = vmatpush1.msra.mxu0 0.0
  %2462 = vmatprep.subr.mxu0 0.0
  %2463 = vmatpush1.msra.mxu0 0.0
  %2464 = vmatprep.subr.mxu0 0.0
  %2465 = vmatpush1.msra.mxu0 0.0
  %2466 = vmatprep.subr.mxu0 0.0
  %2467 = vmatpush1.msra.mxu0 0.0
  %2468 = vmatprep.subr.mxu0 0.0
  %2469 = vmatpush1.msra.mxu0 0.0
  %2470 = vmatprep.subr.mxu0 0.0
  %2471 = vmatpush1.msra.mxu0 0.0
  %2472 = vmatprep.subr.mxu0 0.0
  %2473 = vmatpush1.msra.mxu0 0.0
  %2474 = vmatprep.subr.mxu0 0.0
  %2475 = vmatpush1.msra.mxu0 0.0
  %2476 = vmatprep.subr.mxu0 0.0
  %2477 = vmatpush1.msra.mxu0 0.0
  %2478 = vmatprep.subr.mxu0 0.0
  %2479 = vmatpush1.msra.mxu0 0.0
  %2480 = vmatprep.subr.mxu0 0.0
  %2481 = vmatpush1.msra.mxu0 0.0
  %2482 = vmatprep.subr.mxu0 0.0
  %2483 = vmatpush1.msra.mxu0 0.0
  %2484 = vmatprep.subr.mxu0 0.0
  %2485 = vmatpush1.msra.mxu0 0.0
  %2486 = vmatprep.subr.mxu0 0.0
  %2487 = vmatpush1.msra.mxu0 0.0
  %2488 = vmatprep.subr.mxu0 0.0
  %2489 = vmatpush1.msra.mxu0 0.0
  %2490 = vmatprep.subr.mxu0 0.0
  %2491 = vmatpush1.msra.mxu0 0.0
  %2492 = vmatprep.subr.mxu0 0.0
  %2493 = vmatpush1.msra.mxu0 0.0
  %2494 = vmatprep.subr.mxu0 0.0
  %2495 = vmatpush1.msra.mxu0 0.0
  %2496 = vmatprep.subr.mxu0 0.0
  %2497 = vmatpush1.msra.mxu0 0.0
  %2498 = vmatprep.subr.mxu0 0.0
  %2499 = vmatpush1.msra.mxu0 0.0
  %2500 = vmatprep.subr.mxu0 0.0
  %2501 = vmatpush1.msra.mxu0 0.0
  %2502 = vmatprep.subr.mxu0 0.0
  %2503 = vmatpush1.msra.mxu0 0.0
  %2504 = vmatprep.subr.mxu0 0.0
  %2505 = vmatpush1.msra.mxu0 0.0
  %2506 = vmatprep.subr.mxu0 0.0
  %2507 = vmatpush1.msra.mxu0 0.0
  %2508 = vmatprep.subr.mxu0 0.0
  %2509 = vmatpush1.msra.mxu0 0.0
  %2510 = vmatprep.subr.mxu0 0.0
  %2511 = vmatpush1.msra.mxu0 0.0
  %2512 = vmatprep.subr.mxu0 0.0
  %2513 = vmatpush1.msra.mxu0 0.0
  %2514 = vmatprep.subr.mxu0 0.0
  %2515 = vmatpush1.msra.mxu0 0.0
  %2516 = vmatprep.mubr.f32.mxu0 0.0
  %2517 = vmatmul.mubr.f32.gmra.mrb[0].mxu0 %v2136
  %v2518 = vpop.f32.mrb[0].mxu0
  %v2519 = vadd.f32 %v2447, %v2518
  %v2520 = vpop.f32.mrb[0].mxu0
  %2521 = vmatprep.mubr.f32.mxu0 0.0
  %2522 = vmatmul.mubr.f32.gmra.mrb[0].mxu0 %v2139
  %v2523 = vpop.f32.mrb[0].mxu0
  %v2524 = vadd.f32 %v2447, %v2523
  %v2525 = vpop.f32.mrb[0].mxu0
  %2526 = vmatprep.mubr.f32.mxu0 0.0
  %2527 = vmatmul.mubr.f32.gmra.mrb[0].mxu0 %v2142
  %v2528 = vpop.f32.mrb[0].mxu0
  %v2529 = vadd.f32 %v2447, %v2528
  %v2530 = vpop.f32.mrb[0].mxu0
  %2531 = vmatprep.mubr.f32.mxu0 0.0
  %2532 = vmatmul.mubr.f32.gmra.mrb[0].mxu0 %v2145
  %v2533 = vpop.f32.mrb[0].mxu0
  %v2534 = vadd.f32 %v2447, %v2533
  %v2535 = vpop.f32.mrb[0].mxu0
  %2536 = vmatprep.mubr.f32.mxu0 0.0
  %2537 = vmatmul.mubr.f32.gmra.mrb[0].mxu0 %v2148
  %v2538 = vpop.f32.mrb[0].mxu0
  %v2539 = vadd.f32 %v2447, %v2538
  %v2540 = vpop.f32.mrb[0].mxu0
  %2541 = vmatprep.mubr.f32.mxu0 0.0
  %2542 = vmatmul.mubr.f32.gmra.mrb[0].mxu0 %v2151
  %v2543 = vpop.f32.mrb[0].mxu0
  %v2544 = vadd.f32 %v2447, %v2543
  %v2545 = vpop.f32.mrb[0].mxu0
  %2546 = vmatprep.mubr.f32.mxu0 0.0
  %2547 = vmatmul.mubr.f32.gmra.mrb[0].mxu0 %v2154
  %v2548 = vpop.f32.mrb[0].mxu0
  %v2549 = vadd.f32 %v2447, %v2548
  %v2550 = vpop.f32.mrb[0].mxu0
  %2551 = vmatprep.mubr.f32.mxu0 0.0
  %2552 = vmatmul.mubr.f32.gmra.mrb[0].mxu0 %v2157
  %v2553 = vpop.f32.mrb[0].mxu0
  %v2554 = vadd.f32 %v2447, %v2553
  %v2555 = vpop.f32.mrb[0].mxu0
  %2556 = vmatprep.mubr.f32.mxu0 0.0
  %2557 = vmatmul.mubr.f32.gmra.mrb[0].mxu0 %v2160
  %v2558 = vpop.f32.mrb[0].mxu0
  %v2559 = vadd.f32 %v2447, %v2558
  %v2560 = vpop.f32.mrb[0].mxu0
  %2561 = vmatprep.mubr.f32.mxu0 0.0
  %2562 = vmatmul.mubr.f32.gmra.mrb[0].mxu0 %v2163
  %v2563 = vpop.f32.mrb[0].mxu0
  %v2564 = vadd.f32 %v2447, %v2563
  %v2565 = vpop.f32.mrb[0].mxu0
  %2566 = vmatprep.mubr.f32.mxu0 0.0
  %2567 = vmatmul.mubr.f32.gmra.mrb[0].mxu0 %v2166
  %v2568 = vpop.f32.mrb[0].mxu0
  %v2569 = vadd.f32 %v2447, %v2568
  %v2570 = vpop.f32.mrb[0].mxu0
  %2571 = vmatprep.mubr.f32.mxu0 0.0
  %2572 = vmatmul.mubr.f32.gmra.mrb[0].mxu0 %v2169
  %v2573 = vpop.f32.mrb[0].mxu0
  %v2574 = vadd.f32 %v2447, %v2573
  %v2575 = vpop.f32.mrb[0].mxu0
  %2576 = vdwg.mxu0
  %v2578 = vsel %vm799, %v2241, 0
  %v2581 = vsel %vm799, %v2246, 0
  %v2584 = vsel %vm799, %v2251, 0
  %v2587 = vsel %vm799, %v2256, 0
  %v2590 = vsel %vm799, %v2261, 0
  %v2593 = vsel %vm799, %v2266, 0
  %v2596 = vsel %vm799, %v2271, 0
  %v2599 = vsel %vm799, %v2276, 0
  %v2602 = vsel %vm799, %v2281, 0
  %v2605 = vsel %vm799, %v2286, 0
  %v2608 = vsel %vm799, %v2291, 0
  %v2611 = vsel %vm799, %v2296, 0
  %v2614 = vsel %vm799, %v2380, 0
  %v2617 = vsel %vm799, %v2385, 0
  %v2620 = vsel %vm799, %v2390, 0
  %v2623 = vsel %vm799, %v2395, 0
  %v2626 = vsel %vm799, %v2400, 0
  %v2629 = vsel %vm799, %v2405, 0
  %v2632 = vsel %vm799, %v2410, 0
  %v2635 = vsel %vm799, %v2415, 0
  %v2638 = vsel %vm799, %v2420, 0
  %v2641 = vsel %vm799, %v2425, 0
  %v2644 = vsel %vm799, %v2430, 0
  %v2647 = vsel %vm799, %v2435, 0
  %2649 = vmatprep.subr.mxu0 0.0
  %2650 = vmatpush1.xpose.msra.mxu0 %v2614
  %2651 = vmatprep.subr.mxu0 0.0
  %2652 = vmatpush1.xpose.msra.mxu0 %v2617
  %2653 = vmatprep.subr.mxu0 0.0
  %2654 = vmatpush1.xpose.msra.mxu0 %v2620
  %2655 = vmatprep.subr.mxu0 0.0
  %2656 = vmatpush1.xpose.msra.mxu0 %v2623
  %2657 = vmatprep.subr.mxu0 0.0
  %2658 = vmatpush1.xpose.msra.mxu0 %v2626
  %2659 = vmatprep.subr.mxu0 0.0
  %2660 = vmatpush1.xpose.msra.mxu0 %v2629
  %2661 = vmatprep.subr.mxu0 0.0
  %2662 = vmatpush1.xpose.msra.mxu0 %v2632
  %2663 = vmatprep.subr.mxu0 0.0
  %2664 = vmatpush1.xpose.msra.mxu0 %v2635
  %2665 = vmatprep.subr.mxu0 0.0
  %2666 = vmatpush1.xpose.msra.mxu0 %v2638
  %2667 = vmatprep.subr.mxu0 0.0
  %2668 = vmatpush1.xpose.msra.mxu0 %v2641
  %2669 = vmatprep.subr.mxu0 0.0
  %2670 = vmatpush1.xpose.msra.mxu0 %v2644
  %2671 = vmatprep.subr.mxu0 0.0
  %2672 = vmatpush1.xpose.msra.mxu0 %v2647
  %2673 = vmatprep.subr.mxu0 0.0
  %2674 = vmatpush1.xpose.msra.mxu0 0.0
  %2675 = vmatprep.subr.mxu0 0.0
  %2676 = vmatpush1.xpose.msra.mxu0 0.0
  %2677 = vmatprep.subr.mxu0 0.0
  %2678 = vmatpush1.xpose.msra.mxu0 0.0
  %2679 = vmatprep.subr.mxu0 0.0
  %2680 = vmatpush1.xpose.msra.mxu0 0.0
  %2681 = vmatprep.subr.mxu0 0.0
  %2682 = vmatpush1.xpose.msra.mxu0 0.0
  %2683 = vmatprep.subr.mxu0 0.0
  %2684 = vmatpush1.xpose.msra.mxu0 0.0
  %2685 = vmatprep.subr.mxu0 0.0
  %2686 = vmatpush1.xpose.msra.mxu0 0.0
  %2687 = vmatprep.subr.mxu0 0.0
  %2688 = vmatpush1.xpose.msra.mxu0 0.0
  %2689 = vmatprep.subr.mxu0 0.0
  %2690 = vmatpush1.xpose.msra.mxu0 0.0
  %2691 = vmatprep.subr.mxu0 0.0
  %2692 = vmatpush1.xpose.msra.mxu0 0.0
  %2693 = vmatprep.subr.mxu0 0.0
  %2694 = vmatpush1.xpose.msra.mxu0 0.0
  %2695 = vmatprep.subr.mxu0 0.0
  %2696 = vmatpush1.xpose.msra.mxu0 0.0
  %2697 = vmatprep.subr.mxu0 0.0
  %2698 = vmatpush1.xpose.msra.mxu0 0.0
  %2699 = vmatprep.subr.mxu0 0.0
  %2700 = vmatpush1.xpose.msra.mxu0 0.0
  %2701 = vmatprep.subr.mxu0 0.0
  %2702 = vmatpush1.xpose.msra.mxu0 0.0
  %2703 = vmatprep.subr.mxu0 0.0
  %2704 = vmatpush1.xpose.msra.mxu0 0.0
  %2705 = vmatprep.subr.mxu0 0.0
  %2706 = vmatpush1.xpose.msra.mxu0 0.0
  %2707 = vmatprep.subr.mxu0 0.0
  %2708 = vmatpush1.xpose.msra.mxu0 0.0
  %2709 = vmatprep.subr.mxu0 0.0
  %2710 = vmatpush1.xpose.msra.mxu0 0.0
  %2711 = vmatprep.subr.mxu0 0.0
  %2712 = vmatpush1.xpose.msra.mxu0 0.0
  %2713 = vmatprep.mubr.f32.mxu0 0.0
  %2714 = vmatmul.mubr.f32.gmra.mrb[0].mxu0 %v2578
  %v2715 = vpop.f32.mrb[0].mxu0
  %v2716 = vadd.f32 0.0, %v2715
  %v2717 = vpop.f32.mrb[0].mxu0
  %2718 = vmatprep.mubr.f32.mxu0 0.0
  %2719 = vmatmul.mubr.f32.gmra.mrb[0].mxu0 %v2581
  %v2720 = vpop.f32.mrb[0].mxu0
  %v2721 = vadd.f32 0.0, %v2720
  %v2722 = vpop.f32.mrb[0].mxu0
  %2723 = vmatprep.mubr.f32.mxu0 0.0
  %2724 = vmatmul.mubr.f32.gmra.mrb[0].mxu0 %v2584
  %v2725 = vpop.f32.mrb[0].mxu0
  %v2726 = vadd.f32 0.0, %v2725
  %v2727 = vpop.f32.mrb[0].mxu0
  %2728 = vmatprep.mubr.f32.mxu0 0.0
  %2729 = vmatmul.mubr.f32.gmra.mrb[0].mxu0 %v2587
  %v2730 = vpop.f32.mrb[0].mxu0
  %v2731 = vadd.f32 0.0, %v2730
  %v2732 = vpop.f32.mrb[0].mxu0
  %2733 = vmatprep.mubr.f32.mxu0 0.0
  %2734 = vmatmul.mubr.f32.gmra.mrb[0].mxu0 %v2590
  %v2735 = vpop.f32.mrb[0].mxu0
  %v2736 = vadd.f32 0.0, %v2735
  %v2737 = vpop.f32.mrb[0].mxu0
  %2738 = vmatprep.mubr.f32.mxu0 0.0
  %2739 = vmatmul.mubr.f32.gmra.mrb[0].mxu0 %v2593
  %v2740 = vpop.f32.mrb[0].mxu0
  %v2741 = vadd.f32 0.0, %v2740
  %v2742 = vpop.f32.mrb[0].mxu0
  %2743 = vmatprep.mubr.f32.mxu0 0.0
  %2744 = vmatmul.mubr.f32.gmra.mrb[0].mxu0 %v2596
  %v2745 = vpop.f32.mrb[0].mxu0
  %v2746 = vadd.f32 0.0, %v2745
  %v2747 = vpop.f32.mrb[0].mxu0
  %2748 = vmatprep.mubr.f32.mxu0 0.0
  %2749 = vmatmul.mubr.f32.gmra.mrb[0].mxu0 %v2599
  %v2750 = vpop.f32.mrb[0].mxu0
  %v2751 = vadd.f32 0.0, %v2750
  %v2752 = vpop.f32.mrb[0].mxu0
  %2753 = vmatprep.mubr.f32.mxu0 0.0
  %2754 = vmatmul.mubr.f32.gmra.mrb[0].mxu0 %v2602
  %v2755 = vpop.f32.mrb[0].mxu0
  %v2756 = vadd.f32 0.0, %v2755
  %v2757 = vpop.f32.mrb[0].mxu0
  %2758 = vmatprep.mubr.f32.mxu0 0.0
  %2759 = vmatmul.mubr.f32.gmra.mrb[0].mxu0 %v2605
  %v2760 = vpop.f32.mrb[0].mxu0
  %v2761 = vadd.f32 0.0, %v2760
  %v2762 = vpop.f32.mrb[0].mxu0
  %2763 = vmatprep.mubr.f32.mxu0 0.0
  %2764 = vmatmul.mubr.f32.gmra.mrb[0].mxu0 %v2608
  %v2765 = vpop.f32.mrb[0].mxu0
  %v2766 = vadd.f32 0.0, %v2765
  %v2767 = vpop.f32.mrb[0].mxu0
  %2768 = vmatprep.mubr.f32.mxu0 0.0
  %2769 = vmatmul.mubr.f32.gmra.mrb[0].mxu0 %v2611
  %v2770 = vpop.f32.mrb[0].mxu0
  %v2771 = vadd.f32 0.0, %v2770
  %v2772 = vpop.f32.mrb[0].mxu0
  %2773 = vdwg.mxu0
  %v2774 = vmul.f32 %v2716, 0.2773501
  %v2775 = vmul.f32 %v2721, 0.2773501
  %v2776 = vmul.f32 %v2726, 0.2773501
  %v2777 = vmul.f32 %v2731, 0.2773501
  %v2778 = vmul.f32 %v2736, 0.2773501
  %v2779 = vmul.f32 %v2741, 0.2773501
  %v2780 = vmul.f32 %v2746, 0.2773501
  %v2781 = vmul.f32 %v2751, 0.2773501
  %v2782 = vmul.f32 %v2756, 0.2773501
  %v2783 = vmul.f32 %v2761, 0.2773501
  %v2784 = vmul.f32 %v2766, 0.2773501
  %v2785 = vmul.f32 %v2771, 0.2773501
  %v2786 = vsel %vm1452, %v2774, -inf
  %2787 = vmax.xlane.f32.xlu0 %v2786
  %v2788 = vpop.xlane.xlu0 %2787
  %v2789 = vsel %vm1452, %v2775, -inf
  %2790 = vmax.xlane.f32.xlu0 %v2789
  %v2791 = vpop.xlane.xlu0 %2790
  %v2792 = vsel %vm1452, %v2776, -inf
  %2793 = vmax.xlane.f32.xlu0 %v2792
  %v2794 = vpop.xlane.xlu0 %2793
  %v2795 = vsel %vm1452, %v2777, -inf
  %2796 = vmax.xlane.f32.xlu0 %v2795
  %v2797 = vpop.xlane.xlu0 %2796
  %v2798 = vsel %vm1452, %v2778, -inf
  %2799 = vmax.xlane.f32.xlu0 %v2798
  %v2800 = vpop.xlane.xlu0 %2799
  %v2801 = vsel %vm1452, %v2779, -inf
  %2802 = vmax.xlane.f32.xlu0 %v2801
  %v2803 = vpop.xlane.xlu0 %2802
  %v2804 = vsel %vm1452, %v2780, -inf
  %2805 = vmax.xlane.f32.xlu0 %v2804
  %v2806 = vpop.xlane.xlu0 %2805
  %v2807 = vsel %vm1452, %v2781, -inf
  %2808 = vmax.xlane.f32.xlu0 %v2807
  %v2809 = vpop.xlane.xlu0 %2808
  %v2810 = vsel %vm1452, %v2782, -inf
  %2811 = vmax.xlane.f32.xlu0 %v2810
  %v2812 = vpop.xlane.xlu0 %2811
  %v2813 = vsel %vm1452, %v2783, -inf
  %2814 = vmax.xlane.f32.xlu0 %v2813
  %v2815 = vpop.xlane.xlu0 %2814
  %v2816 = vsel %vm1452, %v2784, -inf
  %2817 = vmax.xlane.f32.xlu0 %v2816
  %v2818 = vpop.xlane.xlu0 %2817
  %v2819 = vsel %vm1452, %v2785, -inf
  %2820 = vmax.xlane.f32.xlu0 %v2819
  %v2821 = vpop.xlane.xlu0 %2820
  %v2822 = vsub.f32 %v2774, %v2788
  %v2823 = vsub.f32 %v2775, %v2791
  %v2824 = vsub.f32 %v2776, %v2794
  %v2825 = vsub.f32 %v2777, %v2797
  %v2826 = vsub.f32 %v2778, %v2800
  %v2827 = vsub.f32 %v2779, %v2803
  %v2828 = vsub.f32 %v2780, %v2806
  %v2829 = vsub.f32 %v2781, %v2809
  %v2830 = vsub.f32 %v2782, %v2812
  %v2831 = vsub.f32 %v2783, %v2815
  %v2832 = vsub.f32 %v2784, %v2818
  %v2833 = vsub.f32 %v2785, %v2821
  %v2834 = vmul.f32 %v2822, 1.442695
  %v2835 = vpow.pop %v2834
  %v2836 = vmul.f32 %v2823, 1.442695
  %v2837 = vpow.pop %v2836
  %v2838 = vmul.f32 %v2824, 1.442695
  %v2839 = vpow.pop %v2838
  %v2840 = vmul.f32 %v2825, 1.442695
  %v2841 = vpow.pop %v2840
  %v2842 = vmul.f32 %v2826, 1.442695
  %v2843 = vpow.pop %v2842
  %v2844 = vmul.f32 %v2827, 1.442695
  %v2845 = vpow.pop %v2844
  %v2846 = vmul.f32 %v2828, 1.442695
  %v2847 = vpow.pop %v2846
  %v2848 = vmul.f32 %v2829, 1.442695
  %v2849 = vpow.pop %v2848
  %v2850 = vmul.f32 %v2830, 1.442695
  %v2851 = vpow.pop %v2850
  %v2852 = vmul.f32 %v2831, 1.442695
  %v2853 = vpow.pop %v2852
  %v2854 = vmul.f32 %v2832, 1.442695
  %v2855 = vpow.pop %v2854
  %v2856 = vmul.f32 %v2833, 1.442695
  %v2857 = vpow.pop %v2856
  %v2858 = vsel %vm1452, %v2835, 0.0
  %2859 = vadd.xlane.f32.xlu0 %v2858
  %v2860 = vpop.xlane.xlu0 %2859
  %v2861 = vsel %vm1452, %v2837, 0.0
  %2862 = vadd.xlane.f32.xlu0 %v2861
  %v2863 = vpop.xlane.xlu0 %2862
  %v2864 = vsel %vm1452, %v2839, 0.0
  %2865 = vadd.xlane.f32.xlu0 %v2864
  %v2866 = vpop.xlane.xlu0 %2865
  %v2867 = vsel %vm1452, %v2841, 0.0
  %2868 = vadd.xlane.f32.xlu0 %v2867
  %v2869 = vpop.xlane.xlu0 %2868
  %v2870 = vsel %vm1452, %v2843, 0.0
  %2871 = vadd.xlane.f32.xlu0 %v2870
  %v2872 = vpop.xlane.xlu0 %2871
  %v2873 = vsel %vm1452, %v2845, 0.0
  %2874 = vadd.xlane.f32.xlu0 %v2873
  %v2875 = vpop.xlane.xlu0 %2874
  %v2876 = vsel %vm1452, %v2847, 0.0
  %2877 = vadd.xlane.f32.xlu0 %v2876
  %v2878 = vpop.xlane.xlu0 %2877
  %v2879 = vsel %vm1452, %v2849, 0.0
  %2880 = vadd.xlane.f32.xlu0 %v2879
  %v2881 = vpop.xlane.xlu0 %2880
  %v2882 = vsel %vm1452, %v2851, 0.0
  %2883 = vadd.xlane.f32.xlu0 %v2882
  %v2884 = vpop.xlane.xlu0 %2883
  %v2885 = vsel %vm1452, %v2853, 0.0
  %2886 = vadd.xlane.f32.xlu0 %v2885
  %v2887 = vpop.xlane.xlu0 %2886
  %v2888 = vsel %vm1452, %v2855, 0.0
  %2889 = vadd.xlane.f32.xlu0 %v2888
  %v2890 = vpop.xlane.xlu0 %2889
  %v2891 = vsel %vm1452, %v2857, 0.0
  %2892 = vadd.xlane.f32.xlu0 %v2891
  %v2893 = vpop.xlane.xlu0 %2892
  %v2894 = vrcp.pop %v2860
  %v2895 = vmul.f32 %v2835, %v2894
  %v2896 = vrcp.pop %v2863
  %v2897 = vmul.f32 %v2837, %v2896
  %v2898 = vrcp.pop %v2866
  %v2899 = vmul.f32 %v2839, %v2898
  %v2900 = vrcp.pop %v2869
  %v2901 = vmul.f32 %v2841, %v2900
  %v2902 = vrcp.pop %v2872
  %v2903 = vmul.f32 %v2843, %v2902
  %v2904 = vrcp.pop %v2875
  %v2905 = vmul.f32 %v2845, %v2904
  %v2906 = vrcp.pop %v2878
  %v2907 = vmul.f32 %v2847, %v2906
  %v2908 = vrcp.pop %v2881
  %v2909 = vmul.f32 %v2849, %v2908
  %v2910 = vrcp.pop %v2884
  %v2911 = vmul.f32 %v2851, %v2910
  %v2912 = vrcp.pop %v2887
  %v2913 = vmul.f32 %v2853, %v2912
  %v2914 = vrcp.pop %v2890
  %v2915 = vmul.f32 %v2855, %v2914
  %v2916 = vrcp.pop %v2893
  %v2917 = vmul.f32 %v2857, %v2916
  %v2919 = vsel %vm1452, %v2895, 0
  %v2922 = vsel %vm1452, %v2897, 0
  %v2925 = vsel %vm1452, %v2899, 0
  %v2928 = vsel %vm1452, %v2901, 0
  %v2931 = vsel %vm1452, %v2903, 0
  %v2934 = vsel %vm1452, %v2905, 0
  %v2937 = vsel %vm1452, %v2907, 0
  %v2940 = vsel %vm1452, %v2909, 0
  %v2943 = vsel %vm1452, %v2911, 0
  %v2946 = vsel %vm1452, %v2913, 0
  %v2949 = vsel %vm1452, %v2915, 0
  %v2952 = vsel %vm1452, %v2917, 0
  %2954 = vmatprep.subr.mxu0 0.0
  %2955 = vmatpush1.msra.mxu0 %v2519
  %2956 = vmatprep.subr.mxu0 0.0
  %2957 = vmatpush1.msra.mxu0 %v2524
  %2958 = vmatprep.subr.mxu0 0.0
  %2959 = vmatpush1.msra.mxu0 %v2529
  %2960 = vmatprep.subr.mxu0 0.0
  %2961 = vmatpush1.msra.mxu0 %v2534
  %2962 = vmatprep.subr.mxu0 0.0
  %2963 = vmatpush1.msra.mxu0 %v2539
  %2964 = vmatprep.subr.mxu0 0.0
  %2965 = vmatpush1.msra.mxu0 %v2544
  %2966 = vmatprep.subr.mxu0 0.0
  %2967 = vmatpush1.msra.mxu0 %v2549
  %2968 = vmatprep.subr.mxu0 0.0
  %2969 = vmatpush1.msra.mxu0 %v2554
  %2970 = vmatprep.subr.mxu0 0.0
  %2971 = vmatpush1.msra.mxu0 %v2559
  %2972 = vmatprep.subr.mxu0 0.0
  %2973 = vmatpush1.msra.mxu0 %v2564
  %2974 = vmatprep.subr.mxu0 0.0
  %2975 = vmatpush1.msra.mxu0 %v2569
  %2976 = vmatprep.subr.mxu0 0.0
  %2977 = vmatpush1.msra.mxu0 %v2574
  %2978 = vmatprep.subr.mxu0 0.0
  %2979 = vmatpush1.msra.mxu0 0.0
  %2980 = vmatprep.subr.mxu0 0.0
  %2981 = vmatpush1.msra.mxu0 0.0
  %2982 = vmatprep.subr.mxu0 0.0
  %2983 = vmatpush1.msra.mxu0 0.0
  %2984 = vmatprep.subr.mxu0 0.0
  %2985 = vmatpush1.msra.mxu0 0.0
  %2986 = vmatprep.subr.mxu0 0.0
  %2987 = vmatpush1.msra.mxu0 0.0
  %2988 = vmatprep.subr.mxu0 0.0
  %2989 = vmatpush1.msra.mxu0 0.0
  %2990 = vmatprep.subr.mxu0 0.0
  %2991 = vmatpush1.msra.mxu0 0.0
  %2992 = vmatprep.subr.mxu0 0.0
  %2993 = vmatpush1.msra.mxu0 0.0
  %2994 = vmatprep.subr.mxu0 0.0
  %2995 = vmatpush1.msra.mxu0 0.0
  %2996 = vmatprep.subr.mxu0 0.0
  %2997 = vmatpush1.msra.mxu0 0.0
  %2998 = vmatprep.subr.mxu0 0.0
  %2999 = vmatpush1.msra.mxu0 0.0
  %3000 = vmatprep.subr.mxu0 0.0
  %3001 = vmatpush1.msra.mxu0 0.0
  %3002 = vmatprep.subr.mxu0 0.0
  %3003 = vmatpush1.msra.mxu0 0.0
  %3004 = vmatprep.subr.mxu0 0.0
  %3005 = vmatpush1.msra.mxu0 0.0
  %3006 = vmatprep.subr.mxu0 0.0
  %3007 = vmatpush1.msra.mxu0 0.0
  %3008 = vmatprep.subr.mxu0 0.0
  %3009 = vmatpush1.msra.mxu0 0.0
  %3010 = vmatprep.subr.mxu0 0.0
  %3011 = vmatpush1.msra.mxu0 0.0
  %3012 = vmatprep.subr.mxu0 0.0
  %3013 = vmatpush1.msra.mxu0 0.0
  %3014 = vmatprep.subr.mxu0 0.0
  %3015 = vmatpush1.msra.mxu0 0.0
  %3016 = vmatprep.subr.mxu0 0.0
  %3017 = vmatpush1.msra.mxu0 0.0
  %3018 = vmatprep.mubr.f32.mxu0 0.0
  %3019 = vmatmul.mubr.f32.gmra.mrb[0].mxu0 %v2919
  %v3020 = vpop.f32.mrb[0].mxu0
  %v3021 = vadd.f32 0.0, %v3020
  %v3022 = vpop.f32.mrb[0].mxu0
  %3023 = vmatprep.mubr.f32.mxu0 0.0
  %3024 = vmatmul.mubr.f32.gmra.mrb[0].mxu0 %v2922
  %v3025 = vpop.f32.mrb[0].mxu0
  %v3026 = vadd.f32 0.0, %v3025
  %v3027 = vpop.f32.mrb[0].mxu0
  %3028 = vmatprep.mubr.f32.mxu0 0.0
  %3029 = vmatmul.mubr.f32.gmra.mrb[0].mxu0 %v2925
  %v3030 = vpop.f32.mrb[0].mxu0
  %v3031 = vadd.f32 0.0, %v3030
  %v3032 = vpop.f32.mrb[0].mxu0
  %3033 = vmatprep.mubr.f32.mxu0 0.0
  %3034 = vmatmul.mubr.f32.gmra.mrb[0].mxu0 %v2928
  %v3035 = vpop.f32.mrb[0].mxu0
  %v3036 = vadd.f32 0.0, %v3035
  %v3037 = vpop.f32.mrb[0].mxu0
  %3038 = vmatprep.mubr.f32.mxu0 0.0
  %3039 = vmatmul.mubr.f32.gmra.mrb[0].mxu0 %v2931
  %v3040 = vpop.f32.mrb[0].mxu0
  %v3041 = vadd.f32 0.0, %v3040
  %v3042 = vpop.f32.mrb[0].mxu0
  %3043 = vmatprep.mubr.f32.mxu0 0.0
  %3044 = vmatmul.mubr.f32.gmra.mrb[0].mxu0 %v2934
  %v3045 = vpop.f32.mrb[0].mxu0
  %v3046 = vadd.f32 0.0, %v3045
  %v3047 = vpop.f32.mrb[0].mxu0
  %3048 = vmatprep.mubr.f32.mxu0 0.0
  %3049 = vmatmul.mubr.f32.gmra.mrb[0].mxu0 %v2937
  %v3050 = vpop.f32.mrb[0].mxu0
  %v3051 = vadd.f32 0.0, %v3050
  %v3052 = vpop.f32.mrb[0].mxu0
  %3053 = vmatprep.mubr.f32.mxu0 0.0
  %3054 = vmatmul.mubr.f32.gmra.mrb[0].mxu0 %v2940
  %v3055 = vpop.f32.mrb[0].mxu0
  %v3056 = vadd.f32 0.0, %v3055
  %v3057 = vpop.f32.mrb[0].mxu0
  %3058 = vmatprep.mubr.f32.mxu0 0.0
  %3059 = vmatmul.mubr.f32.gmra.mrb[0].mxu0 %v2943
  %v3060 = vpop.f32.mrb[0].mxu0
  %v3061 = vadd.f32 0.0, %v3060
  %v3062 = vpop.f32.mrb[0].mxu0
  %3063 = vmatprep.mubr.f32.mxu0 0.0
  %3064 = vmatmul.mubr.f32.gmra.mrb[0].mxu0 %v2946
  %v3065 = vpop.f32.mrb[0].mxu0
  %v3066 = vadd.f32 0.0, %v3065
  %v3067 = vpop.f32.mrb[0].mxu0
  %3068 = vmatprep.mubr.f32.mxu0 0.0
  %3069 = vmatmul.mubr.f32.gmra.mrb[0].mxu0 %v2949
  %v3070 = vpop.f32.mrb[0].mxu0
  %v3071 = vadd.f32 0.0, %v3070
  %v3072 = vpop.f32.mrb[0].mxu0
  %3073 = vmatprep.mubr.f32.mxu0 0.0
  %3074 = vmatmul.mubr.f32.gmra.mrb[0].mxu0 %v2952
  %v3075 = vpop.f32.mrb[0].mxu0
  %v3076 = vadd.f32 0.0, %v3075
  %v3077 = vpop.f32.mrb[0].mxu0
  %3078 = vdwg.mxu0
  %v3080 = vlaneseq
  %v3081 = vshrl.u32 %v3080, 7
  %v3082 = vsub.s32 0, %v3081
  %v3083 = vrot.slane %v2125, %v3082
  %v3086 = vsel %vm799, %v3021, 0
  %v3089 = vsel %vm799, %v3026, 0
  %v3092 = vsel %vm799, %v3031, 0
  %v3095 = vsel %vm799, %v3036, 0
  %v3098 = vsel %vm799, %v3041, 0
  %v3101 = vsel %vm799, %v3046, 0
  %v3104 = vsel %vm799, %v3051, 0
  %v3107 = vsel %vm799, %v3056, 0
  %v3110 = vsel %vm799, %v3061, 0
  %v3113 = vsel %vm799, %v3066, 0
  %v3116 = vsel %vm799, %v3071, 0
  %v3119 = vsel %vm799, %v3076, 0
  %v3122 = vsel %vm836, %v2124, 0
  %3124 = vmatprep.subr.mxu0 0.0
  %3125 = vmatpush1.msra.mxu0 %v2123
  %3126 = vmatprep.subr.mxu0 0.0
  %3127 = vmatpush1.msra.mxu0 %v3122
  %3128 = vmatprep.subr.mxu0 0.0
  %3129 = vmatpush1.msra.mxu0 0.0
  %3130 = vmatprep.subr.mxu0 0.0
  %3131 = vmatpush1.msra.mxu0 0.0
  %3132 = vmatprep.subr.mxu0 0.0
  %3133 = vmatpush1.msra.mxu0 0.0
  %3134 = vmatprep.subr.mxu0 0.0
  %3135 = vmatpush1.msra.mxu0 0.0
  %3136 = vmatprep.subr.mxu0 0.0
  %3137 = vmatpush1.msra.mxu0 0.0
  %3138 = vmatprep.subr.mxu0 0.0
  %3139 = vmatpush1.msra.mxu0 0.0
  %3140 = vmatprep.subr.mxu0 0.0
  %3141 = vmatpush1.msra.mxu0 0.0
  %3142 = vmatprep.subr.mxu0 0.0
  %3143 = vmatpush1.msra.mxu0 0.0
  %3144 = vmatprep.subr.mxu0 0.0
  %3145 = vmatpush1.msra.mxu0 0.0
  %3146 = vmatprep.subr.mxu0 0.0
  %3147 = vmatpush1.msra.mxu0 0.0
  %3148 = vmatprep.subr.mxu0 0.0
  %3149 = vmatpush1.msra.mxu0 0.0
  %3150 = vmatprep.subr.mxu0 0.0
  %3151 = vmatpush1.msra.mxu0 0.0
  %3152 = vmatprep.subr.mxu0 0.0
  %3153 = vmatpush1.msra.mxu0 0.0
  %3154 = vmatprep.subr.mxu0 0.0
  %3155 = vmatpush1.msra.mxu0 0.0
  %3156 = vmatprep.subr.mxu0 0.0
  %3157 = vmatpush1.msra.mxu0 0.0
  %3158 = vmatprep.subr.mxu0 0.0
  %3159 = vmatpush1.msra.mxu0 0.0
  %3160 = vmatprep.subr.mxu0 0.0
  %3161 = vmatpush1.msra.mxu0 0.0
  %3162 = vmatprep.subr.mxu0 0.0
  %3163 = vmatpush1.msra.mxu0 0.0
  %3164 = vmatprep.subr.mxu0 0.0
  %3165 = vmatpush1.msra.mxu0 0.0
  %3166 = vmatprep.subr.mxu0 0.0
  %3167 = vmatpush1.msra.mxu0 0.0
  %3168 = vmatprep.subr.mxu0 0.0
  %3169 = vmatpush1.msra.mxu0 0.0
  %3170 = vmatprep.subr.mxu0 0.0
  %3171 = vmatpush1.msra.mxu0 0.0
  %3172 = vmatprep.subr.mxu0 0.0
  %3173 = vmatpush1.msra.mxu0 0.0
  %3174 = vmatprep.subr.mxu0 0.0
  %3175 = vmatpush1.msra.mxu0 0.0
  %3176 = vmatprep.subr.mxu0 0.0
  %3177 = vmatpush1.msra.mxu0 0.0
  %3178 = vmatprep.subr.mxu0 0.0
  %3179 = vmatpush1.msra.mxu0 0.0
  %3180 = vmatprep.subr.mxu0 0.0
  %3181 = vmatpush1.msra.mxu0 0.0
  %3182 = vmatprep.subr.mxu0 0.0
  %3183 = vmatpush1.msra.mxu0 0.0
  %3184 = vmatprep.subr.mxu0 0.0
  %3185 = vmatpush1.msra.mxu0 0.0
  %3186 = vmatprep.subr.mxu0 0.0
  %3187 = vmatpush1.msra.mxu0 0.0
  %3188 = vmatprep.mubr.f32.mxu0 0.0
  %3189 = vmatmul.mubr.f32.gmra.mrb[0].mxu0 %v3086
  %v3190 = vpop.f32.mrb[0].mxu0
  %v3191 = vadd.f32 %v3083, %v3190
  %v3192 = vpop.f32.mrb[0].mxu0
  %3193 = vmatprep.mubr.f32.mxu0 0.0
  %3194 = vmatmul.mubr.f32.gmra.mrb[0].mxu0 %v3089
  %v3195 = vpop.f32.mrb[0].mxu0
  %v3196 = vadd.f32 %v3083, %v3195
  %v3197 = vpop.f32.mrb[0].mxu0
  %3198 = vmatprep.mubr.f32.mxu0 0.0
  %3199 = vmatmul.mubr.f32.gmra.mrb[0].mxu0 %v3092
  %v3200 = vpop.f32.mrb[0].mxu0
  %v3201 = vadd.f32 %v3083, %v3200
  %v3202 = vpop.f32.mrb[0].mxu0
  %3203 = vmatprep.mubr.f32.mxu0 0.0
  %3204 = vmatmul.mubr.f32.gmra.mrb[0].mxu0 %v3095
  %v3205 = vpop.f32.mrb[0].mxu0
  %v3206 = vadd.f32 %v3083, %v3205
  %v3207 = vpop.f32.mrb[0].mxu0
  %3208 = vmatprep.mubr.f32.mxu0 0.0
  %3209 = vmatmul.mubr.f32.gmra.mrb[0].mxu0 %v3098
  %v3210 = vpop.f32.mrb[0].mxu0
  %v3211 = vadd.f32 %v3083, %v3210
  %v3212 = vpop.f32.mrb[0].mxu0
  %3213 = vmatprep.mubr.f32.mxu0 0.0
  %3214 = vmatmul.mubr.f32.gmra.mrb[0].mxu0 %v3101
  %v3215 = vpop.f32.mrb[0].mxu0
  %v3216 = vadd.f32 %v3083, %v3215
  %v3217 = vpop.f32.mrb[0].mxu0
  %3218 = vmatprep.mubr.f32.mxu0 0.0
  %3219 = vmatmul.mubr.f32.gmra.mrb[0].mxu0 %v3104
  %v3220 = vpop.f32.mrb[0].mxu0
  %v3221 = vadd.f32 %v3083, %v3220
  %v3222 = vpop.f32.mrb[0].mxu0
  %3223 = vmatprep.mubr.f32.mxu0 0.0
  %3224 = vmatmul.mubr.f32.gmra.mrb[0].mxu0 %v3107
  %v3225 = vpop.f32.mrb[0].mxu0
  %v3226 = vadd.f32 %v3083, %v3225
  %v3227 = vpop.f32.mrb[0].mxu0
  %3228 = vmatprep.mubr.f32.mxu0 0.0
  %3229 = vmatmul.mubr.f32.gmra.mrb[0].mxu0 %v3110
  %v3230 = vpop.f32.mrb[0].mxu0
  %v3231 = vadd.f32 %v3083, %v3230
  %v3232 = vpop.f32.mrb[0].mxu0
  %3233 = vmatprep.mubr.f32.mxu0 0.0
  %3234 = vmatmul.mubr.f32.gmra.mrb[0].mxu0 %v3113
  %v3235 = vpop.f32.mrb[0].mxu0
  %v3236 = vadd.f32 %v3083, %v3235
  %v3237 = vpop.f32.mrb[0].mxu0
  %3238 = vmatprep.mubr.f32.mxu0 0.0
  %3239 = vmatmul.mubr.f32.gmra.mrb[0].mxu0 %v3116
  %v3240 = vpop.f32.mrb[0].mxu0
  %v3241 = vadd.f32 %v3083, %v3240
  %v3242 = vpop.f32.mrb[0].mxu0
  %3243 = vmatprep.mubr.f32.mxu0 0.0
  %3244 = vmatmul.mubr.f32.gmra.mrb[0].mxu0 %v3119
  %v3245 = vpop.f32.mrb[0].mxu0
  %v3246 = vadd.f32 %v3083, %v3245
  %v3247 = vpop.f32.mrb[0].mxu0
  %3248 = vdwg.mxu0
  %v3249 = vld [vmem:[%s14] sm:$0x1]
  %v3250 = vld [vmem:[%s15] sm:$0x1]
  %v3251 = vsel %vm799, %v3191, 0.0
  %3252 = vadd.xlane.f32.xlu0 %v3251
  %v3253 = vpop.xlane.xlu0 %3252
  %v3254 = vsel %vm799, %v3196, 0.0
  %3255 = vadd.xlane.f32.xlu0 %v3254
  %v3256 = vpop.xlane.xlu0 %3255
  %v3257 = vsel %vm799, %v3201, 0.0
  %3258 = vadd.xlane.f32.xlu0 %v3257
  %v3259 = vpop.xlane.xlu0 %3258
  %v3260 = vsel %vm799, %v3206, 0.0
  %3261 = vadd.xlane.f32.xlu0 %v3260
  %v3262 = vpop.xlane.xlu0 %3261
  %v3263 = vsel %vm799, %v3211, 0.0
  %3264 = vadd.xlane.f32.xlu0 %v3263
  %v3265 = vpop.xlane.xlu0 %3264
  %v3266 = vsel %vm799, %v3216, 0.0
  %3267 = vadd.xlane.f32.xlu0 %v3266
  %v3268 = vpop.xlane.xlu0 %3267
  %v3269 = vsel %vm799, %v3221, 0.0
  %3270 = vadd.xlane.f32.xlu0 %v3269
  %v3271 = vpop.xlane.xlu0 %3270
  %v3272 = vsel %vm799, %v3226, 0.0
  %3273 = vadd.xlane.f32.xlu0 %v3272
  %v3274 = vpop.xlane.xlu0 %3273
  %v3275 = vsel %vm799, %v3231, 0.0
  %3276 = vadd.xlane.f32.xlu0 %v3275
  %v3277 = vpop.xlane.xlu0 %3276
  %v3278 = vsel %vm799, %v3236, 0.0
  %3279 = vadd.xlane.f32.xlu0 %v3278
  %v3280 = vpop.xlane.xlu0 %3279
  %v3281 = vsel %vm799, %v3241, 0.0
  %3282 = vadd.xlane.f32.xlu0 %v3281
  %v3283 = vpop.xlane.xlu0 %3282
  %v3284 = vsel %vm799, %v3246, 0.0
  %3285 = vadd.xlane.f32.xlu0 %v3284
  %v3286 = vpop.xlane.xlu0 %3285
  %v3287 = vmul.f32 %v3253, %v1966
  %v3288 = vmul.f32 %v3256, %v1966
  %v3289 = vmul.f32 %v3259, %v1966
  %v3290 = vmul.f32 %v3262, %v1966
  %v3291 = vmul.f32 %v3265, %v1966
  %v3292 = vmul.f32 %v3268, %v1966
  %v3293 = vmul.f32 %v3271, %v1966
  %v3294 = vmul.f32 %v3274, %v1966
  %v3295 = vmul.f32 %v3277, %v1966
  %v3296 = vmul.f32 %v3280, %v1966
  %v3297 = vmul.f32 %v3283, %v1966
  %v3298 = vmul.f32 %v3286, %v1966
  %v3299 = vsub.f32 %v3191, %v3287
  %v3300 = vsub.f32 %v3196, %v3288
  %v3301 = vsub.f32 %v3201, %v3289
  %v3302 = vsub.f32 %v3206, %v3290
  %v3303 = vsub.f32 %v3211, %v3291
  %v3304 = vsub.f32 %v3216, %v3292
  %v3305 = vsub.f32 %v3221, %v3293
  %v3306 = vsub.f32 %v3226, %v3294
  %v3307 = vsub.f32 %v3231, %v3295
  %v3308 = vsub.f32 %v3236, %v3296
  %v3309 = vsub.f32 %v3241, %v3297
  %v3310 = vsub.f32 %v3246, %v3298
  %v3311 = vmul.f32 %v3299, %v3299
  %v3312 = vmul.f32 %v3300, %v3300
  %v3313 = vmul.f32 %v3301, %v3301
  %v3314 = vmul.f32 %v3302, %v3302
  %v3315 = vmul.f32 %v3303, %v3303
  %v3316 = vmul.f32 %v3304, %v3304
  %v3317 = vmul.f32 %v3305, %v3305
  %v3318 = vmul.f32 %v3306, %v3306
  %v3319 = vmul.f32 %v3307, %v3307
  %v3320 = vmul.f32 %v3308, %v3308
  %v3321 = vmul.f32 %v3309, %v3309
  %v3322 = vmul.f32 %v3310, %v3310
  %v3323 = vsel %vm799, %v3311, 0.0
  %3324 = vadd.xlane.f32.xlu0 %v3323
  %v3325 = vpop.xlane.xlu0 %3324
  %v3326 = vsel %vm799, %v3312, 0.0
  %3327 = vadd.xlane.f32.xlu0 %v3326
  %v3328 = vpop.xlane.xlu0 %3327
  %v3329 = vsel %vm799, %v3313, 0.0
  %3330 = vadd.xlane.f32.xlu0 %v3329
  %v3331 = vpop.xlane.xlu0 %3330
  %v3332 = vsel %vm799, %v3314, 0.0
  %3333 = vadd.xlane.f32.xlu0 %v3332
  %v3334 = vpop.xlane.xlu0 %3333
  %v3335 = vsel %vm799, %v3315, 0.0
  %3336 = vadd.xlane.f32.xlu0 %v3335
  %v3337 = vpop.xlane.xlu0 %3336
  %v3338 = vsel %vm799, %v3316, 0.0
  %3339 = vadd.xlane.f32.xlu0 %v3338
  %v3340 = vpop.xlane.xlu0 %3339
  %v3341 = vsel %vm799, %v3317, 0.0
  %3342 = vadd.xlane.f32.xlu0 %v3341
  %v3343 = vpop.xlane.xlu0 %3342
  %v3344 = vsel %vm799, %v3318, 0.0
  %3345 = vadd.xlane.f32.xlu0 %v3344
  %v3346 = vpop.xlane.xlu0 %3345
  %v3347 = vsel %vm799, %v3319, 0.0
  %3348 = vadd.xlane.f32.xlu0 %v3347
  %v3349 = vpop.xlane.xlu0 %3348
  %v3350 = vsel %vm799, %v3320, 0.0
  %3351 = vadd.xlane.f32.xlu0 %v3350
  %v3352 = vpop.xlane.xlu0 %3351
  %v3353 = vsel %vm799, %v3321, 0.0
  %3354 = vadd.xlane.f32.xlu0 %v3353
  %v3355 = vpop.xlane.xlu0 %3354
  %v3356 = vsel %vm799, %v3322, 0.0
  %3357 = vadd.xlane.f32.xlu0 %v3356
  %v3358 = vpop.xlane.xlu0 %3357
  %v3359 = vmul.f32 %v3325, %v1966
  %v3360 = vmul.f32 %v3328, %v1966
  %v3361 = vmul.f32 %v3331, %v1966
  %v3362 = vmul.f32 %v3334, %v1966
  %v3363 = vmul.f32 %v3337, %v1966
  %v3364 = vmul.f32 %v3340, %v1966
  %v3365 = vmul.f32 %v3343, %v1966
  %v3366 = vmul.f32 %v3346, %v1966
  %v3367 = vmul.f32 %v3349, %v1966
  %v3368 = vmul.f32 %v3352, %v1966
  %v3369 = vmul.f32 %v3355, %v1966
  %v3370 = vmul.f32 %v3358, %v1966
  %v3371 = vadd.f32 %v3359, 1e-05
  %v3372 = vadd.f32 %v3360, 1e-05
  %v3373 = vadd.f32 %v3361, 1e-05
  %v3374 = vadd.f32 %v3362, 1e-05
  %v3375 = vadd.f32 %v3363, 1e-05
  %v3376 = vadd.f32 %v3364, 1e-05
  %v3377 = vadd.f32 %v3365, 1e-05
  %v3378 = vadd.f32 %v3366, 1e-05
  %v3379 = vadd.f32 %v3367, 1e-05
  %v3380 = vadd.f32 %v3368, 1e-05
  %v3381 = vadd.f32 %v3369, 1e-05
  %v3382 = vadd.f32 %v3370, 1e-05
  %v3383 = vrsqrt.pop %v3371
  %v3384 = vrsqrt.pop %v3372
  %v3385 = vrsqrt.pop %v3373
  %v3386 = vrsqrt.pop %v3374
  %v3387 = vrsqrt.pop %v3375
  %v3388 = vrsqrt.pop %v3376
  %v3389 = vrsqrt.pop %v3377
  %v3390 = vrsqrt.pop %v3378
  %v3391 = vrsqrt.pop %v3379
  %v3392 = vrsqrt.pop %v3380
  %v3393 = vrsqrt.pop %v3381
  %v3394 = vrsqrt.pop %v3382
  %v3395 = vmul.f32 %v3299, %v3383
  %v3396 = vmul.f32 %v3300, %v3384
  %v3397 = vmul.f32 %v3301, %v3385
  %v3398 = vmul.f32 %v3302, %v3386
  %v3399 = vmul.f32 %v3303, %v3387
  %v3400 = vmul.f32 %v3304, %v3388
  %v3401 = vmul.f32 %v3305, %v3389
  %v3402 = vmul.f32 %v3306, %v3390
  %v3403 = vmul.f32 %v3307, %v3391
  %v3404 = vmul.f32 %v3308, %v3392
  %v3405 = vmul.f32 %v3309, %v3393
  %v3406 = vmul.f32 %v3310, %v3394
  %v3408 = vlaneseq
  %v3409 = vshrl.u32 %v3408, 7
  %v3410 = vsub.s32 0, %v3409
  %v3411 = vrot.slane %v3249, %v3410
  %v3413 = vmul.f32 %v3395, %v3411
  %v3414 = vmul.f32 %v3396, %v3411
  %v3415 = vmul.f32 %v3397, %v3411
  %v3416 = vmul.f32 %v3398, %v3411
  %v3417 = vmul.f32 %v3399, %v3411
  %v3418 = vmul.f32 %v3400, %v3411
  %v3419 = vmul.f32 %v3401, %v3411
  %v3420 = vmul.f32 %v3402, %v3411
  %v3421 = vmul.f32 %v3403, %v3411
  %v3422 = vmul.f32 %v3404, %v3411
  %v3423 = vmul.f32 %v3405, %v3411
  %v3424 = vmul.f32 %v3406, %v3411
  %v3426 = vlaneseq
  %v3427 = vshrl.u32 %v3426, 7
  %v3428 = vsub.s32 0, %v3427
  %v3429 = vrot.slane %v3250, %v3428
  %v3431 = vadd.f32 %v3413, %v3429
  %v3432 = vadd.f32 %v3414, %v3429
  %v3433 = vadd.f32 %v3415, %v3429
  %v3434 = vadd.f32 %v3416, %v3429
  %v3435 = vadd.f32 %v3417, %v3429
  %v3436 = vadd.f32 %v3418, %v3429
  %v3437 = vadd.f32 %v3419, %v3429
  %v3438 = vadd.f32 %v3420, %v3429
  %v3439 = vadd.f32 %v3421, %v3429
  %v3440 = vadd.f32 %v3422, %v3429
  %v3441 = vadd.f32 %v3423, %v3429
  %v3442 = vadd.f32 %v3424, %v3429
  %s3443 = smul.u32 13, 96
  %s3444 = smul.u32 %s3443, 1
  %s3445 = sshll.u32 %s3444, 4
  %3446 = dma.done [#allocation3], %s3445
  %v3448 = vsel %vm799, %v785, 0
  %v3451 = vsel %vm799, %v786, 0
  %v3454 = vsel %vm799, %v3431, 0
  %v3457 = vsel %vm799, %v3432, 0
  %v3460 = vsel %vm799, %v3433, 0
  %v3463 = vsel %vm799, %v3434, 0
  %v3466 = vsel %vm799, %v3435, 0
  %v3469 = vsel %vm799, %v3436, 0
  %v3472 = vsel %vm799, %v3437, 0
  %v3475 = vsel %vm799, %v3438, 0
  %v3478 = vsel %vm799, %v3439, 0
  %v3481 = vsel %vm799, %v3440, 0
  %v3484 = vsel %vm799, %v3441, 0
  %v3487 = vsel %vm799, %v3442, 0
  %3489 = vmatprep.subr.mxu0 0.0
  %3490 = vmatpush1.xpose.msra.mxu0 %v3454
  %3491 = vmatprep.subr.mxu0 0.0
  %3492 = vmatpush1.xpose.msra.mxu0 %v3457
  %3493 = vmatprep.subr.mxu0 0.0
  %3494 = vmatpush1.xpose.msra.mxu0 %v3460
  %3495 = vmatprep.subr.mxu0 0.0
  %3496 = vmatpush1.xpose.msra.mxu0 %v3463
  %3497 = vmatprep.subr.mxu0 0.0
  %3498 = vmatpush1.xpose.msra.mxu0 %v3466
  %3499 = vmatprep.subr.mxu0 0.0
  %3500 = vmatpush1.xpose.msra.mxu0 %v3469
  %3501 = vmatprep.subr.mxu0 0.0
  %3502 = vmatpush1.xpose.msra.mxu0 %v3472
  %3503 = vmatprep.subr.mxu0 0.0
  %3504 = vmatpush1.xpose.msra.mxu0 %v3475
  %3505 = vmatprep.subr.mxu0 0.0
  %3506 = vmatpush1.xpose.msra.mxu0 %v3478
  %3507 = vmatprep.subr.mxu0 0.0
  %3508 = vmatpush1.xpose.msra.mxu0 %v3481
  %3509 = vmatprep.subr.mxu0 0.0
  %3510 = vmatpush1.xpose.msra.mxu0 %v3484
  %3511 = vmatprep.subr.mxu0 0.0
  %3512 = vmatpush1.xpose.msra.mxu0 %v3487
  %3513 = vmatprep.subr.mxu0 0.0
  %3514 = vmatpush1.xpose.msra.mxu0 0.0
  %3515 = vmatprep.subr.mxu0 0.0
  %3516 = vmatpush1.xpose.msra.mxu0 0.0
  %3517 = vmatprep.subr.mxu0 0.0
  %3518 = vmatpush1.xpose.msra.mxu0 0.0
  %3519 = vmatprep.subr.mxu0 0.0
  %3520 = vmatpush1.xpose.msra.mxu0 0.0
  %3521 = vmatprep.subr.mxu0 0.0
  %3522 = vmatpush1.xpose.msra.mxu0 0.0
  %3523 = vmatprep.subr.mxu0 0.0
  %3524 = vmatpush1.xpose.msra.mxu0 0.0
  %3525 = vmatprep.subr.mxu0 0.0
  %3526 = vmatpush1.xpose.msra.mxu0 0.0
  %3527 = vmatprep.subr.mxu0 0.0
  %3528 = vmatpush1.xpose.msra.mxu0 0.0
  %3529 = vmatprep.subr.mxu0 0.0
  %3530 = vmatpush1.xpose.msra.mxu0 0.0
  %3531 = vmatprep.subr.mxu0 0.0
  %3532 = vmatpush1.xpose.msra.mxu0 0.0
  %3533 = vmatprep.subr.mxu0 0.0
  %3534 = vmatpush1.xpose.msra.mxu0 0.0
  %3535 = vmatprep.subr.mxu0 0.0
  %3536 = vmatpush1.xpose.msra.mxu0 0.0
  %3537 = vmatprep.subr.mxu0 0.0
  %3538 = vmatpush1.xpose.msra.mxu0 0.0
  %3539 = vmatprep.subr.mxu0 0.0
  %3540 = vmatpush1.xpose.msra.mxu0 0.0
  %3541 = vmatprep.subr.mxu0 0.0
  %3542 = vmatpush1.xpose.msra.mxu0 0.0
  %3543 = vmatprep.subr.mxu0 0.0
  %3544 = vmatpush1.xpose.msra.mxu0 0.0
  %3545 = vmatprep.subr.mxu0 0.0
  %3546 = vmatpush1.xpose.msra.mxu0 0.0
  %3547 = vmatprep.subr.mxu0 0.0
  %3548 = vmatpush1.xpose.msra.mxu0 0.0
  %3549 = vmatprep.subr.mxu0 0.0
  %3550 = vmatpush1.xpose.msra.mxu0 0.0
  %3551 = vmatprep.subr.mxu0 0.0
  %3552 = vmatpush1.xpose.msra.mxu0 0.0
  %3553 = vmatprep.mubr.f32.mxu0 0.0
  %3554 = vmatmul.mubr.f32.gmra.mrb[0].mxu0 %v3448
  %v3555 = vpop.f32.mrb[0].mxu0
  %v3556 = vadd.f32 0.0, %v3555
  %v3557 = vpop.f32.mrb[0].mxu0
  %3558 = vmatprep.mubr.f32.mxu0 0.0
  %3559 = vmatmul.mubr.f32.gmra.mrb[0].mxu0 %v3451
  %v3560 = vpop.f32.mrb[0].mxu0
  %v3561 = vadd.f32 0.0, %v3560
  %v3562 = vpop.f32.mrb[0].mxu0
  %3563 = vdwg.mxu0
  %v3564 = vld [vmem:[%s17] sm:$0x1]
  %v3565 = vld [vmem:[#allocation2] sm:$0xff]
  %v3566 = vld [vmem:[#allocation2 + $0x8] sm:$0xff]
  %v3567 = vld [vmem:[#allocation2 + $0x10] sm:$0xff]
  %v3568 = vld [vmem:[#allocation2 + $0x18] sm:$0xff]
  %v3569 = vld [vmem:[#allocation2 + $0x20] sm:$0xff]
  %v3570 = vld [vmem:[#allocation2 + $0x28] sm:$0xff]
  %v3571 = vld [vmem:[#allocation2 + $0x30] sm:$0xff]
  %v3572 = vld [vmem:[#allocation2 + $0x38] sm:$0xff]
  %v3573 = vld [vmem:[#allocation2 + $0x40] sm:$0xff]
  %v3574 = vld [vmem:[#allocation2 + $0x48] sm:$0xff]
  %v3575 = vld [vmem:[#allocation2 + $0x50] sm:$0xff]
  %v3576 = vld [vmem:[#allocation2 + $0x58] sm:$0xff]
  %v3578 = vsel %vm1452, %v3556, 0
  %3580 = vmatprep.subr.mxu0 0.0
  %3581 = vmatpush1.msra.mxu0 %v3565
  %3582 = vmatprep.subr.mxu0 0.0
  %3583 = vmatpush1.msra.mxu0 %v3566
  %3584 = vmatprep.subr.mxu0 0.0
  %3585 = vmatpush1.msra.mxu0 %v3567
  %3586 = vmatprep.subr.mxu0 0.0
  %3587 = vmatpush1.msra.mxu0 %v3568
  %3588 = vmatprep.subr.mxu0 0.0
  %3589 = vmatpush1.msra.mxu0 %v3569
  %3590 = vmatprep.subr.mxu0 0.0
  %3591 = vmatpush1.msra.mxu0 %v3570
  %3592 = vmatprep.subr.mxu0 0.0
  %3593 = vmatpush1.msra.mxu0 %v3571
  %3594 = vmatprep.subr.mxu0 0.0
  %3595 = vmatpush1.msra.mxu0 %v3572
  %3596 = vmatprep.subr.mxu0 0.0
  %3597 = vmatpush1.msra.mxu0 %v3573
  %3598 = vmatprep.subr.mxu0 0.0
  %3599 = vmatpush1.msra.mxu0 %v3574
  %3600 = vmatprep.subr.mxu0 0.0
  %3601 = vmatpush1.msra.mxu0 %v3575
  %3602 = vmatprep.subr.mxu0 0.0
  %3603 = vmatpush1.msra.mxu0 %v3576
  %3604 = vmatprep.subr.mxu0 0.0
  %3605 = vmatpush1.msra.mxu0 0.0
  %3606 = vmatprep.subr.mxu0 0.0
  %3607 = vmatpush1.msra.mxu0 0.0
  %3608 = vmatprep.subr.mxu0 0.0
  %3609 = vmatpush1.msra.mxu0 0.0
  %3610 = vmatprep.subr.mxu0 0.0
  %3611 = vmatpush1.msra.mxu0 0.0
  %3612 = vmatprep.subr.mxu0 0.0
  %3613 = vmatpush1.msra.mxu0 0.0
  %3614 = vmatprep.subr.mxu0 0.0
  %3615 = vmatpush1.msra.mxu0 0.0
  %3616 = vmatprep.subr.mxu0 0.0
  %3617 = vmatpush1.msra.mxu0 0.0
  %3618 = vmatprep.subr.mxu0 0.0
  %3619 = vmatpush1.msra.mxu0 0.0
  %3620 = vmatprep.subr.mxu0 0.0
  %3621 = vmatpush1.msra.mxu0 0.0
  %3622 = vmatprep.subr.mxu0 0.0
  %3623 = vmatpush1.msra.mxu0 0.0
  %3624 = vmatprep.subr.mxu0 0.0
  %3625 = vmatpush1.msra.mxu0 0.0
  %3626 = vmatprep.subr.mxu0 0.0
  %3627 = vmatpush1.msra.mxu0 0.0
  %3628 = vmatprep.subr.mxu0 0.0
  %3629 = vmatpush1.msra.mxu0 0.0
  %3630 = vmatprep.subr.mxu0 0.0
  %3631 = vmatpush1.msra.mxu0 0.0
  %3632 = vmatprep.subr.mxu0 0.0
  %3633 = vmatpush1.msra.mxu0 0.0
  %3634 = vmatprep.subr.mxu0 0.0
  %3635 = vmatpush1.msra.mxu0 0.0
  %3636 = vmatprep.subr.mxu0 0.0
  %3637 = vmatpush1.msra.mxu0 0.0
  %3638 = vmatprep.subr.mxu0 0.0
  %3639 = vmatpush1.msra.mxu0 0.0
  %3640 = vmatprep.subr.mxu0 0.0
  %3641 = vmatpush1.msra.mxu0 0.0
  %3642 = vmatprep.subr.mxu0 0.0
  %3643 = vmatpush1.msra.mxu0 0.0
  %3644 = vmatprep.mubr.f32.mxu0 0.0
  %3645 = vmatmul.mubr.f32.gmra.mrb[0].mxu0 %v3578
  %v3646 = vpop.f32.mrb[0].mxu0
  %v3647 = vadd.f32 0.0, %v3646
  %v3648 = vpop.f32.mrb[0].mxu0
  %3649 = vdwg.mxu0
  %v3650 = vadd.f32 %v3564, %v3647
  %s3651 = scalar_lea.vmem [#allocation2], 96
  %v3652 = vld [vmem:[%s3651] sm:$0xff]
  %v3653 = vld [vmem:[%s3651 + $0x8] sm:$0xff]
  %v3654 = vld [vmem:[%s3651 + $0x10] sm:$0xff]
  %v3655 = vld [vmem:[%s3651 + $0x18] sm:$0xff]
  %v3656 = vld [vmem:[%s3651 + $0x20] sm:$0xff]
  %v3657 = vld [vmem:[%s3651 + $0x28] sm:$0xff]
  %v3658 = vld [vmem:[%s3651 + $0x30] sm:$0xff]
  %v3659 = vld [vmem:[%s3651 + $0x38] sm:$0xff]
  %v3660 = vld [vmem:[%s3651 + $0x40] sm:$0xff]
  %v3661 = vld [vmem:[%s3651 + $0x48] sm:$0xff]
  %v3662 = vld [vmem:[%s3651 + $0x50] sm:$0xff]
  %v3663 = vld [vmem:[%s3651 + $0x58] sm:$0xff]
  %v3664 = vrot.slane %v3556, 1
  %v3665 = vsel %vm1452, %v3664, 0
  %3667 = vmatprep.subr.mxu0 0.0
  %3668 = vmatpush1.msra.mxu0 %v3652
  %3669 = vmatprep.subr.mxu0 0.0
  %3670 = vmatpush1.msra.mxu0 %v3653
  %3671 = vmatprep.subr.mxu0 0.0
  %3672 = vmatpush1.msra.mxu0 %v3654
  %3673 = vmatprep.subr.mxu0 0.0
  %3674 = vmatpush1.msra.mxu0 %v3655
  %3675 = vmatprep.subr.mxu0 0.0
  %3676 = vmatpush1.msra.mxu0 %v3656
  %3677 = vmatprep.subr.mxu0 0.0
  %3678 = vmatpush1.msra.mxu0 %v3657
  %3679 = vmatprep.subr.mxu0 0.0
  %3680 = vmatpush1.msra.mxu0 %v3658
  %3681 = vmatprep.subr.mxu0 0.0
  %3682 = vmatpush1.msra.mxu0 %v3659
  %3683 = vmatprep.subr.mxu0 0.0
  %3684 = vmatpush1.msra.mxu0 %v3660
  %3685 = vmatprep.subr.mxu0 0.0
  %3686 = vmatpush1.msra.mxu0 %v3661
  %3687 = vmatprep.subr.mxu0 0.0
  %3688 = vmatpush1.msra.mxu0 %v3662
  %3689 = vmatprep.subr.mxu0 0.0
  %3690 = vmatpush1.msra.mxu0 %v3663
  %3691 = vmatprep.subr.mxu0 0.0
  %3692 = vmatpush1.msra.mxu0 0.0
  %3693 = vmatprep.subr.mxu0 0.0
  %3694 = vmatpush1.msra.mxu0 0.0
  %3695 = vmatprep.subr.mxu0 0.0
  %3696 = vmatpush1.msra.mxu0 0.0
  %3697 = vmatprep.subr.mxu0 0.0
  %3698 = vmatpush1.msra.mxu0 0.0
  %3699 = vmatprep.subr.mxu0 0.0
  %3700 = vmatpush1.msra.mxu0 0.0
  %3701 = vmatprep.subr.mxu0 0.0
  %3702 = vmatpush1.msra.mxu0 0.0
  %3703 = vmatprep.subr.mxu0 0.0
  %3704 = vmatpush1.msra.mxu0 0.0
  %3705 = vmatprep.subr.mxu0 0.0
  %3706 = vmatpush1.msra.mxu0 0.0
  %3707 = vmatprep.subr.mxu0 0.0
  %3708 = vmatpush1.msra.mxu0 0.0
  %3709 = vmatprep.subr.mxu0 0.0
  %3710 = vmatpush1.msra.mxu0 0.0
  %3711 = vmatprep.subr.mxu0 0.0
  %3712 = vmatpush1.msra.mxu0 0.0
  %3713 = vmatprep.subr.mxu0 0.0
  %3714 = vmatpush1.msra.mxu0 0.0
  %3715 = vmatprep.subr.mxu0 0.0
  %3716 = vmatpush1.msra.mxu0 0.0
  %3717 = vmatprep.subr.mxu0 0.0
  %3718 = vmatpush1.msra.mxu0 0.0
  %3719 = vmatprep.subr.mxu0 0.0
  %3720 = vmatpush1.msra.mxu0 0.0
  %3721 = vmatprep.subr.mxu0 0.0
  %3722 = vmatpush1.msra.mxu0 0.0
  %3723 = vmatprep.subr.mxu0 0.0
  %3724 = vmatpush1.msra.mxu0 0.0
  %3725 = vmatprep.subr.mxu0 0.0
  %3726 = vmatpush1.msra.mxu0 0.0
  %3727 = vmatprep.subr.mxu0 0.0
  %3728 = vmatpush1.msra.mxu0 0.0
  %3729 = vmatprep.subr.mxu0 0.0
  %3730 = vmatpush1.msra.mxu0 0.0
  %3731 = vmatprep.mubr.f32.mxu0 0.0
  %3732 = vmatmul.mubr.f32.gmra.mrb[0].mxu0 %v3665
  %v3733 = vpop.f32.mrb[0].mxu0
  %v3734 = vadd.f32 0.0, %v3733
  %v3735 = vpop.f32.mrb[0].mxu0
  %3736 = vdwg.mxu0
  %v3737 = vadd.f32 %v3650, %v3734
  %s3738 = scalar_lea.vmem [#allocation2], 192
  %v3739 = vld [vmem:[%s3738] sm:$0xff]
  %v3740 = vld [vmem:[%s3738 + $0x8] sm:$0xff]
  %v3741 = vld [vmem:[%s3738 + $0x10] sm:$0xff]
  %v3742 = vld [vmem:[%s3738 + $0x18] sm:$0xff]
  %v3743 = vld [vmem:[%s3738 + $0x20] sm:$0xff]
  %v3744 = vld [vmem:[%s3738 + $0x28] sm:$0xff]
  %v3745 = vld [vmem:[%s3738 + $0x30] sm:$0xff]
  %v3746 = vld [vmem:[%s3738 + $0x38] sm:$0xff]
  %v3747 = vld [vmem:[%s3738 + $0x40] sm:$0xff]
  %v3748 = vld [vmem:[%s3738 + $0x48] sm:$0xff]
  %v3749 = vld [vmem:[%s3738 + $0x50] sm:$0xff]
  %v3750 = vld [vmem:[%s3738 + $0x58] sm:$0xff]
  %v3751 = vrot.slane %v3556, 2
  %v3752 = vsel %vm1452, %v3751, 0
  %3754 = vmatprep.subr.mxu0 0.0
  %3755 = vmatpush1.msra.mxu0 %v3739
  %3756 = vmatprep.subr.mxu0 0.0
  %3757 = vmatpush1.msra.mxu0 %v3740
  %3758 = vmatprep.subr.mxu0 0.0
  %3759 = vmatpush1.msra.mxu0 %v3741
  %3760 = vmatprep.subr.mxu0 0.0
  %3761 = vmatpush1.msra.mxu0 %v3742
  %3762 = vmatprep.subr.mxu0 0.0
  %3763 = vmatpush1.msra.mxu0 %v3743
  %3764 = vmatprep.subr.mxu0 0.0
  %3765 = vmatpush1.msra.mxu0 %v3744
  %3766 = vmatprep.subr.mxu0 0.0
  %3767 = vmatpush1.msra.mxu0 %v3745
  %3768 = vmatprep.subr.mxu0 0.0
  %3769 = vmatpush1.msra.mxu0 %v3746
  %3770 = vmatprep.subr.mxu0 0.0
  %3771 = vmatpush1.msra.mxu0 %v3747
  %3772 = vmatprep.subr.mxu0 0.0
  %3773 = vmatpush1.msra.mxu0 %v3748
  %3774 = vmatprep.subr.mxu0 0.0
  %3775 = vmatpush1.msra.mxu0 %v3749
  %3776 = vmatprep.subr.mxu0 0.0
  %3777 = vmatpush1.msra.mxu0 %v3750
  %3778 = vmatprep.subr.mxu0 0.0
  %3779 = vmatpush1.msra.mxu0 0.0
  %3780 = vmatprep.subr.mxu0 0.0
  %3781 = vmatpush1.msra.mxu0 0.0
  %3782 = vmatprep.subr.mxu0 0.0
  %3783 = vmatpush1.msra.mxu0 0.0
  %3784 = vmatprep.subr.mxu0 0.0
  %3785 = vmatpush1.msra.mxu0 0.0
  %3786 = vmatprep.subr.mxu0 0.0
  %3787 = vmatpush1.msra.mxu0 0.0
  %3788 = vmatprep.subr.mxu0 0.0
  %3789 = vmatpush1.msra.mxu0 0.0
  %3790 = vmatprep.subr.mxu0 0.0
  %3791 = vmatpush1.msra.mxu0 0.0
  %3792 = vmatprep.subr.mxu0 0.0
  %3793 = vmatpush1.msra.mxu0 0.0
  %3794 = vmatprep.subr.mxu0 0.0
  %3795 = vmatpush1.msra.mxu0 0.0
  %3796 = vmatprep.subr.mxu0 0.0
  %3797 = vmatpush1.msra.mxu0 0.0
  %3798 = vmatprep.subr.mxu0 0.0
  %3799 = vmatpush1.msra.mxu0 0.0
  %3800 = vmatprep.subr.mxu0 0.0
  %3801 = vmatpush1.msra.mxu0 0.0
  %3802 = vmatprep.subr.mxu0 0.0
  %3803 = vmatpush1.msra.mxu0 0.0
  %3804 = vmatprep.subr.mxu0 0.0
  %3805 = vmatpush1.msra.mxu0 0.0
  %3806 = vmatprep.subr.mxu0 0.0
  %3807 = vmatpush1.msra.mxu0 0.0
  %3808 = vmatprep.subr.mxu0 0.0
  %3809 = vmatpush1.msra.mxu0 0.0
  %3810 = vmatprep.subr.mxu0 0.0
  %3811 = vmatpush1.msra.mxu0 0.0
  %3812 = vmatprep.subr.mxu0 0.0
  %3813 = vmatpush1.msra.mxu0 0.0
  %3814 = vmatprep.subr.mxu0 0.0
  %3815 = vmatpush1.msra.mxu0 0.0
  %3816 = vmatprep.subr.mxu0 0.0
  %3817 = vmatpush1.msra.mxu0 0.0
  %3818 = vmatprep.mubr.f32.mxu0 0.0
  %3819 = vmatmul.mubr.f32.gmra.mrb[0].mxu0 %v3752
  %v3820 = vpop.f32.mrb[0].mxu0
  %v3821 = vadd.f32 0.0, %v3820
  %v3822 = vpop.f32.mrb[0].mxu0
  %3823 = vdwg.mxu0
  %v3824 = vadd.f32 %v3737, %v3821
  %s3825 = scalar_lea.vmem [#allocation2], 288
  %v3826 = vld [vmem:[%s3825] sm:$0xff]
  %v3827 = vld [vmem:[%s3825 + $0x8] sm:$0xff]
  %v3828 = vld [vmem:[%s3825 + $0x10] sm:$0xff]
  %v3829 = vld [vmem:[%s3825 + $0x18] sm:$0xff]
  %v3830 = vld [vmem:[%s3825 + $0x20] sm:$0xff]
  %v3831 = vld [vmem:[%s3825 + $0x28] sm:$0xff]
  %v3832 = vld [vmem:[%s3825 + $0x30] sm:$0xff]
  %v3833 = vld [vmem:[%s3825 + $0x38] sm:$0xff]
  %v3834 = vld [vmem:[%s3825 + $0x40] sm:$0xff]
  %v3835 = vld [vmem:[%s3825 + $0x48] sm:$0xff]
  %v3836 = vld [vmem:[%s3825 + $0x50] sm:$0xff]
  %v3837 = vld [vmem:[%s3825 + $0x58] sm:$0xff]
  %v3838 = vrot.slane %v3556, 3
  %v3839 = vsel %vm1452, %v3838, 0
  %3841 = vmatprep.subr.mxu0 0.0
  %3842 = vmatpush1.msra.mxu0 %v3826
  %3843 = vmatprep.subr.mxu0 0.0
  %3844 = vmatpush1.msra.mxu0 %v3827
  %3845 = vmatprep.subr.mxu0 0.0
  %3846 = vmatpush1.msra.mxu0 %v3828
  %3847 = vmatprep.subr.mxu0 0.0
  %3848 = vmatpush1.msra.mxu0 %v3829
  %3849 = vmatprep.subr.mxu0 0.0
  %3850 = vmatpush1.msra.mxu0 %v3830
  %3851 = vmatprep.subr.mxu0 0.0
  %3852 = vmatpush1.msra.mxu0 %v3831
  %3853 = vmatprep.subr.mxu0 0.0
  %3854 = vmatpush1.msra.mxu0 %v3832
  %3855 = vmatprep.subr.mxu0 0.0
  %3856 = vmatpush1.msra.mxu0 %v3833
  %3857 = vmatprep.subr.mxu0 0.0
  %3858 = vmatpush1.msra.mxu0 %v3834
  %3859 = vmatprep.subr.mxu0 0.0
  %3860 = vmatpush1.msra.mxu0 %v3835
  %3861 = vmatprep.subr.mxu0 0.0
  %3862 = vmatpush1.msra.mxu0 %v3836
  %3863 = vmatprep.subr.mxu0 0.0
  %3864 = vmatpush1.msra.mxu0 %v3837
  %3865 = vmatprep.subr.mxu0 0.0
  %3866 = vmatpush1.msra.mxu0 0.0
  %3867 = vmatprep.subr.mxu0 0.0
  %3868 = vmatpush1.msra.mxu0 0.0
  %3869 = vmatprep.subr.mxu0 0.0
  %3870 = vmatpush1.msra.mxu0 0.0
  %3871 = vmatprep.subr.mxu0 0.0
  %3872 = vmatpush1.msra.mxu0 0.0
  %3873 = vmatprep.subr.mxu0 0.0
  %3874 = vmatpush1.msra.mxu0 0.0
  %3875 = vmatprep.subr.mxu0 0.0
  %3876 = vmatpush1.msra.mxu0 0.0
  %3877 = vmatprep.subr.mxu0 0.0
  %3878 = vmatpush1.msra.mxu0 0.0
  %3879 = vmatprep.subr.mxu0 0.0
  %3880 = vmatpush1.msra.mxu0 0.0
  %3881 = vmatprep.subr.mxu0 0.0
  %3882 = vmatpush1.msra.mxu0 0.0
  %3883 = vmatprep.subr.mxu0 0.0
  %3884 = vmatpush1.msra.mxu0 0.0
  %3885 = vmatprep.subr.mxu0 0.0
  %3886 = vmatpush1.msra.mxu0 0.0
  %3887 = vmatprep.subr.mxu0 0.0
  %3888 = vmatpush1.msra.mxu0 0.0
  %3889 = vmatprep.subr.mxu0 0.0
  %3890 = vmatpush1.msra.mxu0 0.0
  %3891 = vmatprep.subr.mxu0 0.0
  %3892 = vmatpush1.msra.mxu0 0.0
  %3893 = vmatprep.subr.mxu0 0.0
  %3894 = vmatpush1.msra.mxu0 0.0
  %3895 = vmatprep.subr.mxu0 0.0
  %3896 = vmatpush1.msra.mxu0 0.0
  %3897 = vmatprep.subr.mxu0 0.0
  %3898 = vmatpush1.msra.mxu0 0.0
  %3899 = vmatprep.subr.mxu0 0.0
  %3900 = vmatpush1.msra.mxu0 0.0
  %3901 = vmatprep.subr.mxu0 0.0
  %3902 = vmatpush1.msra.mxu0 0.0
  %3903 = vmatprep.subr.mxu0 0.0
  %3904 = vmatpush1.msra.mxu0 0.0
  %3905 = vmatprep.mubr.f32.mxu0 0.0
  %3906 = vmatmul.mubr.f32.gmra.mrb[0].mxu0 %v3839
  %v3907 = vpop.f32.mrb[0].mxu0
  %v3908 = vadd.f32 0.0, %v3907
  %v3909 = vpop.f32.mrb[0].mxu0
  %3910 = vdwg.mxu0
  %v3911 = vadd.f32 %v3824, %v3908
  %s3912 = scalar_lea.vmem [#allocation2], 384
  %v3913 = vld [vmem:[%s3912] sm:$0xff]
  %v3914 = vld [vmem:[%s3912 + $0x8] sm:$0xff]
  %v3915 = vld [vmem:[%s3912 + $0x10] sm:$0xff]
  %v3916 = vld [vmem:[%s3912 + $0x18] sm:$0xff]
  %v3917 = vld [vmem:[%s3912 + $0x20] sm:$0xff]
  %v3918 = vld [vmem:[%s3912 + $0x28] sm:$0xff]
  %v3919 = vld [vmem:[%s3912 + $0x30] sm:$0xff]
  %v3920 = vld [vmem:[%s3912 + $0x38] sm:$0xff]
  %v3921 = vld [vmem:[%s3912 + $0x40] sm:$0xff]
  %v3922 = vld [vmem:[%s3912 + $0x48] sm:$0xff]
  %v3923 = vld [vmem:[%s3912 + $0x50] sm:$0xff]
  %v3924 = vld [vmem:[%s3912 + $0x58] sm:$0xff]
  %v3925 = vrot.slane %v3556, 4
  %v3926 = vsel %vm1452, %v3925, 0
  %3928 = vmatprep.subr.mxu0 0.0
  %3929 = vmatpush1.msra.mxu0 %v3913
  %3930 = vmatprep.subr.mxu0 0.0
  %3931 = vmatpush1.msra.mxu0 %v3914
  %3932 = vmatprep.subr.mxu0 0.0
  %3933 = vmatpush1.msra.mxu0 %v3915
  %3934 = vmatprep.subr.mxu0 0.0
  %3935 = vmatpush1.msra.mxu0 %v3916
  %3936 = vmatprep.subr.mxu0 0.0
  %3937 = vmatpush1.msra.mxu0 %v3917
  %3938 = vmatprep.subr.mxu0 0.0
  %3939 = vmatpush1.msra.mxu0 %v3918
  %3940 = vmatprep.subr.mxu0 0.0
  %3941 = vmatpush1.msra.mxu0 %v3919
  %3942 = vmatprep.subr.mxu0 0.0
  %3943 = vmatpush1.msra.mxu0 %v3920
  %3944 = vmatprep.subr.mxu0 0.0
  %3945 = vmatpush1.msra.mxu0 %v3921
  %3946 = vmatprep.subr.mxu0 0.0
  %3947 = vmatpush1.msra.mxu0 %v3922
  %3948 = vmatprep.subr.mxu0 0.0
  %3949 = vmatpush1.msra.mxu0 %v3923
  %3950 = vmatprep.subr.mxu0 0.0
  %3951 = vmatpush1.msra.mxu0 %v3924
  %3952 = vmatprep.subr.mxu0 0.0
  %3953 = vmatpush1.msra.mxu0 0.0
  %3954 = vmatprep.subr.mxu0 0.0
  %3955 = vmatpush1.msra.mxu0 0.0
  %3956 = vmatprep.subr.mxu0 0.0
  %3957 = vmatpush1.msra.mxu0 0.0
  %3958 = vmatprep.subr.mxu0 0.0
  %3959 = vmatpush1.msra.mxu0 0.0
  %3960 = vmatprep.subr.mxu0 0.0
  %3961 = vmatpush1.msra.mxu0 0.0
  %3962 = vmatprep.subr.mxu0 0.0
  %3963 = vmatpush1.msra.mxu0 0.0
  %3964 = vmatprep.subr.mxu0 0.0
  %3965 = vmatpush1.msra.mxu0 0.0
  %3966 = vmatprep.subr.mxu0 0.0
  %3967 = vmatpush1.msra.mxu0 0.0
  %3968 = vmatprep.subr.mxu0 0.0
  %3969 = vmatpush1.msra.mxu0 0.0
  %3970 = vmatprep.subr.mxu0 0.0
  %3971 = vmatpush1.msra.mxu0 0.0
  %3972 = vmatprep.subr.mxu0 0.0
  %3973 = vmatpush1.msra.mxu0 0.0
  %3974 = vmatprep.subr.mxu0 0.0
  %3975 = vmatpush1.msra.mxu0 0.0
  %3976 = vmatprep.subr.mxu0 0.0
  %3977 = vmatpush1.msra.mxu0 0.0
  %3978 = vmatprep.subr.mxu0 0.0
  %3979 = vmatpush1.msra.mxu0 0.0
  %3980 = vmatprep.subr.mxu0 0.0
  %3981 = vmatpush1.msra.mxu0 0.0
  %3982 = vmatprep.subr.mxu0 0.0
  %3983 = vmatpush1.msra.mxu0 0.0
  %3984 = vmatprep.subr.mxu0 0.0
  %3985 = vmatpush1.msra.mxu0 0.0
  %3986 = vmatprep.subr.mxu0 0.0
  %3987 = vmatpush1.msra.mxu0 0.0
  %3988 = vmatprep.subr.mxu0 0.0
  %3989 = vmatpush1.msra.mxu0 0.0
  %3990 = vmatprep.subr.mxu0 0.0
  %3991 = vmatpush1.msra.mxu0 0.0
  %3992 = vmatprep.mubr.f32.mxu0 0.0
  %3993 = vmatmul.mubr.f32.gmra.mrb[0].mxu0 %v3926
  %v3994 = vpop.f32.mrb[0].mxu0
  %v3995 = vadd.f32 0.0, %v3994
  %v3996 = vpop.f32.mrb[0].mxu0
  %3997 = vdwg.mxu0
  %v3998 = vadd.f32 %v3911, %v3995
  %s3999 = scalar_lea.vmem [#allocation2], 480
  %v4000 = vld [vmem:[%s3999] sm:$0xff]
  %v4001 = vld [vmem:[%s3999 + $0x8] sm:$0xff]
  %v4002 = vld [vmem:[%s3999 + $0x10] sm:$0xff]
  %v4003 = vld [vmem:[%s3999 + $0x18] sm:$0xff]
  %v4004 = vld [vmem:[%s3999 + $0x20] sm:$0xff]
  %v4005 = vld [vmem:[%s3999 + $0x28] sm:$0xff]
  %v4006 = vld [vmem:[%s3999 + $0x30] sm:$0xff]
  %v4007 = vld [vmem:[%s3999 + $0x38] sm:$0xff]
  %v4008 = vld [vmem:[%s3999 + $0x40] sm:$0xff]
  %v4009 = vld [vmem:[%s3999 + $0x48] sm:$0xff]
  %v4010 = vld [vmem:[%s3999 + $0x50] sm:$0xff]
  %v4011 = vld [vmem:[%s3999 + $0x58] sm:$0xff]
  %v4012 = vrot.slane %v3556, 5
  %v4013 = vsel %vm1452, %v4012, 0
  %4015 = vmatprep.subr.mxu0 0.0
  %4016 = vmatpush1.msra.mxu0 %v4000
  %4017 = vmatprep.subr.mxu0 0.0
  %4018 = vmatpush1.msra.mxu0 %v4001
  %4019 = vmatprep.subr.mxu0 0.0
  %4020 = vmatpush1.msra.mxu0 %v4002
  %4021 = vmatprep.subr.mxu0 0.0
  %4022 = vmatpush1.msra.mxu0 %v4003
  %4023 = vmatprep.subr.mxu0 0.0
  %4024 = vmatpush1.msra.mxu0 %v4004
  %4025 = vmatprep.subr.mxu0 0.0
  %4026 = vmatpush1.msra.mxu0 %v4005
  %4027 = vmatprep.subr.mxu0 0.0
  %4028 = vmatpush1.msra.mxu0 %v4006
  %4029 = vmatprep.subr.mxu0 0.0
  %4030 = vmatpush1.msra.mxu0 %v4007
  %4031 = vmatprep.subr.mxu0 0.0
  %4032 = vmatpush1.msra.mxu0 %v4008
  %4033 = vmatprep.subr.mxu0 0.0
  %4034 = vmatpush1.msra.mxu0 %v4009
  %4035 = vmatprep.subr.mxu0 0.0
  %4036 = vmatpush1.msra.mxu0 %v4010
  %4037 = vmatprep.subr.mxu0 0.0
  %4038 = vmatpush1.msra.mxu0 %v4011
  %4039 = vmatprep.subr.mxu0 0.0
  %4040 = vmatpush1.msra.mxu0 0.0
  %4041 = vmatprep.subr.mxu0 0.0
  %4042 = vmatpush1.msra.mxu0 0.0
  %4043 = vmatprep.subr.mxu0 0.0
  %4044 = vmatpush1.msra.mxu0 0.0
  %4045 = vmatprep.subr.mxu0 0.0
  %4046 = vmatpush1.msra.mxu0 0.0
  %4047 = vmatprep.subr.mxu0 0.0
  %4048 = vmatpush1.msra.mxu0 0.0
  %4049 = vmatprep.subr.mxu0 0.0
  %4050 = vmatpush1.msra.mxu0 0.0
  %4051 = vmatprep.subr.mxu0 0.0
  %4052 = vmatpush1.msra.mxu0 0.0
  %4053 = vmatprep.subr.mxu0 0.0
  %4054 = vmatpush1.msra.mxu0 0.0
  %4055 = vmatprep.subr.mxu0 0.0
  %4056 = vmatpush1.msra.mxu0 0.0
  %4057 = vmatprep.subr.mxu0 0.0
  %4058 = vmatpush1.msra.mxu0 0.0
  %4059 = vmatprep.subr.mxu0 0.0
  %4060 = vmatpush1.msra.mxu0 0.0
  %4061 = vmatprep.subr.mxu0 0.0
  %4062 = vmatpush1.msra.mxu0 0.0
  %4063 = vmatprep.subr.mxu0 0.0
  %4064 = vmatpush1.msra.mxu0 0.0
  %4065 = vmatprep.subr.mxu0 0.0
  %4066 = vmatpush1.msra.mxu0 0.0
  %4067 = vmatprep.subr.mxu0 0.0
  %4068 = vmatpush1.msra.mxu0 0.0
  %4069 = vmatprep.subr.mxu0 0.0
  %4070 = vmatpush1.msra.mxu0 0.0
  %4071 = vmatprep.subr.mxu0 0.0
  %4072 = vmatpush1.msra.mxu0 0.0
  %4073 = vmatprep.subr.mxu0 0.0
  %4074 = vmatpush1.msra.mxu0 0.0
  %4075 = vmatprep.subr.mxu0 0.0
  %4076 = vmatpush1.msra.mxu0 0.0
  %4077 = vmatprep.subr.mxu0 0.0
  %4078 = vmatpush1.msra.mxu0 0.0
  %4079 = vmatprep.mubr.f32.mxu0 0.0
  %4080 = vmatmul.mubr.f32.gmra.mrb[0].mxu0 %v4013
  %v4081 = vpop.f32.mrb[0].mxu0
  %v4082 = vadd.f32 0.0, %v4081
  %v4083 = vpop.f32.mrb[0].mxu0
  %4084 = vdwg.mxu0
  %v4085 = vadd.f32 %v3998, %v4082
  %s4086 = scalar_lea.vmem [#allocation2], 576
  %v4087 = vld [vmem:[%s4086] sm:$0xff]
  %v4088 = vld [vmem:[%s4086 + $0x8] sm:$0xff]
  %v4089 = vld [vmem:[%s4086 + $0x10] sm:$0xff]
  %v4090 = vld [vmem:[%s4086 + $0x18] sm:$0xff]
  %v4091 = vld [vmem:[%s4086 + $0x20] sm:$0xff]
  %v4092 = vld [vmem:[%s4086 + $0x28] sm:$0xff]
  %v4093 = vld [vmem:[%s4086 + $0x30] sm:$0xff]
  %v4094 = vld [vmem:[%s4086 + $0x38] sm:$0xff]
  %v4095 = vld [vmem:[%s4086 + $0x40] sm:$0xff]
  %v4096 = vld [vmem:[%s4086 + $0x48] sm:$0xff]
  %v4097 = vld [vmem:[%s4086 + $0x50] sm:$0xff]
  %v4098 = vld [vmem:[%s4086 + $0x58] sm:$0xff]
  %v4099 = vrot.slane %v3556, 6
  %v4100 = vsel %vm1452, %v4099, 0
  %4102 = vmatprep.subr.mxu0 0.0
  %4103 = vmatpush1.msra.mxu0 %v4087
  %4104 = vmatprep.subr.mxu0 0.0
  %4105 = vmatpush1.msra.mxu0 %v4088
  %4106 = vmatprep.subr.mxu0 0.0
  %4107 = vmatpush1.msra.mxu0 %v4089
  %4108 = vmatprep.subr.mxu0 0.0
  %4109 = vmatpush1.msra.mxu0 %v4090
  %4110 = vmatprep.subr.mxu0 0.0
  %4111 = vmatpush1.msra.mxu0 %v4091
  %4112 = vmatprep.subr.mxu0 0.0
  %4113 = vmatpush1.msra.mxu0 %v4092
  %4114 = vmatprep.subr.mxu0 0.0
  %4115 = vmatpush1.msra.mxu0 %v4093
  %4116 = vmatprep.subr.mxu0 0.0
  %4117 = vmatpush1.msra.mxu0 %v4094
  %4118 = vmatprep.subr.mxu0 0.0
  %4119 = vmatpush1.msra.mxu0 %v4095
  %4120 = vmatprep.subr.mxu0 0.0
  %4121 = vmatpush1.msra.mxu0 %v4096
  %4122 = vmatprep.subr.mxu0 0.0
  %4123 = vmatpush1.msra.mxu0 %v4097
  %4124 = vmatprep.subr.mxu0 0.0
  %4125 = vmatpush1.msra.mxu0 %v4098
  %4126 = vmatprep.subr.mxu0 0.0
  %4127 = vmatpush1.msra.mxu0 0.0
  %4128 = vmatprep.subr.mxu0 0.0
  %4129 = vmatpush1.msra.mxu0 0.0
  %4130 = vmatprep.subr.mxu0 0.0
  %4131 = vmatpush1.msra.mxu0 0.0
  %4132 = vmatprep.subr.mxu0 0.0
  %4133 = vmatpush1.msra.mxu0 0.0
  %4134 = vmatprep.subr.mxu0 0.0
  %4135 = vmatpush1.msra.mxu0 0.0
  %4136 = vmatprep.subr.mxu0 0.0
  %4137 = vmatpush1.msra.mxu0 0.0
  %4138 = vmatprep.subr.mxu0 0.0
  %4139 = vmatpush1.msra.mxu0 0.0
  %4140 = vmatprep.subr.mxu0 0.0
  %4141 = vmatpush1.msra.mxu0 0.0
  %4142 = vmatprep.subr.mxu0 0.0
  %4143 = vmatpush1.msra.mxu0 0.0
  %4144 = vmatprep.subr.mxu0 0.0
  %4145 = vmatpush1.msra.mxu0 0.0
  %4146 = vmatprep.subr.mxu0 0.0
  %4147 = vmatpush1.msra.mxu0 0.0
  %4148 = vmatprep.subr.mxu0 0.0
  %4149 = vmatpush1.msra.mxu0 0.0
  %4150 = vmatprep.subr.mxu0 0.0
  %4151 = vmatpush1.msra.mxu0 0.0
  %4152 = vmatprep.subr.mxu0 0.0
  %4153 = vmatpush1.msra.mxu0 0.0
  %4154 = vmatprep.subr.mxu0 0.0
  %4155 = vmatpush1.msra.mxu0 0.0
  %4156 = vmatprep.subr.mxu0 0.0
  %4157 = vmatpush1.msra.mxu0 0.0
  %4158 = vmatprep.subr.mxu0 0.0
  %4159 = vmatpush1.msra.mxu0 0.0
  %4160 = vmatprep.subr.mxu0 0.0
  %4161 = vmatpush1.msra.mxu0 0.0
  %4162 = vmatprep.subr.mxu0 0.0
  %4163 = vmatpush1.msra.mxu0 0.0
  %4164 = vmatprep.subr.mxu0 0.0
  %4165 = vmatpush1.msra.mxu0 0.0
  %4166 = vmatprep.mubr.f32.mxu0 0.0
  %4167 = vmatmul.mubr.f32.gmra.mrb[0].mxu0 %v4100
  %v4168 = vpop.f32.mrb[0].mxu0
  %v4169 = vadd.f32 0.0, %v4168
  %v4170 = vpop.f32.mrb[0].mxu0
  %4171 = vdwg.mxu0
  %v4172 = vadd.f32 %v4085, %v4169
  %s4173 = scalar_lea.vmem [#allocation2], 672
  %v4174 = vld [vmem:[%s4173] sm:$0xff]
  %v4175 = vld [vmem:[%s4173 + $0x8] sm:$0xff]
  %v4176 = vld [vmem:[%s4173 + $0x10] sm:$0xff]
  %v4177 = vld [vmem:[%s4173 + $0x18] sm:$0xff]
  %v4178 = vld [vmem:[%s4173 + $0x20] sm:$0xff]
  %v4179 = vld [vmem:[%s4173 + $0x28] sm:$0xff]
  %v4180 = vld [vmem:[%s4173 + $0x30] sm:$0xff]
  %v4181 = vld [vmem:[%s4173 + $0x38] sm:$0xff]
  %v4182 = vld [vmem:[%s4173 + $0x40] sm:$0xff]
  %v4183 = vld [vmem:[%s4173 + $0x48] sm:$0xff]
  %v4184 = vld [vmem:[%s4173 + $0x50] sm:$0xff]
  %v4185 = vld [vmem:[%s4173 + $0x58] sm:$0xff]
  %v4186 = vrot.slane %v3556, 7
  %v4187 = vsel %vm1452, %v4186, 0
  %4189 = vmatprep.subr.mxu0 0.0
  %4190 = vmatpush1.msra.mxu0 %v4174
  %4191 = vmatprep.subr.mxu0 0.0
  %4192 = vmatpush1.msra.mxu0 %v4175
  %4193 = vmatprep.subr.mxu0 0.0
  %4194 = vmatpush1.msra.mxu0 %v4176
  %4195 = vmatprep.subr.mxu0 0.0
  %4196 = vmatpush1.msra.mxu0 %v4177
  %4197 = vmatprep.subr.mxu0 0.0
  %4198 = vmatpush1.msra.mxu0 %v4178
  %4199 = vmatprep.subr.mxu0 0.0
  %4200 = vmatpush1.msra.mxu0 %v4179
  %4201 = vmatprep.subr.mxu0 0.0
  %4202 = vmatpush1.msra.mxu0 %v4180
  %4203 = vmatprep.subr.mxu0 0.0
  %4204 = vmatpush1.msra.mxu0 %v4181
  %4205 = vmatprep.subr.mxu0 0.0
  %4206 = vmatpush1.msra.mxu0 %v4182
  %4207 = vmatprep.subr.mxu0 0.0
  %4208 = vmatpush1.msra.mxu0 %v4183
  %4209 = vmatprep.subr.mxu0 0.0
  %4210 = vmatpush1.msra.mxu0 %v4184
  %4211 = vmatprep.subr.mxu0 0.0
  %4212 = vmatpush1.msra.mxu0 %v4185
  %4213 = vmatprep.subr.mxu0 0.0
  %4214 = vmatpush1.msra.mxu0 0.0
  %4215 = vmatprep.subr.mxu0 0.0
  %4216 = vmatpush1.msra.mxu0 0.0
  %4217 = vmatprep.subr.mxu0 0.0
  %4218 = vmatpush1.msra.mxu0 0.0
  %4219 = vmatprep.subr.mxu0 0.0
  %4220 = vmatpush1.msra.mxu0 0.0
  %4221 = vmatprep.subr.mxu0 0.0
  %4222 = vmatpush1.msra.mxu0 0.0
  %4223 = vmatprep.subr.mxu0 0.0
  %4224 = vmatpush1.msra.mxu0 0.0
  %4225 = vmatprep.subr.mxu0 0.0
  %4226 = vmatpush1.msra.mxu0 0.0
  %4227 = vmatprep.subr.mxu0 0.0
  %4228 = vmatpush1.msra.mxu0 0.0
  %4229 = vmatprep.subr.mxu0 0.0
  %4230 = vmatpush1.msra.mxu0 0.0
  %4231 = vmatprep.subr.mxu0 0.0
  %4232 = vmatpush1.msra.mxu0 0.0
  %4233 = vmatprep.subr.mxu0 0.0
  %4234 = vmatpush1.msra.mxu0 0.0
  %4235 = vmatprep.subr.mxu0 0.0
  %4236 = vmatpush1.msra.mxu0 0.0
  %4237 = vmatprep.subr.mxu0 0.0
  %4238 = vmatpush1.msra.mxu0 0.0
  %4239 = vmatprep.subr.mxu0 0.0
  %4240 = vmatpush1.msra.mxu0 0.0
  %4241 = vmatprep.subr.mxu0 0.0
  %4242 = vmatpush1.msra.mxu0 0.0
  %4243 = vmatprep.subr.mxu0 0.0
  %4244 = vmatpush1.msra.mxu0 0.0
  %4245 = vmatprep.subr.mxu0 0.0
  %4246 = vmatpush1.msra.mxu0 0.0
  %4247 = vmatprep.subr.mxu0 0.0
  %4248 = vmatpush1.msra.mxu0 0.0
  %4249 = vmatprep.subr.mxu0 0.0
  %4250 = vmatpush1.msra.mxu0 0.0
  %4251 = vmatprep.subr.mxu0 0.0
  %4252 = vmatpush1.msra.mxu0 0.0
  %4253 = vmatprep.mubr.f32.mxu0 0.0
  %4254 = vmatmul.mubr.f32.gmra.mrb[0].mxu0 %v4187
  %v4255 = vpop.f32.mrb[0].mxu0
  %v4256 = vadd.f32 0.0, %v4255
  %v4257 = vpop.f32.mrb[0].mxu0
  %4258 = vdwg.mxu0
  %v4259 = vadd.f32 %v4172, %v4256
  %s4260 = scalar_lea.vmem [#allocation2], 768
  %v4261 = vld [vmem:[%s4260] sm:$0xff]
  %v4262 = vld [vmem:[%s4260 + $0x8] sm:$0xff]
  %v4263 = vld [vmem:[%s4260 + $0x10] sm:$0xff]
  %v4264 = vld [vmem:[%s4260 + $0x18] sm:$0xff]
  %v4265 = vld [vmem:[%s4260 + $0x20] sm:$0xff]
  %v4266 = vld [vmem:[%s4260 + $0x28] sm:$0xff]
  %v4267 = vld [vmem:[%s4260 + $0x30] sm:$0xff]
  %v4268 = vld [vmem:[%s4260 + $0x38] sm:$0xff]
  %v4269 = vld [vmem:[%s4260 + $0x40] sm:$0xff]
  %v4270 = vld [vmem:[%s4260 + $0x48] sm:$0xff]
  %v4271 = vld [vmem:[%s4260 + $0x50] sm:$0xff]
  %v4272 = vld [vmem:[%s4260 + $0x58] sm:$0xff]
  %v4274 = vsel %vm1452, %v3561, 0
  %4276 = vmatprep.subr.mxu0 0.0
  %4277 = vmatpush1.msra.mxu0 %v4261
  %4278 = vmatprep.subr.mxu0 0.0
  %4279 = vmatpush1.msra.mxu0 %v4262
  %4280 = vmatprep.subr.mxu0 0.0
  %4281 = vmatpush1.msra.mxu0 %v4263
  %4282 = vmatprep.subr.mxu0 0.0
  %4283 = vmatpush1.msra.mxu0 %v4264
  %4284 = vmatprep.subr.mxu0 0.0
  %4285 = vmatpush1.msra.mxu0 %v4265
  %4286 = vmatprep.subr.mxu0 0.0
  %4287 = vmatpush1.msra.mxu0 %v4266
  %4288 = vmatprep.subr.mxu0 0.0
  %4289 = vmatpush1.msra.mxu0 %v4267
  %4290 = vmatprep.subr.mxu0 0.0
  %4291 = vmatpush1.msra.mxu0 %v4268
  %4292 = vmatprep.subr.mxu0 0.0
  %4293 = vmatpush1.msra.mxu0 %v4269
  %4294 = vmatprep.subr.mxu0 0.0
  %4295 = vmatpush1.msra.mxu0 %v4270
  %4296 = vmatprep.subr.mxu0 0.0
  %4297 = vmatpush1.msra.mxu0 %v4271
  %4298 = vmatprep.subr.mxu0 0.0
  %4299 = vmatpush1.msra.mxu0 %v4272
  %4300 = vmatprep.subr.mxu0 0.0
  %4301 = vmatpush1.msra.mxu0 0.0
  %4302 = vmatprep.subr.mxu0 0.0
  %4303 = vmatpush1.msra.mxu0 0.0
  %4304 = vmatprep.subr.mxu0 0.0
  %4305 = vmatpush1.msra.mxu0 0.0
  %4306 = vmatprep.subr.mxu0 0.0
  %4307 = vmatpush1.msra.mxu0 0.0
  %4308 = vmatprep.subr.mxu0 0.0
  %4309 = vmatpush1.msra.mxu0 0.0
  %4310 = vmatprep.subr.mxu0 0.0
  %4311 = vmatpush1.msra.mxu0 0.0
  %4312 = vmatprep.subr.mxu0 0.0
  %4313 = vmatpush1.msra.mxu0 0.0
  %4314 = vmatprep.subr.mxu0 0.0
  %4315 = vmatpush1.msra.mxu0 0.0
  %4316 = vmatprep.subr.mxu0 0.0
  %4317 = vmatpush1.msra.mxu0 0.0
  %4318 = vmatprep.subr.mxu0 0.0
  %4319 = vmatpush1.msra.mxu0 0.0
  %4320 = vmatprep.subr.mxu0 0.0
  %4321 = vmatpush1.msra.mxu0 0.0
  %4322 = vmatprep.subr.mxu0 0.0
  %4323 = vmatpush1.msra.mxu0 0.0
  %4324 = vmatprep.subr.mxu0 0.0
  %4325 = vmatpush1.msra.mxu0 0.0
  %4326 = vmatprep.subr.mxu0 0.0
  %4327 = vmatpush1.msra.mxu0 0.0
  %4328 = vmatprep.subr.mxu0 0.0
  %4329 = vmatpush1.msra.mxu0 0.0
  %4330 = vmatprep.subr.mxu0 0.0
  %4331 = vmatpush1.msra.mxu0 0.0
  %4332 = vmatprep.subr.mxu0 0.0
  %4333 = vmatpush1.msra.mxu0 0.0
  %4334 = vmatprep.subr.mxu0 0.0
  %4335 = vmatpush1.msra.mxu0 0.0
  %4336 = vmatprep.subr.mxu0 0.0
  %4337 = vmatpush1.msra.mxu0 0.0
  %4338 = vmatprep.subr.mxu0 0.0
  %4339 = vmatpush1.msra.mxu0 0.0
  %4340 = vmatprep.mubr.f32.mxu0 0.0
  %4341 = vmatmul.mubr.f32.gmra.mrb[0].mxu0 %v4274
  %v4342 = vpop.f32.mrb[0].mxu0
  %v4343 = vadd.f32 0.0, %v4342
  %v4344 = vpop.f32.mrb[0].mxu0
  %4345 = vdwg.mxu0
  %v4346 = vadd.f32 %v4259, %v4343
  %s4347 = scalar_lea.vmem [#allocation2], 864
  %v4348 = vld [vmem:[%s4347] sm:$0xff]
  %v4349 = vld [vmem:[%s4347 + $0x8] sm:$0xff]
  %v4350 = vld [vmem:[%s4347 + $0x10] sm:$0xff]
  %v4351 = vld [vmem:[%s4347 + $0x18] sm:$0xff]
  %v4352 = vld [vmem:[%s4347 + $0x20] sm:$0xff]
  %v4353 = vld [vmem:[%s4347 + $0x28] sm:$0xff]
  %v4354 = vld [vmem:[%s4347 + $0x30] sm:$0xff]
  %v4355 = vld [vmem:[%s4347 + $0x38] sm:$0xff]
  %v4356 = vld [vmem:[%s4347 + $0x40] sm:$0xff]
  %v4357 = vld [vmem:[%s4347 + $0x48] sm:$0xff]
  %v4358 = vld [vmem:[%s4347 + $0x50] sm:$0xff]
  %v4359 = vld [vmem:[%s4347 + $0x58] sm:$0xff]
  %v4360 = vrot.slane %v3561, 1
  %v4361 = vsel %vm1452, %v4360, 0
  %4363 = vmatprep.subr.mxu0 0.0
  %4364 = vmatpush1.msra.mxu0 %v4348
  %4365 = vmatprep.subr.mxu0 0.0
  %4366 = vmatpush1.msra.mxu0 %v4349
  %4367 = vmatprep.subr.mxu0 0.0
  %4368 = vmatpush1.msra.mxu0 %v4350
  %4369 = vmatprep.subr.mxu0 0.0
  %4370 = vmatpush1.msra.mxu0 %v4351
  %4371 = vmatprep.subr.mxu0 0.0
  %4372 = vmatpush1.msra.mxu0 %v4352
  %4373 = vmatprep.subr.mxu0 0.0
  %4374 = vmatpush1.msra.mxu0 %v4353
  %4375 = vmatprep.subr.mxu0 0.0
  %4376 = vmatpush1.msra.mxu0 %v4354
  %4377 = vmatprep.subr.mxu0 0.0
  %4378 = vmatpush1.msra.mxu0 %v4355
  %4379 = vmatprep.subr.mxu0 0.0
  %4380 = vmatpush1.msra.mxu0 %v4356
  %4381 = vmatprep.subr.mxu0 0.0
  %4382 = vmatpush1.msra.mxu0 %v4357
  %4383 = vmatprep.subr.mxu0 0.0
  %4384 = vmatpush1.msra.mxu0 %v4358
  %4385 = vmatprep.subr.mxu0 0.0
  %4386 = vmatpush1.msra.mxu0 %v4359
  %4387 = vmatprep.subr.mxu0 0.0
  %4388 = vmatpush1.msra.mxu0 0.0
  %4389 = vmatprep.subr.mxu0 0.0
  %4390 = vmatpush1.msra.mxu0 0.0
  %4391 = vmatprep.subr.mxu0 0.0
  %4392 = vmatpush1.msra.mxu0 0.0
  %4393 = vmatprep.subr.mxu0 0.0
  %4394 = vmatpush1.msra.mxu0 0.0
  %4395 = vmatprep.subr.mxu0 0.0
  %4396 = vmatpush1.msra.mxu0 0.0
  %4397 = vmatprep.subr.mxu0 0.0
  %4398 = vmatpush1.msra.mxu0 0.0
  %4399 = vmatprep.subr.mxu0 0.0
  %4400 = vmatpush1.msra.mxu0 0.0
  %4401 = vmatprep.subr.mxu0 0.0
  %4402 = vmatpush1.msra.mxu0 0.0
  %4403 = vmatprep.subr.mxu0 0.0
  %4404 = vmatpush1.msra.mxu0 0.0
  %4405 = vmatprep.subr.mxu0 0.0
  %4406 = vmatpush1.msra.mxu0 0.0
  %4407 = vmatprep.subr.mxu0 0.0
  %4408 = vmatpush1.msra.mxu0 0.0
  %4409 = vmatprep.subr.mxu0 0.0
  %4410 = vmatpush1.msra.mxu0 0.0
  %4411 = vmatprep.subr.mxu0 0.0
  %4412 = vmatpush1.msra.mxu0 0.0
  %4413 = vmatprep.subr.mxu0 0.0
  %4414 = vmatpush1.msra.mxu0 0.0
  %4415 = vmatprep.subr.mxu0 0.0
  %4416 = vmatpush1.msra.mxu0 0.0
  %4417 = vmatprep.subr.mxu0 0.0
  %4418 = vmatpush1.msra.mxu0 0.0
  %4419 = vmatprep.subr.mxu0 0.0
  %4420 = vmatpush1.msra.mxu0 0.0
  %4421 = vmatprep.subr.mxu0 0.0
  %4422 = vmatpush1.msra.mxu0 0.0
  %4423 = vmatprep.subr.mxu0 0.0
  %4424 = vmatpush1.msra.mxu0 0.0
  %4425 = vmatprep.subr.mxu0 0.0
  %4426 = vmatpush1.msra.mxu0 0.0
  %4427 = vmatprep.mubr.f32.mxu0 0.0
  %4428 = vmatmul.mubr.f32.gmra.mrb[0].mxu0 %v4361
  %v4429 = vpop.f32.mrb[0].mxu0
  %v4430 = vadd.f32 0.0, %v4429
  %v4431 = vpop.f32.mrb[0].mxu0
  %4432 = vdwg.mxu0
  %v4433 = vadd.f32 %v4346, %v4430
  %s4434 = scalar_lea.vmem [#allocation2], 960
  %v4435 = vld [vmem:[%s4434] sm:$0xff]
  %v4436 = vld [vmem:[%s4434 + $0x8] sm:$0xff]
  %v4437 = vld [vmem:[%s4434 + $0x10] sm:$0xff]
  %v4438 = vld [vmem:[%s4434 + $0x18] sm:$0xff]
  %v4439 = vld [vmem:[%s4434 + $0x20] sm:$0xff]
  %v4440 = vld [vmem:[%s4434 + $0x28] sm:$0xff]
  %v4441 = vld [vmem:[%s4434 + $0x30] sm:$0xff]
  %v4442 = vld [vmem:[%s4434 + $0x38] sm:$0xff]
  %v4443 = vld [vmem:[%s4434 + $0x40] sm:$0xff]
  %v4444 = vld [vmem:[%s4434 + $0x48] sm:$0xff]
  %v4445 = vld [vmem:[%s4434 + $0x50] sm:$0xff]
  %v4446 = vld [vmem:[%s4434 + $0x58] sm:$0xff]
  %v4447 = vrot.slane %v3561, 2
  %v4448 = vsel %vm1452, %v4447, 0
  %4450 = vmatprep.subr.mxu0 0.0
  %4451 = vmatpush1.msra.mxu0 %v4435
  %4452 = vmatprep.subr.mxu0 0.0
  %4453 = vmatpush1.msra.mxu0 %v4436
  %4454 = vmatprep.subr.mxu0 0.0
  %4455 = vmatpush1.msra.mxu0 %v4437
  %4456 = vmatprep.subr.mxu0 0.0
  %4457 = vmatpush1.msra.mxu0 %v4438
  %4458 = vmatprep.subr.mxu0 0.0
  %4459 = vmatpush1.msra.mxu0 %v4439
  %4460 = vmatprep.subr.mxu0 0.0
  %4461 = vmatpush1.msra.mxu0 %v4440
  %4462 = vmatprep.subr.mxu0 0.0
  %4463 = vmatpush1.msra.mxu0 %v4441
  %4464 = vmatprep.subr.mxu0 0.0
  %4465 = vmatpush1.msra.mxu0 %v4442
  %4466 = vmatprep.subr.mxu0 0.0
  %4467 = vmatpush1.msra.mxu0 %v4443
  %4468 = vmatprep.subr.mxu0 0.0
  %4469 = vmatpush1.msra.mxu0 %v4444
  %4470 = vmatprep.subr.mxu0 0.0
  %4471 = vmatpush1.msra.mxu0 %v4445
  %4472 = vmatprep.subr.mxu0 0.0
  %4473 = vmatpush1.msra.mxu0 %v4446
  %4474 = vmatprep.subr.mxu0 0.0
  %4475 = vmatpush1.msra.mxu0 0.0
  %4476 = vmatprep.subr.mxu0 0.0
  %4477 = vmatpush1.msra.mxu0 0.0
  %4478 = vmatprep.subr.mxu0 0.0
  %4479 = vmatpush1.msra.mxu0 0.0
  %4480 = vmatprep.subr.mxu0 0.0
  %4481 = vmatpush1.msra.mxu0 0.0
  %4482 = vmatprep.subr.mxu0 0.0
  %4483 = vmatpush1.msra.mxu0 0.0
  %4484 = vmatprep.subr.mxu0 0.0
  %4485 = vmatpush1.msra.mxu0 0.0
  %4486 = vmatprep.subr.mxu0 0.0
  %4487 = vmatpush1.msra.mxu0 0.0
  %4488 = vmatprep.subr.mxu0 0.0
  %4489 = vmatpush1.msra.mxu0 0.0
  %4490 = vmatprep.subr.mxu0 0.0
  %4491 = vmatpush1.msra.mxu0 0.0
  %4492 = vmatprep.subr.mxu0 0.0
  %4493 = vmatpush1.msra.mxu0 0.0
  %4494 = vmatprep.subr.mxu0 0.0
  %4495 = vmatpush1.msra.mxu0 0.0
  %4496 = vmatprep.subr.mxu0 0.0
  %4497 = vmatpush1.msra.mxu0 0.0
  %4498 = vmatprep.subr.mxu0 0.0
  %4499 = vmatpush1.msra.mxu0 0.0
  %4500 = vmatprep.subr.mxu0 0.0
  %4501 = vmatpush1.msra.mxu0 0.0
  %4502 = vmatprep.subr.mxu0 0.0
  %4503 = vmatpush1.msra.mxu0 0.0
  %4504 = vmatprep.subr.mxu0 0.0
  %4505 = vmatpush1.msra.mxu0 0.0
  %4506 = vmatprep.subr.mxu0 0.0
  %4507 = vmatpush1.msra.mxu0 0.0
  %4508 = vmatprep.subr.mxu0 0.0
  %4509 = vmatpush1.msra.mxu0 0.0
  %4510 = vmatprep.subr.mxu0 0.0
  %4511 = vmatpush1.msra.mxu0 0.0
  %4512 = vmatprep.subr.mxu0 0.0
  %4513 = vmatpush1.msra.mxu0 0.0
  %4514 = vmatprep.mubr.f32.mxu0 0.0
  %4515 = vmatmul.mubr.f32.gmra.mrb[0].mxu0 %v4448
  %v4516 = vpop.f32.mrb[0].mxu0
  %v4517 = vadd.f32 0.0, %v4516
  %v4518 = vpop.f32.mrb[0].mxu0
  %4519 = vdwg.mxu0
  %v4520 = vadd.f32 %v4433, %v4517
  %s4521 = scalar_lea.vmem [#allocation2], 1056
  %v4522 = vld [vmem:[%s4521] sm:$0xff]
  %v4523 = vld [vmem:[%s4521 + $0x8] sm:$0xff]
  %v4524 = vld [vmem:[%s4521 + $0x10] sm:$0xff]
  %v4525 = vld [vmem:[%s4521 + $0x18] sm:$0xff]
  %v4526 = vld [vmem:[%s4521 + $0x20] sm:$0xff]
  %v4527 = vld [vmem:[%s4521 + $0x28] sm:$0xff]
  %v4528 = vld [vmem:[%s4521 + $0x30] sm:$0xff]
  %v4529 = vld [vmem:[%s4521 + $0x38] sm:$0xff]
  %v4530 = vld [vmem:[%s4521 + $0x40] sm:$0xff]
  %v4531 = vld [vmem:[%s4521 + $0x48] sm:$0xff]
  %v4532 = vld [vmem:[%s4521 + $0x50] sm:$0xff]
  %v4533 = vld [vmem:[%s4521 + $0x58] sm:$0xff]
  %v4534 = vrot.slane %v3561, 3
  %v4535 = vsel %vm1452, %v4534, 0
  %4537 = vmatprep.subr.mxu0 0.0
  %4538 = vmatpush1.msra.mxu0 %v4522
  %4539 = vmatprep.subr.mxu0 0.0
  %4540 = vmatpush1.msra.mxu0 %v4523
  %4541 = vmatprep.subr.mxu0 0.0
  %4542 = vmatpush1.msra.mxu0 %v4524
  %4543 = vmatprep.subr.mxu0 0.0
  %4544 = vmatpush1.msra.mxu0 %v4525
  %4545 = vmatprep.subr.mxu0 0.0
  %4546 = vmatpush1.msra.mxu0 %v4526
  %4547 = vmatprep.subr.mxu0 0.0
  %4548 = vmatpush1.msra.mxu0 %v4527
  %4549 = vmatprep.subr.mxu0 0.0
  %4550 = vmatpush1.msra.mxu0 %v4528
  %4551 = vmatprep.subr.mxu0 0.0
  %4552 = vmatpush1.msra.mxu0 %v4529
  %4553 = vmatprep.subr.mxu0 0.0
  %4554 = vmatpush1.msra.mxu0 %v4530
  %4555 = vmatprep.subr.mxu0 0.0
  %4556 = vmatpush1.msra.mxu0 %v4531
  %4557 = vmatprep.subr.mxu0 0.0
  %4558 = vmatpush1.msra.mxu0 %v4532
  %4559 = vmatprep.subr.mxu0 0.0
  %4560 = vmatpush1.msra.mxu0 %v4533
  %4561 = vmatprep.subr.mxu0 0.0
  %4562 = vmatpush1.msra.mxu0 0.0
  %4563 = vmatprep.subr.mxu0 0.0
  %4564 = vmatpush1.msra.mxu0 0.0
  %4565 = vmatprep.subr.mxu0 0.0
  %4566 = vmatpush1.msra.mxu0 0.0
  %4567 = vmatprep.subr.mxu0 0.0
  %4568 = vmatpush1.msra.mxu0 0.0
  %4569 = vmatprep.subr.mxu0 0.0
  %4570 = vmatpush1.msra.mxu0 0.0
  %4571 = vmatprep.subr.mxu0 0.0
  %4572 = vmatpush1.msra.mxu0 0.0
  %4573 = vmatprep.subr.mxu0 0.0
  %4574 = vmatpush1.msra.mxu0 0.0
  %4575 = vmatprep.subr.mxu0 0.0
  %4576 = vmatpush1.msra.mxu0 0.0
  %4577 = vmatprep.subr.mxu0 0.0
  %4578 = vmatpush1.msra.mxu0 0.0
  %4579 = vmatprep.subr.mxu0 0.0
  %4580 = vmatpush1.msra.mxu0 0.0
  %4581 = vmatprep.subr.mxu0 0.0
  %4582 = vmatpush1.msra.mxu0 0.0
  %4583 = vmatprep.subr.mxu0 0.0
  %4584 = vmatpush1.msra.mxu0 0.0
  %4585 = vmatprep.subr.mxu0 0.0
  %4586 = vmatpush1.msra.mxu0 0.0
  %4587 = vmatprep.subr.mxu0 0.0
  %4588 = vmatpush1.msra.mxu0 0.0
  %4589 = vmatprep.subr.mxu0 0.0
  %4590 = vmatpush1.msra.mxu0 0.0
  %4591 = vmatprep.subr.mxu0 0.0
  %4592 = vmatpush1.msra.mxu0 0.0
  %4593 = vmatprep.subr.mxu0 0.0
  %4594 = vmatpush1.msra.mxu0 0.0
  %4595 = vmatprep.subr.mxu0 0.0
  %4596 = vmatpush1.msra.mxu0 0.0
  %4597 = vmatprep.subr.mxu0 0.0
  %4598 = vmatpush1.msra.mxu0 0.0
  %4599 = vmatprep.subr.mxu0 0.0
  %4600 = vmatpush1.msra.mxu0 0.0
  %4601 = vmatprep.mubr.f32.mxu0 0.0
  %4602 = vmatmul.mubr.f32.gmra.mrb[0].mxu0 %v4535
  %v4603 = vpop.f32.mrb[0].mxu0
  %v4604 = vadd.f32 0.0, %v4603
  %v4605 = vpop.f32.mrb[0].mxu0
  %4606 = vdwg.mxu0
  %v4607 = vadd.f32 %v4520, %v4604
  %s4608 = scalar_lea.vmem [#allocation2], 1152
  %v4609 = vld [vmem:[%s4608] sm:$0xff]
  %v4610 = vld [vmem:[%s4608 + $0x8] sm:$0xff]
  %v4611 = vld [vmem:[%s4608 + $0x10] sm:$0xff]
  %v4612 = vld [vmem:[%s4608 + $0x18] sm:$0xff]
  %v4613 = vld [vmem:[%s4608 + $0x20] sm:$0xff]
  %v4614 = vld [vmem:[%s4608 + $0x28] sm:$0xff]
  %v4615 = vld [vmem:[%s4608 + $0x30] sm:$0xff]
  %v4616 = vld [vmem:[%s4608 + $0x38] sm:$0xff]
  %v4617 = vld [vmem:[%s4608 + $0x40] sm:$0xff]
  %v4618 = vld [vmem:[%s4608 + $0x48] sm:$0xff]
  %v4619 = vld [vmem:[%s4608 + $0x50] sm:$0xff]
  %v4620 = vld [vmem:[%s4608 + $0x58] sm:$0xff]
  %v4621 = vrot.slane %v3561, 4
  %v4622 = vsel %vm1452, %v4621, 0
  %4624 = vmatprep.subr.mxu0 0.0
  %4625 = vmatpush1.msra.mxu0 %v4609
  %4626 = vmatprep.subr.mxu0 0.0
  %4627 = vmatpush1.msra.mxu0 %v4610
  %4628 = vmatprep.subr.mxu0 0.0
  %4629 = vmatpush1.msra.mxu0 %v4611
  %4630 = vmatprep.subr.mxu0 0.0
  %4631 = vmatpush1.msra.mxu0 %v4612
  %4632 = vmatprep.subr.mxu0 0.0
  %4633 = vmatpush1.msra.mxu0 %v4613
  %4634 = vmatprep.subr.mxu0 0.0
  %4635 = vmatpush1.msra.mxu0 %v4614
  %4636 = vmatprep.subr.mxu0 0.0
  %4637 = vmatpush1.msra.mxu0 %v4615
  %4638 = vmatprep.subr.mxu0 0.0
  %4639 = vmatpush1.msra.mxu0 %v4616
  %4640 = vmatprep.subr.mxu0 0.0
  %4641 = vmatpush1.msra.mxu0 %v4617
  %4642 = vmatprep.subr.mxu0 0.0
  %4643 = vmatpush1.msra.mxu0 %v4618
  %4644 = vmatprep.subr.mxu0 0.0
  %4645 = vmatpush1.msra.mxu0 %v4619
  %4646 = vmatprep.subr.mxu0 0.0
  %4647 = vmatpush1.msra.mxu0 %v4620
  %4648 = vmatprep.subr.mxu0 0.0
  %4649 = vmatpush1.msra.mxu0 0.0
  %4650 = vmatprep.subr.mxu0 0.0
  %4651 = vmatpush1.msra.mxu0 0.0
  %4652 = vmatprep.subr.mxu0 0.0
  %4653 = vmatpush1.msra.mxu0 0.0
  %4654 = vmatprep.subr.mxu0 0.0
  %4655 = vmatpush1.msra.mxu0 0.0
  %4656 = vmatprep.subr.mxu0 0.0
  %4657 = vmatpush1.msra.mxu0 0.0
  %4658 = vmatprep.subr.mxu0 0.0
  %4659 = vmatpush1.msra.mxu0 0.0
  %4660 = vmatprep.subr.mxu0 0.0
  %4661 = vmatpush1.msra.mxu0 0.0
  %4662 = vmatprep.subr.mxu0 0.0
  %4663 = vmatpush1.msra.mxu0 0.0
  %4664 = vmatprep.subr.mxu0 0.0
  %4665 = vmatpush1.msra.mxu0 0.0
  %4666 = vmatprep.subr.mxu0 0.0
  %4667 = vmatpush1.msra.mxu0 0.0
  %4668 = vmatprep.subr.mxu0 0.0
  %4669 = vmatpush1.msra.mxu0 0.0
  %4670 = vmatprep.subr.mxu0 0.0
  %4671 = vmatpush1.msra.mxu0 0.0
  %4672 = vmatprep.subr.mxu0 0.0
  %4673 = vmatpush1.msra.mxu0 0.0
  %4674 = vmatprep.subr.mxu0 0.0
  %4675 = vmatpush1.msra.mxu0 0.0
  %4676 = vmatprep.subr.mxu0 0.0
  %4677 = vmatpush1.msra.mxu0 0.0
  %4678 = vmatprep.subr.mxu0 0.0
  %4679 = vmatpush1.msra.mxu0 0.0
  %4680 = vmatprep.subr.mxu0 0.0
  %4681 = vmatpush1.msra.mxu0 0.0
  %4682 = vmatprep.subr.mxu0 0.0
  %4683 = vmatpush1.msra.mxu0 0.0
  %4684 = vmatprep.subr.mxu0 0.0
  %4685 = vmatpush1.msra.mxu0 0.0
  %4686 = vmatprep.subr.mxu0 0.0
  %4687 = vmatpush1.msra.mxu0 0.0
  %4688 = vmatprep.mubr.f32.mxu0 0.0
  %4689 = vmatmul.mubr.f32.gmra.mrb[0].mxu0 %v4622
  %v4690 = vpop.f32.mrb[0].mxu0
  %v4691 = vadd.f32 0.0, %v4690
  %v4692 = vpop.f32.mrb[0].mxu0
  %4693 = vdwg.mxu0
  %v4694 = vadd.f32 %v4607, %v4691
  %v4695 = vmax.f32 %v4694, 0.0
  %v4696 = vld [vmem:[%s18] sm:$0xff]
  %v4697 = vld [vmem:[%s18 + $0x8] sm:$0xff]
  %v4698 = vld [vmem:[%s18 + $0x10] sm:$0xff]
  %v4699 = vld [vmem:[%s18 + $0x18] sm:$0xff]
  %v4700 = vld [vmem:[%s18 + $0x20] sm:$0xff]
  %v4701 = vld [vmem:[%s18 + $0x28] sm:$0xff]
  %v4702 = vld [vmem:[%s18 + $0x30] sm:$0xff]
  %v4703 = vld [vmem:[%s18 + $0x38] sm:$0xff]
  %v4704 = vld [vmem:[#allocation4] sm:$0x1]
  %vm4705 = vcmask 523264
  %v4707 = vsel %vm4705, %v4695, 0
  %4709 = vmatprep.subr.mxu0 0.0
  %4710 = vmatpush1.msra.mxu0 %v4696
  %4711 = vmatprep.subr.mxu0 0.0
  %4712 = vmatpush1.msra.mxu0 %v4697
  %4713 = vmatprep.subr.mxu0 0.0
  %4714 = vmatpush1.msra.mxu0 %v4698
  %4715 = vmatprep.subr.mxu0 0.0
  %4716 = vmatpush1.msra.mxu0 %v4699
  %4717 = vmatprep.subr.mxu0 0.0
  %4718 = vmatpush1.msra.mxu0 %v4700
  %4719 = vmatprep.subr.mxu0 0.0
  %4720 = vmatpush1.msra.mxu0 %v4701
  %4721 = vmatprep.subr.mxu0 0.0
  %4722 = vmatpush1.msra.mxu0 %v4702
  %4723 = vmatprep.subr.mxu0 0.0
  %4724 = vmatpush1.msra.mxu0 %v4703
  %4725 = vmatprep.subr.mxu0 0.0
  %4726 = vmatpush1.msra.mxu0 0.0
  %4727 = vmatprep.subr.mxu0 0.0
  %4728 = vmatpush1.msra.mxu0 0.0
  %4729 = vmatprep.subr.mxu0 0.0
  %4730 = vmatpush1.msra.mxu0 0.0
  %4731 = vmatprep.subr.mxu0 0.0
  %4732 = vmatpush1.msra.mxu0 0.0
  %4733 = vmatprep.subr.mxu0 0.0
  %4734 = vmatpush1.msra.mxu0 0.0
  %4735 = vmatprep.subr.mxu0 0.0
  %4736 = vmatpush1.msra.mxu0 0.0
  %4737 = vmatprep.subr.mxu0 0.0
  %4738 = vmatpush1.msra.mxu0 0.0
  %4739 = vmatprep.subr.mxu0 0.0
  %4740 = vmatpush1.msra.mxu0 0.0
  %4741 = vmatprep.subr.mxu0 0.0
  %4742 = vmatpush1.msra.mxu0 0.0
  %4743 = vmatprep.subr.mxu0 0.0
  %4744 = vmatpush1.msra.mxu0 0.0
  %4745 = vmatprep.subr.mxu0 0.0
  %4746 = vmatpush1.msra.mxu0 0.0
  %4747 = vmatprep.subr.mxu0 0.0
  %4748 = vmatpush1.msra.mxu0 0.0
  %4749 = vmatprep.subr.mxu0 0.0
  %4750 = vmatpush1.msra.mxu0 0.0
  %4751 = vmatprep.subr.mxu0 0.0
  %4752 = vmatpush1.msra.mxu0 0.0
  %4753 = vmatprep.subr.mxu0 0.0
  %4754 = vmatpush1.msra.mxu0 0.0
  %4755 = vmatprep.subr.mxu0 0.0
  %4756 = vmatpush1.msra.mxu0 0.0
  %4757 = vmatprep.subr.mxu0 0.0
  %4758 = vmatpush1.msra.mxu0 0.0
  %4759 = vmatprep.subr.mxu0 0.0
  %4760 = vmatpush1.msra.mxu0 0.0
  %4761 = vmatprep.subr.mxu0 0.0
  %4762 = vmatpush1.msra.mxu0 0.0
  %4763 = vmatprep.subr.mxu0 0.0
  %4764 = vmatpush1.msra.mxu0 0.0
  %4765 = vmatprep.subr.mxu0 0.0
  %4766 = vmatpush1.msra.mxu0 0.0
  %4767 = vmatprep.subr.mxu0 0.0
  %4768 = vmatpush1.msra.mxu0 0.0
  %4769 = vmatprep.subr.mxu0 0.0
  %4770 = vmatpush1.msra.mxu0 0.0
  %4771 = vmatprep.subr.mxu0 0.0
  %4772 = vmatpush1.msra.mxu0 0.0
  %4773 = vmatprep.mubr.f32.mxu0 0.0
  %4774 = vmatmul.mubr.f32.gmra.mrb[0].mxu0 %v4707
  %v4775 = vpop.f32.mrb[0].mxu0
  %v4776 = vadd.f32 %v4704, %v4775
  %v4777 = vpop.f32.mrb[0].mxu0
  %4778 = vdwg.mxu0
  %vm4779 = vcmask 0
  %4780 = vst.msk [vmem:[%s20] sm:$0x1] %vm4779, %v4776
  %v4781 = vld [vmem:[%s6] sm:$0xff]
  %v4782 = vld [vmem:[%s6 + $0x8] sm:$0x1f]
  %v4783 = vld [vmem:[%s7] sm:$0x1]
  %v4784 = vld [vmem:[%s4] sm:$0xff]
  %v4785 = vld [vmem:[%s4 + $0x8] sm:$0x1f]
  %v4786 = vld [vmem:[%s5] sm:$0x1]
  %v4788 = vlaneseq
  %v4789 = vshrl.u32 %v4788, 7
  %v4790 = vsub.s32 0, %v4789
  %v4791 = vrot.slane %v4786, %v4790
  %v4794 = vsel %vm799, %v773, 0
  %v4797 = vsel %vm799, %v774, 0
  %v4800 = vsel %vm799, %v775, 0
  %v4803 = vsel %vm799, %v776, 0
  %v4806 = vsel %vm799, %v777, 0
  %v4809 = vsel %vm799, %v778, 0
  %v4812 = vsel %vm799, %v779, 0
  %v4815 = vsel %vm799, %v780, 0
  %v4818 = vsel %vm799, %v781, 0
  %v4821 = vsel %vm799, %v782, 0
  %v4824 = vsel %vm799, %v783, 0
  %v4827 = vsel %vm799, %v784, 0
  %v4830 = vsel %vm836, %v4785, 0
  %4832 = vmatprep.subr.mxu0 0.0
  %4833 = vmatpush1.msra.mxu0 %v4784
  %4834 = vmatprep.subr.mxu0 0.0
  %4835 = vmatpush1.msra.mxu0 %v4830
  %4836 = vmatprep.subr.mxu0 0.0
  %4837 = vmatpush1.msra.mxu0 0.0
  %4838 = vmatprep.subr.mxu0 0.0
  %4839 = vmatpush1.msra.mxu0 0.0
  %4840 = vmatprep.subr.mxu0 0.0
  %4841 = vmatpush1.msra.mxu0 0.0
  %4842 = vmatprep.subr.mxu0 0.0
  %4843 = vmatpush1.msra.mxu0 0.0
  %4844 = vmatprep.subr.mxu0 0.0
  %4845 = vmatpush1.msra.mxu0 0.0
  %4846 = vmatprep.subr.mxu0 0.0
  %4847 = vmatpush1.msra.mxu0 0.0
  %4848 = vmatprep.subr.mxu0 0.0
  %4849 = vmatpush1.msra.mxu0 0.0
  %4850 = vmatprep.subr.mxu0 0.0
  %4851 = vmatpush1.msra.mxu0 0.0
  %4852 = vmatprep.subr.mxu0 0.0
  %4853 = vmatpush1.msra.mxu0 0.0
  %4854 = vmatprep.subr.mxu0 0.0
  %4855 = vmatpush1.msra.mxu0 0.0
  %4856 = vmatprep.subr.mxu0 0.0
  %4857 = vmatpush1.msra.mxu0 0.0
  %4858 = vmatprep.subr.mxu0 0.0
  %4859 = vmatpush1.msra.mxu0 0.0
  %4860 = vmatprep.subr.mxu0 0.0
  %4861 = vmatpush1.msra.mxu0 0.0
  %4862 = vmatprep.subr.mxu0 0.0
  %4863 = vmatpush1.msra.mxu0 0.0
  %4864 = vmatprep.subr.mxu0 0.0
  %4865 = vmatpush1.msra.mxu0 0.0
  %4866 = vmatprep.subr.mxu0 0.0
  %4867 = vmatpush1.msra.mxu0 0.0
  %4868 = vmatprep.subr.mxu0 0.0
  %4869 = vmatpush1.msra.mxu0 0.0
  %4870 = vmatprep.subr.mxu0 0.0
  %4871 = vmatpush1.msra.mxu0 0.0
  %4872 = vmatprep.subr.mxu0 0.0
  %4873 = vmatpush1.msra.mxu0 0.0
  %4874 = vmatprep.subr.mxu0 0.0
  %4875 = vmatpush1.msra.mxu0 0.0
  %4876 = vmatprep.subr.mxu0 0.0
  %4877 = vmatpush1.msra.mxu0 0.0
  %4878 = vmatprep.subr.mxu0 0.0
  %4879 = vmatpush1.msra.mxu0 0.0
  %4880 = vmatprep.subr.mxu0 0.0
  %4881 = vmatpush1.msra.mxu0 0.0
  %4882 = vmatprep.subr.mxu0 0.0
  %4883 = vmatpush1.msra.mxu0 0.0
  %4884 = vmatprep.subr.mxu0 0.0
  %4885 = vmatpush1.msra.mxu0 0.0
  %4886 = vmatprep.subr.mxu0 0.0
  %4887 = vmatpush1.msra.mxu0 0.0
  %4888 = vmatprep.subr.mxu0 0.0
  %4889 = vmatpush1.msra.mxu0 0.0
  %4890 = vmatprep.subr.mxu0 0.0
  %4891 = vmatpush1.msra.mxu0 0.0
  %4892 = vmatprep.subr.mxu0 0.0
  %4893 = vmatpush1.msra.mxu0 0.0
  %4894 = vmatprep.subr.mxu0 0.0
  %4895 = vmatpush1.msra.mxu0 0.0
  %4896 = vmatprep.mubr.f32.mxu0 0.0
  %4897 = vmatmul.mubr.f32.gmra.mrb[0].mxu0 %v4794
  %v4898 = vpop.f32.mrb[0].mxu0
  %v4899 = vadd.f32 %v4791, %v4898
  %v4900 = vpop.f32.mrb[0].mxu0
  %4901 = vmatprep.mubr.f32.mxu0 0.0
  %4902 = vmatmul.mubr.f32.gmra.mrb[0].mxu0 %v4797
  %v4903 = vpop.f32.mrb[0].mxu0
  %v4904 = vadd.f32 %v4791, %v4903
  %v4905 = vpop.f32.mrb[0].mxu0
  %4906 = vmatprep.mubr.f32.mxu0 0.0
  %4907 = vmatmul.mubr.f32.gmra.mrb[0].mxu0 %v4800
  %v4908 = vpop.f32.mrb[0].mxu0
  %v4909 = vadd.f32 %v4791, %v4908
  %v4910 = vpop.f32.mrb[0].mxu0
  %4911 = vmatprep.mubr.f32.mxu0 0.0
  %4912 = vmatmul.mubr.f32.gmra.mrb[0].mxu0 %v4803
  %v4913 = vpop.f32.mrb[0].mxu0
  %v4914 = vadd.f32 %v4791, %v4913
  %v4915 = vpop.f32.mrb[0].mxu0
  %4916 = vmatprep.mubr.f32.mxu0 0.0
  %4917 = vmatmul.mubr.f32.gmra.mrb[0].mxu0 %v4806
  %v4918 = vpop.f32.mrb[0].mxu0
  %v4919 = vadd.f32 %v4791, %v4918
  %v4920 = vpop.f32.mrb[0].mxu0
  %4921 = vmatprep.mubr.f32.mxu0 0.0
  %4922 = vmatmul.mubr.f32.gmra.mrb[0].mxu0 %v4809
  %v4923 = vpop.f32.mrb[0].mxu0
  %v4924 = vadd.f32 %v4791, %v4923
  %v4925 = vpop.f32.mrb[0].mxu0
  %4926 = vmatprep.mubr.f32.mxu0 0.0
  %4927 = vmatmul.mubr.f32.gmra.mrb[0].mxu0 %v4812
  %v4928 = vpop.f32.mrb[0].mxu0
  %v4929 = vadd.f32 %v4791, %v4928
  %v4930 = vpop.f32.mrb[0].mxu0
  %4931 = vmatprep.mubr.f32.mxu0 0.0
  %4932 = vmatmul.mubr.f32.gmra.mrb[0].mxu0 %v4815
  %v4933 = vpop.f32.mrb[0].mxu0
  %v4934 = vadd.f32 %v4791, %v4933
  %v4935 = vpop.f32.mrb[0].mxu0
  %4936 = vmatprep.mubr.f32.mxu0 0.0
  %4937 = vmatmul.mubr.f32.gmra.mrb[0].mxu0 %v4818
  %v4938 = vpop.f32.mrb[0].mxu0
  %v4939 = vadd.f32 %v4791, %v4938
  %v4940 = vpop.f32.mrb[0].mxu0
  %4941 = vmatprep.mubr.f32.mxu0 0.0
  %4942 = vmatmul.mubr.f32.gmra.mrb[0].mxu0 %v4821
  %v4943 = vpop.f32.mrb[0].mxu0
  %v4944 = vadd.f32 %v4791, %v4943
  %v4945 = vpop.f32.mrb[0].mxu0
  %4946 = vmatprep.mubr.f32.mxu0 0.0
  %4947 = vmatmul.mubr.f32.gmra.mrb[0].mxu0 %v4824
  %v4948 = vpop.f32.mrb[0].mxu0
  %v4949 = vadd.f32 %v4791, %v4948
  %v4950 = vpop.f32.mrb[0].mxu0
  %4951 = vmatprep.mubr.f32.mxu0 0.0
  %4952 = vmatmul.mubr.f32.gmra.mrb[0].mxu0 %v4827
  %v4953 = vpop.f32.mrb[0].mxu0
  %v4954 = vadd.f32 %v4791, %v4953
  %v4955 = vpop.f32.mrb[0].mxu0
  %4956 = vdwg.mxu0
  %v4957 = vld [vmem:[%s965] sm:$0xff]
  %v4958 = vld [vmem:[%s965 + $0x8] sm:$0x1f]
  %v4959 = vld [vmem:[%s968] sm:$0x1]
  %v4961 = vlaneseq
  %v4962 = vshrl.u32 %v4961, 7
  %v4963 = vsub.s32 0, %v4962
  %v4964 = vrot.slane %v4959, %v4963
  %v4967 = vsel %vm836, %v4958, 0
  %4969 = vmatprep.subr.mxu0 0.0
  %4970 = vmatpush1.msra.mxu0 %v4957
  %4971 = vmatprep.subr.mxu0 0.0
  %4972 = vmatpush1.msra.mxu0 %v4967
  %4973 = vmatprep.subr.mxu0 0.0
  %4974 = vmatpush1.msra.mxu0 0.0
  %4975 = vmatprep.subr.mxu0 0.0
  %4976 = vmatpush1.msra.mxu0 0.0
  %4977 = vmatprep.subr.mxu0 0.0
  %4978 = vmatpush1.msra.mxu0 0.0
  %4979 = vmatprep.subr.mxu0 0.0
  %4980 = vmatpush1.msra.mxu0 0.0
  %4981 = vmatprep.subr.mxu0 0.0
  %4982 = vmatpush1.msra.mxu0 0.0
  %4983 = vmatprep.subr.mxu0 0.0
  %4984 = vmatpush1.msra.mxu0 0.0
  %4985 = vmatprep.subr.mxu0 0.0
  %4986 = vmatpush1.msra.mxu0 0.0
  %4987 = vmatprep.subr.mxu0 0.0
  %4988 = vmatpush1.msra.mxu0 0.0
  %4989 = vmatprep.subr.mxu0 0.0
  %4990 = vmatpush1.msra.mxu0 0.0
  %4991 = vmatprep.subr.mxu0 0.0
  %4992 = vmatpush1.msra.mxu0 0.0
  %4993 = vmatprep.subr.mxu0 0.0
  %4994 = vmatpush1.msra.mxu0 0.0
  %4995 = vmatprep.subr.mxu0 0.0
  %4996 = vmatpush1.msra.mxu0 0.0
  %4997 = vmatprep.subr.mxu0 0.0
  %4998 = vmatpush1.msra.mxu0 0.0
  %4999 = vmatprep.subr.mxu0 0.0
  %5000 = vmatpush1.msra.mxu0 0.0
  %5001 = vmatprep.subr.mxu0 0.0
  %5002 = vmatpush1.msra.mxu0 0.0
  %5003 = vmatprep.subr.mxu0 0.0
  %5004 = vmatpush1.msra.mxu0 0.0
  %5005 = vmatprep.subr.mxu0 0.0
  %5006 = vmatpush1.msra.mxu0 0.0
  %5007 = vmatprep.subr.mxu0 0.0
  %5008 = vmatpush1.msra.mxu0 0.0
  %5009 = vmatprep.subr.mxu0 0.0
  %5010 = vmatpush1.msra.mxu0 0.0
  %5011 = vmatprep.subr.mxu0 0.0
  %5012 = vmatpush1.msra.mxu0 0.0
  %5013 = vmatprep.subr.mxu0 0.0
  %5014 = vmatpush1.msra.mxu0 0.0
  %5015 = vmatprep.subr.mxu0 0.0
  %5016 = vmatpush1.msra.mxu0 0.0
  %5017 = vmatprep.subr.mxu0 0.0
  %5018 = vmatpush1.msra.mxu0 0.0
  %5019 = vmatprep.subr.mxu0 0.0
  %5020 = vmatpush1.msra.mxu0 0.0
  %5021 = vmatprep.subr.mxu0 0.0
  %5022 = vmatpush1.msra.mxu0 0.0
  %5023 = vmatprep.subr.mxu0 0.0
  %5024 = vmatpush1.msra.mxu0 0.0
  %5025 = vmatprep.subr.mxu0 0.0
  %5026 = vmatpush1.msra.mxu0 0.0
  %5027 = vmatprep.subr.mxu0 0.0
  %5028 = vmatpush1.msra.mxu0 0.0
  %5029 = vmatprep.subr.mxu0 0.0
  %5030 = vmatpush1.msra.mxu0 0.0
  %5031 = vmatprep.subr.mxu0 0.0
  %5032 = vmatpush1.msra.mxu0 0.0
  %5033 = vmatprep.mubr.f32.mxu0 0.0
  %5034 = vmatmul.mubr.f32.gmra.mrb[0].mxu0 %v4794
  %v5035 = vpop.f32.mrb[0].mxu0
  %v5036 = vadd.f32 %v4964, %v5035
  %v5037 = vpop.f32.mrb[0].mxu0
  %5038 = vmatprep.mubr.f32.mxu0 0.0
  %5039 = vmatmul.mubr.f32.gmra.mrb[0].mxu0 %v4797
  %v5040 = vpop.f32.mrb[0].mxu0
  %v5041 = vadd.f32 %v4964, %v5040
  %v5042 = vpop.f32.mrb[0].mxu0
  %5043 = vmatprep.mubr.f32.mxu0 0.0
  %5044 = vmatmul.mubr.f32.gmra.mrb[0].mxu0 %v4800
  %v5045 = vpop.f32.mrb[0].mxu0
  %v5046 = vadd.f32 %v4964, %v5045
  %v5047 = vpop.f32.mrb[0].mxu0
  %5048 = vmatprep.mubr.f32.mxu0 0.0
  %5049 = vmatmul.mubr.f32.gmra.mrb[0].mxu0 %v4803
  %v5050 = vpop.f32.mrb[0].mxu0
  %v5051 = vadd.f32 %v4964, %v5050
  %v5052 = vpop.f32.mrb[0].mxu0
  %5053 = vmatprep.mubr.f32.mxu0 0.0
  %5054 = vmatmul.mubr.f32.gmra.mrb[0].mxu0 %v4806
  %v5055 = vpop.f32.mrb[0].mxu0
  %v5056 = vadd.f32 %v4964, %v5055
  %v5057 = vpop.f32.mrb[0].mxu0
  %5058 = vmatprep.mubr.f32.mxu0 0.0
  %5059 = vmatmul.mubr.f32.gmra.mrb[0].mxu0 %v4809
  %v5060 = vpop.f32.mrb[0].mxu0
  %v5061 = vadd.f32 %v4964, %v5060
  %v5062 = vpop.f32.mrb[0].mxu0
  %5063 = vmatprep.mubr.f32.mxu0 0.0
  %5064 = vmatmul.mubr.f32.gmra.mrb[0].mxu0 %v4812
  %v5065 = vpop.f32.mrb[0].mxu0
  %v5066 = vadd.f32 %v4964, %v5065
  %v5067 = vpop.f32.mrb[0].mxu0
  %5068 = vmatprep.mubr.f32.mxu0 0.0
  %5069 = vmatmul.mubr.f32.gmra.mrb[0].mxu0 %v4815
  %v5070 = vpop.f32.mrb[0].mxu0
  %v5071 = vadd.f32 %v4964, %v5070
  %v5072 = vpop.f32.mrb[0].mxu0
  %5073 = vmatprep.mubr.f32.mxu0 0.0
  %5074 = vmatmul.mubr.f32.gmra.mrb[0].mxu0 %v4818
  %v5075 = vpop.f32.mrb[0].mxu0
  %v5076 = vadd.f32 %v4964, %v5075
  %v5077 = vpop.f32.mrb[0].mxu0
  %5078 = vmatprep.mubr.f32.mxu0 0.0
  %5079 = vmatmul.mubr.f32.gmra.mrb[0].mxu0 %v4821
  %v5080 = vpop.f32.mrb[0].mxu0
  %v5081 = vadd.f32 %v4964, %v5080
  %v5082 = vpop.f32.mrb[0].mxu0
  %5083 = vmatprep.mubr.f32.mxu0 0.0
  %5084 = vmatmul.mubr.f32.gmra.mrb[0].mxu0 %v4824
  %v5085 = vpop.f32.mrb[0].mxu0
  %v5086 = vadd.f32 %v4964, %v5085
  %v5087 = vpop.f32.mrb[0].mxu0
  %5088 = vmatprep.mubr.f32.mxu0 0.0
  %5089 = vmatmul.mubr.f32.gmra.mrb[0].mxu0 %v4827
  %v5090 = vpop.f32.mrb[0].mxu0
  %v5091 = vadd.f32 %v4964, %v5090
  %v5092 = vpop.f32.mrb[0].mxu0
  %5093 = vdwg.mxu0
  %v5094 = vld [vmem:[%s1104] sm:$0xff]
  %v5095 = vld [vmem:[%s1104 + $0x8] sm:$0x1f]
  %v5096 = vld [vmem:[%s1107] sm:$0x1]
  %v5098 = vlaneseq
  %v5099 = vshrl.u32 %v5098, 7
  %v5100 = vsub.s32 0, %v5099
  %v5101 = vrot.slane %v5096, %v5100
  %v5104 = vsel %vm836, %v5095, 0
  %5106 = vmatprep.subr.mxu0 0.0
  %5107 = vmatpush1.msra.mxu0 %v5094
  %5108 = vmatprep.subr.mxu0 0.0
  %5109 = vmatpush1.msra.mxu0 %v5104
  %5110 = vmatprep.subr.mxu0 0.0
  %5111 = vmatpush1.msra.mxu0 0.0
  %5112 = vmatprep.subr.mxu0 0.0
  %5113 = vmatpush1.msra.mxu0 0.0
  %5114 = vmatprep.subr.mxu0 0.0
  %5115 = vmatpush1.msra.mxu0 0.0
  %5116 = vmatprep.subr.mxu0 0.0
  %5117 = vmatpush1.msra.mxu0 0.0
  %5118 = vmatprep.subr.mxu0 0.0
  %5119 = vmatpush1.msra.mxu0 0.0
  %5120 = vmatprep.subr.mxu0 0.0
  %5121 = vmatpush1.msra.mxu0 0.0
  %5122 = vmatprep.subr.mxu0 0.0
  %5123 = vmatpush1.msra.mxu0 0.0
  %5124 = vmatprep.subr.mxu0 0.0
  %5125 = vmatpush1.msra.mxu0 0.0
  %5126 = vmatprep.subr.mxu0 0.0
  %5127 = vmatpush1.msra.mxu0 0.0
  %5128 = vmatprep.subr.mxu0 0.0
  %5129 = vmatpush1.msra.mxu0 0.0
  %5130 = vmatprep.subr.mxu0 0.0
  %5131 = vmatpush1.msra.mxu0 0.0
  %5132 = vmatprep.subr.mxu0 0.0
  %5133 = vmatpush1.msra.mxu0 0.0
  %5134 = vmatprep.subr.mxu0 0.0
  %5135 = vmatpush1.msra.mxu0 0.0
  %5136 = vmatprep.subr.mxu0 0.0
  %5137 = vmatpush1.msra.mxu0 0.0
  %5138 = vmatprep.subr.mxu0 0.0
  %5139 = vmatpush1.msra.mxu0 0.0
  %5140 = vmatprep.subr.mxu0 0.0
  %5141 = vmatpush1.msra.mxu0 0.0
  %5142 = vmatprep.subr.mxu0 0.0
  %5143 = vmatpush1.msra.mxu0 0.0
  %5144 = vmatprep.subr.mxu0 0.0
  %5145 = vmatpush1.msra.mxu0 0.0
  %5146 = vmatprep.subr.mxu0 0.0
  %5147 = vmatpush1.msra.mxu0 0.0
  %5148 = vmatprep.subr.mxu0 0.0
  %5149 = vmatpush1.msra.mxu0 0.0
  %5150 = vmatprep.subr.mxu0 0.0
  %5151 = vmatpush1.msra.mxu0 0.0
  %5152 = vmatprep.subr.mxu0 0.0
  %5153 = vmatpush1.msra.mxu0 0.0
  %5154 = vmatprep.subr.mxu0 0.0
  %5155 = vmatpush1.msra.mxu0 0.0
  %5156 = vmatprep.subr.mxu0 0.0
  %5157 = vmatpush1.msra.mxu0 0.0
  %5158 = vmatprep.subr.mxu0 0.0
  %5159 = vmatpush1.msra.mxu0 0.0
  %5160 = vmatprep.subr.mxu0 0.0
  %5161 = vmatpush1.msra.mxu0 0.0
  %5162 = vmatprep.subr.mxu0 0.0
  %5163 = vmatpush1.msra.mxu0 0.0
  %5164 = vmatprep.subr.mxu0 0.0
  %5165 = vmatpush1.msra.mxu0 0.0
  %5166 = vmatprep.subr.mxu0 0.0
  %5167 = vmatpush1.msra.mxu0 0.0
  %5168 = vmatprep.subr.mxu0 0.0
  %5169 = vmatpush1.msra.mxu0 0.0
  %5170 = vmatprep.mubr.f32.mxu0 0.0
  %5171 = vmatmul.mubr.f32.gmra.mrb[0].mxu0 %v4794
  %v5172 = vpop.f32.mrb[0].mxu0
  %v5173 = vadd.f32 %v5101, %v5172
  %v5174 = vpop.f32.mrb[0].mxu0
  %5175 = vmatprep.mubr.f32.mxu0 0.0
  %5176 = vmatmul.mubr.f32.gmra.mrb[0].mxu0 %v4797
  %v5177 = vpop.f32.mrb[0].mxu0
  %v5178 = vadd.f32 %v5101, %v5177
  %v5179 = vpop.f32.mrb[0].mxu0
  %5180 = vmatprep.mubr.f32.mxu0 0.0
  %5181 = vmatmul.mubr.f32.gmra.mrb[0].mxu0 %v4800
  %v5182 = vpop.f32.mrb[0].mxu0
  %v5183 = vadd.f32 %v5101, %v5182
  %v5184 = vpop.f32.mrb[0].mxu0
  %5185 = vmatprep.mubr.f32.mxu0 0.0
  %5186 = vmatmul.mubr.f32.gmra.mrb[0].mxu0 %v4803
  %v5187 = vpop.f32.mrb[0].mxu0
  %v5188 = vadd.f32 %v5101, %v5187
  %v5189 = vpop.f32.mrb[0].mxu0
  %5190 = vmatprep.mubr.f32.mxu0 0.0
  %5191 = vmatmul.mubr.f32.gmra.mrb[0].mxu0 %v4806
  %v5192 = vpop.f32.mrb[0].mxu0
  %v5193 = vadd.f32 %v5101, %v5192
  %v5194 = vpop.f32.mrb[0].mxu0
  %5195 = vmatprep.mubr.f32.mxu0 0.0
  %5196 = vmatmul.mubr.f32.gmra.mrb[0].mxu0 %v4809
  %v5197 = vpop.f32.mrb[0].mxu0
  %v5198 = vadd.f32 %v5101, %v5197
  %v5199 = vpop.f32.mrb[0].mxu0
  %5200 = vmatprep.mubr.f32.mxu0 0.0
  %5201 = vmatmul.mubr.f32.gmra.mrb[0].mxu0 %v4812
  %v5202 = vpop.f32.mrb[0].mxu0
  %v5203 = vadd.f32 %v5101, %v5202
  %v5204 = vpop.f32.mrb[0].mxu0
  %5205 = vmatprep.mubr.f32.mxu0 0.0
  %5206 = vmatmul.mubr.f32.gmra.mrb[0].mxu0 %v4815
  %v5207 = vpop.f32.mrb[0].mxu0
  %v5208 = vadd.f32 %v5101, %v5207
  %v5209 = vpop.f32.mrb[0].mxu0
  %5210 = vmatprep.mubr.f32.mxu0 0.0
  %5211 = vmatmul.mubr.f32.gmra.mrb[0].mxu0 %v4818
  %v5212 = vpop.f32.mrb[0].mxu0
  %v5213 = vadd.f32 %v5101, %v5212
  %v5214 = vpop.f32.mrb[0].mxu0
  %5215 = vmatprep.mubr.f32.mxu0 0.0
  %5216 = vmatmul.mubr.f32.gmra.mrb[0].mxu0 %v4821
  %v5217 = vpop.f32.mrb[0].mxu0
  %v5218 = vadd.f32 %v5101, %v5217
  %v5219 = vpop.f32.mrb[0].mxu0
  %5220 = vmatprep.mubr.f32.mxu0 0.0
  %5221 = vmatmul.mubr.f32.gmra.mrb[0].mxu0 %v4824
  %v5222 = vpop.f32.mrb[0].mxu0
  %v5223 = vadd.f32 %v5101, %v5222
  %v5224 = vpop.f32.mrb[0].mxu0
  %5225 = vmatprep.mubr.f32.mxu0 0.0
  %5226 = vmatmul.mubr.f32.gmra.mrb[0].mxu0 %v4827
  %v5227 = vpop.f32.mrb[0].mxu0
  %v5228 = vadd.f32 %v5101, %v5227
  %v5229 = vpop.f32.mrb[0].mxu0
  %5230 = vdwg.mxu0
  %v5232 = vsel %vm799, %v4899, 0
  %v5235 = vsel %vm799, %v4904, 0
  %v5238 = vsel %vm799, %v4909, 0
  %v5241 = vsel %vm799, %v4914, 0
  %v5244 = vsel %vm799, %v4919, 0
  %v5247 = vsel %vm799, %v4924, 0
  %v5250 = vsel %vm799, %v4929, 0
  %v5253 = vsel %vm799, %v4934, 0
  %v5256 = vsel %vm799, %v4939, 0
  %v5259 = vsel %vm799, %v4944, 0
  %v5262 = vsel %vm799, %v4949, 0
  %v5265 = vsel %vm799, %v4954, 0
  %v5268 = vsel %vm799, %v5036, 0
  %v5271 = vsel %vm799, %v5041, 0
  %v5274 = vsel %vm799, %v5046, 0
  %v5277 = vsel %vm799, %v5051, 0
  %v5280 = vsel %vm799, %v5056, 0
  %v5283 = vsel %vm799, %v5061, 0
  %v5286 = vsel %vm799, %v5066, 0
  %v5289 = vsel %vm799, %v5071, 0
  %v5292 = vsel %vm799, %v5076, 0
  %v5295 = vsel %vm799, %v5081, 0
  %v5298 = vsel %vm799, %v5086, 0
  %v5301 = vsel %vm799, %v5091, 0
  %5303 = vmatprep.subr.mxu0 0.0
  %5304 = vmatpush1.xpose.msra.mxu0 %v5268
  %5305 = vmatprep.subr.mxu0 0.0
  %5306 = vmatpush1.xpose.msra.mxu0 %v5271
  %5307 = vmatprep.subr.mxu0 0.0
  %5308 = vmatpush1.xpose.msra.mxu0 %v5274
  %5309 = vmatprep.subr.mxu0 0.0
  %5310 = vmatpush1.xpose.msra.mxu0 %v5277
  %5311 = vmatprep.subr.mxu0 0.0
  %5312 = vmatpush1.xpose.msra.mxu0 %v5280
  %5313 = vmatprep.subr.mxu0 0.0
  %5314 = vmatpush1.xpose.msra.mxu0 %v5283
  %5315 = vmatprep.subr.mxu0 0.0
  %5316 = vmatpush1.xpose.msra.mxu0 %v5286
  %5317 = vmatprep.subr.mxu0 0.0
  %5318 = vmatpush1.xpose.msra.mxu0 %v5289
  %5319 = vmatprep.subr.mxu0 0.0
  %5320 = vmatpush1.xpose.msra.mxu0 %v5292
  %5321 = vmatprep.subr.mxu0 0.0
  %5322 = vmatpush1.xpose.msra.mxu0 %v5295
  %5323 = vmatprep.subr.mxu0 0.0
  %5324 = vmatpush1.xpose.msra.mxu0 %v5298
  %5325 = vmatprep.subr.mxu0 0.0
  %5326 = vmatpush1.xpose.msra.mxu0 %v5301
  %5327 = vmatprep.subr.mxu0 0.0
  %5328 = vmatpush1.xpose.msra.mxu0 0.0
  %5329 = vmatprep.subr.mxu0 0.0
  %5330 = vmatpush1.xpose.msra.mxu0 0.0
  %5331 = vmatprep.subr.mxu0 0.0
  %5332 = vmatpush1.xpose.msra.mxu0 0.0
  %5333 = vmatprep.subr.mxu0 0.0
  %5334 = vmatpush1.xpose.msra.mxu0 0.0
  %5335 = vmatprep.subr.mxu0 0.0
  %5336 = vmatpush1.xpose.msra.mxu0 0.0
  %5337 = vmatprep.subr.mxu0 0.0
  %5338 = vmatpush1.xpose.msra.mxu0 0.0
  %5339 = vmatprep.subr.mxu0 0.0
  %5340 = vmatpush1.xpose.msra.mxu0 0.0
  %5341 = vmatprep.subr.mxu0 0.0
  %5342 = vmatpush1.xpose.msra.mxu0 0.0
  %5343 = vmatprep.subr.mxu0 0.0
  %5344 = vmatpush1.xpose.msra.mxu0 0.0
  %5345 = vmatprep.subr.mxu0 0.0
  %5346 = vmatpush1.xpose.msra.mxu0 0.0
  %5347 = vmatprep.subr.mxu0 0.0
  %5348 = vmatpush1.xpose.msra.mxu0 0.0
  %5349 = vmatprep.subr.mxu0 0.0
  %5350 = vmatpush1.xpose.msra.mxu0 0.0
  %5351 = vmatprep.subr.mxu0 0.0
  %5352 = vmatpush1.xpose.msra.mxu0 0.0
  %5353 = vmatprep.subr.mxu0 0.0
  %5354 = vmatpush1.xpose.msra.mxu0 0.0
  %5355 = vmatprep.subr.mxu0 0.0
  %5356 = vmatpush1.xpose.msra.mxu0 0.0
  %5357 = vmatprep.subr.mxu0 0.0
  %5358 = vmatpush1.xpose.msra.mxu0 0.0
  %5359 = vmatprep.subr.mxu0 0.0
  %5360 = vmatpush1.xpose.msra.mxu0 0.0
  %5361 = vmatprep.subr.mxu0 0.0
  %5362 = vmatpush1.xpose.msra.mxu0 0.0
  %5363 = vmatprep.subr.mxu0 0.0
  %5364 = vmatpush1.xpose.msra.mxu0 0.0
  %5365 = vmatprep.subr.mxu0 0.0
  %5366 = vmatpush1.xpose.msra.mxu0 0.0
  %5367 = vmatprep.mubr.f32.mxu0 0.0
  %5368 = vmatmul.mubr.f32.gmra.mrb[0].mxu0 %v5232
  %v5369 = vpop.f32.mrb[0].mxu0
  %v5370 = vadd.f32 0.0, %v5369
  %v5371 = vpop.f32.mrb[0].mxu0
  %5372 = vmatprep.mubr.f32.mxu0 0.0
  %5373 = vmatmul.mubr.f32.gmra.mrb[0].mxu0 %v5235
  %v5374 = vpop.f32.mrb[0].mxu0
  %v5375 = vadd.f32 0.0, %v5374
  %v5376 = vpop.f32.mrb[0].mxu0
  %5377 = vmatprep.mubr.f32.mxu0 0.0
  %5378 = vmatmul.mubr.f32.gmra.mrb[0].mxu0 %v5238
  %v5379 = vpop.f32.mrb[0].mxu0
  %v5380 = vadd.f32 0.0, %v5379
  %v5381 = vpop.f32.mrb[0].mxu0
  %5382 = vmatprep.mubr.f32.mxu0 0.0
  %5383 = vmatmul.mubr.f32.gmra.mrb[0].mxu0 %v5241
  %v5384 = vpop.f32.mrb[0].mxu0
  %v5385 = vadd.f32 0.0, %v5384
  %v5386 = vpop.f32.mrb[0].mxu0
  %5387 = vmatprep.mubr.f32.mxu0 0.0
  %5388 = vmatmul.mubr.f32.gmra.mrb[0].mxu0 %v5244
  %v5389 = vpop.f32.mrb[0].mxu0
  %v5390 = vadd.f32 0.0, %v5389
  %v5391 = vpop.f32.mrb[0].mxu0
  %5392 = vmatprep.mubr.f32.mxu0 0.0
  %5393 = vmatmul.mubr.f32.gmra.mrb[0].mxu0 %v5247
  %v5394 = vpop.f32.mrb[0].mxu0
  %v5395 = vadd.f32 0.0, %v5394
  %v5396 = vpop.f32.mrb[0].mxu0
  %5397 = vmatprep.mubr.f32.mxu0 0.0
  %5398 = vmatmul.mubr.f32.gmra.mrb[0].mxu0 %v5250
  %v5399 = vpop.f32.mrb[0].mxu0
  %v5400 = vadd.f32 0.0, %v5399
  %v5401 = vpop.f32.mrb[0].mxu0
  %5402 = vmatprep.mubr.f32.mxu0 0.0
  %5403 = vmatmul.mubr.f32.gmra.mrb[0].mxu0 %v5253
  %v5404 = vpop.f32.mrb[0].mxu0
  %v5405 = vadd.f32 0.0, %v5404
  %v5406 = vpop.f32.mrb[0].mxu0
  %5407 = vmatprep.mubr.f32.mxu0 0.0
  %5408 = vmatmul.mubr.f32.gmra.mrb[0].mxu0 %v5256
  %v5409 = vpop.f32.mrb[0].mxu0
  %v5410 = vadd.f32 0.0, %v5409
  %v5411 = vpop.f32.mrb[0].mxu0
  %5412 = vmatprep.mubr.f32.mxu0 0.0
  %5413 = vmatmul.mubr.f32.gmra.mrb[0].mxu0 %v5259
  %v5414 = vpop.f32.mrb[0].mxu0
  %v5415 = vadd.f32 0.0, %v5414
  %v5416 = vpop.f32.mrb[0].mxu0
  %5417 = vmatprep.mubr.f32.mxu0 0.0
  %5418 = vmatmul.mubr.f32.gmra.mrb[0].mxu0 %v5262
  %v5419 = vpop.f32.mrb[0].mxu0
  %v5420 = vadd.f32 0.0, %v5419
  %v5421 = vpop.f32.mrb[0].mxu0
  %5422 = vmatprep.mubr.f32.mxu0 0.0
  %5423 = vmatmul.mubr.f32.gmra.mrb[0].mxu0 %v5265
  %v5424 = vpop.f32.mrb[0].mxu0
  %v5425 = vadd.f32 0.0, %v5424
  %v5426 = vpop.f32.mrb[0].mxu0
  %5427 = vdwg.mxu0
  %v5428 = vmul.f32 %v5370, 0.2773501
  %v5429 = vmul.f32 %v5375, 0.2773501
  %v5430 = vmul.f32 %v5380, 0.2773501
  %v5431 = vmul.f32 %v5385, 0.2773501
  %v5432 = vmul.f32 %v5390, 0.2773501
  %v5433 = vmul.f32 %v5395, 0.2773501
  %v5434 = vmul.f32 %v5400, 0.2773501
  %v5435 = vmul.f32 %v5405, 0.2773501
  %v5436 = vmul.f32 %v5410, 0.2773501
  %v5437 = vmul.f32 %v5415, 0.2773501
  %v5438 = vmul.f32 %v5420, 0.2773501
  %v5439 = vmul.f32 %v5425, 0.2773501
  %v5440 = vsel %vm1452, %v5428, -inf
  %5441 = vmax.xlane.f32.xlu0 %v5440
  %v5442 = vpop.xlane.xlu0 %5441
  %v5443 = vsel %vm1452, %v5429, -inf
  %5444 = vmax.xlane.f32.xlu0 %v5443
  %v5445 = vpop.xlane.xlu0 %5444
  %v5446 = vsel %vm1452, %v5430, -inf
  %5447 = vmax.xlane.f32.xlu0 %v5446
  %v5448 = vpop.xlane.xlu0 %5447
  %v5449 = vsel %vm1452, %v5431, -inf
  %5450 = vmax.xlane.f32.xlu0 %v5449
  %v5451 = vpop.xlane.xlu0 %5450
  %v5452 = vsel %vm1452, %v5432, -inf
  %5453 = vmax.xlane.f32.xlu0 %v5452
  %v5454 = vpop.xlane.xlu0 %5453
  %v5455 = vsel %vm1452, %v5433, -inf
  %5456 = vmax.xlane.f32.xlu0 %v5455
  %v5457 = vpop.xlane.xlu0 %5456
  %v5458 = vsel %vm1452, %v5434, -inf
  %5459 = vmax.xlane.f32.xlu0 %v5458
  %v5460 = vpop.xlane.xlu0 %5459
  %v5461 = vsel %vm1452, %v5435, -inf
  %5462 = vmax.xlane.f32.xlu0 %v5461
  %v5463 = vpop.xlane.xlu0 %5462
  %v5464 = vsel %vm1452, %v5436, -inf
  %5465 = vmax.xlane.f32.xlu0 %v5464
  %v5466 = vpop.xlane.xlu0 %5465
  %v5467 = vsel %vm1452, %v5437, -inf
  %5468 = vmax.xlane.f32.xlu0 %v5467
  %v5469 = vpop.xlane.xlu0 %5468
  %v5470 = vsel %vm1452, %v5438, -inf
  %5471 = vmax.xlane.f32.xlu0 %v5470
  %v5472 = vpop.xlane.xlu0 %5471
  %v5473 = vsel %vm1452, %v5439, -inf
  %5474 = vmax.xlane.f32.xlu0 %v5473
  %v5475 = vpop.xlane.xlu0 %5474
  %v5476 = vsub.f32 %v5428, %v5442
  %v5477 = vsub.f32 %v5429, %v5445
  %v5478 = vsub.f32 %v5430, %v5448
  %v5479 = vsub.f32 %v5431, %v5451
  %v5480 = vsub.f32 %v5432, %v5454
  %v5481 = vsub.f32 %v5433, %v5457
  %v5482 = vsub.f32 %v5434, %v5460
  %v5483 = vsub.f32 %v5435, %v5463
  %v5484 = vsub.f32 %v5436, %v5466
  %v5485 = vsub.f32 %v5437, %v5469
  %v5486 = vsub.f32 %v5438, %v5472
  %v5487 = vsub.f32 %v5439, %v5475
  %v5488 = vmul.f32 %v5476, 1.442695
  %v5489 = vpow.pop %v5488
  %v5490 = vmul.f32 %v5477, 1.442695
  %v5491 = vpow.pop %v5490
  %v5492 = vmul.f32 %v5478, 1.442695
  %v5493 = vpow.pop %v5492
  %v5494 = vmul.f32 %v5479, 1.442695
  %v5495 = vpow.pop %v5494
  %v5496 = vmul.f32 %v5480, 1.442695
  %v5497 = vpow.pop %v5496
  %v5498 = vmul.f32 %v5481, 1.442695
  %v5499 = vpow.pop %v5498
  %v5500 = vmul.f32 %v5482, 1.442695
  %v5501 = vpow.pop %v5500
  %v5502 = vmul.f32 %v5483, 1.442695
  %v5503 = vpow.pop %v5502
  %v5504 = vmul.f32 %v5484, 1.442695
  %v5505 = vpow.pop %v5504
  %v5506 = vmul.f32 %v5485, 1.442695
  %v5507 = vpow.pop %v5506
  %v5508 = vmul.f32 %v5486, 1.442695
  %v5509 = vpow.pop %v5508
  %v5510 = vmul.f32 %v5487, 1.442695
  %v5511 = vpow.pop %v5510
  %v5512 = vsel %vm1452, %v5489, 0.0
  %5513 = vadd.xlane.f32.xlu0 %v5512
  %v5514 = vpop.xlane.xlu0 %5513
  %v5515 = vsel %vm1452, %v5491, 0.0
  %5516 = vadd.xlane.f32.xlu0 %v5515
  %v5517 = vpop.xlane.xlu0 %5516
  %v5518 = vsel %vm1452, %v5493, 0.0
  %5519 = vadd.xlane.f32.xlu0 %v5518
  %v5520 = vpop.xlane.xlu0 %5519
  %v5521 = vsel %vm1452, %v5495, 0.0
  %5522 = vadd.xlane.f32.xlu0 %v5521
  %v5523 = vpop.xlane.xlu0 %5522
  %v5524 = vsel %vm1452, %v5497, 0.0
  %5525 = vadd.xlane.f32.xlu0 %v5524
  %v5526 = vpop.xlane.xlu0 %5525
  %v5527 = vsel %vm1452, %v5499, 0.0
  %5528 = vadd.xlane.f32.xlu0 %v5527
  %v5529 = vpop.xlane.xlu0 %5528
  %v5530 = vsel %vm1452, %v5501, 0.0
  %5531 = vadd.xlane.f32.xlu0 %v5530
  %v5532 = vpop.xlane.xlu0 %5531
  %v5533 = vsel %vm1452, %v5503, 0.0
  %5534 = vadd.xlane.f32.xlu0 %v5533
  %v5535 = vpop.xlane.xlu0 %5534
  %v5536 = vsel %vm1452, %v5505, 0.0
  %5537 = vadd.xlane.f32.xlu0 %v5536
  %v5538 = vpop.xlane.xlu0 %5537
  %v5539 = vsel %vm1452, %v5507, 0.0
  %5540 = vadd.xlane.f32.xlu0 %v5539
  %v5541 = vpop.xlane.xlu0 %5540
  %v5542 = vsel %vm1452, %v5509, 0.0
  %5543 = vadd.xlane.f32.xlu0 %v5542
  %v5544 = vpop.xlane.xlu0 %5543
  %v5545 = vsel %vm1452, %v5511, 0.0
  %5546 = vadd.xlane.f32.xlu0 %v5545
  %v5547 = vpop.xlane.xlu0 %5546
  %v5548 = vrcp.pop %v5514
  %v5549 = vmul.f32 %v5489, %v5548
  %v5550 = vrcp.pop %v5517
  %v5551 = vmul.f32 %v5491, %v5550
  %v5552 = vrcp.pop %v5520
  %v5553 = vmul.f32 %v5493, %v5552
  %v5554 = vrcp.pop %v5523
  %v5555 = vmul.f32 %v5495, %v5554
  %v5556 = vrcp.pop %v5526
  %v5557 = vmul.f32 %v5497, %v5556
  %v5558 = vrcp.pop %v5529
  %v5559 = vmul.f32 %v5499, %v5558
  %v5560 = vrcp.pop %v5532
  %v5561 = vmul.f32 %v5501, %v5560
  %v5562 = vrcp.pop %v5535
  %v5563 = vmul.f32 %v5503, %v5562
  %v5564 = vrcp.pop %v5538
  %v5565 = vmul.f32 %v5505, %v5564
  %v5566 = vrcp.pop %v5541
  %v5567 = vmul.f32 %v5507, %v5566
  %v5568 = vrcp.pop %v5544
  %v5569 = vmul.f32 %v5509, %v5568
  %v5570 = vrcp.pop %v5547
  %v5571 = vmul.f32 %v5511, %v5570
  %v5573 = vsel %vm1452, %v5549, 0
  %v5576 = vsel %vm1452, %v5551, 0
  %v5579 = vsel %vm1452, %v5553, 0
  %v5582 = vsel %vm1452, %v5555, 0
  %v5585 = vsel %vm1452, %v5557, 0
  %v5588 = vsel %vm1452, %v5559, 0
  %v5591 = vsel %vm1452, %v5561, 0
  %v5594 = vsel %vm1452, %v5563, 0
  %v5597 = vsel %vm1452, %v5565, 0
  %v5600 = vsel %vm1452, %v5567, 0
  %v5603 = vsel %vm1452, %v5569, 0
  %v5606 = vsel %vm1452, %v5571, 0
  %5608 = vmatprep.subr.mxu0 0.0
  %5609 = vmatpush1.msra.mxu0 %v5173
  %5610 = vmatprep.subr.mxu0 0.0
  %5611 = vmatpush1.msra.mxu0 %v5178
  %5612 = vmatprep.subr.mxu0 0.0
  %5613 = vmatpush1.msra.mxu0 %v5183
  %5614 = vmatprep.subr.mxu0 0.0
  %5615 = vmatpush1.msra.mxu0 %v5188
  %5616 = vmatprep.subr.mxu0 0.0
  %5617 = vmatpush1.msra.mxu0 %v5193
  %5618 = vmatprep.subr.mxu0 0.0
  %5619 = vmatpush1.msra.mxu0 %v5198
  %5620 = vmatprep.subr.mxu0 0.0
  %5621 = vmatpush1.msra.mxu0 %v5203
  %5622 = vmatprep.subr.mxu0 0.0
  %5623 = vmatpush1.msra.mxu0 %v5208
  %5624 = vmatprep.subr.mxu0 0.0
  %5625 = vmatpush1.msra.mxu0 %v5213
  %5626 = vmatprep.subr.mxu0 0.0
  %5627 = vmatpush1.msra.mxu0 %v5218
  %5628 = vmatprep.subr.mxu0 0.0
  %5629 = vmatpush1.msra.mxu0 %v5223
  %5630 = vmatprep.subr.mxu0 0.0
  %5631 = vmatpush1.msra.mxu0 %v5228
  %5632 = vmatprep.subr.mxu0 0.0
  %5633 = vmatpush1.msra.mxu0 0.0
  %5634 = vmatprep.subr.mxu0 0.0
  %5635 = vmatpush1.msra.mxu0 0.0
  %5636 = vmatprep.subr.mxu0 0.0
  %5637 = vmatpush1.msra.mxu0 0.0
  %5638 = vmatprep.subr.mxu0 0.0
  %5639 = vmatpush1.msra.mxu0 0.0
  %5640 = vmatprep.subr.mxu0 0.0
  %5641 = vmatpush1.msra.mxu0 0.0
  %5642 = vmatprep.subr.mxu0 0.0
  %5643 = vmatpush1.msra.mxu0 0.0
  %5644 = vmatprep.subr.mxu0 0.0
  %5645 = vmatpush1.msra.mxu0 0.0
  %5646 = vmatprep.subr.mxu0 0.0
  %5647 = vmatpush1.msra.mxu0 0.0
  %5648 = vmatprep.subr.mxu0 0.0
  %5649 = vmatpush1.msra.mxu0 0.0
  %5650 = vmatprep.subr.mxu0 0.0
  %5651 = vmatpush1.msra.mxu0 0.0
  %5652 = vmatprep.subr.mxu0 0.0
  %5653 = vmatpush1.msra.mxu0 0.0
  %5654 = vmatprep.subr.mxu0 0.0
  %5655 = vmatpush1.msra.mxu0 0.0
  %5656 = vmatprep.subr.mxu0 0.0
  %5657 = vmatpush1.msra.mxu0 0.0
  %5658 = vmatprep.subr.mxu0 0.0
  %5659 = vmatpush1.msra.mxu0 0.0
  %5660 = vmatprep.subr.mxu0 0.0
  %5661 = vmatpush1.msra.mxu0 0.0
  %5662 = vmatprep.subr.mxu0 0.0
  %5663 = vmatpush1.msra.mxu0 0.0
  %5664 = vmatprep.subr.mxu0 0.0
  %5665 = vmatpush1.msra.mxu0 0.0
  %5666 = vmatprep.subr.mxu0 0.0
  %5667 = vmatpush1.msra.mxu0 0.0
  %5668 = vmatprep.subr.mxu0 0.0
  %5669 = vmatpush1.msra.mxu0 0.0
  %5670 = vmatprep.subr.mxu0 0.0
  %5671 = vmatpush1.msra.mxu0 0.0
  %5672 = vmatprep.mubr.f32.mxu0 0.0
  %5673 = vmatmul.mubr.f32.gmra.mrb[0].mxu0 %v5573
  %v5674 = vpop.f32.mrb[0].mxu0
  %v5675 = vadd.f32 0.0, %v5674
  %v5676 = vpop.f32.mrb[0].mxu0
  %5677 = vmatprep.mubr.f32.mxu0 0.0
  %5678 = vmatmul.mubr.f32.gmra.mrb[0].mxu0 %v5576
  %v5679 = vpop.f32.mrb[0].mxu0
  %v5680 = vadd.f32 0.0, %v5679
  %v5681 = vpop.f32.mrb[0].mxu0
  %5682 = vmatprep.mubr.f32.mxu0 0.0
  %5683 = vmatmul.mubr.f32.gmra.mrb[0].mxu0 %v5579
  %v5684 = vpop.f32.mrb[0].mxu0
  %v5685 = vadd.f32 0.0, %v5684
  %v5686 = vpop.f32.mrb[0].mxu0
  %5687 = vmatprep.mubr.f32.mxu0 0.0
  %5688 = vmatmul.mubr.f32.gmra.mrb[0].mxu0 %v5582
  %v5689 = vpop.f32.mrb[0].mxu0
  %v5690 = vadd.f32 0.0, %v5689
  %v5691 = vpop.f32.mrb[0].mxu0
  %5692 = vmatprep.mubr.f32.mxu0 0.0
  %5693 = vmatmul.mubr.f32.gmra.mrb[0].mxu0 %v5585
  %v5694 = vpop.f32.mrb[0].mxu0
  %v5695 = vadd.f32 0.0, %v5694
  %v5696 = vpop.f32.mrb[0].mxu0
  %5697 = vmatprep.mubr.f32.mxu0 0.0
  %5698 = vmatmul.mubr.f32.gmra.mrb[0].mxu0 %v5588
  %v5699 = vpop.f32.mrb[0].mxu0
  %v5700 = vadd.f32 0.0, %v5699
  %v5701 = vpop.f32.mrb[0].mxu0
  %5702 = vmatprep.mubr.f32.mxu0 0.0
  %5703 = vmatmul.mubr.f32.gmra.mrb[0].mxu0 %v5591
  %v5704 = vpop.f32.mrb[0].mxu0
  %v5705 = vadd.f32 0.0, %v5704
  %v5706 = vpop.f32.mrb[0].mxu0
  %5707 = vmatprep.mubr.f32.mxu0 0.0
  %5708 = vmatmul.mubr.f32.gmra.mrb[0].mxu0 %v5594
  %v5709 = vpop.f32.mrb[0].mxu0
  %v5710 = vadd.f32 0.0, %v5709
  %v5711 = vpop.f32.mrb[0].mxu0
  %5712 = vmatprep.mubr.f32.mxu0 0.0
  %5713 = vmatmul.mubr.f32.gmra.mrb[0].mxu0 %v5597
  %v5714 = vpop.f32.mrb[0].mxu0
  %v5715 = vadd.f32 0.0, %v5714
  %v5716 = vpop.f32.mrb[0].mxu0
  %5717 = vmatprep.mubr.f32.mxu0 0.0
  %5718 = vmatmul.mubr.f32.gmra.mrb[0].mxu0 %v5600
  %v5719 = vpop.f32.mrb[0].mxu0
  %v5720 = vadd.f32 0.0, %v5719
  %v5721 = vpop.f32.mrb[0].mxu0
  %5722 = vmatprep.mubr.f32.mxu0 0.0
  %5723 = vmatmul.mubr.f32.gmra.mrb[0].mxu0 %v5603
  %v5724 = vpop.f32.mrb[0].mxu0
  %v5725 = vadd.f32 0.0, %v5724
  %v5726 = vpop.f32.mrb[0].mxu0
  %5727 = vmatprep.mubr.f32.mxu0 0.0
  %5728 = vmatmul.mubr.f32.gmra.mrb[0].mxu0 %v5606
  %v5729 = vpop.f32.mrb[0].mxu0
  %v5730 = vadd.f32 0.0, %v5729
  %v5731 = vpop.f32.mrb[0].mxu0
  %5732 = vdwg.mxu0
  %v5734 = vlaneseq
  %v5735 = vshrl.u32 %v5734, 7
  %v5736 = vsub.s32 0, %v5735
  %v5737 = vrot.slane %v4783, %v5736
  %v5740 = vsel %vm799, %v5675, 0
  %v5743 = vsel %vm799, %v5680, 0
  %v5746 = vsel %vm799, %v5685, 0
  %v5749 = vsel %vm799, %v5690, 0
  %v5752 = vsel %vm799, %v5695, 0
  %v5755 = vsel %vm799, %v5700, 0
  %v5758 = vsel %vm799, %v5705, 0
  %v5761 = vsel %vm799, %v5710, 0
  %v5764 = vsel %vm799, %v5715, 0
  %v5767 = vsel %vm799, %v5720, 0
  %v5770 = vsel %vm799, %v5725, 0
  %v5773 = vsel %vm799, %v5730, 0
  %v5776 = vsel %vm836, %v4782, 0
  %5778 = vmatprep.subr.mxu0 0.0
  %5779 = vmatpush1.msra.mxu0 %v4781
  %5780 = vmatprep.subr.mxu0 0.0
  %5781 = vmatpush1.msra.mxu0 %v5776
  %5782 = vmatprep.subr.mxu0 0.0
  %5783 = vmatpush1.msra.mxu0 0.0
  %5784 = vmatprep.subr.mxu0 0.0
  %5785 = vmatpush1.msra.mxu0 0.0
  %5786 = vmatprep.subr.mxu0 0.0
  %5787 = vmatpush1.msra.mxu0 0.0
  %5788 = vmatprep.subr.mxu0 0.0
  %5789 = vmatpush1.msra.mxu0 0.0
  %5790 = vmatprep.subr.mxu0 0.0
  %5791 = vmatpush1.msra.mxu0 0.0
  %5792 = vmatprep.subr.mxu0 0.0
  %5793 = vmatpush1.msra.mxu0 0.0
  %5794 = vmatprep.subr.mxu0 0.0
  %5795 = vmatpush1.msra.mxu0 0.0
  %5796 = vmatprep.subr.mxu0 0.0
  %5797 = vmatpush1.msra.mxu0 0.0
  %5798 = vmatprep.subr.mxu0 0.0
  %5799 = vmatpush1.msra.mxu0 0.0
  %5800 = vmatprep.subr.mxu0 0.0
  %5801 = vmatpush1.msra.mxu0 0.0
  %5802 = vmatprep.subr.mxu0 0.0
  %5803 = vmatpush1.msra.mxu0 0.0
  %5804 = vmatprep.subr.mxu0 0.0
  %5805 = vmatpush1.msra.mxu0 0.0
  %5806 = vmatprep.subr.mxu0 0.0
  %5807 = vmatpush1.msra.mxu0 0.0
  %5808 = vmatprep.subr.mxu0 0.0
  %5809 = vmatpush1.msra.mxu0 0.0
  %5810 = vmatprep.subr.mxu0 0.0
  %5811 = vmatpush1.msra.mxu0 0.0
  %5812 = vmatprep.subr.mxu0 0.0
  %5813 = vmatpush1.msra.mxu0 0.0
  %5814 = vmatprep.subr.mxu0 0.0
  %5815 = vmatpush1.msra.mxu0 0.0
  %5816 = vmatprep.subr.mxu0 0.0
  %5817 = vmatpush1.msra.mxu0 0.0
  %5818 = vmatprep.subr.mxu0 0.0
  %5819 = vmatpush1.msra.mxu0 0.0
  %5820 = vmatprep.subr.mxu0 0.0
  %5821 = vmatpush1.msra.mxu0 0.0
  %5822 = vmatprep.subr.mxu0 0.0
  %5823 = vmatpush1.msra.mxu0 0.0
  %5824 = vmatprep.subr.mxu0 0.0
  %5825 = vmatpush1.msra.mxu0 0.0
  %5826 = vmatprep.subr.mxu0 0.0
  %5827 = vmatpush1.msra.mxu0 0.0
  %5828 = vmatprep.subr.mxu0 0.0
  %5829 = vmatpush1.msra.mxu0 0.0
  %5830 = vmatprep.subr.mxu0 0.0
  %5831 = vmatpush1.msra.mxu0 0.0
  %5832 = vmatprep.subr.mxu0 0.0
  %5833 = vmatpush1.msra.mxu0 0.0
  %5834 = vmatprep.subr.mxu0 0.0
  %5835 = vmatpush1.msra.mxu0 0.0
  %5836 = vmatprep.subr.mxu0 0.0
  %5837 = vmatpush1.msra.mxu0 0.0
  %5838 = vmatprep.subr.mxu0 0.0
  %5839 = vmatpush1.msra.mxu0 0.0
  %5840 = vmatprep.subr.mxu0 0.0
  %5841 = vmatpush1.msra.mxu0 0.0
  %5842 = vmatprep.mubr.f32.mxu0 0.0
  %5843 = vmatmul.mubr.f32.gmra.mrb[0].mxu0 %v5740
  %v5844 = vpop.f32.mrb[0].mxu0
  %v5845 = vadd.f32 %v5737, %v5844
  %v5846 = vpop.f32.mrb[0].mxu0
  %5847 = vmatprep.mubr.f32.mxu0 0.0
  %5848 = vmatmul.mubr.f32.gmra.mrb[0].mxu0 %v5743
  %v5849 = vpop.f32.mrb[0].mxu0
  %v5850 = vadd.f32 %v5737, %v5849
  %v5851 = vpop.f32.mrb[0].mxu0
  %5852 = vmatprep.mubr.f32.mxu0 0.0
  %5853 = vmatmul.mubr.f32.gmra.mrb[0].mxu0 %v5746
  %v5854 = vpop.f32.mrb[0].mxu0
  %v5855 = vadd.f32 %v5737, %v5854
  %v5856 = vpop.f32.mrb[0].mxu0
  %5857 = vmatprep.mubr.f32.mxu0 0.0
  %5858 = vmatmul.mubr.f32.gmra.mrb[0].mxu0 %v5749
  %v5859 = vpop.f32.mrb[0].mxu0
  %v5860 = vadd.f32 %v5737, %v5859
  %v5861 = vpop.f32.mrb[0].mxu0
  %5862 = vmatprep.mubr.f32.mxu0 0.0
  %5863 = vmatmul.mubr.f32.gmra.mrb[0].mxu0 %v5752
  %v5864 = vpop.f32.mrb[0].mxu0
  %v5865 = vadd.f32 %v5737, %v5864
  %v5866 = vpop.f32.mrb[0].mxu0
  %5867 = vmatprep.mubr.f32.mxu0 0.0
  %5868 = vmatmul.mubr.f32.gmra.mrb[0].mxu0 %v5755
  %v5869 = vpop.f32.mrb[0].mxu0
  %v5870 = vadd.f32 %v5737, %v5869
  %v5871 = vpop.f32.mrb[0].mxu0
  %5872 = vmatprep.mubr.f32.mxu0 0.0
  %5873 = vmatmul.mubr.f32.gmra.mrb[0].mxu0 %v5758
  %v5874 = vpop.f32.mrb[0].mxu0
  %v5875 = vadd.f32 %v5737, %v5874
  %v5876 = vpop.f32.mrb[0].mxu0
  %5877 = vmatprep.mubr.f32.mxu0 0.0
  %5878 = vmatmul.mubr.f32.gmra.mrb[0].mxu0 %v5761
  %v5879 = vpop.f32.mrb[0].mxu0
  %v5880 = vadd.f32 %v5737, %v5879
  %v5881 = vpop.f32.mrb[0].mxu0
  %5882 = vmatprep.mubr.f32.mxu0 0.0
  %5883 = vmatmul.mubr.f32.gmra.mrb[0].mxu0 %v5764
  %v5884 = vpop.f32.mrb[0].mxu0
  %v5885 = vadd.f32 %v5737, %v5884
  %v5886 = vpop.f32.mrb[0].mxu0
  %5887 = vmatprep.mubr.f32.mxu0 0.0
  %5888 = vmatmul.mubr.f32.gmra.mrb[0].mxu0 %v5767
  %v5889 = vpop.f32.mrb[0].mxu0
  %v5890 = vadd.f32 %v5737, %v5889
  %v5891 = vpop.f32.mrb[0].mxu0
  %5892 = vmatprep.mubr.f32.mxu0 0.0
  %5893 = vmatmul.mubr.f32.gmra.mrb[0].mxu0 %v5770
  %v5894 = vpop.f32.mrb[0].mxu0
  %v5895 = vadd.f32 %v5737, %v5894
  %v5896 = vpop.f32.mrb[0].mxu0
  %5897 = vmatprep.mubr.f32.mxu0 0.0
  %5898 = vmatmul.mubr.f32.gmra.mrb[0].mxu0 %v5773
  %v5899 = vpop.f32.mrb[0].mxu0
  %v5900 = vadd.f32 %v5737, %v5899
  %v5901 = vpop.f32.mrb[0].mxu0
  %5902 = vdwg.mxu0
  %v5903 = vadd.f32 %v5845, %v773
  %v5904 = vadd.f32 %v5850, %v774
  %v5905 = vadd.f32 %v5855, %v775
  %v5906 = vadd.f32 %v5860, %v776
  %v5907 = vadd.f32 %v5865, %v777
  %v5908 = vadd.f32 %v5870, %v778
  %v5909 = vadd.f32 %v5875, %v779
  %v5910 = vadd.f32 %v5880, %v780
  %v5911 = vadd.f32 %v5885, %v781
  %v5912 = vadd.f32 %v5890, %v782
  %v5913 = vadd.f32 %v5895, %v783
  %v5914 = vadd.f32 %v5900, %v784
  %v5915 = vld [vmem:[%s8] sm:$0x1]
  %v5916 = vld [vmem:[%s9] sm:$0x1]
  %v5917 = vsel %vm799, %v5903, 0.0
  %5918 = vadd.xlane.f32.xlu0 %v5917
  %v5919 = vpop.xlane.xlu0 %5918
  %v5920 = vsel %vm799, %v5904, 0.0
  %5921 = vadd.xlane.f32.xlu0 %v5920
  %v5922 = vpop.xlane.xlu0 %5921
  %v5923 = vsel %vm799, %v5905, 0.0
  %5924 = vadd.xlane.f32.xlu0 %v5923
  %v5925 = vpop.xlane.xlu0 %5924
  %v5926 = vsel %vm799, %v5906, 0.0
  %5927 = vadd.xlane.f32.xlu0 %v5926
  %v5928 = vpop.xlane.xlu0 %5927
  %v5929 = vsel %vm799, %v5907, 0.0
  %5930 = vadd.xlane.f32.xlu0 %v5929
  %v5931 = vpop.xlane.xlu0 %5930
  %v5932 = vsel %vm799, %v5908, 0.0
  %5933 = vadd.xlane.f32.xlu0 %v5932
  %v5934 = vpop.xlane.xlu0 %5933
  %v5935 = vsel %vm799, %v5909, 0.0
  %5936 = vadd.xlane.f32.xlu0 %v5935
  %v5937 = vpop.xlane.xlu0 %5936
  %v5938 = vsel %vm799, %v5910, 0.0
  %5939 = vadd.xlane.f32.xlu0 %v5938
  %v5940 = vpop.xlane.xlu0 %5939
  %v5941 = vsel %vm799, %v5911, 0.0
  %5942 = vadd.xlane.f32.xlu0 %v5941
  %v5943 = vpop.xlane.xlu0 %5942
  %v5944 = vsel %vm799, %v5912, 0.0
  %5945 = vadd.xlane.f32.xlu0 %v5944
  %v5946 = vpop.xlane.xlu0 %5945
  %v5947 = vsel %vm799, %v5913, 0.0
  %5948 = vadd.xlane.f32.xlu0 %v5947
  %v5949 = vpop.xlane.xlu0 %5948
  %v5950 = vsel %vm799, %v5914, 0.0
  %5951 = vadd.xlane.f32.xlu0 %v5950
  %v5952 = vpop.xlane.xlu0 %5951
  %v5953 = vmul.f32 %v5919, %v1966
  %v5954 = vmul.f32 %v5922, %v1966
  %v5955 = vmul.f32 %v5925, %v1966
  %v5956 = vmul.f32 %v5928, %v1966
  %v5957 = vmul.f32 %v5931, %v1966
  %v5958 = vmul.f32 %v5934, %v1966
  %v5959 = vmul.f32 %v5937, %v1966
  %v5960 = vmul.f32 %v5940, %v1966
  %v5961 = vmul.f32 %v5943, %v1966
  %v5962 = vmul.f32 %v5946, %v1966
  %v5963 = vmul.f32 %v5949, %v1966
  %v5964 = vmul.f32 %v5952, %v1966
  %v5965 = vsub.f32 %v5903, %v5953
  %v5966 = vsub.f32 %v5904, %v5954
  %v5967 = vsub.f32 %v5905, %v5955
  %v5968 = vsub.f32 %v5906, %v5956
  %v5969 = vsub.f32 %v5907, %v5957
  %v5970 = vsub.f32 %v5908, %v5958
  %v5971 = vsub.f32 %v5909, %v5959
  %v5972 = vsub.f32 %v5910, %v5960
  %v5973 = vsub.f32 %v5911, %v5961
  %v5974 = vsub.f32 %v5912, %v5962
  %v5975 = vsub.f32 %v5913, %v5963
  %v5976 = vsub.f32 %v5914, %v5964
  %v5977 = vmul.f32 %v5965, %v5965
  %v5978 = vmul.f32 %v5966, %v5966
  %v5979 = vmul.f32 %v5967, %v5967
  %v5980 = vmul.f32 %v5968, %v5968
  %v5981 = vmul.f32 %v5969, %v5969
  %v5982 = vmul.f32 %v5970, %v5970
  %v5983 = vmul.f32 %v5971, %v5971
  %v5984 = vmul.f32 %v5972, %v5972
  %v5985 = vmul.f32 %v5973, %v5973
  %v5986 = vmul.f32 %v5974, %v5974
  %v5987 = vmul.f32 %v5975, %v5975
  %v5988 = vmul.f32 %v5976, %v5976
  %v5989 = vsel %vm799, %v5977, 0.0
  %5990 = vadd.xlane.f32.xlu0 %v5989
  %v5991 = vpop.xlane.xlu0 %5990
  %v5992 = vsel %vm799, %v5978, 0.0
  %5993 = vadd.xlane.f32.xlu0 %v5992
  %v5994 = vpop.xlane.xlu0 %5993
  %v5995 = vsel %vm799, %v5979, 0.0
  %5996 = vadd.xlane.f32.xlu0 %v5995
  %v5997 = vpop.xlane.xlu0 %5996
  %v5998 = vsel %vm799, %v5980, 0.0
  %5999 = vadd.xlane.f32.xlu0 %v5998
  %v6000 = vpop.xlane.xlu0 %5999
  %v6001 = vsel %vm799, %v5981, 0.0
  %6002 = vadd.xlane.f32.xlu0 %v6001
  %v6003 = vpop.xlane.xlu0 %6002
  %v6004 = vsel %vm799, %v5982, 0.0
  %6005 = vadd.xlane.f32.xlu0 %v6004
  %v6006 = vpop.xlane.xlu0 %6005
  %v6007 = vsel %vm799, %v5983, 0.0
  %6008 = vadd.xlane.f32.xlu0 %v6007
  %v6009 = vpop.xlane.xlu0 %6008
  %v6010 = vsel %vm799, %v5984, 0.0
  %6011 = vadd.xlane.f32.xlu0 %v6010
  %v6012 = vpop.xlane.xlu0 %6011
  %v6013 = vsel %vm799, %v5985, 0.0
  %6014 = vadd.xlane.f32.xlu0 %v6013
  %v6015 = vpop.xlane.xlu0 %6014
  %v6016 = vsel %vm799, %v5986, 0.0
  %6017 = vadd.xlane.f32.xlu0 %v6016
  %v6018 = vpop.xlane.xlu0 %6017
  %v6019 = vsel %vm799, %v5987, 0.0
  %6020 = vadd.xlane.f32.xlu0 %v6019
  %v6021 = vpop.xlane.xlu0 %6020
  %v6022 = vsel %vm799, %v5988, 0.0
  %6023 = vadd.xlane.f32.xlu0 %v6022
  %v6024 = vpop.xlane.xlu0 %6023
  %v6025 = vmul.f32 %v5991, %v1966
  %v6026 = vmul.f32 %v5994, %v1966
  %v6027 = vmul.f32 %v5997, %v1966
  %v6028 = vmul.f32 %v6000, %v1966
  %v6029 = vmul.f32 %v6003, %v1966
  %v6030 = vmul.f32 %v6006, %v1966
  %v6031 = vmul.f32 %v6009, %v1966
  %v6032 = vmul.f32 %v6012, %v1966
  %v6033 = vmul.f32 %v6015, %v1966
  %v6034 = vmul.f32 %v6018, %v1966
  %v6035 = vmul.f32 %v6021, %v1966
  %v6036 = vmul.f32 %v6024, %v1966
  %v6037 = vadd.f32 %v6025, 1e-05
  %v6038 = vadd.f32 %v6026, 1e-05
  %v6039 = vadd.f32 %v6027, 1e-05
  %v6040 = vadd.f32 %v6028, 1e-05
  %v6041 = vadd.f32 %v6029, 1e-05
  %v6042 = vadd.f32 %v6030, 1e-05
  %v6043 = vadd.f32 %v6031, 1e-05
  %v6044 = vadd.f32 %v6032, 1e-05
  %v6045 = vadd.f32 %v6033, 1e-05
  %v6046 = vadd.f32 %v6034, 1e-05
  %v6047 = vadd.f32 %v6035, 1e-05
  %v6048 = vadd.f32 %v6036, 1e-05
  %v6049 = vrsqrt.pop %v6037
  %v6050 = vrsqrt.pop %v6038
  %v6051 = vrsqrt.pop %v6039
  %v6052 = vrsqrt.pop %v6040
  %v6053 = vrsqrt.pop %v6041
  %v6054 = vrsqrt.pop %v6042
  %v6055 = vrsqrt.pop %v6043
  %v6056 = vrsqrt.pop %v6044
  %v6057 = vrsqrt.pop %v6045
  %v6058 = vrsqrt.pop %v6046
  %v6059 = vrsqrt.pop %v6047
  %v6060 = vrsqrt.pop %v6048
  %v6061 = vmul.f32 %v5965, %v6049
  %v6062 = vmul.f32 %v5966, %v6050
  %v6063 = vmul.f32 %v5967, %v6051
  %v6064 = vmul.f32 %v5968, %v6052
  %v6065 = vmul.f32 %v5969, %v6053
  %v6066 = vmul.f32 %v5970, %v6054
  %v6067 = vmul.f32 %v5971, %v6055
  %v6068 = vmul.f32 %v5972, %v6056
  %v6069 = vmul.f32 %v5973, %v6057
  %v6070 = vmul.f32 %v5974, %v6058
  %v6071 = vmul.f32 %v5975, %v6059
  %v6072 = vmul.f32 %v5976, %v6060
  %v6074 = vlaneseq
  %v6075 = vshrl.u32 %v6074, 7
  %v6076 = vsub.s32 0, %v6075
  %v6077 = vrot.slane %v5915, %v6076
  %v6079 = vmul.f32 %v6061, %v6077
  %v6080 = vmul.f32 %v6062, %v6077
  %v6081 = vmul.f32 %v6063, %v6077
  %v6082 = vmul.f32 %v6064, %v6077
  %v6083 = vmul.f32 %v6065, %v6077
  %v6084 = vmul.f32 %v6066, %v6077
  %v6085 = vmul.f32 %v6067, %v6077
  %v6086 = vmul.f32 %v6068, %v6077
  %v6087 = vmul.f32 %v6069, %v6077
  %v6088 = vmul.f32 %v6070, %v6077
  %v6089 = vmul.f32 %v6071, %v6077
  %v6090 = vmul.f32 %v6072, %v6077
  %v6092 = vlaneseq
  %v6093 = vshrl.u32 %v6092, 7
  %v6094 = vsub.s32 0, %v6093
  %v6095 = vrot.slane %v5916, %v6094
  %v6097 = vadd.f32 %v6079, %v6095
  %v6098 = vadd.f32 %v6080, %v6095
  %v6099 = vadd.f32 %v6081, %v6095
  %v6100 = vadd.f32 %v6082, %v6095
  %v6101 = vadd.f32 %v6083, %v6095
  %v6102 = vadd.f32 %v6084, %v6095
  %v6103 = vadd.f32 %v6085, %v6095
  %v6104 = vadd.f32 %v6086, %v6095
  %v6105 = vadd.f32 %v6087, %v6095
  %v6106 = vadd.f32 %v6088, %v6095
  %v6107 = vadd.f32 %v6089, %v6095
  %v6108 = vadd.f32 %v6090, %v6095
  %v6109 = vld [vmem:[%s12] sm:$0xff]
  %v6110 = vld [vmem:[%s12 + $0x8] sm:$0x1f]
  %v6111 = vld [vmem:[%s13] sm:$0x1]
  %v6112 = vld [vmem:[%s10] sm:$0xff]
  %v6113 = vld [vmem:[%s10 + $0x8] sm:$0x1f]
  %v6114 = vld [vmem:[%s11] sm:$0x1]
  %v6116 = vlaneseq
  %v6117 = vshrl.u32 %v6116, 7
  %v6118 = vsub.s32 0, %v6117
  %v6119 = vrot.slane %v6114, %v6118
  %v6122 = vsel %vm799, %v6097, 0
  %v6125 = vsel %vm799, %v6098, 0
  %v6128 = vsel %vm799, %v6099, 0
  %v6131 = vsel %vm799, %v6100, 0
  %v6134 = vsel %vm799, %v6101, 0
  %v6137 = vsel %vm799, %v6102, 0
  %v6140 = vsel %vm799, %v6103, 0
  %v6143 = vsel %vm799, %v6104, 0
  %v6146 = vsel %vm799, %v6105, 0
  %v6149 = vsel %vm799, %v6106, 0
  %v6152 = vsel %vm799, %v6107, 0
  %v6155 = vsel %vm799, %v6108, 0
  %v6158 = vsel %vm836, %v6113, 0
  %6160 = vmatprep.subr.mxu0 0.0
  %6161 = vmatpush1.msra.mxu0 %v6112
  %6162 = vmatprep.subr.mxu0 0.0
  %6163 = vmatpush1.msra.mxu0 %v6158
  %6164 = vmatprep.subr.mxu0 0.0
  %6165 = vmatpush1.msra.mxu0 0.0
  %6166 = vmatprep.subr.mxu0 0.0
  %6167 = vmatpush1.msra.mxu0 0.0
  %6168 = vmatprep.subr.mxu0 0.0
  %6169 = vmatpush1.msra.mxu0 0.0
  %6170 = vmatprep.subr.mxu0 0.0
  %6171 = vmatpush1.msra.mxu0 0.0
  %6172 = vmatprep.subr.mxu0 0.0
  %6173 = vmatpush1.msra.mxu0 0.0
  %6174 = vmatprep.subr.mxu0 0.0
  %6175 = vmatpush1.msra.mxu0 0.0
  %6176 = vmatprep.subr.mxu0 0.0
  %6177 = vmatpush1.msra.mxu0 0.0
  %6178 = vmatprep.subr.mxu0 0.0
  %6179 = vmatpush1.msra.mxu0 0.0
  %6180 = vmatprep.subr.mxu0 0.0
  %6181 = vmatpush1.msra.mxu0 0.0
  %6182 = vmatprep.subr.mxu0 0.0
  %6183 = vmatpush1.msra.mxu0 0.0
  %6184 = vmatprep.subr.mxu0 0.0
  %6185 = vmatpush1.msra.mxu0 0.0
  %6186 = vmatprep.subr.mxu0 0.0
  %6187 = vmatpush1.msra.mxu0 0.0
  %6188 = vmatprep.subr.mxu0 0.0
  %6189 = vmatpush1.msra.mxu0 0.0
  %6190 = vmatprep.subr.mxu0 0.0
  %6191 = vmatpush1.msra.mxu0 0.0
  %6192 = vmatprep.subr.mxu0 0.0
  %6193 = vmatpush1.msra.mxu0 0.0
  %6194 = vmatprep.subr.mxu0 0.0
  %6195 = vmatpush1.msra.mxu0 0.0
  %6196 = vmatprep.subr.mxu0 0.0
  %6197 = vmatpush1.msra.mxu0 0.0
  %6198 = vmatprep.subr.mxu0 0.0
  %6199 = vmatpush1.msra.mxu0 0.0
  %6200 = vmatprep.subr.mxu0 0.0
  %6201 = vmatpush1.msra.mxu0 0.0
  %6202 = vmatprep.subr.mxu0 0.0
  %6203 = vmatpush1.msra.mxu0 0.0
  %6204 = vmatprep.subr.mxu0 0.0
  %6205 = vmatpush1.msra.mxu0 0.0
  %6206 = vmatprep.subr.mxu0 0.0
  %6207 = vmatpush1.msra.mxu0 0.0
  %6208 = vmatprep.subr.mxu0 0.0
  %6209 = vmatpush1.msra.mxu0 0.0
  %6210 = vmatprep.subr.mxu0 0.0
  %6211 = vmatpush1.msra.mxu0 0.0
  %6212 = vmatprep.subr.mxu0 0.0
  %6213 = vmatpush1.msra.mxu0 0.0
  %6214 = vmatprep.subr.mxu0 0.0
  %6215 = vmatpush1.msra.mxu0 0.0
  %6216 = vmatprep.subr.mxu0 0.0
  %6217 = vmatpush1.msra.mxu0 0.0
  %6218 = vmatprep.subr.mxu0 0.0
  %6219 = vmatpush1.msra.mxu0 0.0
  %6220 = vmatprep.subr.mxu0 0.0
  %6221 = vmatpush1.msra.mxu0 0.0
  %6222 = vmatprep.subr.mxu0 0.0
  %6223 = vmatpush1.msra.mxu0 0.0
  %6224 = vmatprep.mubr.f32.mxu0 0.0
  %6225 = vmatmul.mubr.f32.gmra.mrb[0].mxu0 %v6122
  %v6226 = vpop.f32.mrb[0].mxu0
  %v6227 = vadd.f32 %v6119, %v6226
  %v6228 = vpop.f32.mrb[0].mxu0
  %6229 = vmatprep.mubr.f32.mxu0 0.0
  %6230 = vmatmul.mubr.f32.gmra.mrb[0].mxu0 %v6125
  %v6231 = vpop.f32.mrb[0].mxu0
  %v6232 = vadd.f32 %v6119, %v6231
  %v6233 = vpop.f32.mrb[0].mxu0
  %6234 = vmatprep.mubr.f32.mxu0 0.0
  %6235 = vmatmul.mubr.f32.gmra.mrb[0].mxu0 %v6128
  %v6236 = vpop.f32.mrb[0].mxu0
  %v6237 = vadd.f32 %v6119, %v6236
  %v6238 = vpop.f32.mrb[0].mxu0
  %6239 = vmatprep.mubr.f32.mxu0 0.0
  %6240 = vmatmul.mubr.f32.gmra.mrb[0].mxu0 %v6131
  %v6241 = vpop.f32.mrb[0].mxu0
  %v6242 = vadd.f32 %v6119, %v6241
  %v6243 = vpop.f32.mrb[0].mxu0
  %6244 = vmatprep.mubr.f32.mxu0 0.0
  %6245 = vmatmul.mubr.f32.gmra.mrb[0].mxu0 %v6134
  %v6246 = vpop.f32.mrb[0].mxu0
  %v6247 = vadd.f32 %v6119, %v6246
  %v6248 = vpop.f32.mrb[0].mxu0
  %6249 = vmatprep.mubr.f32.mxu0 0.0
  %6250 = vmatmul.mubr.f32.gmra.mrb[0].mxu0 %v6137
  %v6251 = vpop.f32.mrb[0].mxu0
  %v6252 = vadd.f32 %v6119, %v6251
  %v6253 = vpop.f32.mrb[0].mxu0
  %6254 = vmatprep.mubr.f32.mxu0 0.0
  %6255 = vmatmul.mubr.f32.gmra.mrb[0].mxu0 %v6140
  %v6256 = vpop.f32.mrb[0].mxu0
  %v6257 = vadd.f32 %v6119, %v6256
  %v6258 = vpop.f32.mrb[0].mxu0
  %6259 = vmatprep.mubr.f32.mxu0 0.0
  %6260 = vmatmul.mubr.f32.gmra.mrb[0].mxu0 %v6143
  %v6261 = vpop.f32.mrb[0].mxu0
  %v6262 = vadd.f32 %v6119, %v6261
  %v6263 = vpop.f32.mrb[0].mxu0
  %6264 = vmatprep.mubr.f32.mxu0 0.0
  %6265 = vmatmul.mubr.f32.gmra.mrb[0].mxu0 %v6146
  %v6266 = vpop.f32.mrb[0].mxu0
  %v6267 = vadd.f32 %v6119, %v6266
  %v6268 = vpop.f32.mrb[0].mxu0
  %6269 = vmatprep.mubr.f32.mxu0 0.0
  %6270 = vmatmul.mubr.f32.gmra.mrb[0].mxu0 %v6149
  %v6271 = vpop.f32.mrb[0].mxu0
  %v6272 = vadd.f32 %v6119, %v6271
  %v6273 = vpop.f32.mrb[0].mxu0
  %6274 = vmatprep.mubr.f32.mxu0 0.0
  %6275 = vmatmul.mubr.f32.gmra.mrb[0].mxu0 %v6152
  %v6276 = vpop.f32.mrb[0].mxu0
  %v6277 = vadd.f32 %v6119, %v6276
  %v6278 = vpop.f32.mrb[0].mxu0
  %6279 = vmatprep.mubr.f32.mxu0 0.0
  %6280 = vmatmul.mubr.f32.gmra.mrb[0].mxu0 %v6155
  %v6281 = vpop.f32.mrb[0].mxu0
  %v6282 = vadd.f32 %v6119, %v6281
  %v6283 = vpop.f32.mrb[0].mxu0
  %6284 = vdwg.mxu0
  %v6285 = vld [vmem:[%s2299] sm:$0xff]
  %v6286 = vld [vmem:[%s2299 + $0x8] sm:$0x1f]
  %v6287 = vld [vmem:[%s2302] sm:$0x1]
  %v6289 = vlaneseq
  %v6290 = vshrl.u32 %v6289, 7
  %v6291 = vsub.s32 0, %v6290
  %v6292 = vrot.slane %v6287, %v6291
  %v6295 = vsel %vm836, %v6286, 0
  %6297 = vmatprep.subr.mxu0 0.0
  %6298 = vmatpush1.msra.mxu0 %v6285
  %6299 = vmatprep.subr.mxu0 0.0
  %6300 = vmatpush1.msra.mxu0 %v6295
  %6301 = vmatprep.subr.mxu0 0.0
  %6302 = vmatpush1.msra.mxu0 0.0
  %6303 = vmatprep.subr.mxu0 0.0
  %6304 = vmatpush1.msra.mxu0 0.0
  %6305 = vmatprep.subr.mxu0 0.0
  %6306 = vmatpush1.msra.mxu0 0.0
  %6307 = vmatprep.subr.mxu0 0.0
  %6308 = vmatpush1.msra.mxu0 0.0
  %6309 = vmatprep.subr.mxu0 0.0
  %6310 = vmatpush1.msra.mxu0 0.0
  %6311 = vmatprep.subr.mxu0 0.0
  %6312 = vmatpush1.msra.mxu0 0.0
  %6313 = vmatprep.subr.mxu0 0.0
  %6314 = vmatpush1.msra.mxu0 0.0
  %6315 = vmatprep.subr.mxu0 0.0
  %6316 = vmatpush1.msra.mxu0 0.0
  %6317 = vmatprep.subr.mxu0 0.0
  %6318 = vmatpush1.msra.mxu0 0.0
  %6319 = vmatprep.subr.mxu0 0.0
  %6320 = vmatpush1.msra.mxu0 0.0
  %6321 = vmatprep.subr.mxu0 0.0
  %6322 = vmatpush1.msra.mxu0 0.0
  %6323 = vmatprep.subr.mxu0 0.0
  %6324 = vmatpush1.msra.mxu0 0.0
  %6325 = vmatprep.subr.mxu0 0.0
  %6326 = vmatpush1.msra.mxu0 0.0
  %6327 = vmatprep.subr.mxu0 0.0
  %6328 = vmatpush1.msra.mxu0 0.0
  %6329 = vmatprep.subr.mxu0 0.0
  %6330 = vmatpush1.msra.mxu0 0.0
  %6331 = vmatprep.subr.mxu0 0.0
  %6332 = vmatpush1.msra.mxu0 0.0
  %6333 = vmatprep.subr.mxu0 0.0
  %6334 = vmatpush1.msra.mxu0 0.0
  %6335 = vmatprep.subr.mxu0 0.0
  %6336 = vmatpush1.msra.mxu0 0.0
  %6337 = vmatprep.subr.mxu0 0.0
  %6338 = vmatpush1.msra.mxu0 0.0
  %6339 = vmatprep.subr.mxu0 0.0
  %6340 = vmatpush1.msra.mxu0 0.0
  %6341 = vmatprep.subr.mxu0 0.0
  %6342 = vmatpush1.msra.mxu0 0.0
  %6343 = vmatprep.subr.mxu0 0.0
  %6344 = vmatpush1.msra.mxu0 0.0
  %6345 = vmatprep.subr.mxu0 0.0
  %6346 = vmatpush1.msra.mxu0 0.0
  %6347 = vmatprep.subr.mxu0 0.0
  %6348 = vmatpush1.msra.mxu0 0.0
  %6349 = vmatprep.subr.mxu0 0.0
  %6350 = vmatpush1.msra.mxu0 0.0
  %6351 = vmatprep.subr.mxu0 0.0
  %6352 = vmatpush1.msra.mxu0 0.0
  %6353 = vmatprep.subr.mxu0 0.0
  %6354 = vmatpush1.msra.mxu0 0.0
  %6355 = vmatprep.subr.mxu0 0.0
  %6356 = vmatpush1.msra.mxu0 0.0
  %6357 = vmatprep.subr.mxu0 0.0
  %6358 = vmatpush1.msra.mxu0 0.0
  %6359 = vmatprep.subr.mxu0 0.0
  %6360 = vmatpush1.msra.mxu0 0.0
  %6361 = vmatprep.mubr.f32.mxu0 0.0
  %6362 = vmatmul.mubr.f32.gmra.mrb[0].mxu0 %v6122
  %v6363 = vpop.f32.mrb[0].mxu0
  %v6364 = vadd.f32 %v6292, %v6363
  %v6365 = vpop.f32.mrb[0].mxu0
  %6366 = vmatprep.mubr.f32.mxu0 0.0
  %6367 = vmatmul.mubr.f32.gmra.mrb[0].mxu0 %v6125
  %v6368 = vpop.f32.mrb[0].mxu0
  %v6369 = vadd.f32 %v6292, %v6368
  %v6370 = vpop.f32.mrb[0].mxu0
  %6371 = vmatprep.mubr.f32.mxu0 0.0
  %6372 = vmatmul.mubr.f32.gmra.mrb[0].mxu0 %v6128
  %v6373 = vpop.f32.mrb[0].mxu0
  %v6374 = vadd.f32 %v6292, %v6373
  %v6375 = vpop.f32.mrb[0].mxu0
  %6376 = vmatprep.mubr.f32.mxu0 0.0
  %6377 = vmatmul.mubr.f32.gmra.mrb[0].mxu0 %v6131
  %v6378 = vpop.f32.mrb[0].mxu0
  %v6379 = vadd.f32 %v6292, %v6378
  %v6380 = vpop.f32.mrb[0].mxu0
  %6381 = vmatprep.mubr.f32.mxu0 0.0
  %6382 = vmatmul.mubr.f32.gmra.mrb[0].mxu0 %v6134
  %v6383 = vpop.f32.mrb[0].mxu0
  %v6384 = vadd.f32 %v6292, %v6383
  %v6385 = vpop.f32.mrb[0].mxu0
  %6386 = vmatprep.mubr.f32.mxu0 0.0
  %6387 = vmatmul.mubr.f32.gmra.mrb[0].mxu0 %v6137
  %v6388 = vpop.f32.mrb[0].mxu0
  %v6389 = vadd.f32 %v6292, %v6388
  %v6390 = vpop.f32.mrb[0].mxu0
  %6391 = vmatprep.mubr.f32.mxu0 0.0
  %6392 = vmatmul.mubr.f32.gmra.mrb[0].mxu0 %v6140
  %v6393 = vpop.f32.mrb[0].mxu0
  %v6394 = vadd.f32 %v6292, %v6393
  %v6395 = vpop.f32.mrb[0].mxu0
  %6396 = vmatprep.mubr.f32.mxu0 0.0
  %6397 = vmatmul.mubr.f32.gmra.mrb[0].mxu0 %v6143
  %v6398 = vpop.f32.mrb[0].mxu0
  %v6399 = vadd.f32 %v6292, %v6398
  %v6400 = vpop.f32.mrb[0].mxu0
  %6401 = vmatprep.mubr.f32.mxu0 0.0
  %6402 = vmatmul.mubr.f32.gmra.mrb[0].mxu0 %v6146
  %v6403 = vpop.f32.mrb[0].mxu0
  %v6404 = vadd.f32 %v6292, %v6403
  %v6405 = vpop.f32.mrb[0].mxu0
  %6406 = vmatprep.mubr.f32.mxu0 0.0
  %6407 = vmatmul.mubr.f32.gmra.mrb[0].mxu0 %v6149
  %v6408 = vpop.f32.mrb[0].mxu0
  %v6409 = vadd.f32 %v6292, %v6408
  %v6410 = vpop.f32.mrb[0].mxu0
  %6411 = vmatprep.mubr.f32.mxu0 0.0
  %6412 = vmatmul.mubr.f32.gmra.mrb[0].mxu0 %v6152
  %v6413 = vpop.f32.mrb[0].mxu0
  %v6414 = vadd.f32 %v6292, %v6413
  %v6415 = vpop.f32.mrb[0].mxu0
  %6416 = vmatprep.mubr.f32.mxu0 0.0
  %6417 = vmatmul.mubr.f32.gmra.mrb[0].mxu0 %v6155
  %v6418 = vpop.f32.mrb[0].mxu0
  %v6419 = vadd.f32 %v6292, %v6418
  %v6420 = vpop.f32.mrb[0].mxu0
  %6421 = vdwg.mxu0
  %v6422 = vld [vmem:[%s2438] sm:$0xff]
  %v6423 = vld [vmem:[%s2438 + $0x8] sm:$0x1f]
  %v6424 = vld [vmem:[%s2441] sm:$0x1]
  %v6426 = vlaneseq
  %v6427 = vshrl.u32 %v6426, 7
  %v6428 = vsub.s32 0, %v6427
  %v6429 = vrot.slane %v6424, %v6428
  %v6432 = vsel %vm836, %v6423, 0
  %6434 = vmatprep.subr.mxu0 0.0
  %6435 = vmatpush1.msra.mxu0 %v6422
  %6436 = vmatprep.subr.mxu0 0.0
  %6437 = vmatpush1.msra.mxu0 %v6432
  %6438 = vmatprep.subr.mxu0 0.0
  %6439 = vmatpush1.msra.mxu0 0.0
  %6440 = vmatprep.subr.mxu0 0.0
  %6441 = vmatpush1.msra.mxu0 0.0
  %6442 = vmatprep.subr.mxu0 0.0
  %6443 = vmatpush1.msra.mxu0 0.0
  %6444 = vmatprep.subr.mxu0 0.0
  %6445 = vmatpush1.msra.mxu0 0.0
  %6446 = vmatprep.subr.mxu0 0.0
  %6447 = vmatpush1.msra.mxu0 0.0
  %6448 = vmatprep.subr.mxu0 0.0
  %6449 = vmatpush1.msra.mxu0 0.0
  %6450 = vmatprep.subr.mxu0 0.0
  %6451 = vmatpush1.msra.mxu0 0.0
  %6452 = vmatprep.subr.mxu0 0.0
  %6453 = vmatpush1.msra.mxu0 0.0
  %6454 = vmatprep.subr.mxu0 0.0
  %6455 = vmatpush1.msra.mxu0 0.0
  %6456 = vmatprep.subr.mxu0 0.0
  %6457 = vmatpush1.msra.mxu0 0.0
  %6458 = vmatprep.subr.mxu0 0.0
  %6459 = vmatpush1.msra.mxu0 0.0
  %6460 = vmatprep.subr.mxu0 0.0
  %6461 = vmatpush1.msra.mxu0 0.0
  %6462 = vmatprep.subr.mxu0 0.0
  %6463 = vmatpush1.msra.mxu0 0.0
  %6464 = vmatprep.subr.mxu0 0.0
  %6465 = vmatpush1.msra.mxu0 0.0
  %6466 = vmatprep.subr.mxu0 0.0
  %6467 = vmatpush1.msra.mxu0 0.0
  %6468 = vmatprep.subr.mxu0 0.0
  %6469 = vmatpush1.msra.mxu0 0.0
  %6470 = vmatprep.subr.mxu0 0.0
  %6471 = vmatpush1.msra.mxu0 0.0
  %6472 = vmatprep.subr.mxu0 0.0
  %6473 = vmatpush1.msra.mxu0 0.0
  %6474 = vmatprep.subr.mxu0 0.0
  %6475 = vmatpush1.msra.mxu0 0.0
  %6476 = vmatprep.subr.mxu0 0.0
  %6477 = vmatpush1.msra.mxu0 0.0
  %6478 = vmatprep.subr.mxu0 0.0
  %6479 = vmatpush1.msra.mxu0 0.0
  %6480 = vmatprep.subr.mxu0 0.0
  %6481 = vmatpush1.msra.mxu0 0.0
  %6482 = vmatprep.subr.mxu0 0.0
  %6483 = vmatpush1.msra.mxu0 0.0
  %6484 = vmatprep.subr.mxu0 0.0
  %6485 = vmatpush1.msra.mxu0 0.0
  %6486 = vmatprep.subr.mxu0 0.0
  %6487 = vmatpush1.msra.mxu0 0.0
  %6488 = vmatprep.subr.mxu0 0.0
  %6489 = vmatpush1.msra.mxu0 0.0
  %6490 = vmatprep.subr.mxu0 0.0
  %6491 = vmatpush1.msra.mxu0 0.0
  %6492 = vmatprep.subr.mxu0 0.0
  %6493 = vmatpush1.msra.mxu0 0.0
  %6494 = vmatprep.subr.mxu0 0.0
  %6495 = vmatpush1.msra.mxu0 0.0
  %6496 = vmatprep.subr.mxu0 0.0
  %6497 = vmatpush1.msra.mxu0 0.0
  %6498 = vmatprep.mubr.f32.mxu0 0.0
  %6499 = vmatmul.mubr.f32.gmra.mrb[0].mxu0 %v6122
  %v6500 = vpop.f32.mrb[0].mxu0
  %v6501 = vadd.f32 %v6429, %v6500
  %v6502 = vpop.f32.mrb[0].mxu0
  %6503 = vmatprep.mubr.f32.mxu0 0.0
  %6504 = vmatmul.mubr.f32.gmra.mrb[0].mxu0 %v6125
  %v6505 = vpop.f32.mrb[0].mxu0
  %v6506 = vadd.f32 %v6429, %v6505
  %v6507 = vpop.f32.mrb[0].mxu0
  %6508 = vmatprep.mubr.f32.mxu0 0.0
  %6509 = vmatmul.mubr.f32.gmra.mrb[0].mxu0 %v6128
  %v6510 = vpop.f32.mrb[0].mxu0
  %v6511 = vadd.f32 %v6429, %v6510
  %v6512 = vpop.f32.mrb[0].mxu0
  %6513 = vmatprep.mubr.f32.mxu0 0.0
  %6514 = vmatmul.mubr.f32.gmra.mrb[0].mxu0 %v6131
  %v6515 = vpop.f32.mrb[0].mxu0
  %v6516 = vadd.f32 %v6429, %v6515
  %v6517 = vpop.f32.mrb[0].mxu0
  %6518 = vmatprep.mubr.f32.mxu0 0.0
  %6519 = vmatmul.mubr.f32.gmra.mrb[0].mxu0 %v6134
  %v6520 = vpop.f32.mrb[0].mxu0
  %v6521 = vadd.f32 %v6429, %v6520
  %v6522 = vpop.f32.mrb[0].mxu0
  %6523 = vmatprep.mubr.f32.mxu0 0.0
  %6524 = vmatmul.mubr.f32.gmra.mrb[0].mxu0 %v6137
  %v6525 = vpop.f32.mrb[0].mxu0
  %v6526 = vadd.f32 %v6429, %v6525
  %v6527 = vpop.f32.mrb[0].mxu0
  %6528 = vmatprep.mubr.f32.mxu0 0.0
  %6529 = vmatmul.mubr.f32.gmra.mrb[0].mxu0 %v6140
  %v6530 = vpop.f32.mrb[0].mxu0
  %v6531 = vadd.f32 %v6429, %v6530
  %v6532 = vpop.f32.mrb[0].mxu0
  %6533 = vmatprep.mubr.f32.mxu0 0.0
  %6534 = vmatmul.mubr.f32.gmra.mrb[0].mxu0 %v6143
  %v6535 = vpop.f32.mrb[0].mxu0
  %v6536 = vadd.f32 %v6429, %v6535
  %v6537 = vpop.f32.mrb[0].mxu0
  %6538 = vmatprep.mubr.f32.mxu0 0.0
  %6539 = vmatmul.mubr.f32.gmra.mrb[0].mxu0 %v6146
  %v6540 = vpop.f32.mrb[0].mxu0
  %v6541 = vadd.f32 %v6429, %v6540
  %v6542 = vpop.f32.mrb[0].mxu0
  %6543 = vmatprep.mubr.f32.mxu0 0.0
  %6544 = vmatmul.mubr.f32.gmra.mrb[0].mxu0 %v6149
  %v6545 = vpop.f32.mrb[0].mxu0
  %v6546 = vadd.f32 %v6429, %v6545
  %v6547 = vpop.f32.mrb[0].mxu0
  %6548 = vmatprep.mubr.f32.mxu0 0.0
  %6549 = vmatmul.mubr.f32.gmra.mrb[0].mxu0 %v6152
  %v6550 = vpop.f32.mrb[0].mxu0
  %v6551 = vadd.f32 %v6429, %v6550
  %v6552 = vpop.f32.mrb[0].mxu0
  %6553 = vmatprep.mubr.f32.mxu0 0.0
  %6554 = vmatmul.mubr.f32.gmra.mrb[0].mxu0 %v6155
  %v6555 = vpop.f32.mrb[0].mxu0
  %v6556 = vadd.f32 %v6429, %v6555
  %v6557 = vpop.f32.mrb[0].mxu0
  %6558 = vdwg.mxu0
  %v6560 = vsel %vm799, %v6227, 0
  %v6563 = vsel %vm799, %v6232, 0
  %v6566 = vsel %vm799, %v6237, 0
  %v6569 = vsel %vm799, %v6242, 0
  %v6572 = vsel %vm799, %v6247, 0
  %v6575 = vsel %vm799, %v6252, 0
  %v6578 = vsel %vm799, %v6257, 0
  %v6581 = vsel %vm799, %v6262, 0
  %v6584 = vsel %vm799, %v6267, 0
  %v6587 = vsel %vm799, %v6272, 0
  %v6590 = vsel %vm799, %v6277, 0
  %v6593 = vsel %vm799, %v6282, 0
  %v6596 = vsel %vm799, %v6364, 0
  %v6599 = vsel %vm799, %v6369, 0
  %v6602 = vsel %vm799, %v6374, 0
  %v6605 = vsel %vm799, %v6379, 0
  %v6608 = vsel %vm799, %v6384, 0
  %v6611 = vsel %vm799, %v6389, 0
  %v6614 = vsel %vm799, %v6394, 0
  %v6617 = vsel %vm799, %v6399, 0
  %v6620 = vsel %vm799, %v6404, 0
  %v6623 = vsel %vm799, %v6409, 0
  %v6626 = vsel %vm799, %v6414, 0
  %v6629 = vsel %vm799, %v6419, 0
  %6631 = vmatprep.subr.mxu0 0.0
  %6632 = vmatpush1.xpose.msra.mxu0 %v6596
  %6633 = vmatprep.subr.mxu0 0.0
  %6634 = vmatpush1.xpose.msra.mxu0 %v6599
  %6635 = vmatprep.subr.mxu0 0.0
  %6636 = vmatpush1.xpose.msra.mxu0 %v6602
  %6637 = vmatprep.subr.mxu0 0.0
  %6638 = vmatpush1.xpose.msra.mxu0 %v6605
  %6639 = vmatprep.subr.mxu0 0.0
  %6640 = vmatpush1.xpose.msra.mxu0 %v6608
  %6641 = vmatprep.subr.mxu0 0.0
  %6642 = vmatpush1.xpose.msra.mxu0 %v6611
  %6643 = vmatprep.subr.mxu0 0.0
  %6644 = vmatpush1.xpose.msra.mxu0 %v6614
  %6645 = vmatprep.subr.mxu0 0.0
  %6646 = vmatpush1.xpose.msra.mxu0 %v6617
  %6647 = vmatprep.subr.mxu0 0.0
  %6648 = vmatpush1.xpose.msra.mxu0 %v6620
  %6649 = vmatprep.subr.mxu0 0.0
  %6650 = vmatpush1.xpose.msra.mxu0 %v6623
  %6651 = vmatprep.subr.mxu0 0.0
  %6652 = vmatpush1.xpose.msra.mxu0 %v6626
  %6653 = vmatprep.subr.mxu0 0.0
  %6654 = vmatpush1.xpose.msra.mxu0 %v6629
  %6655 = vmatprep.subr.mxu0 0.0
  %6656 = vmatpush1.xpose.msra.mxu0 0.0
  %6657 = vmatprep.subr.mxu0 0.0
  %6658 = vmatpush1.xpose.msra.mxu0 0.0
  %6659 = vmatprep.subr.mxu0 0.0
  %6660 = vmatpush1.xpose.msra.mxu0 0.0
  %6661 = vmatprep.subr.mxu0 0.0
  %6662 = vmatpush1.xpose.msra.mxu0 0.0
  %6663 = vmatprep.subr.mxu0 0.0
  %6664 = vmatpush1.xpose.msra.mxu0 0.0
  %6665 = vmatprep.subr.mxu0 0.0
  %6666 = vmatpush1.xpose.msra.mxu0 0.0
  %6667 = vmatprep.subr.mxu0 0.0
  %6668 = vmatpush1.xpose.msra.mxu0 0.0
  %6669 = vmatprep.subr.mxu0 0.0
  %6670 = vmatpush1.xpose.msra.mxu0 0.0
  %6671 = vmatprep.subr.mxu0 0.0
  %6672 = vmatpush1.xpose.msra.mxu0 0.0
  %6673 = vmatprep.subr.mxu0 0.0
  %6674 = vmatpush1.xpose.msra.mxu0 0.0
  %6675 = vmatprep.subr.mxu0 0.0
  %6676 = vmatpush1.xpose.msra.mxu0 0.0
  %6677 = vmatprep.subr.mxu0 0.0
  %6678 = vmatpush1.xpose.msra.mxu0 0.0
  %6679 = vmatprep.subr.mxu0 0.0
  %6680 = vmatpush1.xpose.msra.mxu0 0.0
  %6681 = vmatprep.subr.mxu0 0.0
  %6682 = vmatpush1.xpose.msra.mxu0 0.0
  %6683 = vmatprep.subr.mxu0 0.0
  %6684 = vmatpush1.xpose.msra.mxu0 0.0
  %6685 = vmatprep.subr.mxu0 0.0
  %6686 = vmatpush1.xpose.msra.mxu0 0.0
  %6687 = vmatprep.subr.mxu0 0.0
  %6688 = vmatpush1.xpose.msra.mxu0 0.0
  %6689 = vmatprep.subr.mxu0 0.0
  %6690 = vmatpush1.xpose.msra.mxu0 0.0
  %6691 = vmatprep.subr.mxu0 0.0
  %6692 = vmatpush1.xpose.msra.mxu0 0.0
  %6693 = vmatprep.subr.mxu0 0.0
  %6694 = vmatpush1.xpose.msra.mxu0 0.0
  %6695 = vmatprep.mubr.f32.mxu0 0.0
  %6696 = vmatmul.mubr.f32.gmra.mrb[0].mxu0 %v6560
  %v6697 = vpop.f32.mrb[0].mxu0
  %v6698 = vadd.f32 0.0, %v6697
  %v6699 = vpop.f32.mrb[0].mxu0
  %6700 = vmatprep.mubr.f32.mxu0 0.0
  %6701 = vmatmul.mubr.f32.gmra.mrb[0].mxu0 %v6563
  %v6702 = vpop.f32.mrb[0].mxu0
  %v6703 = vadd.f32 0.0, %v6702
  %v6704 = vpop.f32.mrb[0].mxu0
  %6705 = vmatprep.mubr.f32.mxu0 0.0
  %6706 = vmatmul.mubr.f32.gmra.mrb[0].mxu0 %v6566
  %v6707 = vpop.f32.mrb[0].mxu0
  %v6708 = vadd.f32 0.0, %v6707
  %v6709 = vpop.f32.mrb[0].mxu0
  %6710 = vmatprep.mubr.f32.mxu0 0.0
  %6711 = vmatmul.mubr.f32.gmra.mrb[0].mxu0 %v6569
  %v6712 = vpop.f32.mrb[0].mxu0
  %v6713 = vadd.f32 0.0, %v6712
  %v6714 = vpop.f32.mrb[0].mxu0
  %6715 = vmatprep.mubr.f32.mxu0 0.0
  %6716 = vmatmul.mubr.f32.gmra.mrb[0].mxu0 %v6572
  %v6717 = vpop.f32.mrb[0].mxu0
  %v6718 = vadd.f32 0.0, %v6717
  %v6719 = vpop.f32.mrb[0].mxu0
  %6720 = vmatprep.mubr.f32.mxu0 0.0
  %6721 = vmatmul.mubr.f32.gmra.mrb[0].mxu0 %v6575
  %v6722 = vpop.f32.mrb[0].mxu0
  %v6723 = vadd.f32 0.0, %v6722
  %v6724 = vpop.f32.mrb[0].mxu0
  %6725 = vmatprep.mubr.f32.mxu0 0.0
  %6726 = vmatmul.mubr.f32.gmra.mrb[0].mxu0 %v6578
  %v6727 = vpop.f32.mrb[0].mxu0
  %v6728 = vadd.f32 0.0, %v6727
  %v6729 = vpop.f32.mrb[0].mxu0
  %6730 = vmatprep.mubr.f32.mxu0 0.0
  %6731 = vmatmul.mubr.f32.gmra.mrb[0].mxu0 %v6581
  %v6732 = vpop.f32.mrb[0].mxu0
  %v6733 = vadd.f32 0.0, %v6732
  %v6734 = vpop.f32.mrb[0].mxu0
  %6735 = vmatprep.mubr.f32.mxu0 0.0
  %6736 = vmatmul.mubr.f32.gmra.mrb[0].mxu0 %v6584
  %v6737 = vpop.f32.mrb[0].mxu0
  %v6738 = vadd.f32 0.0, %v6737
  %v6739 = vpop.f32.mrb[0].mxu0
  %6740 = vmatprep.mubr.f32.mxu0 0.0
  %6741 = vmatmul.mubr.f32.gmra.mrb[0].mxu0 %v6587
  %v6742 = vpop.f32.mrb[0].mxu0
  %v6743 = vadd.f32 0.0, %v6742
  %v6744 = vpop.f32.mrb[0].mxu0
  %6745 = vmatprep.mubr.f32.mxu0 0.0
  %6746 = vmatmul.mubr.f32.gmra.mrb[0].mxu0 %v6590
  %v6747 = vpop.f32.mrb[0].mxu0
  %v6748 = vadd.f32 0.0, %v6747
  %v6749 = vpop.f32.mrb[0].mxu0
  %6750 = vmatprep.mubr.f32.mxu0 0.0
  %6751 = vmatmul.mubr.f32.gmra.mrb[0].mxu0 %v6593
  %v6752 = vpop.f32.mrb[0].mxu0
  %v6753 = vadd.f32 0.0, %v6752
  %v6754 = vpop.f32.mrb[0].mxu0
  %6755 = vdwg.mxu0
  %v6756 = vmul.f32 %v6698, 0.2773501
  %v6757 = vmul.f32 %v6703, 0.2773501
  %v6758 = vmul.f32 %v6708, 0.2773501
  %v6759 = vmul.f32 %v6713, 0.2773501
  %v6760 = vmul.f32 %v6718, 0.2773501
  %v6761 = vmul.f32 %v6723, 0.2773501
  %v6762 = vmul.f32 %v6728, 0.2773501
  %v6763 = vmul.f32 %v6733, 0.2773501
  %v6764 = vmul.f32 %v6738, 0.2773501
  %v6765 = vmul.f32 %v6743, 0.2773501
  %v6766 = vmul.f32 %v6748, 0.2773501
  %v6767 = vmul.f32 %v6753, 0.2773501
  %v6768 = vsel %vm1452, %v6756, -inf
  %6769 = vmax.xlane.f32.xlu0 %v6768
  %v6770 = vpop.xlane.xlu0 %6769
  %v6771 = vsel %vm1452, %v6757, -inf
  %6772 = vmax.xlane.f32.xlu0 %v6771
  %v6773 = vpop.xlane.xlu0 %6772
  %v6774 = vsel %vm1452, %v6758, -inf
  %6775 = vmax.xlane.f32.xlu0 %v6774
  %v6776 = vpop.xlane.xlu0 %6775
  %v6777 = vsel %vm1452, %v6759, -inf
  %6778 = vmax.xlane.f32.xlu0 %v6777
  %v6779 = vpop.xlane.xlu0 %6778
  %v6780 = vsel %vm1452, %v6760, -inf
  %6781 = vmax.xlane.f32.xlu0 %v6780
  %v6782 = vpop.xlane.xlu0 %6781
  %v6783 = vsel %vm1452, %v6761, -inf
  %6784 = vmax.xlane.f32.xlu0 %v6783
  %v6785 = vpop.xlane.xlu0 %6784
  %v6786 = vsel %vm1452, %v6762, -inf
  %6787 = vmax.xlane.f32.xlu0 %v6786
  %v6788 = vpop.xlane.xlu0 %6787
  %v6789 = vsel %vm1452, %v6763, -inf
  %6790 = vmax.xlane.f32.xlu0 %v6789
  %v6791 = vpop.xlane.xlu0 %6790
  %v6792 = vsel %vm1452, %v6764, -inf
  %6793 = vmax.xlane.f32.xlu0 %v6792
  %v6794 = vpop.xlane.xlu0 %6793
  %v6795 = vsel %vm1452, %v6765, -inf
  %6796 = vmax.xlane.f32.xlu0 %v6795
  %v6797 = vpop.xlane.xlu0 %6796
  %v6798 = vsel %vm1452, %v6766, -inf
  %6799 = vmax.xlane.f32.xlu0 %v6798
  %v6800 = vpop.xlane.xlu0 %6799
  %v6801 = vsel %vm1452, %v6767, -inf
  %6802 = vmax.xlane.f32.xlu0 %v6801
  %v6803 = vpop.xlane.xlu0 %6802
  %v6804 = vsub.f32 %v6756, %v6770
  %v6805 = vsub.f32 %v6757, %v6773
  %v6806 = vsub.f32 %v6758, %v6776
  %v6807 = vsub.f32 %v6759, %v6779
  %v6808 = vsub.f32 %v6760, %v6782
  %v6809 = vsub.f32 %v6761, %v6785
  %v6810 = vsub.f32 %v6762, %v6788
  %v6811 = vsub.f32 %v6763, %v6791
  %v6812 = vsub.f32 %v6764, %v6794
  %v6813 = vsub.f32 %v6765, %v6797
  %v6814 = vsub.f32 %v6766, %v6800
  %v6815 = vsub.f32 %v6767, %v6803
  %v6816 = vmul.f32 %v6804, 1.442695
  %v6817 = vpow.pop %v6816
  %v6818 = vmul.f32 %v6805, 1.442695
  %v6819 = vpow.pop %v6818
  %v6820 = vmul.f32 %v6806, 1.442695
  %v6821 = vpow.pop %v6820
  %v6822 = vmul.f32 %v6807, 1.442695
  %v6823 = vpow.pop %v6822
  %v6824 = vmul.f32 %v6808, 1.442695
  %v6825 = vpow.pop %v6824
  %v6826 = vmul.f32 %v6809, 1.442695
  %v6827 = vpow.pop %v6826
  %v6828 = vmul.f32 %v6810, 1.442695
  %v6829 = vpow.pop %v6828
  %v6830 = vmul.f32 %v6811, 1.442695
  %v6831 = vpow.pop %v6830
  %v6832 = vmul.f32 %v6812, 1.442695
  %v6833 = vpow.pop %v6832
  %v6834 = vmul.f32 %v6813, 1.442695
  %v6835 = vpow.pop %v6834
  %v6836 = vmul.f32 %v6814, 1.442695
  %v6837 = vpow.pop %v6836
  %v6838 = vmul.f32 %v6815, 1.442695
  %v6839 = vpow.pop %v6838
  %v6840 = vsel %vm1452, %v6817, 0.0
  %6841 = vadd.xlane.f32.xlu0 %v6840
  %v6842 = vpop.xlane.xlu0 %6841
  %v6843 = vsel %vm1452, %v6819, 0.0
  %6844 = vadd.xlane.f32.xlu0 %v6843
  %v6845 = vpop.xlane.xlu0 %6844
  %v6846 = vsel %vm1452, %v6821, 0.0
  %6847 = vadd.xlane.f32.xlu0 %v6846
  %v6848 = vpop.xlane.xlu0 %6847
  %v6849 = vsel %vm1452, %v6823, 0.0
  %6850 = vadd.xlane.f32.xlu0 %v6849
  %v6851 = vpop.xlane.xlu0 %6850
  %v6852 = vsel %vm1452, %v6825, 0.0
  %6853 = vadd.xlane.f32.xlu0 %v6852
  %v6854 = vpop.xlane.xlu0 %6853
  %v6855 = vsel %vm1452, %v6827, 0.0
  %6856 = vadd.xlane.f32.xlu0 %v6855
  %v6857 = vpop.xlane.xlu0 %6856
  %v6858 = vsel %vm1452, %v6829, 0.0
  %6859 = vadd.xlane.f32.xlu0 %v6858
  %v6860 = vpop.xlane.xlu0 %6859
  %v6861 = vsel %vm1452, %v6831, 0.0
  %6862 = vadd.xlane.f32.xlu0 %v6861
  %v6863 = vpop.xlane.xlu0 %6862
  %v6864 = vsel %vm1452, %v6833, 0.0
  %6865 = vadd.xlane.f32.xlu0 %v6864
  %v6866 = vpop.xlane.xlu0 %6865
  %v6867 = vsel %vm1452, %v6835, 0.0
  %6868 = vadd.xlane.f32.xlu0 %v6867
  %v6869 = vpop.xlane.xlu0 %6868
  %v6870 = vsel %vm1452, %v6837, 0.0
  %6871 = vadd.xlane.f32.xlu0 %v6870
  %v6872 = vpop.xlane.xlu0 %6871
  %v6873 = vsel %vm1452, %v6839, 0.0
  %6874 = vadd.xlane.f32.xlu0 %v6873
  %v6875 = vpop.xlane.xlu0 %6874
  %v6876 = vrcp.pop %v6842
  %v6877 = vmul.f32 %v6817, %v6876
  %v6878 = vrcp.pop %v6845
  %v6879 = vmul.f32 %v6819, %v6878
  %v6880 = vrcp.pop %v6848
  %v6881 = vmul.f32 %v6821, %v6880
  %v6882 = vrcp.pop %v6851
  %v6883 = vmul.f32 %v6823, %v6882
  %v6884 = vrcp.pop %v6854
  %v6885 = vmul.f32 %v6825, %v6884
  %v6886 = vrcp.pop %v6857
  %v6887 = vmul.f32 %v6827, %v6886
  %v6888 = vrcp.pop %v6860
  %v6889 = vmul.f32 %v6829, %v6888
  %v6890 = vrcp.pop %v6863
  %v6891 = vmul.f32 %v6831, %v6890
  %v6892 = vrcp.pop %v6866
  %v6893 = vmul.f32 %v6833, %v6892
  %v6894 = vrcp.pop %v6869
  %v6895 = vmul.f32 %v6835, %v6894
  %v6896 = vrcp.pop %v6872
  %v6897 = vmul.f32 %v6837, %v6896
  %v6898 = vrcp.pop %v6875
  %v6899 = vmul.f32 %v6839, %v6898
  %v6901 = vsel %vm1452, %v6877, 0
  %v6904 = vsel %vm1452, %v6879, 0
  %v6907 = vsel %vm1452, %v6881, 0
  %v6910 = vsel %vm1452, %v6883, 0
  %v6913 = vsel %vm1452, %v6885, 0
  %v6916 = vsel %vm1452, %v6887, 0
  %v6919 = vsel %vm1452, %v6889, 0
  %v6922 = vsel %vm1452, %v6891, 0
  %v6925 = vsel %vm1452, %v6893, 0
  %v6928 = vsel %vm1452, %v6895, 0
  %v6931 = vsel %vm1452, %v6897, 0
  %v6934 = vsel %vm1452, %v6899, 0
  %6936 = vmatprep.subr.mxu0 0.0
  %6937 = vmatpush1.msra.mxu0 %v6501
  %6938 = vmatprep.subr.mxu0 0.0
  %6939 = vmatpush1.msra.mxu0 %v6506
  %6940 = vmatprep.subr.mxu0 0.0
  %6941 = vmatpush1.msra.mxu0 %v6511
  %6942 = vmatprep.subr.mxu0 0.0
  %6943 = vmatpush1.msra.mxu0 %v6516
  %6944 = vmatprep.subr.mxu0 0.0
  %6945 = vmatpush1.msra.mxu0 %v6521
  %6946 = vmatprep.subr.mxu0 0.0
  %6947 = vmatpush1.msra.mxu0 %v6526
  %6948 = vmatprep.subr.mxu0 0.0
  %6949 = vmatpush1.msra.mxu0 %v6531
  %6950 = vmatprep.subr.mxu0 0.0
  %6951 = vmatpush1.msra.mxu0 %v6536
  %6952 = vmatprep.subr.mxu0 0.0
  %6953 = vmatpush1.msra.mxu0 %v6541
  %6954 = vmatprep.subr.mxu0 0.0
  %6955 = vmatpush1.msra.mxu0 %v6546
  %6956 = vmatprep.subr.mxu0 0.0
  %6957 = vmatpush1.msra.mxu0 %v6551
  %6958 = vmatprep.subr.mxu0 0.0
  %6959 = vmatpush1.msra.mxu0 %v6556
  %6960 = vmatprep.subr.mxu0 0.0
  %6961 = vmatpush1.msra.mxu0 0.0
  %6962 = vmatprep.subr.mxu0 0.0
  %6963 = vmatpush1.msra.mxu0 0.0
  %6964 = vmatprep.subr.mxu0 0.0
  %6965 = vmatpush1.msra.mxu0 0.0
  %6966 = vmatprep.subr.mxu0 0.0
  %6967 = vmatpush1.msra.mxu0 0.0
  %6968 = vmatprep.subr.mxu0 0.0
  %6969 = vmatpush1.msra.mxu0 0.0
  %6970 = vmatprep.subr.mxu0 0.0
  %6971 = vmatpush1.msra.mxu0 0.0
  %6972 = vmatprep.subr.mxu0 0.0
  %6973 = vmatpush1.msra.mxu0 0.0
  %6974 = vmatprep.subr.mxu0 0.0
  %6975 = vmatpush1.msra.mxu0 0.0
  %6976 = vmatprep.subr.mxu0 0.0
  %6977 = vmatpush1.msra.mxu0 0.0
  %6978 = vmatprep.subr.mxu0 0.0
  %6979 = vmatpush1.msra.mxu0 0.0
  %6980 = vmatprep.subr.mxu0 0.0
  %6981 = vmatpush1.msra.mxu0 0.0
  %6982 = vmatprep.subr.mxu0 0.0
  %6983 = vmatpush1.msra.mxu0 0.0
  %6984 = vmatprep.subr.mxu0 0.0
  %6985 = vmatpush1.msra.mxu0 0.0
  %6986 = vmatprep.subr.mxu0 0.0
  %6987 = vmatpush1.msra.mxu0 0.0
  %6988 = vmatprep.subr.mxu0 0.0
  %6989 = vmatpush1.msra.mxu0 0.0
  %6990 = vmatprep.subr.mxu0 0.0
  %6991 = vmatpush1.msra.mxu0 0.0
  %6992 = vmatprep.subr.mxu0 0.0
  %6993 = vmatpush1.msra.mxu0 0.0
  %6994 = vmatprep.subr.mxu0 0.0
  %6995 = vmatpush1.msra.mxu0 0.0
  %6996 = vmatprep.subr.mxu0 0.0
  %6997 = vmatpush1.msra.mxu0 0.0
  %6998 = vmatprep.subr.mxu0 0.0
  %6999 = vmatpush1.msra.mxu0 0.0
  %7000 = vmatprep.mubr.f32.mxu0 0.0
  %7001 = vmatmul.mubr.f32.gmra.mrb[0].mxu0 %v6901
  %v7002 = vpop.f32.mrb[0].mxu0
  %v7003 = vadd.f32 0.0, %v7002
  %v7004 = vpop.f32.mrb[0].mxu0
  %7005 = vmatprep.mubr.f32.mxu0 0.0
  %7006 = vmatmul.mubr.f32.gmra.mrb[0].mxu0 %v6904
  %v7007 = vpop.f32.mrb[0].mxu0
  %v7008 = vadd.f32 0.0, %v7007
  %v7009 = vpop.f32.mrb[0].mxu0
  %7010 = vmatprep.mubr.f32.mxu0 0.0
  %7011 = vmatmul.mubr.f32.gmra.mrb[0].mxu0 %v6907
  %v7012 = vpop.f32.mrb[0].mxu0
  %v7013 = vadd.f32 0.0, %v7012
  %v7014 = vpop.f32.mrb[0].mxu0
  %7015 = vmatprep.mubr.f32.mxu0 0.0
  %7016 = vmatmul.mubr.f32.gmra.mrb[0].mxu0 %v6910
  %v7017 = vpop.f32.mrb[0].mxu0
  %v7018 = vadd.f32 0.0, %v7017
  %v7019 = vpop.f32.mrb[0].mxu0
  %7020 = vmatprep.mubr.f32.mxu0 0.0
  %7021 = vmatmul.mubr.f32.gmra.mrb[0].mxu0 %v6913
  %v7022 = vpop.f32.mrb[0].mxu0
  %v7023 = vadd.f32 0.0, %v7022
  %v7024 = vpop.f32.mrb[0].mxu0
  %7025 = vmatprep.mubr.f32.mxu0 0.0
  %7026 = vmatmul.mubr.f32.gmra.mrb[0].mxu0 %v6916
  %v7027 = vpop.f32.mrb[0].mxu0
  %v7028 = vadd.f32 0.0, %v7027
  %v7029 = vpop.f32.mrb[0].mxu0
  %7030 = vmatprep.mubr.f32.mxu0 0.0
  %7031 = vmatmul.mubr.f32.gmra.mrb[0].mxu0 %v6919
  %v7032 = vpop.f32.mrb[0].mxu0
  %v7033 = vadd.f32 0.0, %v7032
  %v7034 = vpop.f32.mrb[0].mxu0
  %7035 = vmatprep.mubr.f32.mxu0 0.0
  %7036 = vmatmul.mubr.f32.gmra.mrb[0].mxu0 %v6922
  %v7037 = vpop.f32.mrb[0].mxu0
  %v7038 = vadd.f32 0.0, %v7037
  %v7039 = vpop.f32.mrb[0].mxu0
  %7040 = vmatprep.mubr.f32.mxu0 0.0
  %7041 = vmatmul.mubr.f32.gmra.mrb[0].mxu0 %v6925
  %v7042 = vpop.f32.mrb[0].mxu0
  %v7043 = vadd.f32 0.0, %v7042
  %v7044 = vpop.f32.mrb[0].mxu0
  %7045 = vmatprep.mubr.f32.mxu0 0.0
  %7046 = vmatmul.mubr.f32.gmra.mrb[0].mxu0 %v6928
  %v7047 = vpop.f32.mrb[0].mxu0
  %v7048 = vadd.f32 0.0, %v7047
  %v7049 = vpop.f32.mrb[0].mxu0
  %7050 = vmatprep.mubr.f32.mxu0 0.0
  %7051 = vmatmul.mubr.f32.gmra.mrb[0].mxu0 %v6931
  %v7052 = vpop.f32.mrb[0].mxu0
  %v7053 = vadd.f32 0.0, %v7052
  %v7054 = vpop.f32.mrb[0].mxu0
  %7055 = vmatprep.mubr.f32.mxu0 0.0
  %7056 = vmatmul.mubr.f32.gmra.mrb[0].mxu0 %v6934
  %v7057 = vpop.f32.mrb[0].mxu0
  %v7058 = vadd.f32 0.0, %v7057
  %v7059 = vpop.f32.mrb[0].mxu0
  %7060 = vdwg.mxu0
  %v7062 = vlaneseq
  %v7063 = vshrl.u32 %v7062, 7
  %v7064 = vsub.s32 0, %v7063
  %v7065 = vrot.slane %v6111, %v7064
  %v7068 = vsel %vm799, %v7003, 0
  %v7071 = vsel %vm799, %v7008, 0
  %v7074 = vsel %vm799, %v7013, 0
  %v7077 = vsel %vm799, %v7018, 0
  %v7080 = vsel %vm799, %v7023, 0
  %v7083 = vsel %vm799, %v7028, 0
  %v7086 = vsel %vm799, %v7033, 0
  %v7089 = vsel %vm799, %v7038, 0
  %v7092 = vsel %vm799, %v7043, 0
  %v7095 = vsel %vm799, %v7048, 0
  %v7098 = vsel %vm799, %v7053, 0
  %v7101 = vsel %vm799, %v7058, 0
  %v7104 = vsel %vm836, %v6110, 0
  %7106 = vmatprep.subr.mxu0 0.0
  %7107 = vmatpush1.msra.mxu0 %v6109
  %7108 = vmatprep.subr.mxu0 0.0
  %7109 = vmatpush1.msra.mxu0 %v7104
  %7110 = vmatprep.subr.mxu0 0.0
  %7111 = vmatpush1.msra.mxu0 0.0
  %7112 = vmatprep.subr.mxu0 0.0
  %7113 = vmatpush1.msra.mxu0 0.0
  %7114 = vmatprep.subr.mxu0 0.0
  %7115 = vmatpush1.msra.mxu0 0.0
  %7116 = vmatprep.subr.mxu0 0.0
  %7117 = vmatpush1.msra.mxu0 0.0
  %7118 = vmatprep.subr.mxu0 0.0
  %7119 = vmatpush1.msra.mxu0 0.0
  %7120 = vmatprep.subr.mxu0 0.0
  %7121 = vmatpush1.msra.mxu0 0.0
  %7122 = vmatprep.subr.mxu0 0.0
  %7123 = vmatpush1.msra.mxu0 0.0
  %7124 = vmatprep.subr.mxu0 0.0
  %7125 = vmatpush1.msra.mxu0 0.0
  %7126 = vmatprep.subr.mxu0 0.0
  %7127 = vmatpush1.msra.mxu0 0.0
  %7128 = vmatprep.subr.mxu0 0.0
  %7129 = vmatpush1.msra.mxu0 0.0
  %7130 = vmatprep.subr.mxu0 0.0
  %7131 = vmatpush1.msra.mxu0 0.0
  %7132 = vmatprep.subr.mxu0 0.0
  %7133 = vmatpush1.msra.mxu0 0.0
  %7134 = vmatprep.subr.mxu0 0.0
  %7135 = vmatpush1.msra.mxu0 0.0
  %7136 = vmatprep.subr.mxu0 0.0
  %7137 = vmatpush1.msra.mxu0 0.0
  %7138 = vmatprep.subr.mxu0 0.0
  %7139 = vmatpush1.msra.mxu0 0.0
  %7140 = vmatprep.subr.mxu0 0.0
  %7141 = vmatpush1.msra.mxu0 0.0
  %7142 = vmatprep.subr.mxu0 0.0
  %7143 = vmatpush1.msra.mxu0 0.0
  %7144 = vmatprep.subr.mxu0 0.0
  %7145 = vmatpush1.msra.mxu0 0.0
  %7146 = vmatprep.subr.mxu0 0.0
  %7147 = vmatpush1.msra.mxu0 0.0
  %7148 = vmatprep.subr.mxu0 0.0
  %7149 = vmatpush1.msra.mxu0 0.0
  %7150 = vmatprep.subr.mxu0 0.0
  %7151 = vmatpush1.msra.mxu0 0.0
  %7152 = vmatprep.subr.mxu0 0.0
  %7153 = vmatpush1.msra.mxu0 0.0
  %7154 = vmatprep.subr.mxu0 0.0
  %7155 = vmatpush1.msra.mxu0 0.0
  %7156 = vmatprep.subr.mxu0 0.0
  %7157 = vmatpush1.msra.mxu0 0.0
  %7158 = vmatprep.subr.mxu0 0.0
  %7159 = vmatpush1.msra.mxu0 0.0
  %7160 = vmatprep.subr.mxu0 0.0
  %7161 = vmatpush1.msra.mxu0 0.0
  %7162 = vmatprep.subr.mxu0 0.0
  %7163 = vmatpush1.msra.mxu0 0.0
  %7164 = vmatprep.subr.mxu0 0.0
  %7165 = vmatpush1.msra.mxu0 0.0
  %7166 = vmatprep.subr.mxu0 0.0
  %7167 = vmatpush1.msra.mxu0 0.0
  %7168 = vmatprep.subr.mxu0 0.0
  %7169 = vmatpush1.msra.mxu0 0.0
  %7170 = vmatprep.mubr.f32.mxu0 0.0
  %7171 = vmatmul.mubr.f32.gmra.mrb[0].mxu0 %v7068
  %v7172 = vpop.f32.mrb[0].mxu0
  %v7173 = vadd.f32 %v7065, %v7172
  %v7174 = vpop.f32.mrb[0].mxu0
  %7175 = vmatprep.mubr.f32.mxu0 0.0
  %7176 = vmatmul.mubr.f32.gmra.mrb[0].mxu0 %v7071
  %v7177 = vpop.f32.mrb[0].mxu0
  %v7178 = vadd.f32 %v7065, %v7177
  %v7179 = vpop.f32.mrb[0].mxu0
  %7180 = vmatprep.mubr.f32.mxu0 0.0
  %7181 = vmatmul.mubr.f32.gmra.mrb[0].mxu0 %v7074
  %v7182 = vpop.f32.mrb[0].mxu0
  %v7183 = vadd.f32 %v7065, %v7182
  %v7184 = vpop.f32.mrb[0].mxu0
  %7185 = vmatprep.mubr.f32.mxu0 0.0
  %7186 = vmatmul.mubr.f32.gmra.mrb[0].mxu0 %v7077
  %v7187 = vpop.f32.mrb[0].mxu0
  %v7188 = vadd.f32 %v7065, %v7187
  %v7189 = vpop.f32.mrb[0].mxu0
  %7190 = vmatprep.mubr.f32.mxu0 0.0
  %7191 = vmatmul.mubr.f32.gmra.mrb[0].mxu0 %v7080
  %v7192 = vpop.f32.mrb[0].mxu0
  %v7193 = vadd.f32 %v7065, %v7192
  %v7194 = vpop.f32.mrb[0].mxu0
  %7195 = vmatprep.mubr.f32.mxu0 0.0
  %7196 = vmatmul.mubr.f32.gmra.mrb[0].mxu0 %v7083
  %v7197 = vpop.f32.mrb[0].mxu0
  %v7198 = vadd.f32 %v7065, %v7197
  %v7199 = vpop.f32.mrb[0].mxu0
  %7200 = vmatprep.mubr.f32.mxu0 0.0
  %7201 = vmatmul.mubr.f32.gmra.mrb[0].mxu0 %v7086
  %v7202 = vpop.f32.mrb[0].mxu0
  %v7203 = vadd.f32 %v7065, %v7202
  %v7204 = vpop.f32.mrb[0].mxu0
  %7205 = vmatprep.mubr.f32.mxu0 0.0
  %7206 = vmatmul.mubr.f32.gmra.mrb[0].mxu0 %v7089
  %v7207 = vpop.f32.mrb[0].mxu0
  %v7208 = vadd.f32 %v7065, %v7207
  %v7209 = vpop.f32.mrb[0].mxu0
  %7210 = vmatprep.mubr.f32.mxu0 0.0
  %7211 = vmatmul.mubr.f32.gmra.mrb[0].mxu0 %v7092
  %v7212 = vpop.f32.mrb[0].mxu0
  %v7213 = vadd.f32 %v7065, %v7212
  %v7214 = vpop.f32.mrb[0].mxu0
  %7215 = vmatprep.mubr.f32.mxu0 0.0
  %7216 = vmatmul.mubr.f32.gmra.mrb[0].mxu0 %v7095
  %v7217 = vpop.f32.mrb[0].mxu0
  %v7218 = vadd.f32 %v7065, %v7217
  %v7219 = vpop.f32.mrb[0].mxu0
  %7220 = vmatprep.mubr.f32.mxu0 0.0
  %7221 = vmatmul.mubr.f32.gmra.mrb[0].mxu0 %v7098
  %v7222 = vpop.f32.mrb[0].mxu0
  %v7223 = vadd.f32 %v7065, %v7222
  %v7224 = vpop.f32.mrb[0].mxu0
  %7225 = vmatprep.mubr.f32.mxu0 0.0
  %7226 = vmatmul.mubr.f32.gmra.mrb[0].mxu0 %v7101
  %v7227 = vpop.f32.mrb[0].mxu0
  %v7228 = vadd.f32 %v7065, %v7227
  %v7229 = vpop.f32.mrb[0].mxu0
  %7230 = vdwg.mxu0
  %v7231 = vld [vmem:[%s14] sm:$0x1]
  %v7232 = vld [vmem:[%s15] sm:$0x1]
  %v7233 = vsel %vm799, %v7173, 0.0
  %7234 = vadd.xlane.f32.xlu0 %v7233
  %v7235 = vpop.xlane.xlu0 %7234
  %v7236 = vsel %vm799, %v7178, 0.0
  %7237 = vadd.xlane.f32.xlu0 %v7236
  %v7238 = vpop.xlane.xlu0 %7237
  %v7239 = vsel %vm799, %v7183, 0.0
  %7240 = vadd.xlane.f32.xlu0 %v7239
  %v7241 = vpop.xlane.xlu0 %7240
  %v7242 = vsel %vm799, %v7188, 0.0
  %7243 = vadd.xlane.f32.xlu0 %v7242
  %v7244 = vpop.xlane.xlu0 %7243
  %v7245 = vsel %vm799, %v7193, 0.0
  %7246 = vadd.xlane.f32.xlu0 %v7245
  %v7247 = vpop.xlane.xlu0 %7246
  %v7248 = vsel %vm799, %v7198, 0.0
  %7249 = vadd.xlane.f32.xlu0 %v7248
  %v7250 = vpop.xlane.xlu0 %7249
  %v7251 = vsel %vm799, %v7203, 0.0
  %7252 = vadd.xlane.f32.xlu0 %v7251
  %v7253 = vpop.xlane.xlu0 %7252
  %v7254 = vsel %vm799, %v7208, 0.0
  %7255 = vadd.xlane.f32.xlu0 %v7254
  %v7256 = vpop.xlane.xlu0 %7255
  %v7257 = vsel %vm799, %v7213, 0.0
  %7258 = vadd.xlane.f32.xlu0 %v7257
  %v7259 = vpop.xlane.xlu0 %7258
  %v7260 = vsel %vm799, %v7218, 0.0
  %7261 = vadd.xlane.f32.xlu0 %v7260
  %v7262 = vpop.xlane.xlu0 %7261
  %v7263 = vsel %vm799, %v7223, 0.0
  %7264 = vadd.xlane.f32.xlu0 %v7263
  %v7265 = vpop.xlane.xlu0 %7264
  %v7266 = vsel %vm799, %v7228, 0.0
  %7267 = vadd.xlane.f32.xlu0 %v7266
  %v7268 = vpop.xlane.xlu0 %7267
  %v7269 = vmul.f32 %v7235, %v1966
  %v7270 = vmul.f32 %v7238, %v1966
  %v7271 = vmul.f32 %v7241, %v1966
  %v7272 = vmul.f32 %v7244, %v1966
  %v7273 = vmul.f32 %v7247, %v1966
  %v7274 = vmul.f32 %v7250, %v1966
  %v7275 = vmul.f32 %v7253, %v1966
  %v7276 = vmul.f32 %v7256, %v1966
  %v7277 = vmul.f32 %v7259, %v1966
  %v7278 = vmul.f32 %v7262, %v1966
  %v7279 = vmul.f32 %v7265, %v1966
  %v7280 = vmul.f32 %v7268, %v1966
  %v7281 = vsub.f32 %v7173, %v7269
  %v7282 = vsub.f32 %v7178, %v7270
  %v7283 = vsub.f32 %v7183, %v7271
  %v7284 = vsub.f32 %v7188, %v7272
  %v7285 = vsub.f32 %v7193, %v7273
  %v7286 = vsub.f32 %v7198, %v7274
  %v7287 = vsub.f32 %v7203, %v7275
  %v7288 = vsub.f32 %v7208, %v7276
  %v7289 = vsub.f32 %v7213, %v7277
  %v7290 = vsub.f32 %v7218, %v7278
  %v7291 = vsub.f32 %v7223, %v7279
  %v7292 = vsub.f32 %v7228, %v7280
  %v7293 = vmul.f32 %v7281, %v7281
  %v7294 = vmul.f32 %v7282, %v7282
  %v7295 = vmul.f32 %v7283, %v7283
  %v7296 = vmul.f32 %v7284, %v7284
  %v7297 = vmul.f32 %v7285, %v7285
  %v7298 = vmul.f32 %v7286, %v7286
  %v7299 = vmul.f32 %v7287, %v7287
  %v7300 = vmul.f32 %v7288, %v7288
  %v7301 = vmul.f32 %v7289, %v7289
  %v7302 = vmul.f32 %v7290, %v7290
  %v7303 = vmul.f32 %v7291, %v7291
  %v7304 = vmul.f32 %v7292, %v7292
  %v7305 = vsel %vm799, %v7293, 0.0
  %7306 = vadd.xlane.f32.xlu0 %v7305
  %v7307 = vpop.xlane.xlu0 %7306
  %v7308 = vsel %vm799, %v7294, 0.0
  %7309 = vadd.xlane.f32.xlu0 %v7308
  %v7310 = vpop.xlane.xlu0 %7309
  %v7311 = vsel %vm799, %v7295, 0.0
  %7312 = vadd.xlane.f32.xlu0 %v7311
  %v7313 = vpop.xlane.xlu0 %7312
  %v7314 = vsel %vm799, %v7296, 0.0
  %7315 = vadd.xlane.f32.xlu0 %v7314
  %v7316 = vpop.xlane.xlu0 %7315
  %v7317 = vsel %vm799, %v7297, 0.0
  %7318 = vadd.xlane.f32.xlu0 %v7317
  %v7319 = vpop.xlane.xlu0 %7318
  %v7320 = vsel %vm799, %v7298, 0.0
  %7321 = vadd.xlane.f32.xlu0 %v7320
  %v7322 = vpop.xlane.xlu0 %7321
  %v7323 = vsel %vm799, %v7299, 0.0
  %7324 = vadd.xlane.f32.xlu0 %v7323
  %v7325 = vpop.xlane.xlu0 %7324
  %v7326 = vsel %vm799, %v7300, 0.0
  %7327 = vadd.xlane.f32.xlu0 %v7326
  %v7328 = vpop.xlane.xlu0 %7327
  %v7329 = vsel %vm799, %v7301, 0.0
  %7330 = vadd.xlane.f32.xlu0 %v7329
  %v7331 = vpop.xlane.xlu0 %7330
  %v7332 = vsel %vm799, %v7302, 0.0
  %7333 = vadd.xlane.f32.xlu0 %v7332
  %v7334 = vpop.xlane.xlu0 %7333
  %v7335 = vsel %vm799, %v7303, 0.0
  %7336 = vadd.xlane.f32.xlu0 %v7335
  %v7337 = vpop.xlane.xlu0 %7336
  %v7338 = vsel %vm799, %v7304, 0.0
  %7339 = vadd.xlane.f32.xlu0 %v7338
  %v7340 = vpop.xlane.xlu0 %7339
  %v7341 = vmul.f32 %v7307, %v1966
  %v7342 = vmul.f32 %v7310, %v1966
  %v7343 = vmul.f32 %v7313, %v1966
  %v7344 = vmul.f32 %v7316, %v1966
  %v7345 = vmul.f32 %v7319, %v1966
  %v7346 = vmul.f32 %v7322, %v1966
  %v7347 = vmul.f32 %v7325, %v1966
  %v7348 = vmul.f32 %v7328, %v1966
  %v7349 = vmul.f32 %v7331, %v1966
  %v7350 = vmul.f32 %v7334, %v1966
  %v7351 = vmul.f32 %v7337, %v1966
  %v7352 = vmul.f32 %v7340, %v1966
  %v7353 = vadd.f32 %v7341, 1e-05
  %v7354 = vadd.f32 %v7342, 1e-05
  %v7355 = vadd.f32 %v7343, 1e-05
  %v7356 = vadd.f32 %v7344, 1e-05
  %v7357 = vadd.f32 %v7345, 1e-05
  %v7358 = vadd.f32 %v7346, 1e-05
  %v7359 = vadd.f32 %v7347, 1e-05
  %v7360 = vadd.f32 %v7348, 1e-05
  %v7361 = vadd.f32 %v7349, 1e-05
  %v7362 = vadd.f32 %v7350, 1e-05
  %v7363 = vadd.f32 %v7351, 1e-05
  %v7364 = vadd.f32 %v7352, 1e-05
  %v7365 = vrsqrt.pop %v7353
  %v7366 = vrsqrt.pop %v7354
  %v7367 = vrsqrt.pop %v7355
  %v7368 = vrsqrt.pop %v7356
  %v7369 = vrsqrt.pop %v7357
  %v7370 = vrsqrt.pop %v7358
  %v7371 = vrsqrt.pop %v7359
  %v7372 = vrsqrt.pop %v7360
  %v7373 = vrsqrt.pop %v7361
  %v7374 = vrsqrt.pop %v7362
  %v7375 = vrsqrt.pop %v7363
  %v7376 = vrsqrt.pop %v7364
  %v7377 = vmul.f32 %v7281, %v7365
  %v7378 = vmul.f32 %v7282, %v7366
  %v7379 = vmul.f32 %v7283, %v7367
  %v7380 = vmul.f32 %v7284, %v7368
  %v7381 = vmul.f32 %v7285, %v7369
  %v7382 = vmul.f32 %v7286, %v7370
  %v7383 = vmul.f32 %v7287, %v7371
  %v7384 = vmul.f32 %v7288, %v7372
  %v7385 = vmul.f32 %v7289, %v7373
  %v7386 = vmul.f32 %v7290, %v7374
  %v7387 = vmul.f32 %v7291, %v7375
  %v7388 = vmul.f32 %v7292, %v7376
  %v7390 = vlaneseq
  %v7391 = vshrl.u32 %v7390, 7
  %v7392 = vsub.s32 0, %v7391
  %v7393 = vrot.slane %v7231, %v7392
  %v7395 = vmul.f32 %v7377, %v7393
  %v7396 = vmul.f32 %v7378, %v7393
  %v7397 = vmul.f32 %v7379, %v7393
  %v7398 = vmul.f32 %v7380, %v7393
  %v7399 = vmul.f32 %v7381, %v7393
  %v7400 = vmul.f32 %v7382, %v7393
  %v7401 = vmul.f32 %v7383, %v7393
  %v7402 = vmul.f32 %v7384, %v7393
  %v7403 = vmul.f32 %v7385, %v7393
  %v7404 = vmul.f32 %v7386, %v7393
  %v7405 = vmul.f32 %v7387, %v7393
  %v7406 = vmul.f32 %v7388, %v7393
  %v7408 = vlaneseq
  %v7409 = vshrl.u32 %v7408, 7
  %v7410 = vsub.s32 0, %v7409
  %v7411 = vrot.slane %v7232, %v7410
  %v7413 = vadd.f32 %v7395, %v7411
  %v7414 = vadd.f32 %v7396, %v7411
  %v7415 = vadd.f32 %v7397, %v7411
  %v7416 = vadd.f32 %v7398, %v7411
  %v7417 = vadd.f32 %v7399, %v7411
  %v7418 = vadd.f32 %v7400, %v7411
  %v7419 = vadd.f32 %v7401, %v7411
  %v7420 = vadd.f32 %v7402, %v7411
  %v7421 = vadd.f32 %v7403, %v7411
  %v7422 = vadd.f32 %v7404, %v7411
  %v7423 = vadd.f32 %v7405, %v7411
  %v7424 = vadd.f32 %v7406, %v7411
  %v7426 = vsel %vm799, %v7413, 0
  %v7429 = vsel %vm799, %v7414, 0
  %v7432 = vsel %vm799, %v7415, 0
  %v7435 = vsel %vm799, %v7416, 0
  %v7438 = vsel %vm799, %v7417, 0
  %v7441 = vsel %vm799, %v7418, 0
  %v7444 = vsel %vm799, %v7419, 0
  %v7447 = vsel %vm799, %v7420, 0
  %v7450 = vsel %vm799, %v7421, 0
  %v7453 = vsel %vm799, %v7422, 0
  %v7456 = vsel %vm799, %v7423, 0
  %v7459 = vsel %vm799, %v7424, 0
  %7461 = vmatprep.subr.mxu0 0.0
  %7462 = vmatpush1.xpose.msra.mxu0 %v7426
  %7463 = vmatprep.subr.mxu0 0.0
  %7464 = vmatpush1.xpose.msra.mxu0 %v7429
  %7465 = vmatprep.subr.mxu0 0.0
  %7466 = vmatpush1.xpose.msra.mxu0 %v7432
  %7467 = vmatprep.subr.mxu0 0.0
  %7468 = vmatpush1.xpose.msra.mxu0 %v7435
  %7469 = vmatprep.subr.mxu0 0.0
  %7470 = vmatpush1.xpose.msra.mxu0 %v7438
  %7471 = vmatprep.subr.mxu0 0.0
  %7472 = vmatpush1.xpose.msra.mxu0 %v7441
  %7473 = vmatprep.subr.mxu0 0.0
  %7474 = vmatpush1.xpose.msra.mxu0 %v7444
  %7475 = vmatprep.subr.mxu0 0.0
  %7476 = vmatpush1.xpose.msra.mxu0 %v7447
  %7477 = vmatprep.subr.mxu0 0.0
  %7478 = vmatpush1.xpose.msra.mxu0 %v7450
  %7479 = vmatprep.subr.mxu0 0.0
  %7480 = vmatpush1.xpose.msra.mxu0 %v7453
  %7481 = vmatprep.subr.mxu0 0.0
  %7482 = vmatpush1.xpose.msra.mxu0 %v7456
  %7483 = vmatprep.subr.mxu0 0.0
  %7484 = vmatpush1.xpose.msra.mxu0 %v7459
  %7485 = vmatprep.subr.mxu0 0.0
  %7486 = vmatpush1.xpose.msra.mxu0 0.0
  %7487 = vmatprep.subr.mxu0 0.0
  %7488 = vmatpush1.xpose.msra.mxu0 0.0
  %7489 = vmatprep.subr.mxu0 0.0
  %7490 = vmatpush1.xpose.msra.mxu0 0.0
  %7491 = vmatprep.subr.mxu0 0.0
  %7492 = vmatpush1.xpose.msra.mxu0 0.0
  %7493 = vmatprep.subr.mxu0 0.0
  %7494 = vmatpush1.xpose.msra.mxu0 0.0
  %7495 = vmatprep.subr.mxu0 0.0
  %7496 = vmatpush1.xpose.msra.mxu0 0.0
  %7497 = vmatprep.subr.mxu0 0.0
  %7498 = vmatpush1.xpose.msra.mxu0 0.0
  %7499 = vmatprep.subr.mxu0 0.0
  %7500 = vmatpush1.xpose.msra.mxu0 0.0
  %7501 = vmatprep.subr.mxu0 0.0
  %7502 = vmatpush1.xpose.msra.mxu0 0.0
  %7503 = vmatprep.subr.mxu0 0.0
  %7504 = vmatpush1.xpose.msra.mxu0 0.0
  %7505 = vmatprep.subr.mxu0 0.0
  %7506 = vmatpush1.xpose.msra.mxu0 0.0
  %7507 = vmatprep.subr.mxu0 0.0
  %7508 = vmatpush1.xpose.msra.mxu0 0.0
  %7509 = vmatprep.subr.mxu0 0.0
  %7510 = vmatpush1.xpose.msra.mxu0 0.0
  %7511 = vmatprep.subr.mxu0 0.0
  %7512 = vmatpush1.xpose.msra.mxu0 0.0
  %7513 = vmatprep.subr.mxu0 0.0
  %7514 = vmatpush1.xpose.msra.mxu0 0.0
  %7515 = vmatprep.subr.mxu0 0.0
  %7516 = vmatpush1.xpose.msra.mxu0 0.0
  %7517 = vmatprep.subr.mxu0 0.0
  %7518 = vmatpush1.xpose.msra.mxu0 0.0
  %7519 = vmatprep.subr.mxu0 0.0
  %7520 = vmatpush1.xpose.msra.mxu0 0.0
  %7521 = vmatprep.subr.mxu0 0.0
  %7522 = vmatpush1.xpose.msra.mxu0 0.0
  %7523 = vmatprep.subr.mxu0 0.0
  %7524 = vmatpush1.xpose.msra.mxu0 0.0
  %7525 = vmatprep.mubr.f32.mxu0 0.0
  %7526 = vmatmul.mubr.f32.gmra.mrb[0].mxu0 %v3448
  %v7527 = vpop.f32.mrb[0].mxu0
  %v7528 = vadd.f32 0.0, %v7527
  %v7529 = vpop.f32.mrb[0].mxu0
  %7530 = vmatprep.mubr.f32.mxu0 0.0
  %7531 = vmatmul.mubr.f32.gmra.mrb[0].mxu0 %v3451
  %v7532 = vpop.f32.mrb[0].mxu0
  %v7533 = vadd.f32 0.0, %v7532
  %v7534 = vpop.f32.mrb[0].mxu0
  %7535 = vdwg.mxu0
  %v7536 = vld [vmem:[%s17] sm:$0x1]
  %v7537 = vld [vmem:[#allocation2] sm:$0xff]
  %v7538 = vld [vmem:[#allocation2 + $0x8] sm:$0xff]
  %v7539 = vld [vmem:[#allocation2 + $0x10] sm:$0xff]
  %v7540 = vld [vmem:[#allocation2 + $0x18] sm:$0xff]
  %v7541 = vld [vmem:[#allocation2 + $0x20] sm:$0xff]
  %v7542 = vld [vmem:[#allocation2 + $0x28] sm:$0xff]
  %v7543 = vld [vmem:[#allocation2 + $0x30] sm:$0xff]
  %v7544 = vld [vmem:[#allocation2 + $0x38] sm:$0xff]
  %v7545 = vld [vmem:[#allocation2 + $0x40] sm:$0xff]
  %v7546 = vld [vmem:[#allocation2 + $0x48] sm:$0xff]
  %v7547 = vld [vmem:[#allocation2 + $0x50] sm:$0xff]
  %v7548 = vld [vmem:[#allocation2 + $0x58] sm:$0xff]
  %v7550 = vsel %vm1452, %v7528, 0
  %7552 = vmatprep.subr.mxu0 0.0
  %7553 = vmatpush1.msra.mxu0 %v7537
  %7554 = vmatprep.subr.mxu0 0.0
  %7555 = vmatpush1.msra.mxu0 %v7538
  %7556 = vmatprep.subr.mxu0 0.0
  %7557 = vmatpush1.msra.mxu0 %v7539
  %7558 = vmatprep.subr.mxu0 0.0
  %7559 = vmatpush1.msra.mxu0 %v7540
  %7560 = vmatprep.subr.mxu0 0.0
  %7561 = vmatpush1.msra.mxu0 %v7541
  %7562 = vmatprep.subr.mxu0 0.0
  %7563 = vmatpush1.msra.mxu0 %v7542
  %7564 = vmatprep.subr.mxu0 0.0
  %7565 = vmatpush1.msra.mxu0 %v7543
  %7566 = vmatprep.subr.mxu0 0.0
  %7567 = vmatpush1.msra.mxu0 %v7544
  %7568 = vmatprep.subr.mxu0 0.0
  %7569 = vmatpush1.msra.mxu0 %v7545
  %7570 = vmatprep.subr.mxu0 0.0
  %7571 = vmatpush1.msra.mxu0 %v7546
  %7572 = vmatprep.subr.mxu0 0.0
  %7573 = vmatpush1.msra.mxu0 %v7547
  %7574 = vmatprep.subr.mxu0 0.0
  %7575 = vmatpush1.msra.mxu0 %v7548
  %7576 = vmatprep.subr.mxu0 0.0
  %7577 = vmatpush1.msra.mxu0 0.0
  %7578 = vmatprep.subr.mxu0 0.0
  %7579 = vmatpush1.msra.mxu0 0.0
  %7580 = vmatprep.subr.mxu0 0.0
  %7581 = vmatpush1.msra.mxu0 0.0
  %7582 = vmatprep.subr.mxu0 0.0
  %7583 = vmatpush1.msra.mxu0 0.0
  %7584 = vmatprep.subr.mxu0 0.0
  %7585 = vmatpush1.msra.mxu0 0.0
  %7586 = vmatprep.subr.mxu0 0.0
  %7587 = vmatpush1.msra.mxu0 0.0
  %7588 = vmatprep.subr.mxu0 0.0
  %7589 = vmatpush1.msra.mxu0 0.0
  %7590 = vmatprep.subr.mxu0 0.0
  %7591 = vmatpush1.msra.mxu0 0.0
  %7592 = vmatprep.subr.mxu0 0.0
  %7593 = vmatpush1.msra.mxu0 0.0
  %7594 = vmatprep.subr.mxu0 0.0
  %7595 = vmatpush1.msra.mxu0 0.0
  %7596 = vmatprep.subr.mxu0 0.0
  %7597 = vmatpush1.msra.mxu0 0.0
  %7598 = vmatprep.subr.mxu0 0.0
  %7599 = vmatpush1.msra.mxu0 0.0
  %7600 = vmatprep.subr.mxu0 0.0
  %7601 = vmatpush1.msra.mxu0 0.0
  %7602 = vmatprep.subr.mxu0 0.0
  %7603 = vmatpush1.msra.mxu0 0.0
  %7604 = vmatprep.subr.mxu0 0.0
  %7605 = vmatpush1.msra.mxu0 0.0
  %7606 = vmatprep.subr.mxu0 0.0
  %7607 = vmatpush1.msra.mxu0 0.0
  %7608 = vmatprep.subr.mxu0 0.0
  %7609 = vmatpush1.msra.mxu0 0.0
  %7610 = vmatprep.subr.mxu0 0.0
  %7611 = vmatpush1.msra.mxu0 0.0
  %7612 = vmatprep.subr.mxu0 0.0
  %7613 = vmatpush1.msra.mxu0 0.0
  %7614 = vmatprep.subr.mxu0 0.0
  %7615 = vmatpush1.msra.mxu0 0.0
  %7616 = vmatprep.mubr.f32.mxu0 0.0
  %7617 = vmatmul.mubr.f32.gmra.mrb[0].mxu0 %v7550
  %v7618 = vpop.f32.mrb[0].mxu0
  %v7619 = vadd.f32 0.0, %v7618
  %v7620 = vpop.f32.mrb[0].mxu0
  %7621 = vdwg.mxu0
  %v7622 = vadd.f32 %v7536, %v7619
  %v7623 = vld [vmem:[%s3651] sm:$0xff]
  %v7624 = vld [vmem:[%s3651 + $0x8] sm:$0xff]
  %v7625 = vld [vmem:[%s3651 + $0x10] sm:$0xff]
  %v7626 = vld [vmem:[%s3651 + $0x18] sm:$0xff]
  %v7627 = vld [vmem:[%s3651 + $0x20] sm:$0xff]
  %v7628 = vld [vmem:[%s3651 + $0x28] sm:$0xff]
  %v7629 = vld [vmem:[%s3651 + $0x30] sm:$0xff]
  %v7630 = vld [vmem:[%s3651 + $0x38] sm:$0xff]
  %v7631 = vld [vmem:[%s3651 + $0x40] sm:$0xff]
  %v7632 = vld [vmem:[%s3651 + $0x48] sm:$0xff]
  %v7633 = vld [vmem:[%s3651 + $0x50] sm:$0xff]
  %v7634 = vld [vmem:[%s3651 + $0x58] sm:$0xff]
  %v7635 = vrot.slane %v7528, 1
  %v7636 = vsel %vm1452, %v7635, 0
  %7638 = vmatprep.subr.mxu0 0.0
  %7639 = vmatpush1.msra.mxu0 %v7623
  %7640 = vmatprep.subr.mxu0 0.0
  %7641 = vmatpush1.msra.mxu0 %v7624
  %7642 = vmatprep.subr.mxu0 0.0
  %7643 = vmatpush1.msra.mxu0 %v7625
  %7644 = vmatprep.subr.mxu0 0.0
  %7645 = vmatpush1.msra.mxu0 %v7626
  %7646 = vmatprep.subr.mxu0 0.0
  %7647 = vmatpush1.msra.mxu0 %v7627
  %7648 = vmatprep.subr.mxu0 0.0
  %7649 = vmatpush1.msra.mxu0 %v7628
  %7650 = vmatprep.subr.mxu0 0.0
  %7651 = vmatpush1.msra.mxu0 %v7629
  %7652 = vmatprep.subr.mxu0 0.0
  %7653 = vmatpush1.msra.mxu0 %v7630
  %7654 = vmatprep.subr.mxu0 0.0
  %7655 = vmatpush1.msra.mxu0 %v7631
  %7656 = vmatprep.subr.mxu0 0.0
  %7657 = vmatpush1.msra.mxu0 %v7632
  %7658 = vmatprep.subr.mxu0 0.0
  %7659 = vmatpush1.msra.mxu0 %v7633
  %7660 = vmatprep.subr.mxu0 0.0
  %7661 = vmatpush1.msra.mxu0 %v7634
  %7662 = vmatprep.subr.mxu0 0.0
  %7663 = vmatpush1.msra.mxu0 0.0
  %7664 = vmatprep.subr.mxu0 0.0
  %7665 = vmatpush1.msra.mxu0 0.0
  %7666 = vmatprep.subr.mxu0 0.0
  %7667 = vmatpush1.msra.mxu0 0.0
  %7668 = vmatprep.subr.mxu0 0.0
  %7669 = vmatpush1.msra.mxu0 0.0
  %7670 = vmatprep.subr.mxu0 0.0
  %7671 = vmatpush1.msra.mxu0 0.0
  %7672 = vmatprep.subr.mxu0 0.0
  %7673 = vmatpush1.msra.mxu0 0.0
  %7674 = vmatprep.subr.mxu0 0.0
  %7675 = vmatpush1.msra.mxu0 0.0
  %7676 = vmatprep.subr.mxu0 0.0
  %7677 = vmatpush1.msra.mxu0 0.0
  %7678 = vmatprep.subr.mxu0 0.0
  %7679 = vmatpush1.msra.mxu0 0.0
  %7680 = vmatprep.subr.mxu0 0.0
  %7681 = vmatpush1.msra.mxu0 0.0
  %7682 = vmatprep.subr.mxu0 0.0
  %7683 = vmatpush1.msra.mxu0 0.0
  %7684 = vmatprep.subr.mxu0 0.0
  %7685 = vmatpush1.msra.mxu0 0.0
  %7686 = vmatprep.subr.mxu0 0.0
  %7687 = vmatpush1.msra.mxu0 0.0
  %7688 = vmatprep.subr.mxu0 0.0
  %7689 = vmatpush1.msra.mxu0 0.0
  %7690 = vmatprep.subr.mxu0 0.0
  %7691 = vmatpush1.msra.mxu0 0.0
  %7692 = vmatprep.subr.mxu0 0.0
  %7693 = vmatpush1.msra.mxu0 0.0
  %7694 = vmatprep.subr.mxu0 0.0
  %7695 = vmatpush1.msra.mxu0 0.0
  %7696 = vmatprep.subr.mxu0 0.0
  %7697 = vmatpush1.msra.mxu0 0.0
  %7698 = vmatprep.subr.mxu0 0.0
  %7699 = vmatpush1.msra.mxu0 0.0
  %7700 = vmatprep.subr.mxu0 0.0
  %7701 = vmatpush1.msra.mxu0 0.0
  %7702 = vmatprep.mubr.f32.mxu0 0.0
  %7703 = vmatmul.mubr.f32.gmra.mrb[0].mxu0 %v7636
  %v7704 = vpop.f32.mrb[0].mxu0
  %v7705 = vadd.f32 0.0, %v7704
  %v7706 = vpop.f32.mrb[0].mxu0
  %7707 = vdwg.mxu0
  %v7708 = vadd.f32 %v7622, %v7705
  %v7709 = vld [vmem:[%s3738] sm:$0xff]
  %v7710 = vld [vmem:[%s3738 + $0x8] sm:$0xff]
  %v7711 = vld [vmem:[%s3738 + $0x10] sm:$0xff]
  %v7712 = vld [vmem:[%s3738 + $0x18] sm:$0xff]
  %v7713 = vld [vmem:[%s3738 + $0x20] sm:$0xff]
  %v7714 = vld [vmem:[%s3738 + $0x28] sm:$0xff]
  %v7715 = vld [vmem:[%s3738 + $0x30] sm:$0xff]
  %v7716 = vld [vmem:[%s3738 + $0x38] sm:$0xff]
  %v7717 = vld [vmem:[%s3738 + $0x40] sm:$0xff]
  %v7718 = vld [vmem:[%s3738 + $0x48] sm:$0xff]
  %v7719 = vld [vmem:[%s3738 + $0x50] sm:$0xff]
  %v7720 = vld [vmem:[%s3738 + $0x58] sm:$0xff]
  %v7721 = vrot.slane %v7528, 2
  %v7722 = vsel %vm1452, %v7721, 0
  %7724 = vmatprep.subr.mxu0 0.0
  %7725 = vmatpush1.msra.mxu0 %v7709
  %7726 = vmatprep.subr.mxu0 0.0
  %7727 = vmatpush1.msra.mxu0 %v7710
  %7728 = vmatprep.subr.mxu0 0.0
  %7729 = vmatpush1.msra.mxu0 %v7711
  %7730 = vmatprep.subr.mxu0 0.0
  %7731 = vmatpush1.msra.mxu0 %v7712
  %7732 = vmatprep.subr.mxu0 0.0
  %7733 = vmatpush1.msra.mxu0 %v7713
  %7734 = vmatprep.subr.mxu0 0.0
  %7735 = vmatpush1.msra.mxu0 %v7714
  %7736 = vmatprep.subr.mxu0 0.0
  %7737 = vmatpush1.msra.mxu0 %v7715
  %7738 = vmatprep.subr.mxu0 0.0
  %7739 = vmatpush1.msra.mxu0 %v7716
  %7740 = vmatprep.subr.mxu0 0.0
  %7741 = vmatpush1.msra.mxu0 %v7717
  %7742 = vmatprep.subr.mxu0 0.0
  %7743 = vmatpush1.msra.mxu0 %v7718
  %7744 = vmatprep.subr.mxu0 0.0
  %7745 = vmatpush1.msra.mxu0 %v7719
  %7746 = vmatprep.subr.mxu0 0.0
  %7747 = vmatpush1.msra.mxu0 %v7720
  %7748 = vmatprep.subr.mxu0 0.0
  %7749 = vmatpush1.msra.mxu0 0.0
  %7750 = vmatprep.subr.mxu0 0.0
  %7751 = vmatpush1.msra.mxu0 0.0
  %7752 = vmatprep.subr.mxu0 0.0
  %7753 = vmatpush1.msra.mxu0 0.0
  %7754 = vmatprep.subr.mxu0 0.0
  %7755 = vmatpush1.msra.mxu0 0.0
  %7756 = vmatprep.subr.mxu0 0.0
  %7757 = vmatpush1.msra.mxu0 0.0
  %7758 = vmatprep.subr.mxu0 0.0
  %7759 = vmatpush1.msra.mxu0 0.0
  %7760 = vmatprep.subr.mxu0 0.0
  %7761 = vmatpush1.msra.mxu0 0.0
  %7762 = vmatprep.subr.mxu0 0.0
  %7763 = vmatpush1.msra.mxu0 0.0
  %7764 = vmatprep.subr.mxu0 0.0
  %7765 = vmatpush1.msra.mxu0 0.0
  %7766 = vmatprep.subr.mxu0 0.0
  %7767 = vmatpush1.msra.mxu0 0.0
  %7768 = vmatprep.subr.mxu0 0.0
  %7769 = vmatpush1.msra.mxu0 0.0
  %7770 = vmatprep.subr.mxu0 0.0
  %7771 = vmatpush1.msra.mxu0 0.0
  %7772 = vmatprep.subr.mxu0 0.0
  %7773 = vmatpush1.msra.mxu0 0.0
  %7774 = vmatprep.subr.mxu0 0.0
  %7775 = vmatpush1.msra.mxu0 0.0
  %7776 = vmatprep.subr.mxu0 0.0
  %7777 = vmatpush1.msra.mxu0 0.0
  %7778 = vmatprep.subr.mxu0 0.0
  %7779 = vmatpush1.msra.mxu0 0.0
  %7780 = vmatprep.subr.mxu0 0.0
  %7781 = vmatpush1.msra.mxu0 0.0
  %7782 = vmatprep.subr.mxu0 0.0
  %7783 = vmatpush1.msra.mxu0 0.0
  %7784 = vmatprep.subr.mxu0 0.0
  %7785 = vmatpush1.msra.mxu0 0.0
  %7786 = vmatprep.subr.mxu0 0.0
  %7787 = vmatpush1.msra.mxu0 0.0
  %7788 = vmatprep.mubr.f32.mxu0 0.0
  %7789 = vmatmul.mubr.f32.gmra.mrb[0].mxu0 %v7722
  %v7790 = vpop.f32.mrb[0].mxu0
  %v7791 = vadd.f32 0.0, %v7790
  %v7792 = vpop.f32.mrb[0].mxu0
  %7793 = vdwg.mxu0
  %v7794 = vadd.f32 %v7708, %v7791
  %v7795 = vld [vmem:[%s3825] sm:$0xff]
  %v7796 = vld [vmem:[%s3825 + $0x8] sm:$0xff]
  %v7797 = vld [vmem:[%s3825 + $0x10] sm:$0xff]
  %v7798 = vld [vmem:[%s3825 + $0x18] sm:$0xff]
  %v7799 = vld [vmem:[%s3825 + $0x20] sm:$0xff]
  %v7800 = vld [vmem:[%s3825 + $0x28] sm:$0xff]
  %v7801 = vld [vmem:[%s3825 + $0x30] sm:$0xff]
  %v7802 = vld [vmem:[%s3825 + $0x38] sm:$0xff]
  %v7803 = vld [vmem:[%s3825 + $0x40] sm:$0xff]
  %v7804 = vld [vmem:[%s3825 + $0x48] sm:$0xff]
  %v7805 = vld [vmem:[%s3825 + $0x50] sm:$0xff]
  %v7806 = vld [vmem:[%s3825 + $0x58] sm:$0xff]
  %v7807 = vrot.slane %v7528, 3
  %v7808 = vsel %vm1452, %v7807, 0
  %7810 = vmatprep.subr.mxu0 0.0
  %7811 = vmatpush1.msra.mxu0 %v7795
  %7812 = vmatprep.subr.mxu0 0.0
  %7813 = vmatpush1.msra.mxu0 %v7796
  %7814 = vmatprep.subr.mxu0 0.0
  %7815 = vmatpush1.msra.mxu0 %v7797
  %7816 = vmatprep.subr.mxu0 0.0
  %7817 = vmatpush1.msra.mxu0 %v7798
  %7818 = vmatprep.subr.mxu0 0.0
  %7819 = vmatpush1.msra.mxu0 %v7799
  %7820 = vmatprep.subr.mxu0 0.0
  %7821 = vmatpush1.msra.mxu0 %v7800
  %7822 = vmatprep.subr.mxu0 0.0
  %7823 = vmatpush1.msra.mxu0 %v7801
  %7824 = vmatprep.subr.mxu0 0.0
  %7825 = vmatpush1.msra.mxu0 %v7802
  %7826 = vmatprep.subr.mxu0 0.0
  %7827 = vmatpush1.msra.mxu0 %v7803
  %7828 = vmatprep.subr.mxu0 0.0
  %7829 = vmatpush1.msra.mxu0 %v7804
  %7830 = vmatprep.subr.mxu0 0.0
  %7831 = vmatpush1.msra.mxu0 %v7805
  %7832 = vmatprep.subr.mxu0 0.0
  %7833 = vmatpush1.msra.mxu0 %v7806
  %7834 = vmatprep.subr.mxu0 0.0
  %7835 = vmatpush1.msra.mxu0 0.0
  %7836 = vmatprep.subr.mxu0 0.0
  %7837 = vmatpush1.msra.mxu0 0.0
  %7838 = vmatprep.subr.mxu0 0.0
  %7839 = vmatpush1.msra.mxu0 0.0
  %7840 = vmatprep.subr.mxu0 0.0
  %7841 = vmatpush1.msra.mxu0 0.0
  %7842 = vmatprep.subr.mxu0 0.0
  %7843 = vmatpush1.msra.mxu0 0.0
  %7844 = vmatprep.subr.mxu0 0.0
  %7845 = vmatpush1.msra.mxu0 0.0
  %7846 = vmatprep.subr.mxu0 0.0
  %7847 = vmatpush1.msra.mxu0 0.0
  %7848 = vmatprep.subr.mxu0 0.0
  %7849 = vmatpush1.msra.mxu0 0.0
  %7850 = vmatprep.subr.mxu0 0.0
  %7851 = vmatpush1.msra.mxu0 0.0
  %7852 = vmatprep.subr.mxu0 0.0
  %7853 = vmatpush1.msra.mxu0 0.0
  %7854 = vmatprep.subr.mxu0 0.0
  %7855 = vmatpush1.msra.mxu0 0.0
  %7856 = vmatprep.subr.mxu0 0.0
  %7857 = vmatpush1.msra.mxu0 0.0
  %7858 = vmatprep.subr.mxu0 0.0
  %7859 = vmatpush1.msra.mxu0 0.0
  %7860 = vmatprep.subr.mxu0 0.0
  %7861 = vmatpush1.msra.mxu0 0.0
  %7862 = vmatprep.subr.mxu0 0.0
  %7863 = vmatpush1.msra.mxu0 0.0
  %7864 = vmatprep.subr.mxu0 0.0
  %7865 = vmatpush1.msra.mxu0 0.0
  %7866 = vmatprep.subr.mxu0 0.0
  %7867 = vmatpush1.msra.mxu0 0.0
  %7868 = vmatprep.subr.mxu0 0.0
  %7869 = vmatpush1.msra.mxu0 0.0
  %7870 = vmatprep.subr.mxu0 0.0
  %7871 = vmatpush1.msra.mxu0 0.0
  %7872 = vmatprep.subr.mxu0 0.0
  %7873 = vmatpush1.msra.mxu0 0.0
  %7874 = vmatprep.mubr.f32.mxu0 0.0
  %7875 = vmatmul.mubr.f32.gmra.mrb[0].mxu0 %v7808
  %v7876 = vpop.f32.mrb[0].mxu0
  %v7877 = vadd.f32 0.0, %v7876
  %v7878 = vpop.f32.mrb[0].mxu0
  %7879 = vdwg.mxu0
  %v7880 = vadd.f32 %v7794, %v7877
  %v7881 = vld [vmem:[%s3912] sm:$0xff]
  %v7882 = vld [vmem:[%s3912 + $0x8] sm:$0xff]
  %v7883 = vld [vmem:[%s3912 + $0x10] sm:$0xff]
  %v7884 = vld [vmem:[%s3912 + $0x18] sm:$0xff]
  %v7885 = vld [vmem:[%s3912 + $0x20] sm:$0xff]
  %v7886 = vld [vmem:[%s3912 + $0x28] sm:$0xff]
  %v7887 = vld [vmem:[%s3912 + $0x30] sm:$0xff]
  %v7888 = vld [vmem:[%s3912 + $0x38] sm:$0xff]
  %v7889 = vld [vmem:[%s3912 + $0x40] sm:$0xff]
  %v7890 = vld [vmem:[%s3912 + $0x48] sm:$0xff]
  %v7891 = vld [vmem:[%s3912 + $0x50] sm:$0xff]
  %v7892 = vld [vmem:[%s3912 + $0x58] sm:$0xff]
  %v7893 = vrot.slane %v7528, 4
  %v7894 = vsel %vm1452, %v7893, 0
  %7896 = vmatprep.subr.mxu0 0.0
  %7897 = vmatpush1.msra.mxu0 %v7881
  %7898 = vmatprep.subr.mxu0 0.0
  %7899 = vmatpush1.msra.mxu0 %v7882
  %7900 = vmatprep.subr.mxu0 0.0
  %7901 = vmatpush1.msra.mxu0 %v7883
  %7902 = vmatprep.subr.mxu0 0.0
  %7903 = vmatpush1.msra.mxu0 %v7884
  %7904 = vmatprep.subr.mxu0 0.0
  %7905 = vmatpush1.msra.mxu0 %v7885
  %7906 = vmatprep.subr.mxu0 0.0
  %7907 = vmatpush1.msra.mxu0 %v7886
  %7908 = vmatprep.subr.mxu0 0.0
  %7909 = vmatpush1.msra.mxu0 %v7887
  %7910 = vmatprep.subr.mxu0 0.0
  %7911 = vmatpush1.msra.mxu0 %v7888
  %7912 = vmatprep.subr.mxu0 0.0
  %7913 = vmatpush1.msra.mxu0 %v7889
  %7914 = vmatprep.subr.mxu0 0.0
  %7915 = vmatpush1.msra.mxu0 %v7890
  %7916 = vmatprep.subr.mxu0 0.0
  %7917 = vmatpush1.msra.mxu0 %v7891
  %7918 = vmatprep.subr.mxu0 0.0
  %7919 = vmatpush1.msra.mxu0 %v7892
  %7920 = vmatprep.subr.mxu0 0.0
  %7921 = vmatpush1.msra.mxu0 0.0
  %7922 = vmatprep.subr.mxu0 0.0
  %7923 = vmatpush1.msra.mxu0 0.0
  %7924 = vmatprep.subr.mxu0 0.0
  %7925 = vmatpush1.msra.mxu0 0.0
  %7926 = vmatprep.subr.mxu0 0.0
  %7927 = vmatpush1.msra.mxu0 0.0
  %7928 = vmatprep.subr.mxu0 0.0
  %7929 = vmatpush1.msra.mxu0 0.0
  %7930 = vmatprep.subr.mxu0 0.0
  %7931 = vmatpush1.msra.mxu0 0.0
  %7932 = vmatprep.subr.mxu0 0.0
  %7933 = vmatpush1.msra.mxu0 0.0
  %7934 = vmatprep.subr.mxu0 0.0
  %7935 = vmatpush1.msra.mxu0 0.0
  %7936 = vmatprep.subr.mxu0 0.0
  %7937 = vmatpush1.msra.mxu0 0.0
  %7938 = vmatprep.subr.mxu0 0.0
  %7939 = vmatpush1.msra.mxu0 0.0
  %7940 = vmatprep.subr.mxu0 0.0
  %7941 = vmatpush1.msra.mxu0 0.0
  %7942 = vmatprep.subr.mxu0 0.0
  %7943 = vmatpush1.msra.mxu0 0.0
  %7944 = vmatprep.subr.mxu0 0.0
  %7945 = vmatpush1.msra.mxu0 0.0
  %7946 = vmatprep.subr.mxu0 0.0
  %7947 = vmatpush1.msra.mxu0 0.0
  %7948 = vmatprep.subr.mxu0 0.0
  %7949 = vmatpush1.msra.mxu0 0.0
  %7950 = vmatprep.subr.mxu0 0.0
  %7951 = vmatpush1.msra.mxu0 0.0
  %7952 = vmatprep.subr.mxu0 0.0
  %7953 = vmatpush1.msra.mxu0 0.0
  %7954 = vmatprep.subr.mxu0 0.0
  %7955 = vmatpush1.msra.mxu0 0.0
  %7956 = vmatprep.subr.mxu0 0.0
  %7957 = vmatpush1.msra.mxu0 0.0
  %7958 = vmatprep.subr.mxu0 0.0
  %7959 = vmatpush1.msra.mxu0 0.0
  %7960 = vmatprep.mubr.f32.mxu0 0.0
  %7961 = vmatmul.mubr.f32.gmra.mrb[0].mxu0 %v7894
  %v7962 = vpop.f32.mrb[0].mxu0
  %v7963 = vadd.f32 0.0, %v7962
  %v7964 = vpop.f32.mrb[0].mxu0
  %7965 = vdwg.mxu0
  %v7966 = vadd.f32 %v7880, %v7963
  %v7967 = vld [vmem:[%s3999] sm:$0xff]
  %v7968 = vld [vmem:[%s3999 + $0x8] sm:$0xff]
  %v7969 = vld [vmem:[%s3999 + $0x10] sm:$0xff]
  %v7970 = vld [vmem:[%s3999 + $0x18] sm:$0xff]
  %v7971 = vld [vmem:[%s3999 + $0x20] sm:$0xff]
  %v7972 = vld [vmem:[%s3999 + $0x28] sm:$0xff]
  %v7973 = vld [vmem:[%s3999 + $0x30] sm:$0xff]
  %v7974 = vld [vmem:[%s3999 + $0x38] sm:$0xff]
  %v7975 = vld [vmem:[%s3999 + $0x40] sm:$0xff]
  %v7976 = vld [vmem:[%s3999 + $0x48] sm:$0xff]
  %v7977 = vld [vmem:[%s3999 + $0x50] sm:$0xff]
  %v7978 = vld [vmem:[%s3999 + $0x58] sm:$0xff]
  %v7979 = vrot.slane %v7528, 5
  %v7980 = vsel %vm1452, %v7979, 0
  %7982 = vmatprep.subr.mxu0 0.0
  %7983 = vmatpush1.msra.mxu0 %v7967
  %7984 = vmatprep.subr.mxu0 0.0
  %7985 = vmatpush1.msra.mxu0 %v7968
  %7986 = vmatprep.subr.mxu0 0.0
  %7987 = vmatpush1.msra.mxu0 %v7969
  %7988 = vmatprep.subr.mxu0 0.0
  %7989 = vmatpush1.msra.mxu0 %v7970
  %7990 = vmatprep.subr.mxu0 0.0
  %7991 = vmatpush1.msra.mxu0 %v7971
  %7992 = vmatprep.subr.mxu0 0.0
  %7993 = vmatpush1.msra.mxu0 %v7972
  %7994 = vmatprep.subr.mxu0 0.0
  %7995 = vmatpush1.msra.mxu0 %v7973
  %7996 = vmatprep.subr.mxu0 0.0
  %7997 = vmatpush1.msra.mxu0 %v7974
  %7998 = vmatprep.subr.mxu0 0.0
  %7999 = vmatpush1.msra.mxu0 %v7975
  %8000 = vmatprep.subr.mxu0 0.0
  %8001 = vmatpush1.msra.mxu0 %v7976
  %8002 = vmatprep.subr.mxu0 0.0
  %8003 = vmatpush1.msra.mxu0 %v7977
  %8004 = vmatprep.subr.mxu0 0.0
  %8005 = vmatpush1.msra.mxu0 %v7978
  %8006 = vmatprep.subr.mxu0 0.0
  %8007 = vmatpush1.msra.mxu0 0.0
  %8008 = vmatprep.subr.mxu0 0.0
  %8009 = vmatpush1.msra.mxu0 0.0
  %8010 = vmatprep.subr.mxu0 0.0
  %8011 = vmatpush1.msra.mxu0 0.0
  %8012 = vmatprep.subr.mxu0 0.0
  %8013 = vmatpush1.msra.mxu0 0.0
  %8014 = vmatprep.subr.mxu0 0.0
  %8015 = vmatpush1.msra.mxu0 0.0
  %8016 = vmatprep.subr.mxu0 0.0
  %8017 = vmatpush1.msra.mxu0 0.0
  %8018 = vmatprep.subr.mxu0 0.0
  %8019 = vmatpush1.msra.mxu0 0.0
  %8020 = vmatprep.subr.mxu0 0.0
  %8021 = vmatpush1.msra.mxu0 0.0
  %8022 = vmatprep.subr.mxu0 0.0
  %8023 = vmatpush1.msra.mxu0 0.0
  %8024 = vmatprep.subr.mxu0 0.0
  %8025 = vmatpush1.msra.mxu0 0.0
  %8026 = vmatprep.subr.mxu0 0.0
  %8027 = vmatpush1.msra.mxu0 0.0
  %8028 = vmatprep.subr.mxu0 0.0
  %8029 = vmatpush1.msra.mxu0 0.0
  %8030 = vmatprep.subr.mxu0 0.0
  %8031 = vmatpush1.msra.mxu0 0.0
  %8032 = vmatprep.subr.mxu0 0.0
  %8033 = vmatpush1.msra.mxu0 0.0
  %8034 = vmatprep.subr.mxu0 0.0
  %8035 = vmatpush1.msra.mxu0 0.0
  %8036 = vmatprep.subr.mxu0 0.0
  %8037 = vmatpush1.msra.mxu0 0.0
  %8038 = vmatprep.subr.mxu0 0.0
  %8039 = vmatpush1.msra.mxu0 0.0
  %8040 = vmatprep.subr.mxu0 0.0
  %8041 = vmatpush1.msra.mxu0 0.0
  %8042 = vmatprep.subr.mxu0 0.0
  %8043 = vmatpush1.msra.mxu0 0.0
  %8044 = vmatprep.subr.mxu0 0.0
  %8045 = vmatpush1.msra.mxu0 0.0
  %8046 = vmatprep.mubr.f32.mxu0 0.0
  %8047 = vmatmul.mubr.f32.gmra.mrb[0].mxu0 %v7980
  %v8048 = vpop.f32.mrb[0].mxu0
  %v8049 = vadd.f32 0.0, %v8048
  %v8050 = vpop.f32.mrb[0].mxu0
  %8051 = vdwg.mxu0
  %v8052 = vadd.f32 %v7966, %v8049
  %v8053 = vld [vmem:[%s4086] sm:$0xff]
  %v8054 = vld [vmem:[%s4086 + $0x8] sm:$0xff]
  %v8055 = vld [vmem:[%s4086 + $0x10] sm:$0xff]
  %v8056 = vld [vmem:[%s4086 + $0x18] sm:$0xff]
  %v8057 = vld [vmem:[%s4086 + $0x20] sm:$0xff]
  %v8058 = vld [vmem:[%s4086 + $0x28] sm:$0xff]
  %v8059 = vld [vmem:[%s4086 + $0x30] sm:$0xff]
  %v8060 = vld [vmem:[%s4086 + $0x38] sm:$0xff]
  %v8061 = vld [vmem:[%s4086 + $0x40] sm:$0xff]
  %v8062 = vld [vmem:[%s4086 + $0x48] sm:$0xff]
  %v8063 = vld [vmem:[%s4086 + $0x50] sm:$0xff]
  %v8064 = vld [vmem:[%s4086 + $0x58] sm:$0xff]
  %v8065 = vrot.slane %v7528, 6
  %v8066 = vsel %vm1452, %v8065, 0
  %8068 = vmatprep.subr.mxu0 0.0
  %8069 = vmatpush1.msra.mxu0 %v8053
  %8070 = vmatprep.subr.mxu0 0.0
  %8071 = vmatpush1.msra.mxu0 %v8054
  %8072 = vmatprep.subr.mxu0 0.0
  %8073 = vmatpush1.msra.mxu0 %v8055
  %8074 = vmatprep.subr.mxu0 0.0
  %8075 = vmatpush1.msra.mxu0 %v8056
  %8076 = vmatprep.subr.mxu0 0.0
  %8077 = vmatpush1.msra.mxu0 %v8057
  %8078 = vmatprep.subr.mxu0 0.0
  %8079 = vmatpush1.msra.mxu0 %v8058
  %8080 = vmatprep.subr.mxu0 0.0
  %8081 = vmatpush1.msra.mxu0 %v8059
  %8082 = vmatprep.subr.mxu0 0.0
  %8083 = vmatpush1.msra.mxu0 %v8060
  %8084 = vmatprep.subr.mxu0 0.0
  %8085 = vmatpush1.msra.mxu0 %v8061
  %8086 = vmatprep.subr.mxu0 0.0
  %8087 = vmatpush1.msra.mxu0 %v8062
  %8088 = vmatprep.subr.mxu0 0.0
  %8089 = vmatpush1.msra.mxu0 %v8063
  %8090 = vmatprep.subr.mxu0 0.0
  %8091 = vmatpush1.msra.mxu0 %v8064
  %8092 = vmatprep.subr.mxu0 0.0
  %8093 = vmatpush1.msra.mxu0 0.0
  %8094 = vmatprep.subr.mxu0 0.0
  %8095 = vmatpush1.msra.mxu0 0.0
  %8096 = vmatprep.subr.mxu0 0.0
  %8097 = vmatpush1.msra.mxu0 0.0
  %8098 = vmatprep.subr.mxu0 0.0
  %8099 = vmatpush1.msra.mxu0 0.0
  %8100 = vmatprep.subr.mxu0 0.0
  %8101 = vmatpush1.msra.mxu0 0.0
  %8102 = vmatprep.subr.mxu0 0.0
  %8103 = vmatpush1.msra.mxu0 0.0
  %8104 = vmatprep.subr.mxu0 0.0
  %8105 = vmatpush1.msra.mxu0 0.0
  %8106 = vmatprep.subr.mxu0 0.0
  %8107 = vmatpush1.msra.mxu0 0.0
  %8108 = vmatprep.subr.mxu0 0.0
  %8109 = vmatpush1.msra.mxu0 0.0
  %8110 = vmatprep.subr.mxu0 0.0
  %8111 = vmatpush1.msra.mxu0 0.0
  %8112 = vmatprep.subr.mxu0 0.0
  %8113 = vmatpush1.msra.mxu0 0.0
  %8114 = vmatprep.subr.mxu0 0.0
  %8115 = vmatpush1.msra.mxu0 0.0
  %8116 = vmatprep.subr.mxu0 0.0
  %8117 = vmatpush1.msra.mxu0 0.0
  %8118 = vmatprep.subr.mxu0 0.0
  %8119 = vmatpush1.msra.mxu0 0.0
  %8120 = vmatprep.subr.mxu0 0.0
  %8121 = vmatpush1.msra.mxu0 0.0
  %8122 = vmatprep.subr.mxu0 0.0
  %8123 = vmatpush1.msra.mxu0 0.0
  %8124 = vmatprep.subr.mxu0 0.0
  %8125 = vmatpush1.msra.mxu0 0.0
  %8126 = vmatprep.subr.mxu0 0.0
  %8127 = vmatpush1.msra.mxu0 0.0
  %8128 = vmatprep.subr.mxu0 0.0
  %8129 = vmatpush1.msra.mxu0 0.0
  %8130 = vmatprep.subr.mxu0 0.0
  %8131 = vmatpush1.msra.mxu0 0.0
  %8132 = vmatprep.mubr.f32.mxu0 0.0
  %8133 = vmatmul.mubr.f32.gmra.mrb[0].mxu0 %v8066
  %v8134 = vpop.f32.mrb[0].mxu0
  %v8135 = vadd.f32 0.0, %v8134
  %v8136 = vpop.f32.mrb[0].mxu0
  %8137 = vdwg.mxu0
  %v8138 = vadd.f32 %v8052, %v8135
  %v8139 = vld [vmem:[%s4173] sm:$0xff]
  %v8140 = vld [vmem:[%s4173 + $0x8] sm:$0xff]
  %v8141 = vld [vmem:[%s4173 + $0x10] sm:$0xff]
  %v8142 = vld [vmem:[%s4173 + $0x18] sm:$0xff]
  %v8143 = vld [vmem:[%s4173 + $0x20] sm:$0xff]
  %v8144 = vld [vmem:[%s4173 + $0x28] sm:$0xff]
  %v8145 = vld [vmem:[%s4173 + $0x30] sm:$0xff]
  %v8146 = vld [vmem:[%s4173 + $0x38] sm:$0xff]
  %v8147 = vld [vmem:[%s4173 + $0x40] sm:$0xff]
  %v8148 = vld [vmem:[%s4173 + $0x48] sm:$0xff]
  %v8149 = vld [vmem:[%s4173 + $0x50] sm:$0xff]
  %v8150 = vld [vmem:[%s4173 + $0x58] sm:$0xff]
  %v8151 = vrot.slane %v7528, 7
  %v8152 = vsel %vm1452, %v8151, 0
  %8154 = vmatprep.subr.mxu0 0.0
  %8155 = vmatpush1.msra.mxu0 %v8139
  %8156 = vmatprep.subr.mxu0 0.0
  %8157 = vmatpush1.msra.mxu0 %v8140
  %8158 = vmatprep.subr.mxu0 0.0
  %8159 = vmatpush1.msra.mxu0 %v8141
  %8160 = vmatprep.subr.mxu0 0.0
  %8161 = vmatpush1.msra.mxu0 %v8142
  %8162 = vmatprep.subr.mxu0 0.0
  %8163 = vmatpush1.msra.mxu0 %v8143
  %8164 = vmatprep.subr.mxu0 0.0
  %8165 = vmatpush1.msra.mxu0 %v8144
  %8166 = vmatprep.subr.mxu0 0.0
  %8167 = vmatpush1.msra.mxu0 %v8145
  %8168 = vmatprep.subr.mxu0 0.0
  %8169 = vmatpush1.msra.mxu0 %v8146
  %8170 = vmatprep.subr.mxu0 0.0
  %8171 = vmatpush1.msra.mxu0 %v8147
  %8172 = vmatprep.subr.mxu0 0.0
  %8173 = vmatpush1.msra.mxu0 %v8148
  %8174 = vmatprep.subr.mxu0 0.0
  %8175 = vmatpush1.msra.mxu0 %v8149
  %8176 = vmatprep.subr.mxu0 0.0
  %8177 = vmatpush1.msra.mxu0 %v8150
  %8178 = vmatprep.subr.mxu0 0.0
  %8179 = vmatpush1.msra.mxu0 0.0
  %8180 = vmatprep.subr.mxu0 0.0
  %8181 = vmatpush1.msra.mxu0 0.0
  %8182 = vmatprep.subr.mxu0 0.0
  %8183 = vmatpush1.msra.mxu0 0.0
  %8184 = vmatprep.subr.mxu0 0.0
  %8185 = vmatpush1.msra.mxu0 0.0
  %8186 = vmatprep.subr.mxu0 0.0
  %8187 = vmatpush1.msra.mxu0 0.0
  %8188 = vmatprep.subr.mxu0 0.0
  %8189 = vmatpush1.msra.mxu0 0.0
  %8190 = vmatprep.subr.mxu0 0.0
  %8191 = vmatpush1.msra.mxu0 0.0
  %8192 = vmatprep.subr.mxu0 0.0
  %8193 = vmatpush1.msra.mxu0 0.0
  %8194 = vmatprep.subr.mxu0 0.0
  %8195 = vmatpush1.msra.mxu0 0.0
  %8196 = vmatprep.subr.mxu0 0.0
  %8197 = vmatpush1.msra.mxu0 0.0
  %8198 = vmatprep.subr.mxu0 0.0
  %8199 = vmatpush1.msra.mxu0 0.0
  %8200 = vmatprep.subr.mxu0 0.0
  %8201 = vmatpush1.msra.mxu0 0.0
  %8202 = vmatprep.subr.mxu0 0.0
  %8203 = vmatpush1.msra.mxu0 0.0
  %8204 = vmatprep.subr.mxu0 0.0
  %8205 = vmatpush1.msra.mxu0 0.0
  %8206 = vmatprep.subr.mxu0 0.0
  %8207 = vmatpush1.msra.mxu0 0.0
  %8208 = vmatprep.subr.mxu0 0.0
  %8209 = vmatpush1.msra.mxu0 0.0
  %8210 = vmatprep.subr.mxu0 0.0
  %8211 = vmatpush1.msra.mxu0 0.0
  %8212 = vmatprep.subr.mxu0 0.0
  %8213 = vmatpush1.msra.mxu0 0.0
  %8214 = vmatprep.subr.mxu0 0.0
  %8215 = vmatpush1.msra.mxu0 0.0
  %8216 = vmatprep.subr.mxu0 0.0
  %8217 = vmatpush1.msra.mxu0 0.0
  %8218 = vmatprep.mubr.f32.mxu0 0.0
  %8219 = vmatmul.mubr.f32.gmra.mrb[0].mxu0 %v8152
  %v8220 = vpop.f32.mrb[0].mxu0
  %v8221 = vadd.f32 0.0, %v8220
  %v8222 = vpop.f32.mrb[0].mxu0
  %8223 = vdwg.mxu0
  %v8224 = vadd.f32 %v8138, %v8221
  %v8225 = vld [vmem:[%s4260] sm:$0xff]
  %v8226 = vld [vmem:[%s4260 + $0x8] sm:$0xff]
  %v8227 = vld [vmem:[%s4260 + $0x10] sm:$0xff]
  %v8228 = vld [vmem:[%s4260 + $0x18] sm:$0xff]
  %v8229 = vld [vmem:[%s4260 + $0x20] sm:$0xff]
  %v8230 = vld [vmem:[%s4260 + $0x28] sm:$0xff]
  %v8231 = vld [vmem:[%s4260 + $0x30] sm:$0xff]
  %v8232 = vld [vmem:[%s4260 + $0x38] sm:$0xff]
  %v8233 = vld [vmem:[%s4260 + $0x40] sm:$0xff]
  %v8234 = vld [vmem:[%s4260 + $0x48] sm:$0xff]
  %v8235 = vld [vmem:[%s4260 + $0x50] sm:$0xff]
  %v8236 = vld [vmem:[%s4260 + $0x58] sm:$0xff]
  %v8238 = vsel %vm1452, %v7533, 0
  %8240 = vmatprep.subr.mxu0 0.0
  %8241 = vmatpush1.msra.mxu0 %v8225
  %8242 = vmatprep.subr.mxu0 0.0
  %8243 = vmatpush1.msra.mxu0 %v8226
  %8244 = vmatprep.subr.mxu0 0.0
  %8245 = vmatpush1.msra.mxu0 %v8227
  %8246 = vmatprep.subr.mxu0 0.0
  %8247 = vmatpush1.msra.mxu0 %v8228
  %8248 = vmatprep.subr.mxu0 0.0
  %8249 = vmatpush1.msra.mxu0 %v8229
  %8250 = vmatprep.subr.mxu0 0.0
  %8251 = vmatpush1.msra.mxu0 %v8230
  %8252 = vmatprep.subr.mxu0 0.0
  %8253 = vmatpush1.msra.mxu0 %v8231
  %8254 = vmatprep.subr.mxu0 0.0
  %8255 = vmatpush1.msra.mxu0 %v8232
  %8256 = vmatprep.subr.mxu0 0.0
  %8257 = vmatpush1.msra.mxu0 %v8233
  %8258 = vmatprep.subr.mxu0 0.0
  %8259 = vmatpush1.msra.mxu0 %v8234
  %8260 = vmatprep.subr.mxu0 0.0
  %8261 = vmatpush1.msra.mxu0 %v8235
  %8262 = vmatprep.subr.mxu0 0.0
  %8263 = vmatpush1.msra.mxu0 %v8236
  %8264 = vmatprep.subr.mxu0 0.0
  %8265 = vmatpush1.msra.mxu0 0.0
  %8266 = vmatprep.subr.mxu0 0.0
  %8267 = vmatpush1.msra.mxu0 0.0
  %8268 = vmatprep.subr.mxu0 0.0
  %8269 = vmatpush1.msra.mxu0 0.0
  %8270 = vmatprep.subr.mxu0 0.0
  %8271 = vmatpush1.msra.mxu0 0.0
  %8272 = vmatprep.subr.mxu0 0.0
  %8273 = vmatpush1.msra.mxu0 0.0
  %8274 = vmatprep.subr.mxu0 0.0
  %8275 = vmatpush1.msra.mxu0 0.0
  %8276 = vmatprep.subr.mxu0 0.0
  %8277 = vmatpush1.msra.mxu0 0.0
  %8278 = vmatprep.subr.mxu0 0.0
  %8279 = vmatpush1.msra.mxu0 0.0
  %8280 = vmatprep.subr.mxu0 0.0
  %8281 = vmatpush1.msra.mxu0 0.0
  %8282 = vmatprep.subr.mxu0 0.0
  %8283 = vmatpush1.msra.mxu0 0.0
  %8284 = vmatprep.subr.mxu0 0.0
  %8285 = vmatpush1.msra.mxu0 0.0
  %8286 = vmatprep.subr.mxu0 0.0
  %8287 = vmatpush1.msra.mxu0 0.0
  %8288 = vmatprep.subr.mxu0 0.0
  %8289 = vmatpush1.msra.mxu0 0.0
  %8290 = vmatprep.subr.mxu0 0.0
  %8291 = vmatpush1.msra.mxu0 0.0
  %8292 = vmatprep.subr.mxu0 0.0
  %8293 = vmatpush1.msra.mxu0 0.0
  %8294 = vmatprep.subr.mxu0 0.0
  %8295 = vmatpush1.msra.mxu0 0.0
  %8296 = vmatprep.subr.mxu0 0.0
  %8297 = vmatpush1.msra.mxu0 0.0
  %8298 = vmatprep.subr.mxu0 0.0
  %8299 = vmatpush1.msra.mxu0 0.0
  %8300 = vmatprep.subr.mxu0 0.0
  %8301 = vmatpush1.msra.mxu0 0.0
  %8302 = vmatprep.subr.mxu0 0.0
  %8303 = vmatpush1.msra.mxu0 0.0
  %8304 = vmatprep.mubr.f32.mxu0 0.0
  %8305 = vmatmul.mubr.f32.gmra.mrb[0].mxu0 %v8238
  %v8306 = vpop.f32.mrb[0].mxu0
  %v8307 = vadd.f32 0.0, %v8306
  %v8308 = vpop.f32.mrb[0].mxu0
  %8309 = vdwg.mxu0
  %v8310 = vadd.f32 %v8224, %v8307
  %v8311 = vld [vmem:[%s4347] sm:$0xff]
  %v8312 = vld [vmem:[%s4347 + $0x8] sm:$0xff]
  %v8313 = vld [vmem:[%s4347 + $0x10] sm:$0xff]
  %v8314 = vld [vmem:[%s4347 + $0x18] sm:$0xff]
  %v8315 = vld [vmem:[%s4347 + $0x20] sm:$0xff]
  %v8316 = vld [vmem:[%s4347 + $0x28] sm:$0xff]
  %v8317 = vld [vmem:[%s4347 + $0x30] sm:$0xff]
  %v8318 = vld [vmem:[%s4347 + $0x38] sm:$0xff]
  %v8319 = vld [vmem:[%s4347 + $0x40] sm:$0xff]
  %v8320 = vld [vmem:[%s4347 + $0x48] sm:$0xff]
  %v8321 = vld [vmem:[%s4347 + $0x50] sm:$0xff]
  %v8322 = vld [vmem:[%s4347 + $0x58] sm:$0xff]
  %v8323 = vrot.slane %v7533, 1
  %v8324 = vsel %vm1452, %v8323, 0
  %8326 = vmatprep.subr.mxu0 0.0
  %8327 = vmatpush1.msra.mxu0 %v8311
  %8328 = vmatprep.subr.mxu0 0.0
  %8329 = vmatpush1.msra.mxu0 %v8312
  %8330 = vmatprep.subr.mxu0 0.0
  %8331 = vmatpush1.msra.mxu0 %v8313
  %8332 = vmatprep.subr.mxu0 0.0
  %8333 = vmatpush1.msra.mxu0 %v8314
  %8334 = vmatprep.subr.mxu0 0.0
  %8335 = vmatpush1.msra.mxu0 %v8315
  %8336 = vmatprep.subr.mxu0 0.0
  %8337 = vmatpush1.msra.mxu0 %v8316
  %8338 = vmatprep.subr.mxu0 0.0
  %8339 = vmatpush1.msra.mxu0 %v8317
  %8340 = vmatprep.subr.mxu0 0.0
  %8341 = vmatpush1.msra.mxu0 %v8318
  %8342 = vmatprep.subr.mxu0 0.0
  %8343 = vmatpush1.msra.mxu0 %v8319
  %8344 = vmatprep.subr.mxu0 0.0
  %8345 = vmatpush1.msra.mxu0 %v8320
  %8346 = vmatprep.subr.mxu0 0.0
  %8347 = vmatpush1.msra.mxu0 %v8321
  %8348 = vmatprep.subr.mxu0 0.0
  %8349 = vmatpush1.msra.mxu0 %v8322
  %8350 = vmatprep.subr.mxu0 0.0
  %8351 = vmatpush1.msra.mxu0 0.0
  %8352 = vmatprep.subr.mxu0 0.0
  %8353 = vmatpush1.msra.mxu0 0.0
  %8354 = vmatprep.subr.mxu0 0.0
  %8355 = vmatpush1.msra.mxu0 0.0
  %8356 = vmatprep.subr.mxu0 0.0
  %8357 = vmatpush1.msra.mxu0 0.0
  %8358 = vmatprep.subr.mxu0 0.0
  %8359 = vmatpush1.msra.mxu0 0.0
  %8360 = vmatprep.subr.mxu0 0.0
  %8361 = vmatpush1.msra.mxu0 0.0
  %8362 = vmatprep.subr.mxu0 0.0
  %8363 = vmatpush1.msra.mxu0 0.0
  %8364 = vmatprep.subr.mxu0 0.0
  %8365 = vmatpush1.msra.mxu0 0.0
  %8366 = vmatprep.subr.mxu0 0.0
  %8367 = vmatpush1.msra.mxu0 0.0
  %8368 = vmatprep.subr.mxu0 0.0
  %8369 = vmatpush1.msra.mxu0 0.0
  %8370 = vmatprep.subr.mxu0 0.0
  %8371 = vmatpush1.msra.mxu0 0.0
  %8372 = vmatprep.subr.mxu0 0.0
  %8373 = vmatpush1.msra.mxu0 0.0
  %8374 = vmatprep.subr.mxu0 0.0
  %8375 = vmatpush1.msra.mxu0 0.0
  %8376 = vmatprep.subr.mxu0 0.0
  %8377 = vmatpush1.msra.mxu0 0.0
  %8378 = vmatprep.subr.mxu0 0.0
  %8379 = vmatpush1.msra.mxu0 0.0
  %8380 = vmatprep.subr.mxu0 0.0
  %8381 = vmatpush1.msra.mxu0 0.0
  %8382 = vmatprep.subr.mxu0 0.0
  %8383 = vmatpush1.msra.mxu0 0.0
  %8384 = vmatprep.subr.mxu0 0.0
  %8385 = vmatpush1.msra.mxu0 0.0
  %8386 = vmatprep.subr.mxu0 0.0
  %8387 = vmatpush1.msra.mxu0 0.0
  %8388 = vmatprep.subr.mxu0 0.0
  %8389 = vmatpush1.msra.mxu0 0.0
  %8390 = vmatprep.mubr.f32.mxu0 0.0
  %8391 = vmatmul.mubr.f32.gmra.mrb[0].mxu0 %v8324
  %v8392 = vpop.f32.mrb[0].mxu0
  %v8393 = vadd.f32 0.0, %v8392
  %v8394 = vpop.f32.mrb[0].mxu0
  %8395 = vdwg.mxu0
  %v8396 = vadd.f32 %v8310, %v8393
  %v8397 = vld [vmem:[%s4434] sm:$0xff]
  %v8398 = vld [vmem:[%s4434 + $0x8] sm:$0xff]
  %v8399 = vld [vmem:[%s4434 + $0x10] sm:$0xff]
  %v8400 = vld [vmem:[%s4434 + $0x18] sm:$0xff]
  %v8401 = vld [vmem:[%s4434 + $0x20] sm:$0xff]
  %v8402 = vld [vmem:[%s4434 + $0x28] sm:$0xff]
  %v8403 = vld [vmem:[%s4434 + $0x30] sm:$0xff]
  %v8404 = vld [vmem:[%s4434 + $0x38] sm:$0xff]
  %v8405 = vld [vmem:[%s4434 + $0x40] sm:$0xff]
  %v8406 = vld [vmem:[%s4434 + $0x48] sm:$0xff]
  %v8407 = vld [vmem:[%s4434 + $0x50] sm:$0xff]
  %v8408 = vld [vmem:[%s4434 + $0x58] sm:$0xff]
  %v8409 = vrot.slane %v7533, 2
  %v8410 = vsel %vm1452, %v8409, 0
  %8412 = vmatprep.subr.mxu0 0.0
  %8413 = vmatpush1.msra.mxu0 %v8397
  %8414 = vmatprep.subr.mxu0 0.0
  %8415 = vmatpush1.msra.mxu0 %v8398
  %8416 = vmatprep.subr.mxu0 0.0
  %8417 = vmatpush1.msra.mxu0 %v8399
  %8418 = vmatprep.subr.mxu0 0.0
  %8419 = vmatpush1.msra.mxu0 %v8400
  %8420 = vmatprep.subr.mxu0 0.0
  %8421 = vmatpush1.msra.mxu0 %v8401
  %8422 = vmatprep.subr.mxu0 0.0
  %8423 = vmatpush1.msra.mxu0 %v8402
  %8424 = vmatprep.subr.mxu0 0.0
  %8425 = vmatpush1.msra.mxu0 %v8403
  %8426 = vmatprep.subr.mxu0 0.0
  %8427 = vmatpush1.msra.mxu0 %v8404
  %8428 = vmatprep.subr.mxu0 0.0
  %8429 = vmatpush1.msra.mxu0 %v8405
  %8430 = vmatprep.subr.mxu0 0.0
  %8431 = vmatpush1.msra.mxu0 %v8406
  %8432 = vmatprep.subr.mxu0 0.0
  %8433 = vmatpush1.msra.mxu0 %v8407
  %8434 = vmatprep.subr.mxu0 0.0
  %8435 = vmatpush1.msra.mxu0 %v8408
  %8436 = vmatprep.subr.mxu0 0.0
  %8437 = vmatpush1.msra.mxu0 0.0
  %8438 = vmatprep.subr.mxu0 0.0
  %8439 = vmatpush1.msra.mxu0 0.0
  %8440 = vmatprep.subr.mxu0 0.0
  %8441 = vmatpush1.msra.mxu0 0.0
  %8442 = vmatprep.subr.mxu0 0.0
  %8443 = vmatpush1.msra.mxu0 0.0
  %8444 = vmatprep.subr.mxu0 0.0
  %8445 = vmatpush1.msra.mxu0 0.0
  %8446 = vmatprep.subr.mxu0 0.0
  %8447 = vmatpush1.msra.mxu0 0.0
  %8448 = vmatprep.subr.mxu0 0.0
  %8449 = vmatpush1.msra.mxu0 0.0
  %8450 = vmatprep.subr.mxu0 0.0
  %8451 = vmatpush1.msra.mxu0 0.0
  %8452 = vmatprep.subr.mxu0 0.0
  %8453 = vmatpush1.msra.mxu0 0.0
  %8454 = vmatprep.subr.mxu0 0.0
  %8455 = vmatpush1.msra.mxu0 0.0
  %8456 = vmatprep.subr.mxu0 0.0
  %8457 = vmatpush1.msra.mxu0 0.0
  %8458 = vmatprep.subr.mxu0 0.0
  %8459 = vmatpush1.msra.mxu0 0.0
  %8460 = vmatprep.subr.mxu0 0.0
  %8461 = vmatpush1.msra.mxu0 0.0
  %8462 = vmatprep.subr.mxu0 0.0
  %8463 = vmatpush1.msra.mxu0 0.0
  %8464 = vmatprep.subr.mxu0 0.0
  %8465 = vmatpush1.msra.mxu0 0.0
  %8466 = vmatprep.subr.mxu0 0.0
  %8467 = vmatpush1.msra.mxu0 0.0
  %8468 = vmatprep.subr.mxu0 0.0
  %8469 = vmatpush1.msra.mxu0 0.0
  %8470 = vmatprep.subr.mxu0 0.0
  %8471 = vmatpush1.msra.mxu0 0.0
  %8472 = vmatprep.subr.mxu0 0.0
  %8473 = vmatpush1.msra.mxu0 0.0
  %8474 = vmatprep.subr.mxu0 0.0
  %8475 = vmatpush1.msra.mxu0 0.0
  %8476 = vmatprep.mubr.f32.mxu0 0.0
  %8477 = vmatmul.mubr.f32.gmra.mrb[0].mxu0 %v8410
  %v8478 = vpop.f32.mrb[0].mxu0
  %v8479 = vadd.f32 0.0, %v8478
  %v8480 = vpop.f32.mrb[0].mxu0
  %8481 = vdwg.mxu0
  %v8482 = vadd.f32 %v8396, %v8479
  %v8483 = vld [vmem:[%s4521] sm:$0xff]
  %v8484 = vld [vmem:[%s4521 + $0x8] sm:$0xff]
  %v8485 = vld [vmem:[%s4521 + $0x10] sm:$0xff]
  %v8486 = vld [vmem:[%s4521 + $0x18] sm:$0xff]
  %v8487 = vld [vmem:[%s4521 + $0x20] sm:$0xff]
  %v8488 = vld [vmem:[%s4521 + $0x28] sm:$0xff]
  %v8489 = vld [vmem:[%s4521 + $0x30] sm:$0xff]
  %v8490 = vld [vmem:[%s4521 + $0x38] sm:$0xff]
  %v8491 = vld [vmem:[%s4521 + $0x40] sm:$0xff]
  %v8492 = vld [vmem:[%s4521 + $0x48] sm:$0xff]
  %v8493 = vld [vmem:[%s4521 + $0x50] sm:$0xff]
  %v8494 = vld [vmem:[%s4521 + $0x58] sm:$0xff]
  %v8495 = vrot.slane %v7533, 3
  %v8496 = vsel %vm1452, %v8495, 0
  %8498 = vmatprep.subr.mxu0 0.0
  %8499 = vmatpush1.msra.mxu0 %v8483
  %8500 = vmatprep.subr.mxu0 0.0
  %8501 = vmatpush1.msra.mxu0 %v8484
  %8502 = vmatprep.subr.mxu0 0.0
  %8503 = vmatpush1.msra.mxu0 %v8485
  %8504 = vmatprep.subr.mxu0 0.0
  %8505 = vmatpush1.msra.mxu0 %v8486
  %8506 = vmatprep.subr.mxu0 0.0
  %8507 = vmatpush1.msra.mxu0 %v8487
  %8508 = vmatprep.subr.mxu0 0.0
  %8509 = vmatpush1.msra.mxu0 %v8488
  %8510 = vmatprep.subr.mxu0 0.0
  %8511 = vmatpush1.msra.mxu0 %v8489
  %8512 = vmatprep.subr.mxu0 0.0
  %8513 = vmatpush1.msra.mxu0 %v8490
  %8514 = vmatprep.subr.mxu0 0.0
  %8515 = vmatpush1.msra.mxu0 %v8491
  %8516 = vmatprep.subr.mxu0 0.0
  %8517 = vmatpush1.msra.mxu0 %v8492
  %8518 = vmatprep.subr.mxu0 0.0
  %8519 = vmatpush1.msra.mxu0 %v8493
  %8520 = vmatprep.subr.mxu0 0.0
  %8521 = vmatpush1.msra.mxu0 %v8494
  %8522 = vmatprep.subr.mxu0 0.0
  %8523 = vmatpush1.msra.mxu0 0.0
  %8524 = vmatprep.subr.mxu0 0.0
  %8525 = vmatpush1.msra.mxu0 0.0
  %8526 = vmatprep.subr.mxu0 0.0
  %8527 = vmatpush1.msra.mxu0 0.0
  %8528 = vmatprep.subr.mxu0 0.0
  %8529 = vmatpush1.msra.mxu0 0.0
  %8530 = vmatprep.subr.mxu0 0.0
  %8531 = vmatpush1.msra.mxu0 0.0
  %8532 = vmatprep.subr.mxu0 0.0
  %8533 = vmatpush1.msra.mxu0 0.0
  %8534 = vmatprep.subr.mxu0 0.0
  %8535 = vmatpush1.msra.mxu0 0.0
  %8536 = vmatprep.subr.mxu0 0.0
  %8537 = vmatpush1.msra.mxu0 0.0
  %8538 = vmatprep.subr.mxu0 0.0
  %8539 = vmatpush1.msra.mxu0 0.0
  %8540 = vmatprep.subr.mxu0 0.0
  %8541 = vmatpush1.msra.mxu0 0.0
  %8542 = vmatprep.subr.mxu0 0.0
  %8543 = vmatpush1.msra.mxu0 0.0
  %8544 = vmatprep.subr.mxu0 0.0
  %8545 = vmatpush1.msra.mxu0 0.0
  %8546 = vmatprep.subr.mxu0 0.0
  %8547 = vmatpush1.msra.mxu0 0.0
  %8548 = vmatprep.subr.mxu0 0.0
  %8549 = vmatpush1.msra.mxu0 0.0
  %8550 = vmatprep.subr.mxu0 0.0
  %8551 = vmatpush1.msra.mxu0 0.0
  %8552 = vmatprep.subr.mxu0 0.0
  %8553 = vmatpush1.msra.mxu0 0.0
  %8554 = vmatprep.subr.mxu0 0.0
  %8555 = vmatpush1.msra.mxu0 0.0
  %8556 = vmatprep.subr.mxu0 0.0
  %8557 = vmatpush1.msra.mxu0 0.0
  %8558 = vmatprep.subr.mxu0 0.0
  %8559 = vmatpush1.msra.mxu0 0.0
  %8560 = vmatprep.subr.mxu0 0.0
  %8561 = vmatpush1.msra.mxu0 0.0
  %8562 = vmatprep.mubr.f32.mxu0 0.0
  %8563 = vmatmul.mubr.f32.gmra.mrb[0].mxu0 %v8496
  %v8564 = vpop.f32.mrb[0].mxu0
  %v8565 = vadd.f32 0.0, %v8564
  %v8566 = vpop.f32.mrb[0].mxu0
  %8567 = vdwg.mxu0
  %v8568 = vadd.f32 %v8482, %v8565
  %v8569 = vld [vmem:[%s4608] sm:$0xff]
  %v8570 = vld [vmem:[%s4608 + $0x8] sm:$0xff]
  %v8571 = vld [vmem:[%s4608 + $0x10] sm:$0xff]
  %v8572 = vld [vmem:[%s4608 + $0x18] sm:$0xff]
  %v8573 = vld [vmem:[%s4608 + $0x20] sm:$0xff]
  %v8574 = vld [vmem:[%s4608 + $0x28] sm:$0xff]
  %v8575 = vld [vmem:[%s4608 + $0x30] sm:$0xff]
  %v8576 = vld [vmem:[%s4608 + $0x38] sm:$0xff]
  %v8577 = vld [vmem:[%s4608 + $0x40] sm:$0xff]
  %v8578 = vld [vmem:[%s4608 + $0x48] sm:$0xff]
  %v8579 = vld [vmem:[%s4608 + $0x50] sm:$0xff]
  %v8580 = vld [vmem:[%s4608 + $0x58] sm:$0xff]
  %v8581 = vrot.slane %v7533, 4
  %v8582 = vsel %vm1452, %v8581, 0
  %8584 = vmatprep.subr.mxu0 0.0
  %8585 = vmatpush1.msra.mxu0 %v8569
  %8586 = vmatprep.subr.mxu0 0.0
  %8587 = vmatpush1.msra.mxu0 %v8570
  %8588 = vmatprep.subr.mxu0 0.0
  %8589 = vmatpush1.msra.mxu0 %v8571
  %8590 = vmatprep.subr.mxu0 0.0
  %8591 = vmatpush1.msra.mxu0 %v8572
  %8592 = vmatprep.subr.mxu0 0.0
  %8593 = vmatpush1.msra.mxu0 %v8573
  %8594 = vmatprep.subr.mxu0 0.0
  %8595 = vmatpush1.msra.mxu0 %v8574
  %8596 = vmatprep.subr.mxu0 0.0
  %8597 = vmatpush1.msra.mxu0 %v8575
  %8598 = vmatprep.subr.mxu0 0.0
  %8599 = vmatpush1.msra.mxu0 %v8576
  %8600 = vmatprep.subr.mxu0 0.0
  %8601 = vmatpush1.msra.mxu0 %v8577
  %8602 = vmatprep.subr.mxu0 0.0
  %8603 = vmatpush1.msra.mxu0 %v8578
  %8604 = vmatprep.subr.mxu0 0.0
  %8605 = vmatpush1.msra.mxu0 %v8579
  %8606 = vmatprep.subr.mxu0 0.0
  %8607 = vmatpush1.msra.mxu0 %v8580
  %8608 = vmatprep.subr.mxu0 0.0
  %8609 = vmatpush1.msra.mxu0 0.0
  %8610 = vmatprep.subr.mxu0 0.0
  %8611 = vmatpush1.msra.mxu0 0.0
  %8612 = vmatprep.subr.mxu0 0.0
  %8613 = vmatpush1.msra.mxu0 0.0
  %8614 = vmatprep.subr.mxu0 0.0
  %8615 = vmatpush1.msra.mxu0 0.0
  %8616 = vmatprep.subr.mxu0 0.0
  %8617 = vmatpush1.msra.mxu0 0.0
  %8618 = vmatprep.subr.mxu0 0.0
  %8619 = vmatpush1.msra.mxu0 0.0
  %8620 = vmatprep.subr.mxu0 0.0
  %8621 = vmatpush1.msra.mxu0 0.0
  %8622 = vmatprep.subr.mxu0 0.0
  %8623 = vmatpush1.msra.mxu0 0.0
  %8624 = vmatprep.subr.mxu0 0.0
  %8625 = vmatpush1.msra.mxu0 0.0
  %8626 = vmatprep.subr.mxu0 0.0
  %8627 = vmatpush1.msra.mxu0 0.0
  %8628 = vmatprep.subr.mxu0 0.0
  %8629 = vmatpush1.msra.mxu0 0.0
  %8630 = vmatprep.subr.mxu0 0.0
  %8631 = vmatpush1.msra.mxu0 0.0
  %8632 = vmatprep.subr.mxu0 0.0
  %8633 = vmatpush1.msra.mxu0 0.0
  %8634 = vmatprep.subr.mxu0 0.0
  %8635 = vmatpush1.msra.mxu0 0.0
  %8636 = vmatprep.subr.mxu0 0.0
  %8637 = vmatpush1.msra.mxu0 0.0
  %8638 = vmatprep.subr.mxu0 0.0
  %8639 = vmatpush1.msra.mxu0 0.0
  %8640 = vmatprep.subr.mxu0 0.0
  %8641 = vmatpush1.msra.mxu0 0.0
  %8642 = vmatprep.subr.mxu0 0.0
  %8643 = vmatpush1.msra.mxu0 0.0
  %8644 = vmatprep.subr.mxu0 0.0
  %8645 = vmatpush1.msra.mxu0 0.0
  %8646 = vmatprep.subr.mxu0 0.0
  %8647 = vmatpush1.msra.mxu0 0.0
  %8648 = vmatprep.mubr.f32.mxu0 0.0
  %8649 = vmatmul.mubr.f32.gmra.mrb[0].mxu0 %v8582
  %v8650 = vpop.f32.mrb[0].mxu0
  %v8651 = vadd.f32 0.0, %v8650
  %v8652 = vpop.f32.mrb[0].mxu0
  %8653 = vdwg.mxu0
  %v8654 = vadd.f32 %v8568, %v8651
  %v8655 = vmax.f32 %v8654, 0.0
  %v8656 = vld [vmem:[%s18] sm:$0xff]
  %v8657 = vld [vmem:[%s18 + $0x8] sm:$0xff]
  %v8658 = vld [vmem:[%s18 + $0x10] sm:$0xff]
  %v8659 = vld [vmem:[%s18 + $0x18] sm:$0xff]
  %v8660 = vld [vmem:[%s18 + $0x20] sm:$0xff]
  %v8661 = vld [vmem:[%s18 + $0x28] sm:$0xff]
  %v8662 = vld [vmem:[%s18 + $0x30] sm:$0xff]
  %v8663 = vld [vmem:[%s18 + $0x38] sm:$0xff]
  %v8664 = vld [vmem:[#allocation4] sm:$0x1]
  %v8666 = vsel %vm4705, %v8655, 0
  %8668 = vmatprep.subr.mxu0 0.0
  %8669 = vmatpush1.msra.mxu0 %v8656
  %8670 = vmatprep.subr.mxu0 0.0
  %8671 = vmatpush1.msra.mxu0 %v8657
  %8672 = vmatprep.subr.mxu0 0.0
  %8673 = vmatpush1.msra.mxu0 %v8658
  %8674 = vmatprep.subr.mxu0 0.0
  %8675 = vmatpush1.msra.mxu0 %v8659
  %8676 = vmatprep.subr.mxu0 0.0
  %8677 = vmatpush1.msra.mxu0 %v8660
  %8678 = vmatprep.subr.mxu0 0.0
  %8679 = vmatpush1.msra.mxu0 %v8661
  %8680 = vmatprep.subr.mxu0 0.0
  %8681 = vmatpush1.msra.mxu0 %v8662
  %8682 = vmatprep.subr.mxu0 0.0
  %8683 = vmatpush1.msra.mxu0 %v8663
  %8684 = vmatprep.subr.mxu0 0.0
  %8685 = vmatpush1.msra.mxu0 0.0
  %8686 = vmatprep.subr.mxu0 0.0
  %8687 = vmatpush1.msra.mxu0 0.0
  %8688 = vmatprep.subr.mxu0 0.0
  %8689 = vmatpush1.msra.mxu0 0.0
  %8690 = vmatprep.subr.mxu0 0.0
  %8691 = vmatpush1.msra.mxu0 0.0
  %8692 = vmatprep.subr.mxu0 0.0
  %8693 = vmatpush1.msra.mxu0 0.0
  %8694 = vmatprep.subr.mxu0 0.0
  %8695 = vmatpush1.msra.mxu0 0.0
  %8696 = vmatprep.subr.mxu0 0.0
  %8697 = vmatpush1.msra.mxu0 0.0
  %8698 = vmatprep.subr.mxu0 0.0
  %8699 = vmatpush1.msra.mxu0 0.0
  %8700 = vmatprep.subr.mxu0 0.0
  %8701 = vmatpush1.msra.mxu0 0.0
  %8702 = vmatprep.subr.mxu0 0.0
  %8703 = vmatpush1.msra.mxu0 0.0
  %8704 = vmatprep.subr.mxu0 0.0
  %8705 = vmatpush1.msra.mxu0 0.0
  %8706 = vmatprep.subr.mxu0 0.0
  %8707 = vmatpush1.msra.mxu0 0.0
  %8708 = vmatprep.subr.mxu0 0.0
  %8709 = vmatpush1.msra.mxu0 0.0
  %8710 = vmatprep.subr.mxu0 0.0
  %8711 = vmatpush1.msra.mxu0 0.0
  %8712 = vmatprep.subr.mxu0 0.0
  %8713 = vmatpush1.msra.mxu0 0.0
  %8714 = vmatprep.subr.mxu0 0.0
  %8715 = vmatpush1.msra.mxu0 0.0
  %8716 = vmatprep.subr.mxu0 0.0
  %8717 = vmatpush1.msra.mxu0 0.0
  %8718 = vmatprep.subr.mxu0 0.0
  %8719 = vmatpush1.msra.mxu0 0.0
  %8720 = vmatprep.subr.mxu0 0.0
  %8721 = vmatpush1.msra.mxu0 0.0
  %8722 = vmatprep.subr.mxu0 0.0
  %8723 = vmatpush1.msra.mxu0 0.0
  %8724 = vmatprep.subr.mxu0 0.0
  %8725 = vmatpush1.msra.mxu0 0.0
  %8726 = vmatprep.subr.mxu0 0.0
  %8727 = vmatpush1.msra.mxu0 0.0
  %8728 = vmatprep.subr.mxu0 0.0
  %8729 = vmatpush1.msra.mxu0 0.0
  %8730 = vmatprep.subr.mxu0 0.0
  %8731 = vmatpush1.msra.mxu0 0.0
  %8732 = vmatprep.mubr.f32.mxu0 0.0
  %8733 = vmatmul.mubr.f32.gmra.mrb[0].mxu0 %v8666
  %v8734 = vpop.f32.mrb[0].mxu0
  %v8735 = vadd.f32 %v8664, %v8734
  %v8736 = vpop.f32.mrb[0].mxu0
  %8737 = vdwg.mxu0
  %8738 = vst.msk [vmem:[%s20 + $0x1] sm:$0x1] %vm4779, %v8735
  // Predicated region
  $region112: #{dual_cnn_regressor_forward.1} parent=0 // pred_check
    _
  $region113: #{dual_cnn_regressor_forward.1} parent=0 // pred_check_branch
    %8740 = sbr.rel (0) target = $region115
  $region114: #{dual_cnn_regressor_forward.1} parent=0 // pred_region
    _
  $region115: #{dual_cnn_regressor_forward.1} parent=0 // pred_fallthru
    _
  // Predicated region
  $region116: #{dual_cnn_regressor_forward.1} parent=0 // pred_check
    _
  $region117: #{dual_cnn_regressor_forward.1} parent=0 // pred_check_branch
    %8742 = sbr.rel (0) target = $region119
  $region118: #{dual_cnn_regressor_forward.1} parent=0 // pred_region
    _
  $region119: #{dual_cnn_regressor_forward.1} parent=0 // pred_fallthru
    _
  %8743 = vsyncmov [#allocation3]
  %s8744 = vpop.sfrf %8743
  %p8745 = scmp.eq.s32.totalorder %s8744, 0
  %p8746 = pneg %p8745
  %8748 = shalt.err (%p8746)

</llo_original>
